<compile_context>
chip_gen: v7x
topology: tpu7x:2x2x1
jax: 0.10.0
libtpu: 0.0.40
codegen_flags: <defaults>
</compile_context>

<pallas_src>
import functools

import jax
import jax.numpy as jnp
import numpy as np
from jax import lax
from jax.experimental import pallas as pl
from jax.experimental.pallas import tpu as pltpu


def _round_up(x, m):
    return (x + m - 1) // m * m


def _vmem_cap_bytes():
    # Per-generation usable cap (v5e/v6e: 128 MiB, v7x: 64 MiB per TC).
    try:
        return int(pltpu.get_tpu_info().vmem_capacity_bytes) * 7 // 8
    except Exception:
        return 56 << 20


# ---------------------------------------------------------------------------
# Pallas kernel: multi-layer LSTM, one grid step == one chunk of T timesteps.
# Layer-outer / time-inner (cuDNN-style):
#   per layer:  batched x-projection for all T steps (one tall MXU matmul)
#               then a sequential loop with only h_prev @ W_hh on the chain.
# The out_ref block doubles as the inter-layer sequence buffer.
# ---------------------------------------------------------------------------
def _lstm_kernel(*refs, num_layers, time_chunk, seq_len, hidden_p, unroll):
    L, T, S, Hp = num_layers, time_chunk, seq_len, hidden_p
    has_wr = L > 1

    if has_wr:
        (x_ref, w_ih0_hbm, w_ihr_hbm, w_hh_hbm, b_ref,
         out_ref, h_out_ref, c_out_ref,
         w_ih0_v, w_ihr_v, w_hh_v, h_st, c_st, gate_st, dma_sem) = refs
    else:
        (x_ref, w_ih0_hbm, w_hh_hbm, b_ref,
         out_ref, h_out_ref, c_out_ref,
         w_ih0_v, w_hh_v, h_st, c_st, gate_st, dma_sem) = refs
        w_ihr_hbm = w_ihr_v = None

    chunk = pl.program_id(0)
    t_base = chunk * T                       # hoisted: one scalar mul per chunk
    needs_mask = (S % T) != 0                # static: only tail chunk has pad steps
    Bp = h_st.shape[1]
    mm_dtype = w_ih0_v.dtype                 # bf16 in production, f32 here

    # ---- one-time setup: weights HBM -> VMEM (single copy, never re-fetched),
    #      zero the recurrent state ------------------------------------------
    @pl.when(chunk == 0)
    def _():
        copies = [pltpu.make_async_copy(w_ih0_hbm, w_ih0_v, dma_sem.at[0]),
                  pltpu.make_async_copy(w_hh_hbm, w_hh_v, dma_sem.at[1])]
        if has_wr:
            copies.append(pltpu.make_async_copy(w_ihr_hbm, w_ihr_v, dma_sem.at[2]))
        for cp in copies:
            cp.start()
        for cp in copies:
            cp.wait()
        h_st[...] = jnp.zeros_like(h_st)
        c_st[...] = jnp.zeros_like(c_st)

    for l in range(L):                       # static unroll over layers
        # ---- (1) batched input projection for the whole chunk ---------------
        # Bias is folded in here once (not re-broadcast every timestep).
        if l == 0:
            inp_seq = x_ref[...].reshape(T * Bp, x_ref.shape[2])
            w_ih = w_ih0_v[...]
        else:
            inp_seq = out_ref[...].reshape(T * Bp, Hp)   # previous layer's outputs
            w_ih = w_ihr_v[l - 1]
        gate_st[...] = (
            jnp.dot(inp_seq.astype(mm_dtype), w_ih,
                    preferred_element_type=jnp.float32)
            + b_ref[l]
        ).reshape(gate_st.shape)

        # ---- (2) sequential recurrence: only h_prev @ W_hh + gate math ------
        def step_fn(t, carry):
            h_prev, c_prev = carry
            gates = gate_st[t] + jnp.dot(h_prev.astype(mm_dtype), w_hh_v[l],
                                         preferred_element_type=jnp.float32)
            # PyTorch gate order i, f, g, o — each slice is a 128-lane slab.
            i = jax.nn.sigmoid(gates[:, 0 * Hp:1 * Hp])
            f = jax.nn.sigmoid(gates[:, 1 * Hp:2 * Hp])
            g = jnp.tanh(gates[:, 2 * Hp:3 * Hp])
            o = jax.nn.sigmoid(gates[:, 3 * Hp:4 * Hp])
            c = f * c_prev + i * g
            h = o * jnp.tanh(c)
            if needs_mask:
                valid = (t_base + t) < S      # freeze state on padded tail steps
                h = jnp.where(valid, h, h_prev)
                c = jnp.where(valid, c, c_prev)
            # Lane-dense store; for l < L-1 this is the next layer's input slab.
            out_ref[t] = h.astype(out_ref.dtype)
            return h, c

        h_f, c_f = lax.fori_loop(0, T, step_fn, (h_st[l], c_st[l]), unroll=unroll)
        h_st[l] = h_f
        c_st[l] = c_f

    @pl.when(chunk == pl.num_programs(0) - 1)
    def _():
        h_out_ref[...] = h_st[...].astype(h_out_ref.dtype)
        c_out_ref[...] = c_st[...].astype(c_out_ref.dtype)


def lstm_pallas(x, w_ih0, w_ihr, w_hh, bias, *, seq_len, time_chunk,
                out_dtype=jnp.float32):
    """x: (Sp, Bp, Ep) padded time-major input. Returns padded out/h/c."""
    Sp, Bp, Ep = x.shape
    L = bias.shape[0]
    Hp = bias.shape[-1] // 4
    T = time_chunk
    n_chunks = Sp // T
    has_wr = w_ihr is not None

    unroll = True if T <= 16 else 4          # partial unroll for long chunks

    kernel = functools.partial(
        _lstm_kernel, num_layers=L, time_chunk=T, seq_len=seq_len,
        hidden_p=Hp, unroll=unroll)

    # VMEM budget: 2x only for the pipelined x/out chunks, weights counted once
    # (single VMEM copy), plus gate/state scratch and final-state blocks.
    wt_bytes = jnp.dtype(w_ih0.dtype).itemsize
    out_bytes = jnp.dtype(out_dtype).itemsize
    need = (
        2 * T * Bp * Ep * 4                               # x chunk (double-buffered)
        + 2 * T * Bp * Hp * out_bytes                     # out chunk (double-buffered)
        + (Ep + (2 * L - 1) * Hp) * 4 * Hp * wt_bytes     # weights: single copy
        + 2 * L * 4 * Hp * 4                              # bias block (tiny)
        + 2 * L * Bp * Hp * 4                             # h/c recurrent state
        + T * Bp * 4 * Hp * 4                             # gate scratch
        + 2 * 2 * L * Bp * Hp * 4                         # final h/c output blocks
    )
    vmem_limit = int(min(max(int(1.25 * need) + (1 << 20), 8 << 20),
                         _vmem_cap_bytes()))

    in_specs = [pl.BlockSpec((T, Bp, Ep), lambda c: (c, 0, 0)),   # x chunk (pipelined)
                pl.BlockSpec(memory_space=pl.ANY)]                # W_ih layer 0 (HBM)
    inputs = [x, w_ih0]
    if has_wr:
        in_specs.append(pl.BlockSpec(memory_space=pl.ANY))        # W_ih layers 1..L-1
        inputs.append(w_ihr)
    in_specs += [pl.BlockSpec(memory_space=pl.ANY),               # W_hh all layers
                 pl.BlockSpec((L, 1, 4 * Hp), lambda c: (0, 0, 0))]  # b_ih + b_hh
    inputs += [w_hh, bias]

    scratch_shapes = [pltpu.VMEM((Ep, 4 * Hp), w_ih0.dtype)]      # W_ih0 resident copy
    if has_wr:
        scratch_shapes.append(pltpu.VMEM((L - 1, Hp, 4 * Hp), w_ih0.dtype))
    scratch_shapes += [
        pltpu.VMEM((L, Hp, 4 * Hp), w_ih0.dtype),                 # W_hh resident copy
        pltpu.VMEM((L, Bp, Hp), jnp.float32),                     # h state
        pltpu.VMEM((L, Bp, Hp), jnp.float32),                     # c state
        pltpu.VMEM((T, Bp, 4 * Hp), jnp.float32),                 # batched gate scratch
        pltpu.SemaphoreType.DMA((3 if has_wr else 2,)),           # weight-copy sems
    ]

    grid_spec = pltpu.PrefetchScalarGridSpec(
        num_scalar_prefetch=0,
        grid=(n_chunks,),
        in_specs=in_specs,
        out_specs=[
            pl.BlockSpec((T, Bp, Hp), lambda c: (c, 0, 0)),       # out chunk
            pl.BlockSpec((L, Bp, Hp), lambda c: (0, 0, 0)),       # final h
            pl.BlockSpec((L, Bp, Hp), lambda c: (0, 0, 0)),       # final c
        ],
        scratch_shapes=scratch_shapes,
    )

    out, h, c = pl.pallas_call(
        kernel,
        out_shape=(
            jax.ShapeDtypeStruct((Sp, Bp, Hp), out_dtype),
            jax.ShapeDtypeStruct((L, Bp, Hp), jnp.float32),
            jax.ShapeDtypeStruct((L, Bp, Hp), jnp.float32),
        ),
        grid_spec=grid_spec,
        compiler_params=pltpu.CompilerParams(
            dimension_semantics=("arbitrary",),   # time recurrence is sequential
            vmem_limit_bytes=vmem_limit,
        ),
    )(*inputs)
    return out, h, c


# ---------------------------------------------------------------------------
# Seq2SeqEncoder forward (wrapper: embedding glue + padding + Pallas LSTM)
# ---------------------------------------------------------------------------
def seq2seq_encoder_forward(tokens, params, *, time_chunk=32,
                            param_dtype=jnp.float32, out_dtype=jnp.float32):
    """tokens: (batch, seq) int32. Returns (out, (h, c)) like the PyTorch module.

    param_dtype=jnp.bfloat16 halves weight VMEM (recommended for v7x / large H);
    out_dtype=jnp.bfloat16 halves HBM writeback (recommended on v5e).  Defaults
    stay f32 for exact parity with the f32 PyTorch module.
    """
    B, S = tokens.shape
    E = params["embedding"].shape[1]
    L = len(params["w_ih"])
    H = params["w_hh"][0].shape[1]

    Bp = _round_up(B, 8)        # sublane multiple (f32)
    Ep = _round_up(E, 128)      # lane multiple
    Hp = _round_up(H, 128)      # lane multiple -> gate slices & output store lane-aligned
    T = min(time_chunk, S)
    Sp = _round_up(S, T)

    # TODO(synk): embedding gather (data-dependent row lookup) kept in plain JAX glue.
    emb = jnp.take(params["embedding"], tokens, axis=0)          # (B, S, E)
    x = jnp.transpose(emb, (1, 0, 2)).astype(jnp.float32)        # (S, B, E) time-major
    x_p = jnp.zeros((Sp, Bp, Ep), jnp.float32).at[:S, :B, :E].set(x)

    def pad_gates(w_t):
        # (in, 4H) -> (in, 4Hp): pad each gate block i/f/g/o from H to Hp with
        # zeros so padded hidden lanes see zero gates and stay identically zero.
        n_in = w_t.shape[0]
        return jnp.pad(w_t.reshape(n_in, 4, H),
                       ((0, 0), (0, 0), (0, Hp - H))).reshape(n_in, 4 * Hp)

    def pad_ih(l, in_dim, in_pad):
        return jnp.pad(pad_gates(params["w_ih"][l].T), ((0, in_pad - in_dim), (0, 0)))

    def pad_hh(l):
        return jnp.pad(pad_gates(params["w_hh"][l].T), ((0, Hp - H), (0, 0)))

    w_ih0 = pad_ih(0, E, Ep).astype(param_dtype)                              # (Ep, 4Hp)
    w_ihr = (jnp.stack([pad_ih(l, H, Hp) for l in range(1, L)], 0).astype(param_dtype)
             if L > 1 else None)                                              # (L-1, Hp, 4Hp)
    w_hh = jnp.stack([pad_hh(l) for l in range(L)], 0).astype(param_dtype)    # (L, Hp, 4Hp)

    bias = jnp.stack(
        [jnp.pad((params["b_ih"][l] + params["b_hh"][l]).reshape(4, H),
                 ((0, 0), (0, Hp - H))).reshape(1, 4 * Hp)
         for l in range(L)], 0).astype(jnp.float32)                           # (L, 1, 4Hp)

    out_p, h_p, c_p = lstm_pallas(x_p, w_ih0, w_ihr, w_hh, bias,
                                  seq_len=S, time_chunk=T, out_dtype=out_dtype)
    out = out_p[:S, :B, :H]
    h = h_p[:, :B, :H]
    c = c_p[:, :B, :H]
    return out, (h, c)


# ---------------------------------------------------------------------------
# Pure-JAX reference (mirrors PyTorch nn.LSTM semantics, dropout=0)
# ---------------------------------------------------------------------------
def seq2seq_encoder_reference(tokens, params):
    emb = jnp.take(params["embedding"], tokens, axis=0)
    x = jnp.transpose(emb, (1, 0, 2)).astype(jnp.float32)
    S, B, _ = x.shape
    L = len(params["w_ih"])
    H = params["w_hh"][0].shape[1]

    h = [jnp.zeros((B, H), jnp.float32) for _ in range(L)]
    c = [jnp.zeros((B, H), jnp.float32) for _ in range(L)]
    outs = []
    for t in range(S):
        inp = x[t]
        for l in range(L):
            gates = (inp @ params["w_ih"][l].T + params["b_ih"][l]
                     + h[l] @ params["w_hh"][l].T + params["b_hh"][l])
            i = jax.nn.sigmoid(gates[:, 0 * H:1 * H])
            f = jax.nn.sigmoid(gates[:, 1 * H:2 * H])
            g = jnp.tanh(gates[:, 2 * H:3 * H])
            o = jax.nn.sigmoid(gates[:, 3 * H:4 * H])
            c[l] = f * c[l] + i * g
            h[l] = o * jnp.tanh(c[l])
            inp = h[l]
        outs.append(inp)
    return jnp.stack(outs, 0), (jnp.stack(h, 0), jnp.stack(c, 0))


# ---------------------------------------------------------------------------
# Deterministic parameter init (shapes per nn.Embedding / nn.LSTM)
# ---------------------------------------------------------------------------
def init_params(key, vocab_size, embed_size, num_hiddens, num_layers):
    k_bound = 1.0 / np.sqrt(num_hiddens)
    keys = jax.random.split(key, 1 + 4 * num_layers)
    params = {
        "embedding": jax.random.normal(keys[0], (vocab_size, embed_size), jnp.float32),
        "w_ih": [], "w_hh": [], "b_ih": [], "b_hh": [],
    }
    idx = 1
    for l in range(num_layers):
        in_size = embed_size if l == 0 else num_hiddens
        params["w_ih"].append(jax.random.uniform(
            keys[idx], (4 * num_hiddens, in_size), jnp.float32, -k_bound, k_bound)); idx += 1
        params["w_hh"].append(jax.random.uniform(
            keys[idx], (4 * num_hiddens, num_hiddens), jnp.float32, -k_bound, k_bound)); idx += 1
        params["b_ih"].append(jax.random.uniform(
            keys[idx], (4 * num_hiddens,), jnp.float32, -k_bound, k_bound)); idx += 1
        params["b_hh"].append(jax.random.uniform(
            keys[idx], (4 * num_hiddens,), jnp.float32, -k_bound, k_bound)); idx += 1
    return params


if __name__ == "__main__":
    vocab_size, embed_size, num_hiddens, num_layers = 20, 16, 32, 2
    batch, seq = 4, 8

    key = jax.random.PRNGKey(0)
    k_param, k_tok = jax.random.split(key)
    params = init_params(k_param, vocab_size, embed_size, num_hiddens, num_layers)
    tokens = jax.random.randint(k_tok, (batch, seq), 0, vocab_size, dtype=jnp.int32)

    out, (h, c) = seq2seq_encoder_forward(tokens, params)
    jax.block_until_ready((out, h, c))

    out_ref, (h_ref, c_ref) = seq2seq_encoder_reference(tokens, params)

    assert out.shape == (seq, batch, num_hiddens)
    assert h.shape == (num_layers, batch, num_hiddens)
    assert c.shape == (num_layers, batch, num_hiddens)
    np.testing.assert_allclose(np.asarray(out), np.asarray(out_ref), rtol=5e-5, atol=5e-5)
    np.testing.assert_allclose(np.asarray(h), np.asarray(h_ref), rtol=5e-5, atol=5e-5)
    np.testing.assert_allclose(np.asarray(c), np.asarray(c_ref), rtol=5e-5, atol=5e-5)

    # Also exercise the single-layer specialization (no w_ihr buffer at all).
    params1 = init_params(k_param, vocab_size, embed_size, num_hiddens, 1)
    out1, (h1, c1) = seq2seq_encoder_forward(tokens, params1)
    jax.block_until_ready((out1, h1, c1))
    out1_ref, (h1_ref, c1_ref) = seq2seq_encoder_reference(tokens, params1)
    np.testing.assert_allclose(np.asarray(out1), np.asarray(out1_ref), rtol=5e-5, atol=5e-5)
    np.testing.assert_allclose(np.asarray(h1), np.asarray(h1_ref), rtol=5e-5, atol=5e-5)
    np.testing.assert_allclose(np.asarray(c1), np.asarray(c1_ref), rtol=5e-5, atol=5e-5)

    print("KERNEL_OK")
</pallas_src>

<mosaic_0001>
module attributes {stable_mosaic.version = 11 : i64} {
  func.func @_lstm_kernel(%arg0: i32, %arg1: memref<8x8x128xf32, #tpu.memory_space<vmem>>, %arg2: memref<128x512xf32, #tpu.memory_space<any>>, %arg3: memref<1x128x512xf32, #tpu.memory_space<any>>, %arg4: memref<2x128x512xf32, #tpu.memory_space<any>>, %arg5: memref<2x1x512xf32, #tpu.memory_space<vmem>>, %arg6: memref<8x8x128xf32, #tpu.memory_space<vmem>>, %arg7: memref<2x8x128xf32, #tpu.memory_space<vmem>>, %arg8: memref<2x8x128xf32, #tpu.memory_space<vmem>>, %arg9: memref<128x512xf32, #tpu.memory_space<vmem>>, %arg10: memref<1x128x512xf32, #tpu.memory_space<vmem>>, %arg11: memref<2x128x512xf32, #tpu.memory_space<vmem>>, %arg12: memref<2x8x128xf32, #tpu.memory_space<vmem>>, %arg13: memref<2x8x128xf32, #tpu.memory_space<vmem>>, %arg14: memref<8x8x512xf32, #tpu.memory_space<vmem>>, %arg15: memref<3x!tpu.dma_semaphore, #tpu.memory_space<semaphore_mem>>) attributes {dimension_semantics = [#tpu.dimension_semantics<arbitrary>], iteration_bounds = array<i64: 1>, scalar_prefetch = 0 : i64, scratch_operands = 7 : i64, tpu.core_type = #tpu.core_type<tc>, window_params = [{transform_indices = @transform_0, window_bounds = array<i64: 8, 8, 128>}, {}, {}, {}, {pipeline_mode = #tpu.pipeline_mode<synchronous>, transform_indices = @transform_4, window_bounds = array<i64: 2, 1, 512>}, {transform_indices = @transform_5, window_bounds = array<i64: 8, 8, 128>}, {pipeline_mode = #tpu.pipeline_mode<synchronous>, transform_indices = @transform_6, window_bounds = array<i64: 2, 8, 128>}, {pipeline_mode = #tpu.pipeline_mode<synchronous>, transform_indices = @transform_7, window_bounds = array<i64: 2, 8, 128>}]} {
    %c0_i32 = arith.constant 0 : i32
    %0 = arith.cmpi eq, %arg0, %c0_i32 : i32
    %1 = arith.extui %0 : i1 to i32
    %c0_i32_0 = arith.constant 0 : i32
    %2 = arith.cmpi ne, %1, %c0_i32_0 : i32
    scf.if %2 {
      %c0_i32_235 = arith.constant 0 : i32
      %623 = tpu.memref_slice %arg15[%c0_i32_235] : memref<3x!tpu.dma_semaphore, #tpu.memory_space<semaphore_mem>> -> memref<1x!tpu.dma_semaphore, #tpu.memory_space<semaphore_mem>>
      %624 = tpu.memref_squeeze %623 : memref<1x!tpu.dma_semaphore, #tpu.memory_space<semaphore_mem>> -> memref<!tpu.dma_semaphore, #tpu.memory_space<semaphore_mem>>
      tpu.enqueue_dma source(%arg2 : memref<128x512xf32, #tpu.memory_space<any>>) target(%arg9 : memref<128x512xf32, #tpu.memory_space<vmem>>) target_semaphore(%624 : memref<!tpu.dma_semaphore, #tpu.memory_space<semaphore_mem>>)
      %c1_i32_236 = arith.constant 1 : i32
      %625 = tpu.memref_slice %arg15[%c1_i32_236] : memref<3x!tpu.dma_semaphore, #tpu.memory_space<semaphore_mem>> -> memref<1x!tpu.dma_semaphore, #tpu.memory_space<semaphore_mem>>
      %626 = tpu.memref_squeeze %625 : memref<1x!tpu.dma_semaphore, #tpu.memory_space<semaphore_mem>> -> memref<!tpu.dma_semaphore, #tpu.memory_space<semaphore_mem>>
      tpu.enqueue_dma source(%arg4 : memref<2x128x512xf32, #tpu.memory_space<any>>) target(%arg11 : memref<2x128x512xf32, #tpu.memory_space<vmem>>) target_semaphore(%626 : memref<!tpu.dma_semaphore, #tpu.memory_space<semaphore_mem>>)
      %c2_i32_237 = arith.constant 2 : i32
      %627 = tpu.memref_slice %arg15[%c2_i32_237] : memref<3x!tpu.dma_semaphore, #tpu.memory_space<semaphore_mem>> -> memref<1x!tpu.dma_semaphore, #tpu.memory_space<semaphore_mem>>
      %628 = tpu.memref_squeeze %627 : memref<1x!tpu.dma_semaphore, #tpu.memory_space<semaphore_mem>> -> memref<!tpu.dma_semaphore, #tpu.memory_space<semaphore_mem>>
      tpu.enqueue_dma source(%arg3 : memref<1x128x512xf32, #tpu.memory_space<any>>) target(%arg10 : memref<1x128x512xf32, #tpu.memory_space<vmem>>) target_semaphore(%628 : memref<!tpu.dma_semaphore, #tpu.memory_space<semaphore_mem>>)
      %c0_i32_238 = arith.constant 0 : i32
      %629 = tpu.memref_slice %arg15[%c0_i32_238] : memref<3x!tpu.dma_semaphore, #tpu.memory_space<semaphore_mem>> -> memref<1x!tpu.dma_semaphore, #tpu.memory_space<semaphore_mem>>
      %630 = tpu.memref_squeeze %629 : memref<1x!tpu.dma_semaphore, #tpu.memory_space<semaphore_mem>> -> memref<!tpu.dma_semaphore, #tpu.memory_space<semaphore_mem>>
      tpu.wait_dma2 semaphore(%630 : memref<!tpu.dma_semaphore, #tpu.memory_space<semaphore_mem>>) src(%arg2 : memref<128x512xf32, #tpu.memory_space<any>>) dst(%arg9 : memref<128x512xf32, #tpu.memory_space<vmem>>)
      %c1_i32_239 = arith.constant 1 : i32
      %631 = tpu.memref_slice %arg15[%c1_i32_239] : memref<3x!tpu.dma_semaphore, #tpu.memory_space<semaphore_mem>> -> memref<1x!tpu.dma_semaphore, #tpu.memory_space<semaphore_mem>>
      %632 = tpu.memref_squeeze %631 : memref<1x!tpu.dma_semaphore, #tpu.memory_space<semaphore_mem>> -> memref<!tpu.dma_semaphore, #tpu.memory_space<semaphore_mem>>
      tpu.wait_dma2 semaphore(%632 : memref<!tpu.dma_semaphore, #tpu.memory_space<semaphore_mem>>) src(%arg4 : memref<2x128x512xf32, #tpu.memory_space<any>>) dst(%arg11 : memref<2x128x512xf32, #tpu.memory_space<vmem>>)
      %c2_i32_240 = arith.constant 2 : i32
      %633 = tpu.memref_slice %arg15[%c2_i32_240] : memref<3x!tpu.dma_semaphore, #tpu.memory_space<semaphore_mem>> -> memref<1x!tpu.dma_semaphore, #tpu.memory_space<semaphore_mem>>
      %634 = tpu.memref_squeeze %633 : memref<1x!tpu.dma_semaphore, #tpu.memory_space<semaphore_mem>> -> memref<!tpu.dma_semaphore, #tpu.memory_space<semaphore_mem>>
      tpu.wait_dma2 semaphore(%634 : memref<!tpu.dma_semaphore, #tpu.memory_space<semaphore_mem>>) src(%arg3 : memref<1x128x512xf32, #tpu.memory_space<any>>) dst(%arg10 : memref<1x128x512xf32, #tpu.memory_space<vmem>>)
      %cst_241 = arith.constant 0.000000e+00 : f32
      %635 = vector.broadcast %cst_241 : f32 to vector<2x8x128xf32>
      %c0_242 = arith.constant 0 : index
      %c0_243 = arith.constant 0 : index
      %c0_244 = arith.constant 0 : index
      %636 = vector.load %arg12[%c0_242, %c0_243, %c0_244] : memref<2x8x128xf32, #tpu.memory_space<vmem>>, vector<2x8x128xf32>
      tpu.vector_store %arg12[%c0_242, %c0_243, %c0_244], %635 {strides = array<i32>} : memref<2x8x128xf32, #tpu.memory_space<vmem>>, vector<2x8x128xf32>,
      %cst_245 = arith.constant 0.000000e+00 : f32
      %637 = vector.broadcast %cst_245 : f32 to vector<2x8x128xf32>
      %c0_246 = arith.constant 0 : index
      %c0_247 = arith.constant 0 : index
      %c0_248 = arith.constant 0 : index
      %638 = vector.load %arg13[%c0_246, %c0_247, %c0_248] : memref<2x8x128xf32, #tpu.memory_space<vmem>>, vector<2x8x128xf32>
      tpu.vector_store %arg13[%c0_246, %c0_247, %c0_248], %637 {strides = array<i32>} : memref<2x8x128xf32, #tpu.memory_space<vmem>>, vector<2x8x128xf32>,
    } else {
    }
    %c0 = arith.constant 0 : index
    %c0_1 = arith.constant 0 : index
    %c0_2 = arith.constant 0 : index
    %3 = vector.load %arg1[%c0, %c0_1, %c0_2] : memref<8x8x128xf32, #tpu.memory_space<vmem>>, vector<8x8x128xf32>
    %4 = vector.shape_cast %3 : vector<8x8x128xf32> to vector<64x128xf32>
    %c0_3 = arith.constant 0 : index
    %c0_4 = arith.constant 0 : index
    %5 = vector.load %arg9[%c0_3, %c0_4] : memref<128x512xf32, #tpu.memory_space<vmem>>, vector<128x512xf32>
    %cst = arith.constant dense<0.000000e+00> : vector<64x512xf32>
    %6 = tpu.matmul %4, %5, %cst {dimension_numbers = #tpu.dot_dimension_numbers<[1], [0], [0], [1], [0, 0, 1, 1], [], []>} : vector<64x128xf32>, vector<128x512xf32>, vector<64x512xf32> -> vector<64x512xf32>
    %c0_5 = arith.constant 0 : index
    %c0_6 = arith.constant 0 : index
    %c0_7 = arith.constant 0 : index
    %7 = vector.load %arg5[%c0_5, %c0_6, %c0_7] : memref<2x1x512xf32, #tpu.memory_space<vmem>>, vector<1x1x512xf32>
    %8 = vector.shape_cast %7 : vector<1x1x512xf32> to vector<1x512xf32>
    %9 = vector.broadcast %8 : vector<1x512xf32> to vector<64x512xf32>
    %10 = arith.addf %6, %9 : vector<64x512xf32>
    %11 = vector.shape_cast %10 : vector<64x512xf32> to vector<8x8x512xf32>
    %c0_8 = arith.constant 0 : index
    %c0_9 = arith.constant 0 : index
    %c0_10 = arith.constant 0 : index
    %12 = vector.load %arg14[%c0_8, %c0_9, %c0_10] : memref<8x8x512xf32, #tpu.memory_space<vmem>>, vector<8x8x512xf32>
    tpu.vector_store %arg14[%c0_8, %c0_9, %c0_10], %11 {strides = array<i32>} : memref<8x8x512xf32, #tpu.memory_space<vmem>>, vector<8x8x512xf32>,
    %c0_11 = arith.constant 0 : index
    %c0_12 = arith.constant 0 : index
    %c0_13 = arith.constant 0 : index
    %13 = vector.load %arg12[%c0_11, %c0_12, %c0_13] : memref<2x8x128xf32, #tpu.memory_space<vmem>>, vector<1x8x128xf32>
    %14 = vector.shape_cast %13 : vector<1x8x128xf32> to vector<8x128xf32>
    %c0_14 = arith.constant 0 : index
    %c0_15 = arith.constant 0 : index
    %c0_16 = arith.constant 0 : index
    %15 = vector.load %arg13[%c0_14, %c0_15, %c0_16] : memref<2x8x128xf32, #tpu.memory_space<vmem>>, vector<1x8x128xf32>
    %16 = vector.shape_cast %15 : vector<1x8x128xf32> to vector<8x128xf32>
    %c0_i32_17 = arith.constant 0 : i32
    %17 = arith.index_cast %c0_i32_17 : i32 to index
    %c0_18 = arith.constant 0 : index
    %c0_19 = arith.constant 0 : index
    %18 = vector.load %arg14[%17, %c0_18, %c0_19] : memref<8x8x512xf32, #tpu.memory_space<vmem>>, vector<1x8x512xf32>
    %19 = vector.shape_cast %18 : vector<1x8x512xf32> to vector<8x512xf32>
    %c0_20 = arith.constant 0 : index
    %c0_21 = arith.constant 0 : index
    %c0_22 = arith.constant 0 : index
    %20 = vector.load %arg11[%c0_20, %c0_21, %c0_22] : memref<2x128x512xf32, #tpu.memory_space<vmem>>, vector<1x128x512xf32>
    %21 = vector.shape_cast %20 : vector<1x128x512xf32> to vector<128x512xf32>
    %cst_23 = arith.constant dense<0.000000e+00> : vector<8x512xf32>
    %22 = tpu.matmul %14, %21, %cst_23 {dimension_numbers = #tpu.dot_dimension_numbers<[1], [0], [0], [1], [0, 0, 1, 1], [], []>} : vector<8x128xf32>, vector<128x512xf32>, vector<8x512xf32> -> vector<8x512xf32>
    %23 = arith.addf %19, %22 : vector<8x512xf32>
    %24 = vector.extract_strided_slice %23 {offsets = [0, 0], sizes = [8, 128], strides = [1, 1]} : vector<8x512xf32> to vector<8x128xf32>
    %25 = arith.negf %24 : vector<8x128xf32>
    %26 = math.exp %25 : vector<8x128xf32>
    %cst_24 = arith.constant 1.000000e+00 : f32
    %27 = vector.broadcast %cst_24 : f32 to vector<8x128xf32>
    %28 = arith.addf %27, %26 : vector<8x128xf32>
    %29 = arith.divf %27, %28 : vector<8x128xf32>
    %30 = vector.extract_strided_slice %23 {offsets = [0, 128], sizes = [8, 128], strides = [1, 1]} : vector<8x512xf32> to vector<8x128xf32>
    %31 = arith.negf %30 : vector<8x128xf32>
    %32 = math.exp %31 : vector<8x128xf32>
    %cst_25 = arith.constant 1.000000e+00 : f32
    %33 = vector.broadcast %cst_25 : f32 to vector<8x128xf32>
    %34 = arith.addf %33, %32 : vector<8x128xf32>
    %35 = arith.divf %33, %34 : vector<8x128xf32>
    %36 = vector.extract_strided_slice %23 {offsets = [0, 256], sizes = [8, 128], strides = [1, 1]} : vector<8x512xf32> to vector<8x128xf32>
    %37 = math.tanh %36 : vector<8x128xf32>
    %38 = vector.extract_strided_slice %23 {offsets = [0, 384], sizes = [8, 128], strides = [1, 1]} : vector<8x512xf32> to vector<8x128xf32>
    %39 = arith.negf %38 : vector<8x128xf32>
    %40 = math.exp %39 : vector<8x128xf32>
    %cst_26 = arith.constant 1.000000e+00 : f32
    %41 = vector.broadcast %cst_26 : f32 to vector<8x128xf32>
    %42 = arith.addf %41, %40 : vector<8x128xf32>
    %43 = arith.divf %41, %42 : vector<8x128xf32>
    %44 = arith.mulf %35, %16 : vector<8x128xf32>
    %45 = arith.mulf %29, %37 : vector<8x128xf32>
    %46 = arith.addf %44, %45 : vector<8x128xf32>
    %47 = math.tanh %46 : vector<8x128xf32>
    %48 = arith.mulf %43, %47 : vector<8x128xf32>
    %49 = arith.index_cast %c0_i32_17 : i32 to index
    %c0_27 = arith.constant 0 : index
    %c0_28 = arith.constant 0 : index
    %50 = vector.load %arg6[%49, %c0_27, %c0_28] : memref<8x8x128xf32, #tpu.memory_space<vmem>>, vector<1x8x128xf32>
    %51 = vector.shape_cast %50 : vector<1x8x128xf32> to vector<8x128xf32>
    %52 = vector.shape_cast %48 : vector<8x128xf32> to vector<1x8x128xf32>
    tpu.vector_store %arg6[%49, %c0_27, %c0_28], %52 {strides = array<i32>} : memref<8x8x128xf32, #tpu.memory_space<vmem>>, vector<1x8x128xf32>,
    %c1_i32 = arith.constant 1 : i32
    %53 = arith.index_cast %c1_i32 : i32 to index
    %c0_29 = arith.constant 0 : index
    %c0_30 = arith.constant 0 : index
    %54 = vector.load %arg14[%53, %c0_29, %c0_30] : memref<8x8x512xf32, #tpu.memory_space<vmem>>, vector<1x8x512xf32>
    %55 = vector.shape_cast %54 : vector<1x8x512xf32> to vector<8x512xf32>
    %c0_31 = arith.constant 0 : index
    %c0_32 = arith.constant 0 : index
    %c0_33 = arith.constant 0 : index
    %56 = vector.load %arg11[%c0_31, %c0_32, %c0_33] : memref<2x128x512xf32, #tpu.memory_space<vmem>>, vector<1x128x512xf32>
    %57 = vector.shape_cast %56 : vector<1x128x512xf32> to vector<128x512xf32>
    %cst_34 = arith.constant dense<0.000000e+00> : vector<8x512xf32>
    %58 = tpu.matmul %48, %57, %cst_34 {dimension_numbers = #tpu.dot_dimension_numbers<[1], [0], [0], [1], [0, 0, 1, 1], [], []>} : vector<8x128xf32>, vector<128x512xf32>, vector<8x512xf32> -> vector<8x512xf32>
    %59 = arith.addf %55, %58 : vector<8x512xf32>
    %60 = vector.extract_strided_slice %59 {offsets = [0, 0], sizes = [8, 128], strides = [1, 1]} : vector<8x512xf32> to vector<8x128xf32>
    %61 = arith.negf %60 : vector<8x128xf32>
    %62 = math.exp %61 : vector<8x128xf32>
    %cst_35 = arith.constant 1.000000e+00 : f32
    %63 = vector.broadcast %cst_35 : f32 to vector<8x128xf32>
    %64 = arith.addf %63, %62 : vector<8x128xf32>
    %65 = arith.divf %63, %64 : vector<8x128xf32>
    %66 = vector.extract_strided_slice %59 {offsets = [0, 128], sizes = [8, 128], strides = [1, 1]} : vector<8x512xf32> to vector<8x128xf32>
    %67 = arith.negf %66 : vector<8x128xf32>
    %68 = math.exp %67 : vector<8x128xf32>
    %cst_36 = arith.constant 1.000000e+00 : f32
    %69 = vector.broadcast %cst_36 : f32 to vector<8x128xf32>
    %70 = arith.addf %69, %68 : vector<8x128xf32>
    %71 = arith.divf %69, %70 : vector<8x128xf32>
    %72 = vector.extract_strided_slice %59 {offsets = [0, 256], sizes = [8, 128], strides = [1, 1]} : vector<8x512xf32> to vector<8x128xf32>
    %73 = math.tanh %72 : vector<8x128xf32>
    %74 = vector.extract_strided_slice %59 {offsets = [0, 384], sizes = [8, 128], strides = [1, 1]} : vector<8x512xf32> to vector<8x128xf32>
    %75 = arith.negf %74 : vector<8x128xf32>
    %76 = math.exp %75 : vector<8x128xf32>
    %cst_37 = arith.constant 1.000000e+00 : f32
    %77 = vector.broadcast %cst_37 : f32 to vector<8x128xf32>
    %78 = arith.addf %77, %76 : vector<8x128xf32>
    %79 = arith.divf %77, %78 : vector<8x128xf32>
    %80 = arith.mulf %71, %46 : vector<8x128xf32>
    %81 = arith.mulf %65, %73 : vector<8x128xf32>
    %82 = arith.addf %80, %81 : vector<8x128xf32>
    %83 = math.tanh %82 : vector<8x128xf32>
    %84 = arith.mulf %79, %83 : vector<8x128xf32>
    %85 = arith.index_cast %c1_i32 : i32 to index
    %c0_38 = arith.constant 0 : index
    %c0_39 = arith.constant 0 : index
    %86 = vector.load %arg6[%85, %c0_38, %c0_39] : memref<8x8x128xf32, #tpu.memory_space<vmem>>, vector<1x8x128xf32>
    %87 = vector.shape_cast %86 : vector<1x8x128xf32> to vector<8x128xf32>
    %88 = vector.shape_cast %84 : vector<8x128xf32> to vector<1x8x128xf32>
    tpu.vector_store %arg6[%85, %c0_38, %c0_39], %88 {strides = array<i32>} : memref<8x8x128xf32, #tpu.memory_space<vmem>>, vector<1x8x128xf32>,
    %c2_i32 = arith.constant 2 : i32
    %89 = arith.index_cast %c2_i32 : i32 to index
    %c0_40 = arith.constant 0 : index
    %c0_41 = arith.constant 0 : index
    %90 = vector.load %arg14[%89, %c0_40, %c0_41] : memref<8x8x512xf32, #tpu.memory_space<vmem>>, vector<1x8x512xf32>
    %91 = vector.shape_cast %90 : vector<1x8x512xf32> to vector<8x512xf32>
    %c0_42 = arith.constant 0 : index
    %c0_43 = arith.constant 0 : index
    %c0_44 = arith.constant 0 : index
    %92 = vector.load %arg11[%c0_42, %c0_43, %c0_44] : memref<2x128x512xf32, #tpu.memory_space<vmem>>, vector<1x128x512xf32>
    %93 = vector.shape_cast %92 : vector<1x128x512xf32> to vector<128x512xf32>
    %cst_45 = arith.constant dense<0.000000e+00> : vector<8x512xf32>
    %94 = tpu.matmul %84, %93, %cst_45 {dimension_numbers = #tpu.dot_dimension_numbers<[1], [0], [0], [1], [0, 0, 1, 1], [], []>} : vector<8x128xf32>, vector<128x512xf32>, vector<8x512xf32> -> vector<8x512xf32>
    %95 = arith.addf %91, %94 : vector<8x512xf32>
    %96 = vector.extract_strided_slice %95 {offsets = [0, 0], sizes = [8, 128], strides = [1, 1]} : vector<8x512xf32> to vector<8x128xf32>
    %97 = arith.negf %96 : vector<8x128xf32>
    %98 = math.exp %97 : vector<8x128xf32>
    %cst_46 = arith.constant 1.000000e+00 : f32
    %99 = vector.broadcast %cst_46 : f32 to vector<8x128xf32>
    %100 = arith.addf %99, %98 : vector<8x128xf32>
    %101 = arith.divf %99, %100 : vector<8x128xf32>
    %102 = vector.extract_strided_slice %95 {offsets = [0, 128], sizes = [8, 128], strides = [1, 1]} : vector<8x512xf32> to vector<8x128xf32>
    %103 = arith.negf %102 : vector<8x128xf32>
    %104 = math.exp %103 : vector<8x128xf32>
    %cst_47 = arith.constant 1.000000e+00 : f32
    %105 = vector.broadcast %cst_47 : f32 to vector<8x128xf32>
    %106 = arith.addf %105, %104 : vector<8x128xf32>
    %107 = arith.divf %105, %106 : vector<8x128xf32>
    %108 = vector.extract_strided_slice %95 {offsets = [0, 256], sizes = [8, 128], strides = [1, 1]} : vector<8x512xf32> to vector<8x128xf32>
    %109 = math.tanh %108 : vector<8x128xf32>
    %110 = vector.extract_strided_slice %95 {offsets = [0, 384], sizes = [8, 128], strides = [1, 1]} : vector<8x512xf32> to vector<8x128xf32>
    %111 = arith.negf %110 : vector<8x128xf32>
    %112 = math.exp %111 : vector<8x128xf32>
    %cst_48 = arith.constant 1.000000e+00 : f32
    %113 = vector.broadcast %cst_48 : f32 to vector<8x128xf32>
    %114 = arith.addf %113, %112 : vector<8x128xf32>
    %115 = arith.divf %113, %114 : vector<8x128xf32>
    %116 = arith.mulf %107, %82 : vector<8x128xf32>
    %117 = arith.mulf %101, %109 : vector<8x128xf32>
    %118 = arith.addf %116, %117 : vector<8x128xf32>
    %119 = math.tanh %118 : vector<8x128xf32>
    %120 = arith.mulf %115, %119 : vector<8x128xf32>
    %121 = arith.index_cast %c2_i32 : i32 to index
    %c0_49 = arith.constant 0 : index
    %c0_50 = arith.constant 0 : index
    %122 = vector.load %arg6[%121, %c0_49, %c0_50] : memref<8x8x128xf32, #tpu.memory_space<vmem>>, vector<1x8x128xf32>
    %123 = vector.shape_cast %122 : vector<1x8x128xf32> to vector<8x128xf32>
    %124 = vector.shape_cast %120 : vector<8x128xf32> to vector<1x8x128xf32>
    tpu.vector_store %arg6[%121, %c0_49, %c0_50], %124 {strides = array<i32>} : memref<8x8x128xf32, #tpu.memory_space<vmem>>, vector<1x8x128xf32>,
    %c3_i32 = arith.constant 3 : i32
    %125 = arith.index_cast %c3_i32 : i32 to index
    %c0_51 = arith.constant 0 : index
    %c0_52 = arith.constant 0 : index
    %126 = vector.load %arg14[%125, %c0_51, %c0_52] : memref<8x8x512xf32, #tpu.memory_space<vmem>>, vector<1x8x512xf32>
    %127 = vector.shape_cast %126 : vector<1x8x512xf32> to vector<8x512xf32>
    %c0_53 = arith.constant 0 : index
    %c0_54 = arith.constant 0 : index
    %c0_55 = arith.constant 0 : index
    %128 = vector.load %arg11[%c0_53, %c0_54, %c0_55] : memref<2x128x512xf32, #tpu.memory_space<vmem>>, vector<1x128x512xf32>
    %129 = vector.shape_cast %128 : vector<1x128x512xf32> to vector<128x512xf32>
    %cst_56 = arith.constant dense<0.000000e+00> : vector<8x512xf32>
    %130 = tpu.matmul %120, %129, %cst_56 {dimension_numbers = #tpu.dot_dimension_numbers<[1], [0], [0], [1], [0, 0, 1, 1], [], []>} : vector<8x128xf32>, vector<128x512xf32>, vector<8x512xf32> -> vector<8x512xf32>
    %131 = arith.addf %127, %130 : vector<8x512xf32>
    %132 = vector.extract_strided_slice %131 {offsets = [0, 0], sizes = [8, 128], strides = [1, 1]} : vector<8x512xf32> to vector<8x128xf32>
    %133 = arith.negf %132 : vector<8x128xf32>
    %134 = math.exp %133 : vector<8x128xf32>
    %cst_57 = arith.constant 1.000000e+00 : f32
    %135 = vector.broadcast %cst_57 : f32 to vector<8x128xf32>
    %136 = arith.addf %135, %134 : vector<8x128xf32>
    %137 = arith.divf %135, %136 : vector<8x128xf32>
    %138 = vector.extract_strided_slice %131 {offsets = [0, 128], sizes = [8, 128], strides = [1, 1]} : vector<8x512xf32> to vector<8x128xf32>
    %139 = arith.negf %138 : vector<8x128xf32>
    %140 = math.exp %139 : vector<8x128xf32>
    %cst_58 = arith.constant 1.000000e+00 : f32
    %141 = vector.broadcast %cst_58 : f32 to vector<8x128xf32>
    %142 = arith.addf %141, %140 : vector<8x128xf32>
    %143 = arith.divf %141, %142 : vector<8x128xf32>
    %144 = vector.extract_strided_slice %131 {offsets = [0, 256], sizes = [8, 128], strides = [1, 1]} : vector<8x512xf32> to vector<8x128xf32>
    %145 = math.tanh %144 : vector<8x128xf32>
    %146 = vector.extract_strided_slice %131 {offsets = [0, 384], sizes = [8, 128], strides = [1, 1]} : vector<8x512xf32> to vector<8x128xf32>
    %147 = arith.negf %146 : vector<8x128xf32>
    %148 = math.exp %147 : vector<8x128xf32>
    %cst_59 = arith.constant 1.000000e+00 : f32
    %149 = vector.broadcast %cst_59 : f32 to vector<8x128xf32>
    %150 = arith.addf %149, %148 : vector<8x128xf32>
    %151 = arith.divf %149, %150 : vector<8x128xf32>
    %152 = arith.mulf %143, %118 : vector<8x128xf32>
    %153 = arith.mulf %137, %145 : vector<8x128xf32>
    %154 = arith.addf %152, %153 : vector<8x128xf32>
    %155 = math.tanh %154 : vector<8x128xf32>
    %156 = arith.mulf %151, %155 : vector<8x128xf32>
    %157 = arith.index_cast %c3_i32 : i32 to index
    %c0_60 = arith.constant 0 : index
    %c0_61 = arith.constant 0 : index
    %158 = vector.load %arg6[%157, %c0_60, %c0_61] : memref<8x8x128xf32, #tpu.memory_space<vmem>>, vector<1x8x128xf32>
    %159 = vector.shape_cast %158 : vector<1x8x128xf32> to vector<8x128xf32>
    %160 = vector.shape_cast %156 : vector<8x128xf32> to vector<1x8x128xf32>
    tpu.vector_store %arg6[%157, %c0_60, %c0_61], %160 {strides = array<i32>} : memref<8x8x128xf32, #tpu.memory_space<vmem>>, vector<1x8x128xf32>,
    %c4_i32 = arith.constant 4 : i32
    %161 = arith.index_cast %c4_i32 : i32 to index
    %c0_62 = arith.constant 0 : index
    %c0_63 = arith.constant 0 : index
    %162 = vector.load %arg14[%161, %c0_62, %c0_63] : memref<8x8x512xf32, #tpu.memory_space<vmem>>, vector<1x8x512xf32>
    %163 = vector.shape_cast %162 : vector<1x8x512xf32> to vector<8x512xf32>
    %c0_64 = arith.constant 0 : index
    %c0_65 = arith.constant 0 : index
    %c0_66 = arith.constant 0 : index
    %164 = vector.load %arg11[%c0_64, %c0_65, %c0_66] : memref<2x128x512xf32, #tpu.memory_space<vmem>>, vector<1x128x512xf32>
    %165 = vector.shape_cast %164 : vector<1x128x512xf32> to vector<128x512xf32>
    %cst_67 = arith.constant dense<0.000000e+00> : vector<8x512xf32>
    %166 = tpu.matmul %156, %165, %cst_67 {dimension_numbers = #tpu.dot_dimension_numbers<[1], [0], [0], [1], [0, 0, 1, 1], [], []>} : vector<8x128xf32>, vector<128x512xf32>, vector<8x512xf32> -> vector<8x512xf32>
    %167 = arith.addf %163, %166 : vector<8x512xf32>
    %168 = vector.extract_strided_slice %167 {offsets = [0, 0], sizes = [8, 128], strides = [1, 1]} : vector<8x512xf32> to vector<8x128xf32>
    %169 = arith.negf %168 : vector<8x128xf32>
    %170 = math.exp %169 : vector<8x128xf32>
    %cst_68 = arith.constant 1.000000e+00 : f32
    %171 = vector.broadcast %cst_68 : f32 to vector<8x128xf32>
    %172 = arith.addf %171, %170 : vector<8x128xf32>
    %173 = arith.divf %171, %172 : vector<8x128xf32>
    %174 = vector.extract_strided_slice %167 {offsets = [0, 128], sizes = [8, 128], strides = [1, 1]} : vector<8x512xf32> to vector<8x128xf32>
    %175 = arith.negf %174 : vector<8x128xf32>
    %176 = math.exp %175 : vector<8x128xf32>
    %cst_69 = arith.constant 1.000000e+00 : f32
    %177 = vector.broadcast %cst_69 : f32 to vector<8x128xf32>
    %178 = arith.addf %177, %176 : vector<8x128xf32>
    %179 = arith.divf %177, %178 : vector<8x128xf32>
    %180 = vector.extract_strided_slice %167 {offsets = [0, 256], sizes = [8, 128], strides = [1, 1]} : vector<8x512xf32> to vector<8x128xf32>
    %181 = math.tanh %180 : vector<8x128xf32>
    %182 = vector.extract_strided_slice %167 {offsets = [0, 384], sizes = [8, 128], strides = [1, 1]} : vector<8x512xf32> to vector<8x128xf32>
    %183 = arith.negf %182 : vector<8x128xf32>
    %184 = math.exp %183 : vector<8x128xf32>
    %cst_70 = arith.constant 1.000000e+00 : f32
    %185 = vector.broadcast %cst_70 : f32 to vector<8x128xf32>
    %186 = arith.addf %185, %184 : vector<8x128xf32>
    %187 = arith.divf %185, %186 : vector<8x128xf32>
    %188 = arith.mulf %179, %154 : vector<8x128xf32>
    %189 = arith.mulf %173, %181 : vector<8x128xf32>
    %190 = arith.addf %188, %189 : vector<8x128xf32>
    %191 = math.tanh %190 : vector<8x128xf32>
    %192 = arith.mulf %187, %191 : vector<8x128xf32>
    %193 = arith.index_cast %c4_i32 : i32 to index
    %c0_71 = arith.constant 0 : index
    %c0_72 = arith.constant 0 : index
    %194 = vector.load %arg6[%193, %c0_71, %c0_72] : memref<8x8x128xf32, #tpu.memory_space<vmem>>, vector<1x8x128xf32>
    %195 = vector.shape_cast %194 : vector<1x8x128xf32> to vector<8x128xf32>
    %196 = vector.shape_cast %192 : vector<8x128xf32> to vector<1x8x128xf32>
    tpu.vector_store %arg6[%193, %c0_71, %c0_72], %196 {strides = array<i32>} : memref<8x8x128xf32, #tpu.memory_space<vmem>>, vector<1x8x128xf32>,
    %c5_i32 = arith.constant 5 : i32
    %197 = arith.index_cast %c5_i32 : i32 to index
    %c0_73 = arith.constant 0 : index
    %c0_74 = arith.constant 0 : index
    %198 = vector.load %arg14[%197, %c0_73, %c0_74] : memref<8x8x512xf32, #tpu.memory_space<vmem>>, vector<1x8x512xf32>
    %199 = vector.shape_cast %198 : vector<1x8x512xf32> to vector<8x512xf32>
    %c0_75 = arith.constant 0 : index
    %c0_76 = arith.constant 0 : index
    %c0_77 = arith.constant 0 : index
    %200 = vector.load %arg11[%c0_75, %c0_76, %c0_77] : memref<2x128x512xf32, #tpu.memory_space<vmem>>, vector<1x128x512xf32>
    %201 = vector.shape_cast %200 : vector<1x128x512xf32> to vector<128x512xf32>
    %cst_78 = arith.constant dense<0.000000e+00> : vector<8x512xf32>
    %202 = tpu.matmul %192, %201, %cst_78 {dimension_numbers = #tpu.dot_dimension_numbers<[1], [0], [0], [1], [0, 0, 1, 1], [], []>} : vector<8x128xf32>, vector<128x512xf32>, vector<8x512xf32> -> vector<8x512xf32>
    %203 = arith.addf %199, %202 : vector<8x512xf32>
    %204 = vector.extract_strided_slice %203 {offsets = [0, 0], sizes = [8, 128], strides = [1, 1]} : vector<8x512xf32> to vector<8x128xf32>
    %205 = arith.negf %204 : vector<8x128xf32>
    %206 = math.exp %205 : vector<8x128xf32>
    %cst_79 = arith.constant 1.000000e+00 : f32
    %207 = vector.broadcast %cst_79 : f32 to vector<8x128xf32>
    %208 = arith.addf %207, %206 : vector<8x128xf32>
    %209 = arith.divf %207, %208 : vector<8x128xf32>
    %210 = vector.extract_strided_slice %203 {offsets = [0, 128], sizes = [8, 128], strides = [1, 1]} : vector<8x512xf32> to vector<8x128xf32>
    %211 = arith.negf %210 : vector<8x128xf32>
    %212 = math.exp %211 : vector<8x128xf32>
    %cst_80 = arith.constant 1.000000e+00 : f32
    %213 = vector.broadcast %cst_80 : f32 to vector<8x128xf32>
    %214 = arith.addf %213, %212 : vector<8x128xf32>
    %215 = arith.divf %213, %214 : vector<8x128xf32>
    %216 = vector.extract_strided_slice %203 {offsets = [0, 256], sizes = [8, 128], strides = [1, 1]} : vector<8x512xf32> to vector<8x128xf32>
    %217 = math.tanh %216 : vector<8x128xf32>
    %218 = vector.extract_strided_slice %203 {offsets = [0, 384], sizes = [8, 128], strides = [1, 1]} : vector<8x512xf32> to vector<8x128xf32>
    %219 = arith.negf %218 : vector<8x128xf32>
    %220 = math.exp %219 : vector<8x128xf32>
    %cst_81 = arith.constant 1.000000e+00 : f32
    %221 = vector.broadcast %cst_81 : f32 to vector<8x128xf32>
    %222 = arith.addf %221, %220 : vector<8x128xf32>
    %223 = arith.divf %221, %222 : vector<8x128xf32>
    %224 = arith.mulf %215, %190 : vector<8x128xf32>
    %225 = arith.mulf %209, %217 : vector<8x128xf32>
    %226 = arith.addf %224, %225 : vector<8x128xf32>
    %227 = math.tanh %226 : vector<8x128xf32>
    %228 = arith.mulf %223, %227 : vector<8x128xf32>
    %229 = arith.index_cast %c5_i32 : i32 to index
    %c0_82 = arith.constant 0 : index
    %c0_83 = arith.constant 0 : index
    %230 = vector.load %arg6[%229, %c0_82, %c0_83] : memref<8x8x128xf32, #tpu.memory_space<vmem>>, vector<1x8x128xf32>
    %231 = vector.shape_cast %230 : vector<1x8x128xf32> to vector<8x128xf32>
    %232 = vector.shape_cast %228 : vector<8x128xf32> to vector<1x8x128xf32>
    tpu.vector_store %arg6[%229, %c0_82, %c0_83], %232 {strides = array<i32>} : memref<8x8x128xf32, #tpu.memory_space<vmem>>, vector<1x8x128xf32>,
    %c6_i32 = arith.constant 6 : i32
    %233 = arith.index_cast %c6_i32 : i32 to index
    %c0_84 = arith.constant 0 : index
    %c0_85 = arith.constant 0 : index
    %234 = vector.load %arg14[%233, %c0_84, %c0_85] : memref<8x8x512xf32, #tpu.memory_space<vmem>>, vector<1x8x512xf32>
    %235 = vector.shape_cast %234 : vector<1x8x512xf32> to vector<8x512xf32>
    %c0_86 = arith.constant 0 : index
    %c0_87 = arith.constant 0 : index
    %c0_88 = arith.constant 0 : index
    %236 = vector.load %arg11[%c0_86, %c0_87, %c0_88] : memref<2x128x512xf32, #tpu.memory_space<vmem>>, vector<1x128x512xf32>
    %237 = vector.shape_cast %236 : vector<1x128x512xf32> to vector<128x512xf32>
    %cst_89 = arith.constant dense<0.000000e+00> : vector<8x512xf32>
    %238 = tpu.matmul %228, %237, %cst_89 {dimension_numbers = #tpu.dot_dimension_numbers<[1], [0], [0], [1], [0, 0, 1, 1], [], []>} : vector<8x128xf32>, vector<128x512xf32>, vector<8x512xf32> -> vector<8x512xf32>
    %239 = arith.addf %235, %238 : vector<8x512xf32>
    %240 = vector.extract_strided_slice %239 {offsets = [0, 0], sizes = [8, 128], strides = [1, 1]} : vector<8x512xf32> to vector<8x128xf32>
    %241 = arith.negf %240 : vector<8x128xf32>
    %242 = math.exp %241 : vector<8x128xf32>
    %cst_90 = arith.constant 1.000000e+00 : f32
    %243 = vector.broadcast %cst_90 : f32 to vector<8x128xf32>
    %244 = arith.addf %243, %242 : vector<8x128xf32>
    %245 = arith.divf %243, %244 : vector<8x128xf32>
    %246 = vector.extract_strided_slice %239 {offsets = [0, 128], sizes = [8, 128], strides = [1, 1]} : vector<8x512xf32> to vector<8x128xf32>
    %247 = arith.negf %246 : vector<8x128xf32>
    %248 = math.exp %247 : vector<8x128xf32>
    %cst_91 = arith.constant 1.000000e+00 : f32
    %249 = vector.broadcast %cst_91 : f32 to vector<8x128xf32>
    %250 = arith.addf %249, %248 : vector<8x128xf32>
    %251 = arith.divf %249, %250 : vector<8x128xf32>
    %252 = vector.extract_strided_slice %239 {offsets = [0, 256], sizes = [8, 128], strides = [1, 1]} : vector<8x512xf32> to vector<8x128xf32>
    %253 = math.tanh %252 : vector<8x128xf32>
    %254 = vector.extract_strided_slice %239 {offsets = [0, 384], sizes = [8, 128], strides = [1, 1]} : vector<8x512xf32> to vector<8x128xf32>
    %255 = arith.negf %254 : vector<8x128xf32>
    %256 = math.exp %255 : vector<8x128xf32>
    %cst_92 = arith.constant 1.000000e+00 : f32
    %257 = vector.broadcast %cst_92 : f32 to vector<8x128xf32>
    %258 = arith.addf %257, %256 : vector<8x128xf32>
    %259 = arith.divf %257, %258 : vector<8x128xf32>
    %260 = arith.mulf %251, %226 : vector<8x128xf32>
    %261 = arith.mulf %245, %253 : vector<8x128xf32>
    %262 = arith.addf %260, %261 : vector<8x128xf32>
    %263 = math.tanh %262 : vector<8x128xf32>
    %264 = arith.mulf %259, %263 : vector<8x128xf32>
    %265 = arith.index_cast %c6_i32 : i32 to index
    %c0_93 = arith.constant 0 : index
    %c0_94 = arith.constant 0 : index
    %266 = vector.load %arg6[%265, %c0_93, %c0_94] : memref<8x8x128xf32, #tpu.memory_space<vmem>>, vector<1x8x128xf32>
    %267 = vector.shape_cast %266 : vector<1x8x128xf32> to vector<8x128xf32>
    %268 = vector.shape_cast %264 : vector<8x128xf32> to vector<1x8x128xf32>
    tpu.vector_store %arg6[%265, %c0_93, %c0_94], %268 {strides = array<i32>} : memref<8x8x128xf32, #tpu.memory_space<vmem>>, vector<1x8x128xf32>,
    %c7_i32 = arith.constant 7 : i32
    %269 = arith.index_cast %c7_i32 : i32 to index
    %c0_95 = arith.constant 0 : index
    %c0_96 = arith.constant 0 : index
    %270 = vector.load %arg14[%269, %c0_95, %c0_96] : memref<8x8x512xf32, #tpu.memory_space<vmem>>, vector<1x8x512xf32>
    %271 = vector.shape_cast %270 : vector<1x8x512xf32> to vector<8x512xf32>
    %c0_97 = arith.constant 0 : index
    %c0_98 = arith.constant 0 : index
    %c0_99 = arith.constant 0 : index
    %272 = vector.load %arg11[%c0_97, %c0_98, %c0_99] : memref<2x128x512xf32, #tpu.memory_space<vmem>>, vector<1x128x512xf32>
    %273 = vector.shape_cast %272 : vector<1x128x512xf32> to vector<128x512xf32>
    %cst_100 = arith.constant dense<0.000000e+00> : vector<8x512xf32>
    %274 = tpu.matmul %264, %273, %cst_100 {dimension_numbers = #tpu.dot_dimension_numbers<[1], [0], [0], [1], [0, 0, 1, 1], [], []>} : vector<8x128xf32>, vector<128x512xf32>, vector<8x512xf32> -> vector<8x512xf32>
    %275 = arith.addf %271, %274 : vector<8x512xf32>
    %276 = vector.extract_strided_slice %275 {offsets = [0, 0], sizes = [8, 128], strides = [1, 1]} : vector<8x512xf32> to vector<8x128xf32>
    %277 = arith.negf %276 : vector<8x128xf32>
    %278 = math.exp %277 : vector<8x128xf32>
    %cst_101 = arith.constant 1.000000e+00 : f32
    %279 = vector.broadcast %cst_101 : f32 to vector<8x128xf32>
    %280 = arith.addf %279, %278 : vector<8x128xf32>
    %281 = arith.divf %279, %280 : vector<8x128xf32>
    %282 = vector.extract_strided_slice %275 {offsets = [0, 128], sizes = [8, 128], strides = [1, 1]} : vector<8x512xf32> to vector<8x128xf32>
    %283 = arith.negf %282 : vector<8x128xf32>
    %284 = math.exp %283 : vector<8x128xf32>
    %cst_102 = arith.constant 1.000000e+00 : f32
    %285 = vector.broadcast %cst_102 : f32 to vector<8x128xf32>
    %286 = arith.addf %285, %284 : vector<8x128xf32>
    %287 = arith.divf %285, %286 : vector<8x128xf32>
    %288 = vector.extract_strided_slice %275 {offsets = [0, 256], sizes = [8, 128], strides = [1, 1]} : vector<8x512xf32> to vector<8x128xf32>
    %289 = math.tanh %288 : vector<8x128xf32>
    %290 = vector.extract_strided_slice %275 {offsets = [0, 384], sizes = [8, 128], strides = [1, 1]} : vector<8x512xf32> to vector<8x128xf32>
    %291 = arith.negf %290 : vector<8x128xf32>
    %292 = math.exp %291 : vector<8x128xf32>
    %cst_103 = arith.constant 1.000000e+00 : f32
    %293 = vector.broadcast %cst_103 : f32 to vector<8x128xf32>
    %294 = arith.addf %293, %292 : vector<8x128xf32>
    %295 = arith.divf %293, %294 : vector<8x128xf32>
    %296 = arith.mulf %287, %262 : vector<8x128xf32>
    %297 = arith.mulf %281, %289 : vector<8x128xf32>
    %298 = arith.addf %296, %297 : vector<8x128xf32>
    %299 = math.tanh %298 : vector<8x128xf32>
    %300 = arith.mulf %295, %299 : vector<8x128xf32>
    %301 = arith.index_cast %c7_i32 : i32 to index
    %c0_104 = arith.constant 0 : index
    %c0_105 = arith.constant 0 : index
    %302 = vector.load %arg6[%301, %c0_104, %c0_105] : memref<8x8x128xf32, #tpu.memory_space<vmem>>, vector<1x8x128xf32>
    %303 = vector.shape_cast %302 : vector<1x8x128xf32> to vector<8x128xf32>
    %304 = vector.shape_cast %300 : vector<8x128xf32> to vector<1x8x128xf32>
    tpu.vector_store %arg6[%301, %c0_104, %c0_105], %304 {strides = array<i32>} : memref<8x8x128xf32, #tpu.memory_space<vmem>>, vector<1x8x128xf32>,
    %c8_i32 = arith.constant 8 : i32
    %c0_106 = arith.constant 0 : index
    %c0_107 = arith.constant 0 : index
    %c0_108 = arith.constant 0 : index
    %305 = vector.load %arg12[%c0_106, %c0_107, %c0_108] : memref<2x8x128xf32, #tpu.memory_space<vmem>>, vector<1x8x128xf32>
    %306 = vector.shape_cast %305 : vector<1x8x128xf32> to vector<8x128xf32>
    %307 = vector.shape_cast %300 : vector<8x128xf32> to vector<1x8x128xf32>
    tpu.vector_store %arg12[%c0_106, %c0_107, %c0_108], %307 {strides = array<i32>} : memref<2x8x128xf32, #tpu.memory_space<vmem>>, vector<1x8x128xf32>,
    %c0_109 = arith.constant 0 : index
    %c0_110 = arith.constant 0 : index
    %c0_111 = arith.constant 0 : index
    %308 = vector.load %arg13[%c0_109, %c0_110, %c0_111] : memref<2x8x128xf32, #tpu.memory_space<vmem>>, vector<1x8x128xf32>
    %309 = vector.shape_cast %308 : vector<1x8x128xf32> to vector<8x128xf32>
    %310 = vector.shape_cast %298 : vector<8x128xf32> to vector<1x8x128xf32>
    tpu.vector_store %arg13[%c0_109, %c0_110, %c0_111], %310 {strides = array<i32>} : memref<2x8x128xf32, #tpu.memory_space<vmem>>, vector<1x8x128xf32>,
    %c0_112 = arith.constant 0 : index
    %c0_113 = arith.constant 0 : index
    %c0_114 = arith.constant 0 : index
    %311 = vector.load %arg6[%c0_112, %c0_113, %c0_114] : memref<8x8x128xf32, #tpu.memory_space<vmem>>, vector<8x8x128xf32>
    %312 = vector.shape_cast %311 : vector<8x8x128xf32> to vector<64x128xf32>
    %c0_115 = arith.constant 0 : index
    %c0_116 = arith.constant 0 : index
    %c0_117 = arith.constant 0 : index
    %313 = vector.load %arg10[%c0_115, %c0_116, %c0_117] : memref<1x128x512xf32, #tpu.memory_space<vmem>>, vector<1x128x512xf32>
    %314 = vector.shape_cast %313 : vector<1x128x512xf32> to vector<128x512xf32>
    %cst_118 = arith.constant dense<0.000000e+00> : vector<64x512xf32>
    %315 = tpu.matmul %312, %314, %cst_118 {dimension_numbers = #tpu.dot_dimension_numbers<[1], [0], [0], [1], [0, 0, 1, 1], [], []>} : vector<64x128xf32>, vector<128x512xf32>, vector<64x512xf32> -> vector<64x512xf32>
    %c1 = arith.constant 1 : index
    %c0_119 = arith.constant 0 : index
    %c0_120 = arith.constant 0 : index
    %316 = vector.load %arg5[%c1, %c0_119, %c0_120] : memref<2x1x512xf32, #tpu.memory_space<vmem>>, vector<1x1x512xf32>
    %317 = vector.shape_cast %316 : vector<1x1x512xf32> to vector<1x512xf32>
    %318 = vector.broadcast %317 : vector<1x512xf32> to vector<64x512xf32>
    %319 = arith.addf %315, %318 : vector<64x512xf32>
    %320 = vector.shape_cast %319 : vector<64x512xf32> to vector<8x8x512xf32>
    %c0_121 = arith.constant 0 : index
    %c0_122 = arith.constant 0 : index
    %c0_123 = arith.constant 0 : index
    %321 = vector.load %arg14[%c0_121, %c0_122, %c0_123] : memref<8x8x512xf32, #tpu.memory_space<vmem>>, vector<8x8x512xf32>
    tpu.vector_store %arg14[%c0_121, %c0_122, %c0_123], %320 {strides = array<i32>} : memref<8x8x512xf32, #tpu.memory_space<vmem>>, vector<8x8x512xf32>,
    %c1_124 = arith.constant 1 : index
    %c0_125 = arith.constant 0 : index
    %c0_126 = arith.constant 0 : index
    %322 = vector.load %arg12[%c1_124, %c0_125, %c0_126] : memref<2x8x128xf32, #tpu.memory_space<vmem>>, vector<1x8x128xf32>
    %323 = vector.shape_cast %322 : vector<1x8x128xf32> to vector<8x128xf32>
    %c1_127 = arith.constant 1 : index
    %c0_128 = arith.constant 0 : index
    %c0_129 = arith.constant 0 : index
    %324 = vector.load %arg13[%c1_127, %c0_128, %c0_129] : memref<2x8x128xf32, #tpu.memory_space<vmem>>, vector<1x8x128xf32>
    %325 = vector.shape_cast %324 : vector<1x8x128xf32> to vector<8x128xf32>
    %c0_i32_130 = arith.constant 0 : i32
    %326 = arith.index_cast %c0_i32_130 : i32 to index
    %c0_131 = arith.constant 0 : index
    %c0_132 = arith.constant 0 : index
    %327 = vector.load %arg14[%326, %c0_131, %c0_132] : memref<8x8x512xf32, #tpu.memory_space<vmem>>, vector<1x8x512xf32>
    %328 = vector.shape_cast %327 : vector<1x8x512xf32> to vector<8x512xf32>
    %c1_133 = arith.constant 1 : index
    %c0_134 = arith.constant 0 : index
    %c0_135 = arith.constant 0 : index
    %329 = vector.load %arg11[%c1_133, %c0_134, %c0_135] : memref<2x128x512xf32, #tpu.memory_space<vmem>>, vector<1x128x512xf32>
    %330 = vector.shape_cast %329 : vector<1x128x512xf32> to vector<128x512xf32>
    %cst_136 = arith.constant dense<0.000000e+00> : vector<8x512xf32>
    %331 = tpu.matmul %323, %330, %cst_136 {dimension_numbers = #tpu.dot_dimension_numbers<[1], [0], [0], [1], [0, 0, 1, 1], [], []>} : vector<8x128xf32>, vector<128x512xf32>, vector<8x512xf32> -> vector<8x512xf32>
    %332 = arith.addf %328, %331 : vector<8x512xf32>
    %333 = vector.extract_strided_slice %332 {offsets = [0, 0], sizes = [8, 128], strides = [1, 1]} : vector<8x512xf32> to vector<8x128xf32>
    %334 = arith.negf %333 : vector<8x128xf32>
    %335 = math.exp %334 : vector<8x128xf32>
    %cst_137 = arith.constant 1.000000e+00 : f32
    %336 = vector.broadcast %cst_137 : f32 to vector<8x128xf32>
    %337 = arith.addf %336, %335 : vector<8x128xf32>
    %338 = arith.divf %336, %337 : vector<8x128xf32>
    %339 = vector.extract_strided_slice %332 {offsets = [0, 128], sizes = [8, 128], strides = [1, 1]} : vector<8x512xf32> to vector<8x128xf32>
    %340 = arith.negf %339 : vector<8x128xf32>
    %341 = math.exp %340 : vector<8x128xf32>
    %cst_138 = arith.constant 1.000000e+00 : f32
    %342 = vector.broadcast %cst_138 : f32 to vector<8x128xf32>
    %343 = arith.addf %342, %341 : vector<8x128xf32>
    %344 = arith.divf %342, %343 : vector<8x128xf32>
    %345 = vector.extract_strided_slice %332 {offsets = [0, 256], sizes = [8, 128], strides = [1, 1]} : vector<8x512xf32> to vector<8x128xf32>
    %346 = math.tanh %345 : vector<8x128xf32>
    %347 = vector.extract_strided_slice %332 {offsets = [0, 384], sizes = [8, 128], strides = [1, 1]} : vector<8x512xf32> to vector<8x128xf32>
    %348 = arith.negf %347 : vector<8x128xf32>
    %349 = math.exp %348 : vector<8x128xf32>
    %cst_139 = arith.constant 1.000000e+00 : f32
    %350 = vector.broadcast %cst_139 : f32 to vector<8x128xf32>
    %351 = arith.addf %350, %349 : vector<8x128xf32>
    %352 = arith.divf %350, %351 : vector<8x128xf32>
    %353 = arith.mulf %344, %325 : vector<8x128xf32>
    %354 = arith.mulf %338, %346 : vector<8x128xf32>
    %355 = arith.addf %353, %354 : vector<8x128xf32>
    %356 = math.tanh %355 : vector<8x128xf32>
    %357 = arith.mulf %352, %356 : vector<8x128xf32>
    %358 = arith.index_cast %c0_i32_130 : i32 to index
    %c0_140 = arith.constant 0 : index
    %c0_141 = arith.constant 0 : index
    %359 = vector.load %arg6[%358, %c0_140, %c0_141] : memref<8x8x128xf32, #tpu.memory_space<vmem>>, vector<1x8x128xf32>
    %360 = vector.shape_cast %359 : vector<1x8x128xf32> to vector<8x128xf32>
    %361 = vector.shape_cast %357 : vector<8x128xf32> to vector<1x8x128xf32>
    tpu.vector_store %arg6[%358, %c0_140, %c0_141], %361 {strides = array<i32>} : memref<8x8x128xf32, #tpu.memory_space<vmem>>, vector<1x8x128xf32>,
    %c1_i32_142 = arith.constant 1 : i32
    %362 = arith.index_cast %c1_i32_142 : i32 to index
    %c0_143 = arith.constant 0 : index
    %c0_144 = arith.constant 0 : index
    %363 = vector.load %arg14[%362, %c0_143, %c0_144] : memref<8x8x512xf32, #tpu.memory_space<vmem>>, vector<1x8x512xf32>
    %364 = vector.shape_cast %363 : vector<1x8x512xf32> to vector<8x512xf32>
    %c1_145 = arith.constant 1 : index
    %c0_146 = arith.constant 0 : index
    %c0_147 = arith.constant 0 : index
    %365 = vector.load %arg11[%c1_145, %c0_146, %c0_147] : memref<2x128x512xf32, #tpu.memory_space<vmem>>, vector<1x128x512xf32>
    %366 = vector.shape_cast %365 : vector<1x128x512xf32> to vector<128x512xf32>
    %cst_148 = arith.constant dense<0.000000e+00> : vector<8x512xf32>
    %367 = tpu.matmul %357, %366, %cst_148 {dimension_numbers = #tpu.dot_dimension_numbers<[1], [0], [0], [1], [0, 0, 1, 1], [], []>} : vector<8x128xf32>, vector<128x512xf32>, vector<8x512xf32> -> vector<8x512xf32>
    %368 = arith.addf %364, %367 : vector<8x512xf32>
    %369 = vector.extract_strided_slice %368 {offsets = [0, 0], sizes = [8, 128], strides = [1, 1]} : vector<8x512xf32> to vector<8x128xf32>
    %370 = arith.negf %369 : vector<8x128xf32>
    %371 = math.exp %370 : vector<8x128xf32>
    %cst_149 = arith.constant 1.000000e+00 : f32
    %372 = vector.broadcast %cst_149 : f32 to vector<8x128xf32>
    %373 = arith.addf %372, %371 : vector<8x128xf32>
    %374 = arith.divf %372, %373 : vector<8x128xf32>
    %375 = vector.extract_strided_slice %368 {offsets = [0, 128], sizes = [8, 128], strides = [1, 1]} : vector<8x512xf32> to vector<8x128xf32>
    %376 = arith.negf %375 : vector<8x128xf32>
    %377 = math.exp %376 : vector<8x128xf32>
    %cst_150 = arith.constant 1.000000e+00 : f32
    %378 = vector.broadcast %cst_150 : f32 to vector<8x128xf32>
    %379 = arith.addf %378, %377 : vector<8x128xf32>
    %380 = arith.divf %378, %379 : vector<8x128xf32>
    %381 = vector.extract_strided_slice %368 {offsets = [0, 256], sizes = [8, 128], strides = [1, 1]} : vector<8x512xf32> to vector<8x128xf32>
    %382 = math.tanh %381 : vector<8x128xf32>
    %383 = vector.extract_strided_slice %368 {offsets = [0, 384], sizes = [8, 128], strides = [1, 1]} : vector<8x512xf32> to vector<8x128xf32>
    %384 = arith.negf %383 : vector<8x128xf32>
    %385 = math.exp %384 : vector<8x128xf32>
    %cst_151 = arith.constant 1.000000e+00 : f32
    %386 = vector.broadcast %cst_151 : f32 to vector<8x128xf32>
    %387 = arith.addf %386, %385 : vector<8x128xf32>
    %388 = arith.divf %386, %387 : vector<8x128xf32>
    %389 = arith.mulf %380, %355 : vector<8x128xf32>
    %390 = arith.mulf %374, %382 : vector<8x128xf32>
    %391 = arith.addf %389, %390 : vector<8x128xf32>
    %392 = math.tanh %391 : vector<8x128xf32>
    %393 = arith.mulf %388, %392 : vector<8x128xf32>
    %394 = arith.index_cast %c1_i32_142 : i32 to index
    %c0_152 = arith.constant 0 : index
    %c0_153 = arith.constant 0 : index
    %395 = vector.load %arg6[%394, %c0_152, %c0_153] : memref<8x8x128xf32, #tpu.memory_space<vmem>>, vector<1x8x128xf32>
    %396 = vector.shape_cast %395 : vector<1x8x128xf32> to vector<8x128xf32>
    %397 = vector.shape_cast %393 : vector<8x128xf32> to vector<1x8x128xf32>
    tpu.vector_store %arg6[%394, %c0_152, %c0_153], %397 {strides = array<i32>} : memref<8x8x128xf32, #tpu.memory_space<vmem>>, vector<1x8x128xf32>,
    %c2_i32_154 = arith.constant 2 : i32
    %398 = arith.index_cast %c2_i32_154 : i32 to index
    %c0_155 = arith.constant 0 : index
    %c0_156 = arith.constant 0 : index
    %399 = vector.load %arg14[%398, %c0_155, %c0_156] : memref<8x8x512xf32, #tpu.memory_space<vmem>>, vector<1x8x512xf32>
    %400 = vector.shape_cast %399 : vector<1x8x512xf32> to vector<8x512xf32>
    %c1_157 = arith.constant 1 : index
    %c0_158 = arith.constant 0 : index
    %c0_159 = arith.constant 0 : index
    %401 = vector.load %arg11[%c1_157, %c0_158, %c0_159] : memref<2x128x512xf32, #tpu.memory_space<vmem>>, vector<1x128x512xf32>
    %402 = vector.shape_cast %401 : vector<1x128x512xf32> to vector<128x512xf32>
    %cst_160 = arith.constant dense<0.000000e+00> : vector<8x512xf32>
    %403 = tpu.matmul %393, %402, %cst_160 {dimension_numbers = #tpu.dot_dimension_numbers<[1], [0], [0], [1], [0, 0, 1, 1], [], []>} : vector<8x128xf32>, vector<128x512xf32>, vector<8x512xf32> -> vector<8x512xf32>
    %404 = arith.addf %400, %403 : vector<8x512xf32>
    %405 = vector.extract_strided_slice %404 {offsets = [0, 0], sizes = [8, 128], strides = [1, 1]} : vector<8x512xf32> to vector<8x128xf32>
    %406 = arith.negf %405 : vector<8x128xf32>
    %407 = math.exp %406 : vector<8x128xf32>
    %cst_161 = arith.constant 1.000000e+00 : f32
    %408 = vector.broadcast %cst_161 : f32 to vector<8x128xf32>
    %409 = arith.addf %408, %407 : vector<8x128xf32>
    %410 = arith.divf %408, %409 : vector<8x128xf32>
    %411 = vector.extract_strided_slice %404 {offsets = [0, 128], sizes = [8, 128], strides = [1, 1]} : vector<8x512xf32> to vector<8x128xf32>
    %412 = arith.negf %411 : vector<8x128xf32>
    %413 = math.exp %412 : vector<8x128xf32>
    %cst_162 = arith.constant 1.000000e+00 : f32
    %414 = vector.broadcast %cst_162 : f32 to vector<8x128xf32>
    %415 = arith.addf %414, %413 : vector<8x128xf32>
    %416 = arith.divf %414, %415 : vector<8x128xf32>
    %417 = vector.extract_strided_slice %404 {offsets = [0, 256], sizes = [8, 128], strides = [1, 1]} : vector<8x512xf32> to vector<8x128xf32>
    %418 = math.tanh %417 : vector<8x128xf32>
    %419 = vector.extract_strided_slice %404 {offsets = [0, 384], sizes = [8, 128], strides = [1, 1]} : vector<8x512xf32> to vector<8x128xf32>
    %420 = arith.negf %419 : vector<8x128xf32>
    %421 = math.exp %420 : vector<8x128xf32>
    %cst_163 = arith.constant 1.000000e+00 : f32
    %422 = vector.broadcast %cst_163 : f32 to vector<8x128xf32>
    %423 = arith.addf %422, %421 : vector<8x128xf32>
    %424 = arith.divf %422, %423 : vector<8x128xf32>
    %425 = arith.mulf %416, %391 : vector<8x128xf32>
    %426 = arith.mulf %410, %418 : vector<8x128xf32>
    %427 = arith.addf %425, %426 : vector<8x128xf32>
    %428 = math.tanh %427 : vector<8x128xf32>
    %429 = arith.mulf %424, %428 : vector<8x128xf32>
    %430 = arith.index_cast %c2_i32_154 : i32 to index
    %c0_164 = arith.constant 0 : index
    %c0_165 = arith.constant 0 : index
    %431 = vector.load %arg6[%430, %c0_164, %c0_165] : memref<8x8x128xf32, #tpu.memory_space<vmem>>, vector<1x8x128xf32>
    %432 = vector.shape_cast %431 : vector<1x8x128xf32> to vector<8x128xf32>
    %433 = vector.shape_cast %429 : vector<8x128xf32> to vector<1x8x128xf32>
    tpu.vector_store %arg6[%430, %c0_164, %c0_165], %433 {strides = array<i32>} : memref<8x8x128xf32, #tpu.memory_space<vmem>>, vector<1x8x128xf32>,
    %c3_i32_166 = arith.constant 3 : i32
    %434 = arith.index_cast %c3_i32_166 : i32 to index
    %c0_167 = arith.constant 0 : index
    %c0_168 = arith.constant 0 : index
    %435 = vector.load %arg14[%434, %c0_167, %c0_168] : memref<8x8x512xf32, #tpu.memory_space<vmem>>, vector<1x8x512xf32>
    %436 = vector.shape_cast %435 : vector<1x8x512xf32> to vector<8x512xf32>
    %c1_169 = arith.constant 1 : index
    %c0_170 = arith.constant 0 : index
    %c0_171 = arith.constant 0 : index
    %437 = vector.load %arg11[%c1_169, %c0_170, %c0_171] : memref<2x128x512xf32, #tpu.memory_space<vmem>>, vector<1x128x512xf32>
    %438 = vector.shape_cast %437 : vector<1x128x512xf32> to vector<128x512xf32>
    %cst_172 = arith.constant dense<0.000000e+00> : vector<8x512xf32>
    %439 = tpu.matmul %429, %438, %cst_172 {dimension_numbers = #tpu.dot_dimension_numbers<[1], [0], [0], [1], [0, 0, 1, 1], [], []>} : vector<8x128xf32>, vector<128x512xf32>, vector<8x512xf32> -> vector<8x512xf32>
    %440 = arith.addf %436, %439 : vector<8x512xf32>
    %441 = vector.extract_strided_slice %440 {offsets = [0, 0], sizes = [8, 128], strides = [1, 1]} : vector<8x512xf32> to vector<8x128xf32>
    %442 = arith.negf %441 : vector<8x128xf32>
    %443 = math.exp %442 : vector<8x128xf32>
    %cst_173 = arith.constant 1.000000e+00 : f32
    %444 = vector.broadcast %cst_173 : f32 to vector<8x128xf32>
    %445 = arith.addf %444, %443 : vector<8x128xf32>
    %446 = arith.divf %444, %445 : vector<8x128xf32>
    %447 = vector.extract_strided_slice %440 {offsets = [0, 128], sizes = [8, 128], strides = [1, 1]} : vector<8x512xf32> to vector<8x128xf32>
    %448 = arith.negf %447 : vector<8x128xf32>
    %449 = math.exp %448 : vector<8x128xf32>
    %cst_174 = arith.constant 1.000000e+00 : f32
    %450 = vector.broadcast %cst_174 : f32 to vector<8x128xf32>
    %451 = arith.addf %450, %449 : vector<8x128xf32>
    %452 = arith.divf %450, %451 : vector<8x128xf32>
    %453 = vector.extract_strided_slice %440 {offsets = [0, 256], sizes = [8, 128], strides = [1, 1]} : vector<8x512xf32> to vector<8x128xf32>
    %454 = math.tanh %453 : vector<8x128xf32>
    %455 = vector.extract_strided_slice %440 {offsets = [0, 384], sizes = [8, 128], strides = [1, 1]} : vector<8x512xf32> to vector<8x128xf32>
    %456 = arith.negf %455 : vector<8x128xf32>
    %457 = math.exp %456 : vector<8x128xf32>
    %cst_175 = arith.constant 1.000000e+00 : f32
    %458 = vector.broadcast %cst_175 : f32 to vector<8x128xf32>
    %459 = arith.addf %458, %457 : vector<8x128xf32>
    %460 = arith.divf %458, %459 : vector<8x128xf32>
    %461 = arith.mulf %452, %427 : vector<8x128xf32>
    %462 = arith.mulf %446, %454 : vector<8x128xf32>
    %463 = arith.addf %461, %462 : vector<8x128xf32>
    %464 = math.tanh %463 : vector<8x128xf32>
    %465 = arith.mulf %460, %464 : vector<8x128xf32>
    %466 = arith.index_cast %c3_i32_166 : i32 to index
    %c0_176 = arith.constant 0 : index
    %c0_177 = arith.constant 0 : index
    %467 = vector.load %arg6[%466, %c0_176, %c0_177] : memref<8x8x128xf32, #tpu.memory_space<vmem>>, vector<1x8x128xf32>
    %468 = vector.shape_cast %467 : vector<1x8x128xf32> to vector<8x128xf32>
    %469 = vector.shape_cast %465 : vector<8x128xf32> to vector<1x8x128xf32>
    tpu.vector_store %arg6[%466, %c0_176, %c0_177], %469 {strides = array<i32>} : memref<8x8x128xf32, #tpu.memory_space<vmem>>, vector<1x8x128xf32>,
    %c4_i32_178 = arith.constant 4 : i32
    %470 = arith.index_cast %c4_i32_178 : i32 to index
    %c0_179 = arith.constant 0 : index
    %c0_180 = arith.constant 0 : index
    %471 = vector.load %arg14[%470, %c0_179, %c0_180] : memref<8x8x512xf32, #tpu.memory_space<vmem>>, vector<1x8x512xf32>
    %472 = vector.shape_cast %471 : vector<1x8x512xf32> to vector<8x512xf32>
    %c1_181 = arith.constant 1 : index
    %c0_182 = arith.constant 0 : index
    %c0_183 = arith.constant 0 : index
    %473 = vector.load %arg11[%c1_181, %c0_182, %c0_183] : memref<2x128x512xf32, #tpu.memory_space<vmem>>, vector<1x128x512xf32>
    %474 = vector.shape_cast %473 : vector<1x128x512xf32> to vector<128x512xf32>
    %cst_184 = arith.constant dense<0.000000e+00> : vector<8x512xf32>
    %475 = tpu.matmul %465, %474, %cst_184 {dimension_numbers = #tpu.dot_dimension_numbers<[1], [0], [0], [1], [0, 0, 1, 1], [], []>} : vector<8x128xf32>, vector<128x512xf32>, vector<8x512xf32> -> vector<8x512xf32>
    %476 = arith.addf %472, %475 : vector<8x512xf32>
    %477 = vector.extract_strided_slice %476 {offsets = [0, 0], sizes = [8, 128], strides = [1, 1]} : vector<8x512xf32> to vector<8x128xf32>
    %478 = arith.negf %477 : vector<8x128xf32>
    %479 = math.exp %478 : vector<8x128xf32>
    %cst_185 = arith.constant 1.000000e+00 : f32
    %480 = vector.broadcast %cst_185 : f32 to vector<8x128xf32>
    %481 = arith.addf %480, %479 : vector<8x128xf32>
    %482 = arith.divf %480, %481 : vector<8x128xf32>
    %483 = vector.extract_strided_slice %476 {offsets = [0, 128], sizes = [8, 128], strides = [1, 1]} : vector<8x512xf32> to vector<8x128xf32>
    %484 = arith.negf %483 : vector<8x128xf32>
    %485 = math.exp %484 : vector<8x128xf32>
    %cst_186 = arith.constant 1.000000e+00 : f32
    %486 = vector.broadcast %cst_186 : f32 to vector<8x128xf32>
    %487 = arith.addf %486, %485 : vector<8x128xf32>
    %488 = arith.divf %486, %487 : vector<8x128xf32>
    %489 = vector.extract_strided_slice %476 {offsets = [0, 256], sizes = [8, 128], strides = [1, 1]} : vector<8x512xf32> to vector<8x128xf32>
    %490 = math.tanh %489 : vector<8x128xf32>
    %491 = vector.extract_strided_slice %476 {offsets = [0, 384], sizes = [8, 128], strides = [1, 1]} : vector<8x512xf32> to vector<8x128xf32>
    %492 = arith.negf %491 : vector<8x128xf32>
    %493 = math.exp %492 : vector<8x128xf32>
    %cst_187 = arith.constant 1.000000e+00 : f32
    %494 = vector.broadcast %cst_187 : f32 to vector<8x128xf32>
    %495 = arith.addf %494, %493 : vector<8x128xf32>
    %496 = arith.divf %494, %495 : vector<8x128xf32>
    %497 = arith.mulf %488, %463 : vector<8x128xf32>
    %498 = arith.mulf %482, %490 : vector<8x128xf32>
    %499 = arith.addf %497, %498 : vector<8x128xf32>
    %500 = math.tanh %499 : vector<8x128xf32>
    %501 = arith.mulf %496, %500 : vector<8x128xf32>
    %502 = arith.index_cast %c4_i32_178 : i32 to index
    %c0_188 = arith.constant 0 : index
    %c0_189 = arith.constant 0 : index
    %503 = vector.load %arg6[%502, %c0_188, %c0_189] : memref<8x8x128xf32, #tpu.memory_space<vmem>>, vector<1x8x128xf32>
    %504 = vector.shape_cast %503 : vector<1x8x128xf32> to vector<8x128xf32>
    %505 = vector.shape_cast %501 : vector<8x128xf32> to vector<1x8x128xf32>
    tpu.vector_store %arg6[%502, %c0_188, %c0_189], %505 {strides = array<i32>} : memref<8x8x128xf32, #tpu.memory_space<vmem>>, vector<1x8x128xf32>,
    %c5_i32_190 = arith.constant 5 : i32
    %506 = arith.index_cast %c5_i32_190 : i32 to index
    %c0_191 = arith.constant 0 : index
    %c0_192 = arith.constant 0 : index
    %507 = vector.load %arg14[%506, %c0_191, %c0_192] : memref<8x8x512xf32, #tpu.memory_space<vmem>>, vector<1x8x512xf32>
    %508 = vector.shape_cast %507 : vector<1x8x512xf32> to vector<8x512xf32>
    %c1_193 = arith.constant 1 : index
    %c0_194 = arith.constant 0 : index
    %c0_195 = arith.constant 0 : index
    %509 = vector.load %arg11[%c1_193, %c0_194, %c0_195] : memref<2x128x512xf32, #tpu.memory_space<vmem>>, vector<1x128x512xf32>
    %510 = vector.shape_cast %509 : vector<1x128x512xf32> to vector<128x512xf32>
    %cst_196 = arith.constant dense<0.000000e+00> : vector<8x512xf32>
    %511 = tpu.matmul %501, %510, %cst_196 {dimension_numbers = #tpu.dot_dimension_numbers<[1], [0], [0], [1], [0, 0, 1, 1], [], []>} : vector<8x128xf32>, vector<128x512xf32>, vector<8x512xf32> -> vector<8x512xf32>
    %512 = arith.addf %508, %511 : vector<8x512xf32>
    %513 = vector.extract_strided_slice %512 {offsets = [0, 0], sizes = [8, 128], strides = [1, 1]} : vector<8x512xf32> to vector<8x128xf32>
    %514 = arith.negf %513 : vector<8x128xf32>
    %515 = math.exp %514 : vector<8x128xf32>
    %cst_197 = arith.constant 1.000000e+00 : f32
    %516 = vector.broadcast %cst_197 : f32 to vector<8x128xf32>
    %517 = arith.addf %516, %515 : vector<8x128xf32>
    %518 = arith.divf %516, %517 : vector<8x128xf32>
    %519 = vector.extract_strided_slice %512 {offsets = [0, 128], sizes = [8, 128], strides = [1, 1]} : vector<8x512xf32> to vector<8x128xf32>
    %520 = arith.negf %519 : vector<8x128xf32>
    %521 = math.exp %520 : vector<8x128xf32>
    %cst_198 = arith.constant 1.000000e+00 : f32
    %522 = vector.broadcast %cst_198 : f32 to vector<8x128xf32>
    %523 = arith.addf %522, %521 : vector<8x128xf32>
    %524 = arith.divf %522, %523 : vector<8x128xf32>
    %525 = vector.extract_strided_slice %512 {offsets = [0, 256], sizes = [8, 128], strides = [1, 1]} : vector<8x512xf32> to vector<8x128xf32>
    %526 = math.tanh %525 : vector<8x128xf32>
    %527 = vector.extract_strided_slice %512 {offsets = [0, 384], sizes = [8, 128], strides = [1, 1]} : vector<8x512xf32> to vector<8x128xf32>
    %528 = arith.negf %527 : vector<8x128xf32>
    %529 = math.exp %528 : vector<8x128xf32>
    %cst_199 = arith.constant 1.000000e+00 : f32
    %530 = vector.broadcast %cst_199 : f32 to vector<8x128xf32>
    %531 = arith.addf %530, %529 : vector<8x128xf32>
    %532 = arith.divf %530, %531 : vector<8x128xf32>
    %533 = arith.mulf %524, %499 : vector<8x128xf32>
    %534 = arith.mulf %518, %526 : vector<8x128xf32>
    %535 = arith.addf %533, %534 : vector<8x128xf32>
    %536 = math.tanh %535 : vector<8x128xf32>
    %537 = arith.mulf %532, %536 : vector<8x128xf32>
    %538 = arith.index_cast %c5_i32_190 : i32 to index
    %c0_200 = arith.constant 0 : index
    %c0_201 = arith.constant 0 : index
    %539 = vector.load %arg6[%538, %c0_200, %c0_201] : memref<8x8x128xf32, #tpu.memory_space<vmem>>, vector<1x8x128xf32>
    %540 = vector.shape_cast %539 : vector<1x8x128xf32> to vector<8x128xf32>
    %541 = vector.shape_cast %537 : vector<8x128xf32> to vector<1x8x128xf32>
    tpu.vector_store %arg6[%538, %c0_200, %c0_201], %541 {strides = array<i32>} : memref<8x8x128xf32, #tpu.memory_space<vmem>>, vector<1x8x128xf32>,
    %c6_i32_202 = arith.constant 6 : i32
    %542 = arith.index_cast %c6_i32_202 : i32 to index
    %c0_203 = arith.constant 0 : index
    %c0_204 = arith.constant 0 : index
    %543 = vector.load %arg14[%542, %c0_203, %c0_204] : memref<8x8x512xf32, #tpu.memory_space<vmem>>, vector<1x8x512xf32>
    %544 = vector.shape_cast %543 : vector<1x8x512xf32> to vector<8x512xf32>
    %c1_205 = arith.constant 1 : index
    %c0_206 = arith.constant 0 : index
    %c0_207 = arith.constant 0 : index
    %545 = vector.load %arg11[%c1_205, %c0_206, %c0_207] : memref<2x128x512xf32, #tpu.memory_space<vmem>>, vector<1x128x512xf32>
    %546 = vector.shape_cast %545 : vector<1x128x512xf32> to vector<128x512xf32>
    %cst_208 = arith.constant dense<0.000000e+00> : vector<8x512xf32>
    %547 = tpu.matmul %537, %546, %cst_208 {dimension_numbers = #tpu.dot_dimension_numbers<[1], [0], [0], [1], [0, 0, 1, 1], [], []>} : vector<8x128xf32>, vector<128x512xf32>, vector<8x512xf32> -> vector<8x512xf32>
    %548 = arith.addf %544, %547 : vector<8x512xf32>
    %549 = vector.extract_strided_slice %548 {offsets = [0, 0], sizes = [8, 128], strides = [1, 1]} : vector<8x512xf32> to vector<8x128xf32>
    %550 = arith.negf %549 : vector<8x128xf32>
    %551 = math.exp %550 : vector<8x128xf32>
    %cst_209 = arith.constant 1.000000e+00 : f32
    %552 = vector.broadcast %cst_209 : f32 to vector<8x128xf32>
    %553 = arith.addf %552, %551 : vector<8x128xf32>
    %554 = arith.divf %552, %553 : vector<8x128xf32>
    %555 = vector.extract_strided_slice %548 {offsets = [0, 128], sizes = [8, 128], strides = [1, 1]} : vector<8x512xf32> to vector<8x128xf32>
    %556 = arith.negf %555 : vector<8x128xf32>
    %557 = math.exp %556 : vector<8x128xf32>
    %cst_210 = arith.constant 1.000000e+00 : f32
    %558 = vector.broadcast %cst_210 : f32 to vector<8x128xf32>
    %559 = arith.addf %558, %557 : vector<8x128xf32>
    %560 = arith.divf %558, %559 : vector<8x128xf32>
    %561 = vector.extract_strided_slice %548 {offsets = [0, 256], sizes = [8, 128], strides = [1, 1]} : vector<8x512xf32> to vector<8x128xf32>
    %562 = math.tanh %561 : vector<8x128xf32>
    %563 = vector.extract_strided_slice %548 {offsets = [0, 384], sizes = [8, 128], strides = [1, 1]} : vector<8x512xf32> to vector<8x128xf32>
    %564 = arith.negf %563 : vector<8x128xf32>
    %565 = math.exp %564 : vector<8x128xf32>
    %cst_211 = arith.constant 1.000000e+00 : f32
    %566 = vector.broadcast %cst_211 : f32 to vector<8x128xf32>
    %567 = arith.addf %566, %565 : vector<8x128xf32>
    %568 = arith.divf %566, %567 : vector<8x128xf32>
    %569 = arith.mulf %560, %535 : vector<8x128xf32>
    %570 = arith.mulf %554, %562 : vector<8x128xf32>
    %571 = arith.addf %569, %570 : vector<8x128xf32>
    %572 = math.tanh %571 : vector<8x128xf32>
    %573 = arith.mulf %568, %572 : vector<8x128xf32>
    %574 = arith.index_cast %c6_i32_202 : i32 to index
    %c0_212 = arith.constant 0 : index
    %c0_213 = arith.constant 0 : index
    %575 = vector.load %arg6[%574, %c0_212, %c0_213] : memref<8x8x128xf32, #tpu.memory_space<vmem>>, vector<1x8x128xf32>
    %576 = vector.shape_cast %575 : vector<1x8x128xf32> to vector<8x128xf32>
    %577 = vector.shape_cast %573 : vector<8x128xf32> to vector<1x8x128xf32>
    tpu.vector_store %arg6[%574, %c0_212, %c0_213], %577 {strides = array<i32>} : memref<8x8x128xf32, #tpu.memory_space<vmem>>, vector<1x8x128xf32>,
    %c7_i32_214 = arith.constant 7 : i32
    %578 = arith.index_cast %c7_i32_214 : i32 to index
    %c0_215 = arith.constant 0 : index
    %c0_216 = arith.constant 0 : index
    %579 = vector.load %arg14[%578, %c0_215, %c0_216] : memref<8x8x512xf32, #tpu.memory_space<vmem>>, vector<1x8x512xf32>
    %580 = vector.shape_cast %579 : vector<1x8x512xf32> to vector<8x512xf32>
    %c1_217 = arith.constant 1 : index
    %c0_218 = arith.constant 0 : index
    %c0_219 = arith.constant 0 : index
    %581 = vector.load %arg11[%c1_217, %c0_218, %c0_219] : memref<2x128x512xf32, #tpu.memory_space<vmem>>, vector<1x128x512xf32>
    %582 = vector.shape_cast %581 : vector<1x128x512xf32> to vector<128x512xf32>
    %cst_220 = arith.constant dense<0.000000e+00> : vector<8x512xf32>
    %583 = tpu.matmul %573, %582, %cst_220 {dimension_numbers = #tpu.dot_dimension_numbers<[1], [0], [0], [1], [0, 0, 1, 1], [], []>} : vector<8x128xf32>, vector<128x512xf32>, vector<8x512xf32> -> vector<8x512xf32>
    %584 = arith.addf %580, %583 : vector<8x512xf32>
    %585 = vector.extract_strided_slice %584 {offsets = [0, 0], sizes = [8, 128], strides = [1, 1]} : vector<8x512xf32> to vector<8x128xf32>
    %586 = arith.negf %585 : vector<8x128xf32>
    %587 = math.exp %586 : vector<8x128xf32>
    %cst_221 = arith.constant 1.000000e+00 : f32
    %588 = vector.broadcast %cst_221 : f32 to vector<8x128xf32>
    %589 = arith.addf %588, %587 : vector<8x128xf32>
    %590 = arith.divf %588, %589 : vector<8x128xf32>
    %591 = vector.extract_strided_slice %584 {offsets = [0, 128], sizes = [8, 128], strides = [1, 1]} : vector<8x512xf32> to vector<8x128xf32>
    %592 = arith.negf %591 : vector<8x128xf32>
    %593 = math.exp %592 : vector<8x128xf32>
    %cst_222 = arith.constant 1.000000e+00 : f32
    %594 = vector.broadcast %cst_222 : f32 to vector<8x128xf32>
    %595 = arith.addf %594, %593 : vector<8x128xf32>
    %596 = arith.divf %594, %595 : vector<8x128xf32>
    %597 = vector.extract_strided_slice %584 {offsets = [0, 256], sizes = [8, 128], strides = [1, 1]} : vector<8x512xf32> to vector<8x128xf32>
    %598 = math.tanh %597 : vector<8x128xf32>
    %599 = vector.extract_strided_slice %584 {offsets = [0, 384], sizes = [8, 128], strides = [1, 1]} : vector<8x512xf32> to vector<8x128xf32>
    %600 = arith.negf %599 : vector<8x128xf32>
    %601 = math.exp %600 : vector<8x128xf32>
    %cst_223 = arith.constant 1.000000e+00 : f32
    %602 = vector.broadcast %cst_223 : f32 to vector<8x128xf32>
    %603 = arith.addf %602, %601 : vector<8x128xf32>
    %604 = arith.divf %602, %603 : vector<8x128xf32>
    %605 = arith.mulf %596, %571 : vector<8x128xf32>
    %606 = arith.mulf %590, %598 : vector<8x128xf32>
    %607 = arith.addf %605, %606 : vector<8x128xf32>
    %608 = math.tanh %607 : vector<8x128xf32>
    %609 = arith.mulf %604, %608 : vector<8x128xf32>
    %610 = arith.index_cast %c7_i32_214 : i32 to index
    %c0_224 = arith.constant 0 : index
    %c0_225 = arith.constant 0 : index
    %611 = vector.load %arg6[%610, %c0_224, %c0_225] : memref<8x8x128xf32, #tpu.memory_space<vmem>>, vector<1x8x128xf32>
    %612 = vector.shape_cast %611 : vector<1x8x128xf32> to vector<8x128xf32>
    %613 = vector.shape_cast %609 : vector<8x128xf32> to vector<1x8x128xf32>
    tpu.vector_store %arg6[%610, %c0_224, %c0_225], %613 {strides = array<i32>} : memref<8x8x128xf32, #tpu.memory_space<vmem>>, vector<1x8x128xf32>,
    %c8_i32_226 = arith.constant 8 : i32
    %c1_227 = arith.constant 1 : index
    %c0_228 = arith.constant 0 : index
    %c0_229 = arith.constant 0 : index
    %614 = vector.load %arg12[%c1_227, %c0_228, %c0_229] : memref<2x8x128xf32, #tpu.memory_space<vmem>>, vector<1x8x128xf32>
    %615 = vector.shape_cast %614 : vector<1x8x128xf32> to vector<8x128xf32>
    %616 = vector.shape_cast %609 : vector<8x128xf32> to vector<1x8x128xf32>
    tpu.vector_store %arg12[%c1_227, %c0_228, %c0_229], %616 {strides = array<i32>} : memref<2x8x128xf32, #tpu.memory_space<vmem>>, vector<1x8x128xf32>,
    %c1_230 = arith.constant 1 : index
    %c0_231 = arith.constant 0 : index
    %c0_232 = arith.constant 0 : index
    %617 = vector.load %arg13[%c1_230, %c0_231, %c0_232] : memref<2x8x128xf32, #tpu.memory_space<vmem>>, vector<1x8x128xf32>
    %618 = vector.shape_cast %617 : vector<1x8x128xf32> to vector<8x128xf32>
    %619 = vector.shape_cast %607 : vector<8x128xf32> to vector<1x8x128xf32>
    tpu.vector_store %arg13[%c1_230, %c0_231, %c0_232], %619 {strides = array<i32>} : memref<2x8x128xf32, #tpu.memory_space<vmem>>, vector<1x8x128xf32>,
    %c0_i32_233 = arith.constant 0 : i32
    %620 = arith.cmpi eq, %arg0, %c0_i32_233 : i32
    %621 = arith.extui %620 : i1 to i32
    %c0_i32_234 = arith.constant 0 : i32
    %622 = arith.cmpi ne, %621, %c0_i32_234 : i32
    scf.if %622 {
      %c0_235 = arith.constant 0 : index
      %c0_236 = arith.constant 0 : index
      %c0_237 = arith.constant 0 : index
      %623 = vector.load %arg12[%c0_235, %c0_236, %c0_237] : memref<2x8x128xf32, #tpu.memory_space<vmem>>, vector<2x8x128xf32>
      %c0_238 = arith.constant 0 : index
      %c0_239 = arith.constant 0 : index
      %c0_240 = arith.constant 0 : index
      %624 = vector.load %arg7[%c0_238, %c0_239, %c0_240] : memref<2x8x128xf32, #tpu.memory_space<vmem>>, vector<2x8x128xf32>
      tpu.vector_store %arg7[%c0_238, %c0_239, %c0_240], %623 {strides = array<i32>} : memref<2x8x128xf32, #tpu.memory_space<vmem>>, vector<2x8x128xf32>,
      %c0_241 = arith.constant 0 : index
      %c0_242 = arith.constant 0 : index
      %c0_243 = arith.constant 0 : index
      %625 = vector.load %arg13[%c0_241, %c0_242, %c0_243] : memref<2x8x128xf32, #tpu.memory_space<vmem>>, vector<2x8x128xf32>
      %c0_244 = arith.constant 0 : index
      %c0_245 = arith.constant 0 : index
      %c0_246 = arith.constant 0 : index
      %626 = vector.load %arg8[%c0_244, %c0_245, %c0_246] : memref<2x8x128xf32, #tpu.memory_space<vmem>>, vector<2x8x128xf32>
      tpu.vector_store %arg8[%c0_244, %c0_245, %c0_246], %625 {strides = array<i32>} : memref<2x8x128xf32, #tpu.memory_space<vmem>>, vector<2x8x128xf32>,
    } else {
    }
    return
  }
  func.func @transform_0(%arg0: i32) -> (i32, i32, i32) {
    %c0_i32 = arith.constant 0 : i32
    %c0_i32_0 = arith.constant 0 : i32
    %c0_i32_1 = arith.constant 0 : i32
    return %arg0, %c0_i32, %c0_i32_0 : i32, i32, i32
  }
  func.func @transform_4(%arg0: i32) -> (i32, i32, i32) {
    %c0_i32 = arith.constant 0 : i32
    %c0_i32_0 = arith.constant 0 : i32
    %c0_i32_1 = arith.constant 0 : i32
    %c0_i32_2 = arith.constant 0 : i32
    return %c0_i32, %c0_i32_0, %c0_i32_1 : i32, i32, i32
  }
  func.func @transform_5(%arg0: i32) -> (i32, i32, i32) {
    %c0_i32 = arith.constant 0 : i32
    %c0_i32_0 = arith.constant 0 : i32
    %c0_i32_1 = arith.constant 0 : i32
    return %arg0, %c0_i32, %c0_i32_0 : i32, i32, i32
  }
  func.func @transform_6(%arg0: i32) -> (i32, i32, i32) {
    %c0_i32 = arith.constant 0 : i32
    %c0_i32_0 = arith.constant 0 : i32
    %c0_i32_1 = arith.constant 0 : i32
    %c0_i32_2 = arith.constant 0 : i32
    return %c0_i32, %c0_i32_0, %c0_i32_1 : i32, i32, i32
  }
  func.func @transform_7(%arg0: i32) -> (i32, i32, i32) {
    %c0_i32 = arith.constant 0 : i32
    %c0_i32_0 = arith.constant 0 : i32
    %c0_i32_1 = arith.constant 0 : i32
    %c0_i32_2 = arith.constant 0 : i32
    return %c0_i32, %c0_i32_0, %c0_i32_1 : i32, i32, i32
  }
}

</mosaic_0001>

<llo_original>
// kernel: tpu_custom_call.1
$region0: #{tpu_custom_call.1}
  #allocation0 [shape = 'u32[]', space=smem, size = 0x4, offset = 0x4, fixed_abs, tag = 'smem constant byte address 0x4 - core index']
  #allocation1 [shape = 'u32[144,128]{1,0:T(1,128)}', space=vmem, size = 0x12000, scoped, tag = 'internal scratch']
  #allocation2 [shape = 'f32[128,512]{1,0:T(8,128)}', space=vmem, size = 0x40000, scoped, tag = 'scratch operand']
  #allocation3 [shape = 'f32[1,128,512]{2,1,0:T(8,128)}', space=vmem, size = 0x40000, scoped, tag = 'scratch operand']
  #allocation4 [shape = 'f32[2,128,512]{2,1,0:T(8,128)}', space=vmem, size = 0x80000, scoped, tag = 'scratch operand']
  #allocation5 [shape = 'f32[2,8,128]{2,1,0:T(8,128)}', space=vmem, size = 0x2000, scoped, tag = 'scratch operand']
  #allocation6 [shape = 'f32[2,8,128]{2,1,0:T(8,128)}', space=vmem, size = 0x2000, scoped, tag = 'scratch operand']
  #allocation7 [shape = 'f32[8,8,512]{2,1,0:T(8,128)}', space=vmem, size = 0x20000, scoped, tag = 'scratch operand']
  #allocation8 [shape = 's32[3]{0}', space=sflag, size = 0xc, scoped, tag = 'scratch operand']
  #allocation16 [shape = 's32[]', space=sflag, size = 0x4, offset = 0, fixed_abs, tag = 'sflag constant byte address 0x0 - dummy sync flag']
  #allocation17 [shape = 's32[]', space=sflag, size = 0x4, offset = 0, fixed_abs, tag = 'sflag constant byte address 0x0 - dummy sync flag']
  #allocation18 [shape = 'u32[]', space=smem, size = 0x4, offset = 0x44, fixed_abs, tag = 'smem constant byte address 0x44 - assertion arg 0']
  #allocation19 [shape = 'u32[]', space=smem, size = 0x4, offset = 0x48, fixed_abs, tag = 'smem constant byte address 0x48 - assertion arg 1']
  #allocation20 [shape = 's32[]', space=sflag, size = 0x4, offset = 0, fixed_abs, tag = 'sflag constant byte address 0x0 - dummy sync flag']
  #allocation21 [shape = 's32[]', space=sflag, size = 0x4, offset = 0, fixed_abs, tag = 'sflag constant byte address 0x0 - dummy sync flag']
  #allocation22 [shape = 's32[]', space=sflag, size = 0x4, offset = 0, fixed_abs, tag = 'sflag constant byte address 0x0 - dummy sync flag']
  #allocation23 [shape = 's32[]', space=sflag, size = 0x4, offset = 0, fixed_abs, tag = 'sflag constant byte address 0x0 - dummy sync flag']
  %s0 = inlined_call_operand.hbm [shape: f32[8,8,128], index: 0, kind: input, shape index: {}]
  %s1 = inlined_call_operand.hbm [shape: f32[128,512], index: 1, kind: input, shape index: {}]
  %s2 = inlined_call_operand.hbm [shape: f32[1,128,512], index: 2, kind: input, shape index: {}]
  %s3 = inlined_call_operand.hbm [shape: f32[2,128,512], index: 3, kind: input, shape index: {}]
  %s4 = inlined_call_operand.vmem [shape: f32[2,1,512], index: 4, kind: input, shape index: {}]
  %s5 = inlined_call_operand.hbm [shape: f32[8,8,128], index: 5, kind: output, shape index: {0}]
  %s6 = inlined_call_operand.hbm [shape: f32[2,8,128], index: 6, kind: output, shape index: {1}]
  %s7 = inlined_call_operand.hbm [shape: f32[2,8,128], index: 7, kind: output, shape index: {2}]
  %8 = xla_tuple %s5, %s6, %s7
  %s9 = sld [smem:[#allocation0]]
  $region58: #{tpu_custom_call.1} parent=0
    _
  %s11 = ssub.s32 1, %s9
  %s12 = scalar_select 0, %s11, %s9
  $region1: #{tpu_custom_call.1} parent=0
    #allocation9 [shape = 'u8[32768]{0}', space=vmem, size = 0x8000, scoped, tag = 'input window, operand 0, single buffered']
    #allocation10 [shape = 's32[1]{0}', space=sflag, size = 0x4, scoped, tag = 'scoped memory for tpu_custom_call.1']
    #allocation11 [shape = 's32[1]{0}', space=sflag, size = 0x4, scoped, tag = 'scoped memory for tpu_custom_call.1']
    #allocation12 [shape = 'u8[32768]{0}', space=vmem, size = 0x8000, scoped, tag = 'output window, operand 0, single buffered']
    #allocation13 [shape = 'u8[8192]{0}', space=vmem, size = 0x2000, scoped, tag = 'output window, operand 1, single buffered']
    #allocation14 [shape = 's32[1]{0}', space=sflag, size = 0x4, scoped, tag = 'scoped memory for tpu_custom_call.1']
    #allocation15 [shape = 'u8[8192]{0}', space=vmem, size = 0x2000, scoped, tag = 'output window, operand 2, single buffered']
    %13 = vsyncpa [#allocation10], 0
    %14 = vsyncpa [#allocation11], 0
    %15 = vsyncpa [#allocation14], 0
    // Predicated region
    $region2: #{tpu_custom_call.1} parent=1 // pred_check
      _
    $region3: #{tpu_custom_call.1} parent=1 // pred_check_branch
      %17 = sbr.rel (0) target = $region5
    $region4: #{tpu_custom_call.1} parent=1 // pred_region
      %s19 = ssub.s32 1024, 1024
      %20 = vsyncadd [#allocation10], %s19
      %s21 = sshll.u32 [#allocation9], 4
      %s22 = int_to_ptr.vmem [resolvable:$true] %s21
      %27 = dma.hbm_to_vmem [thread:$0]  %s0, 1024, %s22, [#allocation10], 128, 128, 8
    $region5: #{tpu_custom_call.1} parent=1 // pred_fallthru
      _
    // Predicated region
    $region6: #{tpu_custom_call.1} parent=1 // pred_check
      _
    $region7: #{tpu_custom_call.1} parent=1 // pred_check_branch
      %29 = sbr.rel (0) target = $region9
    $region8: #{tpu_custom_call.1} parent=1 // pred_region
      _
    $region9: #{tpu_custom_call.1} parent=1 // pred_fallthru
      _
    // Predicated region
    $region10: #{tpu_custom_call.1} parent=1 // pred_check
      _
    $region11: #{tpu_custom_call.1} parent=1 // pred_check_branch
      %31 = sbr.rel (0) target = $region13
    $region12: #{tpu_custom_call.1} parent=1 // pred_region
      %32 = dma.done [#allocation10], 1024
    $region13: #{tpu_custom_call.1} parent=1 // pred_fallthru
      _
    %p33 = scmp.eq.s32.totalorder 0, 0
    // Predicated region
    $region14: #{tpu_custom_call.1} parent=1 // pred_check
      %p34 = pneg %p33
    $region15: #{tpu_custom_call.1} parent=1 // pred_check_branch
      %36 = sbr.rel (%p34) target = $region17
    $region16: #{tpu_custom_call.1} parent=1 // pred_region
      // Predicated region
      $region18: #{tpu_custom_call.1} parent=16 // pred_check
        _
      $region19: #{tpu_custom_call.1} parent=16 // pred_check_branch
        %38 = sbr.rel target = $region21
      $region20: #{tpu_custom_call.1} parent=16 // pred_region
        %39 = sst [smem:[#allocation18]] [#allocation17]
        %40 = sst [smem:[#allocation19]] [#allocation16]
      $region21: #{tpu_custom_call.1} parent=16 // pred_fallthru
        _
      %42 = shalt.err (0)
      %s44 = sshll.u32 [#allocation2], 4
      %s45 = int_to_ptr.vmem [resolvable:$true] %s44
      %47 = dma.hbm_to_vmem [thread:$0]  %s1, 8192, %s45, [#allocation8]
      %s48 = scalar_lea.sflag [#allocation8], 1
      // Predicated region
      $region22: #{tpu_custom_call.1} parent=16 // pred_check
        _
      $region23: #{tpu_custom_call.1} parent=16 // pred_check_branch
        %50 = sbr.rel target = $region25
      $region24: #{tpu_custom_call.1} parent=16 // pred_region
        %51 = sst [smem:[#allocation18]] [#allocation21]
        %52 = sst [smem:[#allocation19]] [#allocation20]
      $region25: #{tpu_custom_call.1} parent=16 // pred_fallthru
        _
      %54 = shalt.err (0)
      %s56 = sshll.u32 [#allocation4], 4
      %s57 = int_to_ptr.vmem [resolvable:$true] %s56
      %59 = dma.hbm_to_vmem [thread:$0]  %s3, 16384, %s57, %s48
      %s60 = scalar_lea.sflag [#allocation8], 2
      // Predicated region
      $region26: #{tpu_custom_call.1} parent=16 // pred_check
        _
      $region27: #{tpu_custom_call.1} parent=16 // pred_check_branch
        %62 = sbr.rel target = $region29
      $region28: #{tpu_custom_call.1} parent=16 // pred_region
        %63 = sst [smem:[#allocation18]] [#allocation23]
        %64 = sst [smem:[#allocation19]] [#allocation22]
      $region29: #{tpu_custom_call.1} parent=16 // pred_fallthru
        _
      %66 = shalt.err (0)
      %s68 = sshll.u32 [#allocation3], 4
      %s69 = int_to_ptr.vmem [resolvable:$true] %s68
      %71 = dma.hbm_to_vmem [thread:$0]  %s2, 8192, %s69, %s60
      %s72 = smul.u32 8, 16
      %s73 = smul.u32 %s72, 4
      %s74 = sshll.u32 %s73, 4
      %75 = dma.done [#allocation8], %s74
      %s76 = smul.u32 8, 2
      %s77 = smul.u32 %s76, 16
      %s78 = smul.u32 %s77, 4
      %s79 = sshll.u32 %s78, 4
      %80 = dma.done %s48, %s79
      %s81 = smul.u32 8, 1
      %s82 = smul.u32 %s81, 16
      %s83 = smul.u32 %s82, 4
      %s84 = sshll.u32 %s83, 4
      %85 = dma.done %s60, %s84
      %86 = vst [vmem:[#allocation5] sm:$0xff] 0.0
      %87 = vst [vmem:[#allocation5 + $0x8] sm:$0xff] 0.0
      %88 = vst [vmem:[#allocation6] sm:$0xff] 0.0
      %89 = vst [vmem:[#allocation6 + $0x8] sm:$0xff] 0.0
    $region17: #{tpu_custom_call.1} parent=1 // pred_fallthru
      _
    %v90 = vld [vmem:[#allocation9] sm:$0xff]
    %v91 = vld [vmem:[#allocation9 + $0x8] sm:$0xff]
    %v92 = vld [vmem:[#allocation9 + $0x10] sm:$0xff]
    %v93 = vld [vmem:[#allocation9 + $0x18] sm:$0xff]
    %v94 = vld [vmem:[#allocation9 + $0x20] sm:$0xff]
    %v95 = vld [vmem:[#allocation9 + $0x28] sm:$0xff]
    %v96 = vld [vmem:[#allocation9 + $0x30] sm:$0xff]
    %v97 = vld [vmem:[#allocation9 + $0x38] sm:$0xff]
    %v98 = vld [vmem:[#allocation2] sm:$0xff]
    %v99 = vld [vmem:[#allocation2 + $0x8] sm:$0xff]
    %v100 = vld [vmem:[#allocation2 + $0x10] sm:$0xff]
    %v101 = vld [vmem:[#allocation2 + $0x18] sm:$0xff]
    %v102 = vld [vmem:[#allocation2 + $0x20] sm:$0xff]
    %v103 = vld [vmem:[#allocation2 + $0x28] sm:$0xff]
    %v104 = vld [vmem:[#allocation2 + $0x30] sm:$0xff]
    %v105 = vld [vmem:[#allocation2 + $0x38] sm:$0xff]
    %v106 = vld [vmem:[#allocation2 + $0x40] sm:$0xff]
    %v107 = vld [vmem:[#allocation2 + $0x48] sm:$0xff]
    %v108 = vld [vmem:[#allocation2 + $0x50] sm:$0xff]
    %v109 = vld [vmem:[#allocation2 + $0x58] sm:$0xff]
    %v110 = vld [vmem:[#allocation2 + $0x60] sm:$0xff]
    %v111 = vld [vmem:[#allocation2 + $0x68] sm:$0xff]
    %v112 = vld [vmem:[#allocation2 + $0x70] sm:$0xff]
    %v113 = vld [vmem:[#allocation2 + $0x78] sm:$0xff]
    %v114 = vld [vmem:[#allocation2 + $0x80] sm:$0xff]
    %v115 = vld [vmem:[#allocation2 + $0x88] sm:$0xff]
    %v116 = vld [vmem:[#allocation2 + $0x90] sm:$0xff]
    %v117 = vld [vmem:[#allocation2 + $0x98] sm:$0xff]
    %v118 = vld [vmem:[#allocation2 + $0xa0] sm:$0xff]
    %v119 = vld [vmem:[#allocation2 + $0xa8] sm:$0xff]
    %v120 = vld [vmem:[#allocation2 + $0xb0] sm:$0xff]
    %v121 = vld [vmem:[#allocation2 + $0xb8] sm:$0xff]
    %v122 = vld [vmem:[#allocation2 + $0xc0] sm:$0xff]
    %v123 = vld [vmem:[#allocation2 + $0xc8] sm:$0xff]
    %v124 = vld [vmem:[#allocation2 + $0xd0] sm:$0xff]
    %v125 = vld [vmem:[#allocation2 + $0xd8] sm:$0xff]
    %v126 = vld [vmem:[#allocation2 + $0xe0] sm:$0xff]
    %v127 = vld [vmem:[#allocation2 + $0xe8] sm:$0xff]
    %v128 = vld [vmem:[#allocation2 + $0xf0] sm:$0xff]
    %v129 = vld [vmem:[#allocation2 + $0xf8] sm:$0xff]
    %v130 = vld [vmem:[#allocation2 + $0x100] sm:$0xff]
    %v131 = vld [vmem:[#allocation2 + $0x108] sm:$0xff]
    %v132 = vld [vmem:[#allocation2 + $0x110] sm:$0xff]
    %v133 = vld [vmem:[#allocation2 + $0x118] sm:$0xff]
    %v134 = vld [vmem:[#allocation2 + $0x120] sm:$0xff]
    %v135 = vld [vmem:[#allocation2 + $0x128] sm:$0xff]
    %v136 = vld [vmem:[#allocation2 + $0x130] sm:$0xff]
    %v137 = vld [vmem:[#allocation2 + $0x138] sm:$0xff]
    %v138 = vld [vmem:[#allocation2 + $0x140] sm:$0xff]
    %v139 = vld [vmem:[#allocation2 + $0x148] sm:$0xff]
    %v140 = vld [vmem:[#allocation2 + $0x150] sm:$0xff]
    %v141 = vld [vmem:[#allocation2 + $0x158] sm:$0xff]
    %v142 = vld [vmem:[#allocation2 + $0x160] sm:$0xff]
    %v143 = vld [vmem:[#allocation2 + $0x168] sm:$0xff]
    %v144 = vld [vmem:[#allocation2 + $0x170] sm:$0xff]
    %v145 = vld [vmem:[#allocation2 + $0x178] sm:$0xff]
    %v146 = vld [vmem:[#allocation2 + $0x180] sm:$0xff]
    %v147 = vld [vmem:[#allocation2 + $0x188] sm:$0xff]
    %v148 = vld [vmem:[#allocation2 + $0x190] sm:$0xff]
    %v149 = vld [vmem:[#allocation2 + $0x198] sm:$0xff]
    %v150 = vld [vmem:[#allocation2 + $0x1a0] sm:$0xff]
    %v151 = vld [vmem:[#allocation2 + $0x1a8] sm:$0xff]
    %v152 = vld [vmem:[#allocation2 + $0x1b0] sm:$0xff]
    %v153 = vld [vmem:[#allocation2 + $0x1b8] sm:$0xff]
    %v154 = vld [vmem:[#allocation2 + $0x1c0] sm:$0xff]
    %v155 = vld [vmem:[#allocation2 + $0x1c8] sm:$0xff]
    %v156 = vld [vmem:[#allocation2 + $0x1d0] sm:$0xff]
    %v157 = vld [vmem:[#allocation2 + $0x1d8] sm:$0xff]
    %v158 = vld [vmem:[#allocation2 + $0x1e0] sm:$0xff]
    %v159 = vld [vmem:[#allocation2 + $0x1e8] sm:$0xff]
    %v160 = vld [vmem:[#allocation2 + $0x1f0] sm:$0xff]
    %v161 = vld [vmem:[#allocation2 + $0x1f8] sm:$0xff]
    %v162 = vld [vmem:[%s4] sm:$0xf]
    %v164 = vlaneseq
    %v165 = vshrl.u32 %v164, 7
    %v166 = vsub.s32 0, %v165
    %v167 = vrot.slane %v162, %v166
    %v168 = vlaneseq
    %v169 = vshrl.u32 %v168, 7
    %v170 = vsub.s32 1, %v169
    %v171 = vrot.slane %v162, %v170
    %v172 = vlaneseq
    %v173 = vshrl.u32 %v172, 7
    %v174 = vsub.s32 2, %v173
    %v175 = vrot.slane %v162, %v174
    %v176 = vlaneseq
    %v177 = vshrl.u32 %v176, 7
    %v178 = vsub.s32 3, %v177
    %v179 = vrot.slane %v162, %v178
    %184 = vmatprep.subr.mxu0 %v99
    %185 = vmatpush1.msra.mxu0 %v98
    %186 = vmatprep.subr.mxu0 %v103
    %187 = vmatpush1.msra.mxu0 %v102
    %188 = vmatprep.subr.mxu0 %v107
    %189 = vmatpush1.msra.mxu0 %v106
    %190 = vmatprep.subr.mxu0 %v111
    %191 = vmatpush1.msra.mxu0 %v110
    %192 = vmatprep.subr.mxu0 %v115
    %193 = vmatpush1.msra.mxu0 %v114
    %194 = vmatprep.subr.mxu0 %v119
    %195 = vmatpush1.msra.mxu0 %v118
    %196 = vmatprep.subr.mxu0 %v123
    %197 = vmatpush1.msra.mxu0 %v122
    %198 = vmatprep.subr.mxu0 %v127
    %199 = vmatpush1.msra.mxu0 %v126
    %200 = vmatprep.subr.mxu0 %v131
    %201 = vmatpush1.msra.mxu0 %v130
    %202 = vmatprep.subr.mxu0 %v135
    %203 = vmatpush1.msra.mxu0 %v134
    %204 = vmatprep.subr.mxu0 %v139
    %205 = vmatpush1.msra.mxu0 %v138
    %206 = vmatprep.subr.mxu0 %v143
    %207 = vmatpush1.msra.mxu0 %v142
    %208 = vmatprep.subr.mxu0 %v147
    %209 = vmatpush1.msra.mxu0 %v146
    %210 = vmatprep.subr.mxu0 %v151
    %211 = vmatpush1.msra.mxu0 %v150
    %212 = vmatprep.subr.mxu0 %v155
    %213 = vmatpush1.msra.mxu0 %v154
    %214 = vmatprep.subr.mxu0 %v159
    %215 = vmatpush1.msra.mxu0 %v158
    %216 = vmatprep.subr.mxu0 0.0
    %217 = vmatpush1.msra.mxu0 0.0
    %218 = vmatprep.subr.mxu0 0.0
    %219 = vmatpush1.msra.mxu0 0.0
    %220 = vmatprep.subr.mxu0 0.0
    %221 = vmatpush1.msra.mxu0 0.0
    %222 = vmatprep.subr.mxu0 0.0
    %223 = vmatpush1.msra.mxu0 0.0
    %224 = vmatprep.subr.mxu0 0.0
    %225 = vmatpush1.msra.mxu0 0.0
    %226 = vmatprep.subr.mxu0 0.0
    %227 = vmatpush1.msra.mxu0 0.0
    %228 = vmatprep.subr.mxu0 0.0
    %229 = vmatpush1.msra.mxu0 0.0
    %230 = vmatprep.subr.mxu0 0.0
    %231 = vmatpush1.msra.mxu0 0.0
    %232 = vmatprep.subr.mxu0 0.0
    %233 = vmatpush1.msra.mxu0 0.0
    %234 = vmatprep.subr.mxu0 0.0
    %235 = vmatpush1.msra.mxu0 0.0
    %236 = vmatprep.subr.mxu0 0.0
    %237 = vmatpush1.msra.mxu0 0.0
    %238 = vmatprep.subr.mxu0 0.0
    %239 = vmatpush1.msra.mxu0 0.0
    %240 = vmatprep.subr.mxu0 0.0
    %241 = vmatpush1.msra.mxu0 0.0
    %242 = vmatprep.subr.mxu0 0.0
    %243 = vmatpush1.msra.mxu0 0.0
    %244 = vmatprep.subr.mxu0 0.0
    %245 = vmatpush1.msra.mxu0 0.0
    %246 = vmatprep.subr.mxu0 0.0
    %247 = vmatpush1.msra.mxu0 0.0
    %248 = vmatprep.mubr.f32.mxu0 0.0
    %249 = vmatmul.mubr.f32.gmra.mrb[0].mxu0 %v90
    %v250 = vpop.f32.mrb[0].mxu0
    %v251 = vadd.f32 %v167, %v250
    %v252 = vpop.f32.mrb[0].mxu0
    %v253 = vadd.f32 %v171, %v252
    %254 = vmatprep.mubr.f32.mxu0 0.0
    %255 = vmatmul.mubr.f32.gmra.mrb[0].mxu0 %v91
    %v256 = vpop.f32.mrb[0].mxu0
    %v257 = vadd.f32 %v167, %v256
    %v258 = vpop.f32.mrb[0].mxu0
    %v259 = vadd.f32 %v171, %v258
    %260 = vmatprep.mubr.f32.mxu0 0.0
    %261 = vmatmul.mubr.f32.gmra.mrb[0].mxu0 %v92
    %v262 = vpop.f32.mrb[0].mxu0
    %v263 = vadd.f32 %v167, %v262
    %v264 = vpop.f32.mrb[0].mxu0
    %v265 = vadd.f32 %v171, %v264
    %266 = vmatprep.mubr.f32.mxu0 0.0
    %267 = vmatmul.mubr.f32.gmra.mrb[0].mxu0 %v93
    %v268 = vpop.f32.mrb[0].mxu0
    %v269 = vadd.f32 %v167, %v268
    %v270 = vpop.f32.mrb[0].mxu0
    %v271 = vadd.f32 %v171, %v270
    %272 = vmatprep.mubr.f32.mxu0 0.0
    %273 = vmatmul.mubr.f32.gmra.mrb[0].mxu0 %v94
    %v274 = vpop.f32.mrb[0].mxu0
    %v275 = vadd.f32 %v167, %v274
    %v276 = vpop.f32.mrb[0].mxu0
    %v277 = vadd.f32 %v171, %v276
    %278 = vmatprep.mubr.f32.mxu0 0.0
    %279 = vmatmul.mubr.f32.gmra.mrb[0].mxu0 %v95
    %v280 = vpop.f32.mrb[0].mxu0
    %v281 = vadd.f32 %v167, %v280
    %v282 = vpop.f32.mrb[0].mxu0
    %v283 = vadd.f32 %v171, %v282
    %284 = vmatprep.mubr.f32.mxu0 0.0
    %285 = vmatmul.mubr.f32.gmra.mrb[0].mxu0 %v96
    %v286 = vpop.f32.mrb[0].mxu0
    %v287 = vadd.f32 %v167, %v286
    %v288 = vpop.f32.mrb[0].mxu0
    %v289 = vadd.f32 %v171, %v288
    %290 = vmatprep.mubr.f32.mxu0 0.0
    %291 = vmatmul.mubr.f32.gmra.mrb[0].mxu0 %v97
    %v292 = vpop.f32.mrb[0].mxu0
    %v293 = vadd.f32 %v167, %v292
    %v294 = vpop.f32.mrb[0].mxu0
    %v295 = vadd.f32 %v171, %v294
    %296 = vdwg.mxu0
    %297 = vmatprep.subr.mxu0 %v101
    %298 = vmatpush1.msra.mxu0 %v100
    %299 = vmatprep.subr.mxu0 %v105
    %300 = vmatpush1.msra.mxu0 %v104
    %301 = vmatprep.subr.mxu0 %v109
    %302 = vmatpush1.msra.mxu0 %v108
    %303 = vmatprep.subr.mxu0 %v113
    %304 = vmatpush1.msra.mxu0 %v112
    %305 = vmatprep.subr.mxu0 %v117
    %306 = vmatpush1.msra.mxu0 %v116
    %307 = vmatprep.subr.mxu0 %v121
    %308 = vmatpush1.msra.mxu0 %v120
    %309 = vmatprep.subr.mxu0 %v125
    %310 = vmatpush1.msra.mxu0 %v124
    %311 = vmatprep.subr.mxu0 %v129
    %312 = vmatpush1.msra.mxu0 %v128
    %313 = vmatprep.subr.mxu0 %v133
    %314 = vmatpush1.msra.mxu0 %v132
    %315 = vmatprep.subr.mxu0 %v137
    %316 = vmatpush1.msra.mxu0 %v136
    %317 = vmatprep.subr.mxu0 %v141
    %318 = vmatpush1.msra.mxu0 %v140
    %319 = vmatprep.subr.mxu0 %v145
    %320 = vmatpush1.msra.mxu0 %v144
    %321 = vmatprep.subr.mxu0 %v149
    %322 = vmatpush1.msra.mxu0 %v148
    %323 = vmatprep.subr.mxu0 %v153
    %324 = vmatpush1.msra.mxu0 %v152
    %325 = vmatprep.subr.mxu0 %v157
    %326 = vmatpush1.msra.mxu0 %v156
    %327 = vmatprep.subr.mxu0 %v161
    %328 = vmatpush1.msra.mxu0 %v160
    %329 = vmatprep.subr.mxu0 0.0
    %330 = vmatpush1.msra.mxu0 0.0
    %331 = vmatprep.subr.mxu0 0.0
    %332 = vmatpush1.msra.mxu0 0.0
    %333 = vmatprep.subr.mxu0 0.0
    %334 = vmatpush1.msra.mxu0 0.0
    %335 = vmatprep.subr.mxu0 0.0
    %336 = vmatpush1.msra.mxu0 0.0
    %337 = vmatprep.subr.mxu0 0.0
    %338 = vmatpush1.msra.mxu0 0.0
    %339 = vmatprep.subr.mxu0 0.0
    %340 = vmatpush1.msra.mxu0 0.0
    %341 = vmatprep.subr.mxu0 0.0
    %342 = vmatpush1.msra.mxu0 0.0
    %343 = vmatprep.subr.mxu0 0.0
    %344 = vmatpush1.msra.mxu0 0.0
    %345 = vmatprep.subr.mxu0 0.0
    %346 = vmatpush1.msra.mxu0 0.0
    %347 = vmatprep.subr.mxu0 0.0
    %348 = vmatpush1.msra.mxu0 0.0
    %349 = vmatprep.subr.mxu0 0.0
    %350 = vmatpush1.msra.mxu0 0.0
    %351 = vmatprep.subr.mxu0 0.0
    %352 = vmatpush1.msra.mxu0 0.0
    %353 = vmatprep.subr.mxu0 0.0
    %354 = vmatpush1.msra.mxu0 0.0
    %355 = vmatprep.subr.mxu0 0.0
    %356 = vmatpush1.msra.mxu0 0.0
    %357 = vmatprep.subr.mxu0 0.0
    %358 = vmatpush1.msra.mxu0 0.0
    %359 = vmatprep.subr.mxu0 0.0
    %360 = vmatpush1.msra.mxu0 0.0
    %361 = vmatprep.mubr.f32.mxu0 0.0
    %362 = vmatmul.mubr.f32.gmra.mrb[0].mxu0 %v90
    %v363 = vpop.f32.mrb[0].mxu0
    %v364 = vadd.f32 %v175, %v363
    %v365 = vpop.f32.mrb[0].mxu0
    %v366 = vadd.f32 %v179, %v365
    %367 = vmatprep.mubr.f32.mxu0 0.0
    %368 = vmatmul.mubr.f32.gmra.mrb[0].mxu0 %v91
    %v369 = vpop.f32.mrb[0].mxu0
    %v370 = vadd.f32 %v175, %v369
    %v371 = vpop.f32.mrb[0].mxu0
    %v372 = vadd.f32 %v179, %v371
    %373 = vmatprep.mubr.f32.mxu0 0.0
    %374 = vmatmul.mubr.f32.gmra.mrb[0].mxu0 %v92
    %v375 = vpop.f32.mrb[0].mxu0
    %v376 = vadd.f32 %v175, %v375
    %v377 = vpop.f32.mrb[0].mxu0
    %v378 = vadd.f32 %v179, %v377
    %379 = vmatprep.mubr.f32.mxu0 0.0
    %380 = vmatmul.mubr.f32.gmra.mrb[0].mxu0 %v93
    %v381 = vpop.f32.mrb[0].mxu0
    %v382 = vadd.f32 %v175, %v381
    %v383 = vpop.f32.mrb[0].mxu0
    %v384 = vadd.f32 %v179, %v383
    %385 = vmatprep.mubr.f32.mxu0 0.0
    %386 = vmatmul.mubr.f32.gmra.mrb[0].mxu0 %v94
    %v387 = vpop.f32.mrb[0].mxu0
    %v388 = vadd.f32 %v175, %v387
    %v389 = vpop.f32.mrb[0].mxu0
    %v390 = vadd.f32 %v179, %v389
    %391 = vmatprep.mubr.f32.mxu0 0.0
    %392 = vmatmul.mubr.f32.gmra.mrb[0].mxu0 %v95
    %v393 = vpop.f32.mrb[0].mxu0
    %v394 = vadd.f32 %v175, %v393
    %v395 = vpop.f32.mrb[0].mxu0
    %v396 = vadd.f32 %v179, %v395
    %397 = vmatprep.mubr.f32.mxu0 0.0
    %398 = vmatmul.mubr.f32.gmra.mrb[0].mxu0 %v96
    %v399 = vpop.f32.mrb[0].mxu0
    %v400 = vadd.f32 %v175, %v399
    %v401 = vpop.f32.mrb[0].mxu0
    %v402 = vadd.f32 %v179, %v401
    %403 = vmatprep.mubr.f32.mxu0 0.0
    %404 = vmatmul.mubr.f32.gmra.mrb[0].mxu0 %v97
    %v405 = vpop.f32.mrb[0].mxu0
    %v406 = vadd.f32 %v175, %v405
    %v407 = vpop.f32.mrb[0].mxu0
    %v408 = vadd.f32 %v179, %v407
    %409 = vdwg.mxu0
    %410 = vst [vmem:[#allocation7] sm:$0xff] %v251
    %411 = vst [vmem:[#allocation7 + $0x8] sm:$0xff] %v253
    %412 = vst [vmem:[#allocation7 + $0x10] sm:$0xff] %v364
    %413 = vst [vmem:[#allocation7 + $0x18] sm:$0xff] %v366
    %414 = vst [vmem:[#allocation7 + $0x20] sm:$0xff] %v257
    %415 = vst [vmem:[#allocation7 + $0x28] sm:$0xff] %v259
    %416 = vst [vmem:[#allocation7 + $0x30] sm:$0xff] %v370
    %417 = vst [vmem:[#allocation7 + $0x38] sm:$0xff] %v372
    %418 = vst [vmem:[#allocation7 + $0x40] sm:$0xff] %v263
    %419 = vst [vmem:[#allocation7 + $0x48] sm:$0xff] %v265
    %420 = vst [vmem:[#allocation7 + $0x50] sm:$0xff] %v376
    %421 = vst [vmem:[#allocation7 + $0x58] sm:$0xff] %v378
    %422 = vst [vmem:[#allocation7 + $0x60] sm:$0xff] %v269
    %423 = vst [vmem:[#allocation7 + $0x68] sm:$0xff] %v271
    %424 = vst [vmem:[#allocation7 + $0x70] sm:$0xff] %v382
    %425 = vst [vmem:[#allocation7 + $0x78] sm:$0xff] %v384
    %426 = vst [vmem:[#allocation7 + $0x80] sm:$0xff] %v275
    %427 = vst [vmem:[#allocation7 + $0x88] sm:$0xff] %v277
    %428 = vst [vmem:[#allocation7 + $0x90] sm:$0xff] %v388
    %429 = vst [vmem:[#allocation7 + $0x98] sm:$0xff] %v390
    %430 = vst [vmem:[#allocation7 + $0xa0] sm:$0xff] %v281
    %431 = vst [vmem:[#allocation7 + $0xa8] sm:$0xff] %v283
    %432 = vst [vmem:[#allocation7 + $0xb0] sm:$0xff] %v394
    %433 = vst [vmem:[#allocation7 + $0xb8] sm:$0xff] %v396
    %434 = vst [vmem:[#allocation7 + $0xc0] sm:$0xff] %v287
    %435 = vst [vmem:[#allocation7 + $0xc8] sm:$0xff] %v289
    %436 = vst [vmem:[#allocation7 + $0xd0] sm:$0xff] %v400
    %437 = vst [vmem:[#allocation7 + $0xd8] sm:$0xff] %v402
    %438 = vst [vmem:[#allocation7 + $0xe0] sm:$0xff] %v293
    %439 = vst [vmem:[#allocation7 + $0xe8] sm:$0xff] %v295
    %440 = vst [vmem:[#allocation7 + $0xf0] sm:$0xff] %v406
    %441 = vst [vmem:[#allocation7 + $0xf8] sm:$0xff] %v408
    %v442 = vld [vmem:[#allocation5] sm:$0xff]
    %v443 = vld [vmem:[#allocation6] sm:$0xff]
    %v444 = vld [vmem:[#allocation7] sm:$0xff]
    %v445 = vld [vmem:[#allocation7 + $0x8] sm:$0xff]
    %v446 = vld [vmem:[#allocation7 + $0x10] sm:$0xff]
    %v447 = vld [vmem:[#allocation7 + $0x18] sm:$0xff]
    %v448 = vld [vmem:[#allocation4] sm:$0xff]
    %v449 = vld [vmem:[#allocation4 + $0x8] sm:$0xff]
    %v450 = vld [vmem:[#allocation4 + $0x10] sm:$0xff]
    %v451 = vld [vmem:[#allocation4 + $0x18] sm:$0xff]
    %v452 = vld [vmem:[#allocation4 + $0x20] sm:$0xff]
    %v453 = vld [vmem:[#allocation4 + $0x28] sm:$0xff]
    %v454 = vld [vmem:[#allocation4 + $0x30] sm:$0xff]
    %v455 = vld [vmem:[#allocation4 + $0x38] sm:$0xff]
    %v456 = vld [vmem:[#allocation4 + $0x40] sm:$0xff]
    %v457 = vld [vmem:[#allocation4 + $0x48] sm:$0xff]
    %v458 = vld [vmem:[#allocation4 + $0x50] sm:$0xff]
    %v459 = vld [vmem:[#allocation4 + $0x58] sm:$0xff]
    %v460 = vld [vmem:[#allocation4 + $0x60] sm:$0xff]
    %v461 = vld [vmem:[#allocation4 + $0x68] sm:$0xff]
    %v462 = vld [vmem:[#allocation4 + $0x70] sm:$0xff]
    %v463 = vld [vmem:[#allocation4 + $0x78] sm:$0xff]
    %v464 = vld [vmem:[#allocation4 + $0x80] sm:$0xff]
    %v465 = vld [vmem:[#allocation4 + $0x88] sm:$0xff]
    %v466 = vld [vmem:[#allocation4 + $0x90] sm:$0xff]
    %v467 = vld [vmem:[#allocation4 + $0x98] sm:$0xff]
    %v468 = vld [vmem:[#allocation4 + $0xa0] sm:$0xff]
    %v469 = vld [vmem:[#allocation4 + $0xa8] sm:$0xff]
    %v470 = vld [vmem:[#allocation4 + $0xb0] sm:$0xff]
    %v471 = vld [vmem:[#allocation4 + $0xb8] sm:$0xff]
    %v472 = vld [vmem:[#allocation4 + $0xc0] sm:$0xff]
    %v473 = vld [vmem:[#allocation4 + $0xc8] sm:$0xff]
    %v474 = vld [vmem:[#allocation4 + $0xd0] sm:$0xff]
    %v475 = vld [vmem:[#allocation4 + $0xd8] sm:$0xff]
    %v476 = vld [vmem:[#allocation4 + $0xe0] sm:$0xff]
    %v477 = vld [vmem:[#allocation4 + $0xe8] sm:$0xff]
    %v478 = vld [vmem:[#allocation4 + $0xf0] sm:$0xff]
    %v479 = vld [vmem:[#allocation4 + $0xf8] sm:$0xff]
    %v480 = vld [vmem:[#allocation4 + $0x100] sm:$0xff]
    %v481 = vld [vmem:[#allocation4 + $0x108] sm:$0xff]
    %v482 = vld [vmem:[#allocation4 + $0x110] sm:$0xff]
    %v483 = vld [vmem:[#allocation4 + $0x118] sm:$0xff]
    %v484 = vld [vmem:[#allocation4 + $0x120] sm:$0xff]
    %v485 = vld [vmem:[#allocation4 + $0x128] sm:$0xff]
    %v486 = vld [vmem:[#allocation4 + $0x130] sm:$0xff]
    %v487 = vld [vmem:[#allocation4 + $0x138] sm:$0xff]
    %v488 = vld [vmem:[#allocation4 + $0x140] sm:$0xff]
    %v489 = vld [vmem:[#allocation4 + $0x148] sm:$0xff]
    %v490 = vld [vmem:[#allocation4 + $0x150] sm:$0xff]
    %v491 = vld [vmem:[#allocation4 + $0x158] sm:$0xff]
    %v492 = vld [vmem:[#allocation4 + $0x160] sm:$0xff]
    %v493 = vld [vmem:[#allocation4 + $0x168] sm:$0xff]
    %v494 = vld [vmem:[#allocation4 + $0x170] sm:$0xff]
    %v495 = vld [vmem:[#allocation4 + $0x178] sm:$0xff]
    %v496 = vld [vmem:[#allocation4 + $0x180] sm:$0xff]
    %v497 = vld [vmem:[#allocation4 + $0x188] sm:$0xff]
    %v498 = vld [vmem:[#allocation4 + $0x190] sm:$0xff]
    %v499 = vld [vmem:[#allocation4 + $0x198] sm:$0xff]
    %v500 = vld [vmem:[#allocation4 + $0x1a0] sm:$0xff]
    %v501 = vld [vmem:[#allocation4 + $0x1a8] sm:$0xff]
    %v502 = vld [vmem:[#allocation4 + $0x1b0] sm:$0xff]
    %v503 = vld [vmem:[#allocation4 + $0x1b8] sm:$0xff]
    %v504 = vld [vmem:[#allocation4 + $0x1c0] sm:$0xff]
    %v505 = vld [vmem:[#allocation4 + $0x1c8] sm:$0xff]
    %v506 = vld [vmem:[#allocation4 + $0x1d0] sm:$0xff]
    %v507 = vld [vmem:[#allocation4 + $0x1d8] sm:$0xff]
    %v508 = vld [vmem:[#allocation4 + $0x1e0] sm:$0xff]
    %v509 = vld [vmem:[#allocation4 + $0x1e8] sm:$0xff]
    %v510 = vld [vmem:[#allocation4 + $0x1f0] sm:$0xff]
    %v511 = vld [vmem:[#allocation4 + $0x1f8] sm:$0xff]
    %512 = vmatprep.subr.mxu0 %v449
    %513 = vmatpush1.msra.mxu0 %v448
    %514 = vmatprep.subr.mxu0 %v453
    %515 = vmatpush1.msra.mxu0 %v452
    %516 = vmatprep.subr.mxu0 %v457
    %517 = vmatpush1.msra.mxu0 %v456
    %518 = vmatprep.subr.mxu0 %v461
    %519 = vmatpush1.msra.mxu0 %v460
    %520 = vmatprep.subr.mxu0 %v465
    %521 = vmatpush1.msra.mxu0 %v464
    %522 = vmatprep.subr.mxu0 %v469
    %523 = vmatpush1.msra.mxu0 %v468
    %524 = vmatprep.subr.mxu0 %v473
    %525 = vmatpush1.msra.mxu0 %v472
    %526 = vmatprep.subr.mxu0 %v477
    %527 = vmatpush1.msra.mxu0 %v476
    %528 = vmatprep.subr.mxu0 %v481
    %529 = vmatpush1.msra.mxu0 %v480
    %530 = vmatprep.subr.mxu0 %v485
    %531 = vmatpush1.msra.mxu0 %v484
    %532 = vmatprep.subr.mxu0 %v489
    %533 = vmatpush1.msra.mxu0 %v488
    %534 = vmatprep.subr.mxu0 %v493
    %535 = vmatpush1.msra.mxu0 %v492
    %536 = vmatprep.subr.mxu0 %v497
    %537 = vmatpush1.msra.mxu0 %v496
    %538 = vmatprep.subr.mxu0 %v501
    %539 = vmatpush1.msra.mxu0 %v500
    %540 = vmatprep.subr.mxu0 %v505
    %541 = vmatpush1.msra.mxu0 %v504
    %542 = vmatprep.subr.mxu0 %v509
    %543 = vmatpush1.msra.mxu0 %v508
    %544 = vmatprep.subr.mxu0 0.0
    %545 = vmatpush1.msra.mxu0 0.0
    %546 = vmatprep.subr.mxu0 0.0
    %547 = vmatpush1.msra.mxu0 0.0
    %548 = vmatprep.subr.mxu0 0.0
    %549 = vmatpush1.msra.mxu0 0.0
    %550 = vmatprep.subr.mxu0 0.0
    %551 = vmatpush1.msra.mxu0 0.0
    %552 = vmatprep.subr.mxu0 0.0
    %553 = vmatpush1.msra.mxu0 0.0
    %554 = vmatprep.subr.mxu0 0.0
    %555 = vmatpush1.msra.mxu0 0.0
    %556 = vmatprep.subr.mxu0 0.0
    %557 = vmatpush1.msra.mxu0 0.0
    %558 = vmatprep.subr.mxu0 0.0
    %559 = vmatpush1.msra.mxu0 0.0
    %560 = vmatprep.subr.mxu0 0.0
    %561 = vmatpush1.msra.mxu0 0.0
    %562 = vmatprep.subr.mxu0 0.0
    %563 = vmatpush1.msra.mxu0 0.0
    %564 = vmatprep.subr.mxu0 0.0
    %565 = vmatpush1.msra.mxu0 0.0
    %566 = vmatprep.subr.mxu0 0.0
    %567 = vmatpush1.msra.mxu0 0.0
    %568 = vmatprep.subr.mxu0 0.0
    %569 = vmatpush1.msra.mxu0 0.0
    %570 = vmatprep.subr.mxu0 0.0
    %571 = vmatpush1.msra.mxu0 0.0
    %572 = vmatprep.subr.mxu0 0.0
    %573 = vmatpush1.msra.mxu0 0.0
    %574 = vmatprep.subr.mxu0 0.0
    %575 = vmatpush1.msra.mxu0 0.0
    %576 = vmatprep.mubr.f32.mxu0 0.0
    %577 = vmatmul.mubr.f32.gmra.mrb[0].mxu0 %v442
    %v578 = vpop.f32.mrb[0].mxu0
    %v579 = vadd.f32 0.0, %v578
    %v580 = vpop.f32.mrb[0].mxu0
    %v581 = vadd.f32 0.0, %v580
    %582 = vdwg.mxu0
    %583 = vmatprep.subr.mxu0 %v451
    %584 = vmatpush1.msra.mxu0 %v450
    %585 = vmatprep.subr.mxu0 %v455
    %586 = vmatpush1.msra.mxu0 %v454
    %587 = vmatprep.subr.mxu0 %v459
    %588 = vmatpush1.msra.mxu0 %v458
    %589 = vmatprep.subr.mxu0 %v463
    %590 = vmatpush1.msra.mxu0 %v462
    %591 = vmatprep.subr.mxu0 %v467
    %592 = vmatpush1.msra.mxu0 %v466
    %593 = vmatprep.subr.mxu0 %v471
    %594 = vmatpush1.msra.mxu0 %v470
    %595 = vmatprep.subr.mxu0 %v475
    %596 = vmatpush1.msra.mxu0 %v474
    %597 = vmatprep.subr.mxu0 %v479
    %598 = vmatpush1.msra.mxu0 %v478
    %599 = vmatprep.subr.mxu0 %v483
    %600 = vmatpush1.msra.mxu0 %v482
    %601 = vmatprep.subr.mxu0 %v487
    %602 = vmatpush1.msra.mxu0 %v486
    %603 = vmatprep.subr.mxu0 %v491
    %604 = vmatpush1.msra.mxu0 %v490
    %605 = vmatprep.subr.mxu0 %v495
    %606 = vmatpush1.msra.mxu0 %v494
    %607 = vmatprep.subr.mxu0 %v499
    %608 = vmatpush1.msra.mxu0 %v498
    %609 = vmatprep.subr.mxu0 %v503
    %610 = vmatpush1.msra.mxu0 %v502
    %611 = vmatprep.subr.mxu0 %v507
    %612 = vmatpush1.msra.mxu0 %v506
    %613 = vmatprep.subr.mxu0 %v511
    %614 = vmatpush1.msra.mxu0 %v510
    %615 = vmatprep.subr.mxu0 0.0
    %616 = vmatpush1.msra.mxu0 0.0
    %617 = vmatprep.subr.mxu0 0.0
    %618 = vmatpush1.msra.mxu0 0.0
    %619 = vmatprep.subr.mxu0 0.0
    %620 = vmatpush1.msra.mxu0 0.0
    %621 = vmatprep.subr.mxu0 0.0
    %622 = vmatpush1.msra.mxu0 0.0
    %623 = vmatprep.subr.mxu0 0.0
    %624 = vmatpush1.msra.mxu0 0.0
    %625 = vmatprep.subr.mxu0 0.0
    %626 = vmatpush1.msra.mxu0 0.0
    %627 = vmatprep.subr.mxu0 0.0
    %628 = vmatpush1.msra.mxu0 0.0
    %629 = vmatprep.subr.mxu0 0.0
    %630 = vmatpush1.msra.mxu0 0.0
    %631 = vmatprep.subr.mxu0 0.0
    %632 = vmatpush1.msra.mxu0 0.0
    %633 = vmatprep.subr.mxu0 0.0
    %634 = vmatpush1.msra.mxu0 0.0
    %635 = vmatprep.subr.mxu0 0.0
    %636 = vmatpush1.msra.mxu0 0.0
    %637 = vmatprep.subr.mxu0 0.0
    %638 = vmatpush1.msra.mxu0 0.0
    %639 = vmatprep.subr.mxu0 0.0
    %640 = vmatpush1.msra.mxu0 0.0
    %641 = vmatprep.subr.mxu0 0.0
    %642 = vmatpush1.msra.mxu0 0.0
    %643 = vmatprep.subr.mxu0 0.0
    %644 = vmatpush1.msra.mxu0 0.0
    %645 = vmatprep.subr.mxu0 0.0
    %646 = vmatpush1.msra.mxu0 0.0
    %647 = vmatprep.mubr.f32.mxu0 0.0
    %648 = vmatmul.mubr.f32.gmra.mrb[0].mxu0 %v442
    %v649 = vpop.f32.mrb[0].mxu0
    %v650 = vadd.f32 0.0, %v649
    %v651 = vpop.f32.mrb[0].mxu0
    %v652 = vadd.f32 0.0, %v651
    %653 = vdwg.mxu0
    %v654 = vadd.f32 %v444, %v579
    %v655 = vadd.f32 %v445, %v581
    %v656 = vadd.f32 %v446, %v650
    %v657 = vadd.f32 %v447, %v652
    %v658 = vxor.u32 %v654, 2147483648
    %v659 = vmul.f32 %v658, 1.442695
    %v660 = vpow.pop %v659
    %v661 = vadd.f32 %v660, 1.0
    %v662 = vrcp.pop %v661
    %v663 = vmul.f32 1.0, %v662
    %v664 = vxor.u32 %v655, 2147483648
    %v665 = vmul.f32 %v664, 1.442695
    %v666 = vpow.pop %v665
    %v667 = vadd.f32 %v666, 1.0
    %v668 = vrcp.pop %v667
    %v669 = vmul.f32 1.0, %v668
    %v670 = vtanh.pop %v656
    %v671 = vxor.u32 %v657, 2147483648
    %v672 = vmul.f32 %v671, 1.442695
    %v673 = vpow.pop %v672
    %v674 = vadd.f32 %v673, 1.0
    %v675 = vrcp.pop %v674
    %v676 = vmul.f32 1.0, %v675
    %v677 = vmul.f32 %v669, %v443
    %v678 = vmul.f32 %v663, %v670
    %v679 = vadd.f32 %v677, %v678
    %v680 = vtanh.pop %v679
    %v681 = vmul.f32 %v676, %v680
    %682 = vst [vmem:[#allocation12] sm:$0xff] %v681
    %s683 = scalar_lea.vmem [#allocation7], 32
    %v684 = vld [vmem:[%s683] sm:$0xff]
    %v685 = vld [vmem:[%s683 + $0x8] sm:$0xff]
    %v686 = vld [vmem:[%s683 + $0x10] sm:$0xff]
    %v687 = vld [vmem:[%s683 + $0x18] sm:$0xff]
    %v688 = vld [vmem:[#allocation4] sm:$0xff]
    %v689 = vld [vmem:[#allocation4 + $0x8] sm:$0xff]
    %v690 = vld [vmem:[#allocation4 + $0x10] sm:$0xff]
    %v691 = vld [vmem:[#allocation4 + $0x18] sm:$0xff]
    %v692 = vld [vmem:[#allocation4 + $0x20] sm:$0xff]
    %v693 = vld [vmem:[#allocation4 + $0x28] sm:$0xff]
    %v694 = vld [vmem:[#allocation4 + $0x30] sm:$0xff]
    %v695 = vld [vmem:[#allocation4 + $0x38] sm:$0xff]
    %v696 = vld [vmem:[#allocation4 + $0x40] sm:$0xff]
    %v697 = vld [vmem:[#allocation4 + $0x48] sm:$0xff]
    %v698 = vld [vmem:[#allocation4 + $0x50] sm:$0xff]
    %v699 = vld [vmem:[#allocation4 + $0x58] sm:$0xff]
    %v700 = vld [vmem:[#allocation4 + $0x60] sm:$0xff]
    %v701 = vld [vmem:[#allocation4 + $0x68] sm:$0xff]
    %v702 = vld [vmem:[#allocation4 + $0x70] sm:$0xff]
    %v703 = vld [vmem:[#allocation4 + $0x78] sm:$0xff]
    %v704 = vld [vmem:[#allocation4 + $0x80] sm:$0xff]
    %v705 = vld [vmem:[#allocation4 + $0x88] sm:$0xff]
    %v706 = vld [vmem:[#allocation4 + $0x90] sm:$0xff]
    %v707 = vld [vmem:[#allocation4 + $0x98] sm:$0xff]
    %v708 = vld [vmem:[#allocation4 + $0xa0] sm:$0xff]
    %v709 = vld [vmem:[#allocation4 + $0xa8] sm:$0xff]
    %v710 = vld [vmem:[#allocation4 + $0xb0] sm:$0xff]
    %v711 = vld [vmem:[#allocation4 + $0xb8] sm:$0xff]
    %v712 = vld [vmem:[#allocation4 + $0xc0] sm:$0xff]
    %v713 = vld [vmem:[#allocation4 + $0xc8] sm:$0xff]
    %v714 = vld [vmem:[#allocation4 + $0xd0] sm:$0xff]
    %v715 = vld [vmem:[#allocation4 + $0xd8] sm:$0xff]
    %v716 = vld [vmem:[#allocation4 + $0xe0] sm:$0xff]
    %v717 = vld [vmem:[#allocation4 + $0xe8] sm:$0xff]
    %v718 = vld [vmem:[#allocation4 + $0xf0] sm:$0xff]
    %v719 = vld [vmem:[#allocation4 + $0xf8] sm:$0xff]
    %v720 = vld [vmem:[#allocation4 + $0x100] sm:$0xff]
    %v721 = vld [vmem:[#allocation4 + $0x108] sm:$0xff]
    %v722 = vld [vmem:[#allocation4 + $0x110] sm:$0xff]
    %v723 = vld [vmem:[#allocation4 + $0x118] sm:$0xff]
    %v724 = vld [vmem:[#allocation4 + $0x120] sm:$0xff]
    %v725 = vld [vmem:[#allocation4 + $0x128] sm:$0xff]
    %v726 = vld [vmem:[#allocation4 + $0x130] sm:$0xff]
    %v727 = vld [vmem:[#allocation4 + $0x138] sm:$0xff]
    %v728 = vld [vmem:[#allocation4 + $0x140] sm:$0xff]
    %v729 = vld [vmem:[#allocation4 + $0x148] sm:$0xff]
    %v730 = vld [vmem:[#allocation4 + $0x150] sm:$0xff]
    %v731 = vld [vmem:[#allocation4 + $0x158] sm:$0xff]
    %v732 = vld [vmem:[#allocation4 + $0x160] sm:$0xff]
    %v733 = vld [vmem:[#allocation4 + $0x168] sm:$0xff]
    %v734 = vld [vmem:[#allocation4 + $0x170] sm:$0xff]
    %v735 = vld [vmem:[#allocation4 + $0x178] sm:$0xff]
    %v736 = vld [vmem:[#allocation4 + $0x180] sm:$0xff]
    %v737 = vld [vmem:[#allocation4 + $0x188] sm:$0xff]
    %v738 = vld [vmem:[#allocation4 + $0x190] sm:$0xff]
    %v739 = vld [vmem:[#allocation4 + $0x198] sm:$0xff]
    %v740 = vld [vmem:[#allocation4 + $0x1a0] sm:$0xff]
    %v741 = vld [vmem:[#allocation4 + $0x1a8] sm:$0xff]
    %v742 = vld [vmem:[#allocation4 + $0x1b0] sm:$0xff]
    %v743 = vld [vmem:[#allocation4 + $0x1b8] sm:$0xff]
    %v744 = vld [vmem:[#allocation4 + $0x1c0] sm:$0xff]
    %v745 = vld [vmem:[#allocation4 + $0x1c8] sm:$0xff]
    %v746 = vld [vmem:[#allocation4 + $0x1d0] sm:$0xff]
    %v747 = vld [vmem:[#allocation4 + $0x1d8] sm:$0xff]
    %v748 = vld [vmem:[#allocation4 + $0x1e0] sm:$0xff]
    %v749 = vld [vmem:[#allocation4 + $0x1e8] sm:$0xff]
    %v750 = vld [vmem:[#allocation4 + $0x1f0] sm:$0xff]
    %v751 = vld [vmem:[#allocation4 + $0x1f8] sm:$0xff]
    %752 = vmatprep.subr.mxu0 %v689
    %753 = vmatpush1.msra.mxu0 %v688
    %754 = vmatprep.subr.mxu0 %v693
    %755 = vmatpush1.msra.mxu0 %v692
    %756 = vmatprep.subr.mxu0 %v697
    %757 = vmatpush1.msra.mxu0 %v696
    %758 = vmatprep.subr.mxu0 %v701
    %759 = vmatpush1.msra.mxu0 %v700
    %760 = vmatprep.subr.mxu0 %v705
    %761 = vmatpush1.msra.mxu0 %v704
    %762 = vmatprep.subr.mxu0 %v709
    %763 = vmatpush1.msra.mxu0 %v708
    %764 = vmatprep.subr.mxu0 %v713
    %765 = vmatpush1.msra.mxu0 %v712
    %766 = vmatprep.subr.mxu0 %v717
    %767 = vmatpush1.msra.mxu0 %v716
    %768 = vmatprep.subr.mxu0 %v721
    %769 = vmatpush1.msra.mxu0 %v720
    %770 = vmatprep.subr.mxu0 %v725
    %771 = vmatpush1.msra.mxu0 %v724
    %772 = vmatprep.subr.mxu0 %v729
    %773 = vmatpush1.msra.mxu0 %v728
    %774 = vmatprep.subr.mxu0 %v733
    %775 = vmatpush1.msra.mxu0 %v732
    %776 = vmatprep.subr.mxu0 %v737
    %777 = vmatpush1.msra.mxu0 %v736
    %778 = vmatprep.subr.mxu0 %v741
    %779 = vmatpush1.msra.mxu0 %v740
    %780 = vmatprep.subr.mxu0 %v745
    %781 = vmatpush1.msra.mxu0 %v744
    %782 = vmatprep.subr.mxu0 %v749
    %783 = vmatpush1.msra.mxu0 %v748
    %784 = vmatprep.subr.mxu0 0.0
    %785 = vmatpush1.msra.mxu0 0.0
    %786 = vmatprep.subr.mxu0 0.0
    %787 = vmatpush1.msra.mxu0 0.0
    %788 = vmatprep.subr.mxu0 0.0
    %789 = vmatpush1.msra.mxu0 0.0
    %790 = vmatprep.subr.mxu0 0.0
    %791 = vmatpush1.msra.mxu0 0.0
    %792 = vmatprep.subr.mxu0 0.0
    %793 = vmatpush1.msra.mxu0 0.0
    %794 = vmatprep.subr.mxu0 0.0
    %795 = vmatpush1.msra.mxu0 0.0
    %796 = vmatprep.subr.mxu0 0.0
    %797 = vmatpush1.msra.mxu0 0.0
    %798 = vmatprep.subr.mxu0 0.0
    %799 = vmatpush1.msra.mxu0 0.0
    %800 = vmatprep.subr.mxu0 0.0
    %801 = vmatpush1.msra.mxu0 0.0
    %802 = vmatprep.subr.mxu0 0.0
    %803 = vmatpush1.msra.mxu0 0.0
    %804 = vmatprep.subr.mxu0 0.0
    %805 = vmatpush1.msra.mxu0 0.0
    %806 = vmatprep.subr.mxu0 0.0
    %807 = vmatpush1.msra.mxu0 0.0
    %808 = vmatprep.subr.mxu0 0.0
    %809 = vmatpush1.msra.mxu0 0.0
    %810 = vmatprep.subr.mxu0 0.0
    %811 = vmatpush1.msra.mxu0 0.0
    %812 = vmatprep.subr.mxu0 0.0
    %813 = vmatpush1.msra.mxu0 0.0
    %814 = vmatprep.subr.mxu0 0.0
    %815 = vmatpush1.msra.mxu0 0.0
    %816 = vmatprep.mubr.f32.mxu0 0.0
    %817 = vmatmul.mubr.f32.gmra.mrb[0].mxu0 %v681
    %v818 = vpop.f32.mrb[0].mxu0
    %v819 = vadd.f32 0.0, %v818
    %v820 = vpop.f32.mrb[0].mxu0
    %v821 = vadd.f32 0.0, %v820
    %822 = vdwg.mxu0
    %823 = vmatprep.subr.mxu0 %v691
    %824 = vmatpush1.msra.mxu0 %v690
    %825 = vmatprep.subr.mxu0 %v695
    %826 = vmatpush1.msra.mxu0 %v694
    %827 = vmatprep.subr.mxu0 %v699
    %828 = vmatpush1.msra.mxu0 %v698
    %829 = vmatprep.subr.mxu0 %v703
    %830 = vmatpush1.msra.mxu0 %v702
    %831 = vmatprep.subr.mxu0 %v707
    %832 = vmatpush1.msra.mxu0 %v706
    %833 = vmatprep.subr.mxu0 %v711
    %834 = vmatpush1.msra.mxu0 %v710
    %835 = vmatprep.subr.mxu0 %v715
    %836 = vmatpush1.msra.mxu0 %v714
    %837 = vmatprep.subr.mxu0 %v719
    %838 = vmatpush1.msra.mxu0 %v718
    %839 = vmatprep.subr.mxu0 %v723
    %840 = vmatpush1.msra.mxu0 %v722
    %841 = vmatprep.subr.mxu0 %v727
    %842 = vmatpush1.msra.mxu0 %v726
    %843 = vmatprep.subr.mxu0 %v731
    %844 = vmatpush1.msra.mxu0 %v730
    %845 = vmatprep.subr.mxu0 %v735
    %846 = vmatpush1.msra.mxu0 %v734
    %847 = vmatprep.subr.mxu0 %v739
    %848 = vmatpush1.msra.mxu0 %v738
    %849 = vmatprep.subr.mxu0 %v743
    %850 = vmatpush1.msra.mxu0 %v742
    %851 = vmatprep.subr.mxu0 %v747
    %852 = vmatpush1.msra.mxu0 %v746
    %853 = vmatprep.subr.mxu0 %v751
    %854 = vmatpush1.msra.mxu0 %v750
    %855 = vmatprep.subr.mxu0 0.0
    %856 = vmatpush1.msra.mxu0 0.0
    %857 = vmatprep.subr.mxu0 0.0
    %858 = vmatpush1.msra.mxu0 0.0
    %859 = vmatprep.subr.mxu0 0.0
    %860 = vmatpush1.msra.mxu0 0.0
    %861 = vmatprep.subr.mxu0 0.0
    %862 = vmatpush1.msra.mxu0 0.0
    %863 = vmatprep.subr.mxu0 0.0
    %864 = vmatpush1.msra.mxu0 0.0
    %865 = vmatprep.subr.mxu0 0.0
    %866 = vmatpush1.msra.mxu0 0.0
    %867 = vmatprep.subr.mxu0 0.0
    %868 = vmatpush1.msra.mxu0 0.0
    %869 = vmatprep.subr.mxu0 0.0
    %870 = vmatpush1.msra.mxu0 0.0
    %871 = vmatprep.subr.mxu0 0.0
    %872 = vmatpush1.msra.mxu0 0.0
    %873 = vmatprep.subr.mxu0 0.0
    %874 = vmatpush1.msra.mxu0 0.0
    %875 = vmatprep.subr.mxu0 0.0
    %876 = vmatpush1.msra.mxu0 0.0
    %877 = vmatprep.subr.mxu0 0.0
    %878 = vmatpush1.msra.mxu0 0.0
    %879 = vmatprep.subr.mxu0 0.0
    %880 = vmatpush1.msra.mxu0 0.0
    %881 = vmatprep.subr.mxu0 0.0
    %882 = vmatpush1.msra.mxu0 0.0
    %883 = vmatprep.subr.mxu0 0.0
    %884 = vmatpush1.msra.mxu0 0.0
    %885 = vmatprep.subr.mxu0 0.0
    %886 = vmatpush1.msra.mxu0 0.0
    %887 = vmatprep.mubr.f32.mxu0 0.0
    %888 = vmatmul.mubr.f32.gmra.mrb[0].mxu0 %v681
    %v889 = vpop.f32.mrb[0].mxu0
    %v890 = vadd.f32 0.0, %v889
    %v891 = vpop.f32.mrb[0].mxu0
    %v892 = vadd.f32 0.0, %v891
    %893 = vdwg.mxu0
    %v894 = vadd.f32 %v684, %v819
    %v895 = vadd.f32 %v685, %v821
    %v896 = vadd.f32 %v686, %v890
    %v897 = vadd.f32 %v687, %v892
    %v898 = vxor.u32 %v894, 2147483648
    %v899 = vmul.f32 %v898, 1.442695
    %v900 = vpow.pop %v899
    %v901 = vadd.f32 %v900, 1.0
    %v902 = vrcp.pop %v901
    %v903 = vmul.f32 1.0, %v902
    %v904 = vxor.u32 %v895, 2147483648
    %v905 = vmul.f32 %v904, 1.442695
    %v906 = vpow.pop %v905
    %v907 = vadd.f32 %v906, 1.0
    %v908 = vrcp.pop %v907
    %v909 = vmul.f32 1.0, %v908
    %v910 = vtanh.pop %v896
    %v911 = vxor.u32 %v897, 2147483648
    %v912 = vmul.f32 %v911, 1.442695
    %v913 = vpow.pop %v912
    %v914 = vadd.f32 %v913, 1.0
    %v915 = vrcp.pop %v914
    %v916 = vmul.f32 1.0, %v915
    %v917 = vmul.f32 %v909, %v679
    %v918 = vmul.f32 %v903, %v910
    %v919 = vadd.f32 %v917, %v918
    %v920 = vtanh.pop %v919
    %v921 = vmul.f32 %v916, %v920
    %s922 = scalar_lea.vmem [#allocation12], 8
    %923 = vst [vmem:[%s922] sm:$0xff] %v921
    %s924 = scalar_lea.vmem [#allocation7], 64
    %v925 = vld [vmem:[%s924] sm:$0xff]
    %v926 = vld [vmem:[%s924 + $0x8] sm:$0xff]
    %v927 = vld [vmem:[%s924 + $0x10] sm:$0xff]
    %v928 = vld [vmem:[%s924 + $0x18] sm:$0xff]
    %v929 = vld [vmem:[#allocation4] sm:$0xff]
    %v930 = vld [vmem:[#allocation4 + $0x8] sm:$0xff]
    %v931 = vld [vmem:[#allocation4 + $0x10] sm:$0xff]
    %v932 = vld [vmem:[#allocation4 + $0x18] sm:$0xff]
    %v933 = vld [vmem:[#allocation4 + $0x20] sm:$0xff]
    %v934 = vld [vmem:[#allocation4 + $0x28] sm:$0xff]
    %v935 = vld [vmem:[#allocation4 + $0x30] sm:$0xff]
    %v936 = vld [vmem:[#allocation4 + $0x38] sm:$0xff]
    %v937 = vld [vmem:[#allocation4 + $0x40] sm:$0xff]
    %v938 = vld [vmem:[#allocation4 + $0x48] sm:$0xff]
    %v939 = vld [vmem:[#allocation4 + $0x50] sm:$0xff]
    %v940 = vld [vmem:[#allocation4 + $0x58] sm:$0xff]
    %v941 = vld [vmem:[#allocation4 + $0x60] sm:$0xff]
    %v942 = vld [vmem:[#allocation4 + $0x68] sm:$0xff]
    %v943 = vld [vmem:[#allocation4 + $0x70] sm:$0xff]
    %v944 = vld [vmem:[#allocation4 + $0x78] sm:$0xff]
    %v945 = vld [vmem:[#allocation4 + $0x80] sm:$0xff]
    %v946 = vld [vmem:[#allocation4 + $0x88] sm:$0xff]
    %v947 = vld [vmem:[#allocation4 + $0x90] sm:$0xff]
    %v948 = vld [vmem:[#allocation4 + $0x98] sm:$0xff]
    %v949 = vld [vmem:[#allocation4 + $0xa0] sm:$0xff]
    %v950 = vld [vmem:[#allocation4 + $0xa8] sm:$0xff]
    %v951 = vld [vmem:[#allocation4 + $0xb0] sm:$0xff]
    %v952 = vld [vmem:[#allocation4 + $0xb8] sm:$0xff]
    %v953 = vld [vmem:[#allocation4 + $0xc0] sm:$0xff]
    %v954 = vld [vmem:[#allocation4 + $0xc8] sm:$0xff]
    %v955 = vld [vmem:[#allocation4 + $0xd0] sm:$0xff]
    %v956 = vld [vmem:[#allocation4 + $0xd8] sm:$0xff]
    %v957 = vld [vmem:[#allocation4 + $0xe0] sm:$0xff]
    %v958 = vld [vmem:[#allocation4 + $0xe8] sm:$0xff]
    %v959 = vld [vmem:[#allocation4 + $0xf0] sm:$0xff]
    %v960 = vld [vmem:[#allocation4 + $0xf8] sm:$0xff]
    %v961 = vld [vmem:[#allocation4 + $0x100] sm:$0xff]
    %v962 = vld [vmem:[#allocation4 + $0x108] sm:$0xff]
    %v963 = vld [vmem:[#allocation4 + $0x110] sm:$0xff]
    %v964 = vld [vmem:[#allocation4 + $0x118] sm:$0xff]
    %v965 = vld [vmem:[#allocation4 + $0x120] sm:$0xff]
    %v966 = vld [vmem:[#allocation4 + $0x128] sm:$0xff]
    %v967 = vld [vmem:[#allocation4 + $0x130] sm:$0xff]
    %v968 = vld [vmem:[#allocation4 + $0x138] sm:$0xff]
    %v969 = vld [vmem:[#allocation4 + $0x140] sm:$0xff]
    %v970 = vld [vmem:[#allocation4 + $0x148] sm:$0xff]
    %v971 = vld [vmem:[#allocation4 + $0x150] sm:$0xff]
    %v972 = vld [vmem:[#allocation4 + $0x158] sm:$0xff]
    %v973 = vld [vmem:[#allocation4 + $0x160] sm:$0xff]
    %v974 = vld [vmem:[#allocation4 + $0x168] sm:$0xff]
    %v975 = vld [vmem:[#allocation4 + $0x170] sm:$0xff]
    %v976 = vld [vmem:[#allocation4 + $0x178] sm:$0xff]
    %v977 = vld [vmem:[#allocation4 + $0x180] sm:$0xff]
    %v978 = vld [vmem:[#allocation4 + $0x188] sm:$0xff]
    %v979 = vld [vmem:[#allocation4 + $0x190] sm:$0xff]
    %v980 = vld [vmem:[#allocation4 + $0x198] sm:$0xff]
    %v981 = vld [vmem:[#allocation4 + $0x1a0] sm:$0xff]
    %v982 = vld [vmem:[#allocation4 + $0x1a8] sm:$0xff]
    %v983 = vld [vmem:[#allocation4 + $0x1b0] sm:$0xff]
    %v984 = vld [vmem:[#allocation4 + $0x1b8] sm:$0xff]
    %v985 = vld [vmem:[#allocation4 + $0x1c0] sm:$0xff]
    %v986 = vld [vmem:[#allocation4 + $0x1c8] sm:$0xff]
    %v987 = vld [vmem:[#allocation4 + $0x1d0] sm:$0xff]
    %v988 = vld [vmem:[#allocation4 + $0x1d8] sm:$0xff]
    %v989 = vld [vmem:[#allocation4 + $0x1e0] sm:$0xff]
    %v990 = vld [vmem:[#allocation4 + $0x1e8] sm:$0xff]
    %v991 = vld [vmem:[#allocation4 + $0x1f0] sm:$0xff]
    %v992 = vld [vmem:[#allocation4 + $0x1f8] sm:$0xff]
    %993 = vmatprep.subr.mxu0 %v930
    %994 = vmatpush1.msra.mxu0 %v929
    %995 = vmatprep.subr.mxu0 %v934
    %996 = vmatpush1.msra.mxu0 %v933
    %997 = vmatprep.subr.mxu0 %v938
    %998 = vmatpush1.msra.mxu0 %v937
    %999 = vmatprep.subr.mxu0 %v942
    %1000 = vmatpush1.msra.mxu0 %v941
    %1001 = vmatprep.subr.mxu0 %v946
    %1002 = vmatpush1.msra.mxu0 %v945
    %1003 = vmatprep.subr.mxu0 %v950
    %1004 = vmatpush1.msra.mxu0 %v949
    %1005 = vmatprep.subr.mxu0 %v954
    %1006 = vmatpush1.msra.mxu0 %v953
    %1007 = vmatprep.subr.mxu0 %v958
    %1008 = vmatpush1.msra.mxu0 %v957
    %1009 = vmatprep.subr.mxu0 %v962
    %1010 = vmatpush1.msra.mxu0 %v961
    %1011 = vmatprep.subr.mxu0 %v966
    %1012 = vmatpush1.msra.mxu0 %v965
    %1013 = vmatprep.subr.mxu0 %v970
    %1014 = vmatpush1.msra.mxu0 %v969
    %1015 = vmatprep.subr.mxu0 %v974
    %1016 = vmatpush1.msra.mxu0 %v973
    %1017 = vmatprep.subr.mxu0 %v978
    %1018 = vmatpush1.msra.mxu0 %v977
    %1019 = vmatprep.subr.mxu0 %v982
    %1020 = vmatpush1.msra.mxu0 %v981
    %1021 = vmatprep.subr.mxu0 %v986
    %1022 = vmatpush1.msra.mxu0 %v985
    %1023 = vmatprep.subr.mxu0 %v990
    %1024 = vmatpush1.msra.mxu0 %v989
    %1025 = vmatprep.subr.mxu0 0.0
    %1026 = vmatpush1.msra.mxu0 0.0
    %1027 = vmatprep.subr.mxu0 0.0
    %1028 = vmatpush1.msra.mxu0 0.0
    %1029 = vmatprep.subr.mxu0 0.0
    %1030 = vmatpush1.msra.mxu0 0.0
    %1031 = vmatprep.subr.mxu0 0.0
    %1032 = vmatpush1.msra.mxu0 0.0
    %1033 = vmatprep.subr.mxu0 0.0
    %1034 = vmatpush1.msra.mxu0 0.0
    %1035 = vmatprep.subr.mxu0 0.0
    %1036 = vmatpush1.msra.mxu0 0.0
    %1037 = vmatprep.subr.mxu0 0.0
    %1038 = vmatpush1.msra.mxu0 0.0
    %1039 = vmatprep.subr.mxu0 0.0
    %1040 = vmatpush1.msra.mxu0 0.0
    %1041 = vmatprep.subr.mxu0 0.0
    %1042 = vmatpush1.msra.mxu0 0.0
    %1043 = vmatprep.subr.mxu0 0.0
    %1044 = vmatpush1.msra.mxu0 0.0
    %1045 = vmatprep.subr.mxu0 0.0
    %1046 = vmatpush1.msra.mxu0 0.0
    %1047 = vmatprep.subr.mxu0 0.0
    %1048 = vmatpush1.msra.mxu0 0.0
    %1049 = vmatprep.subr.mxu0 0.0
    %1050 = vmatpush1.msra.mxu0 0.0
    %1051 = vmatprep.subr.mxu0 0.0
    %1052 = vmatpush1.msra.mxu0 0.0
    %1053 = vmatprep.subr.mxu0 0.0
    %1054 = vmatpush1.msra.mxu0 0.0
    %1055 = vmatprep.subr.mxu0 0.0
    %1056 = vmatpush1.msra.mxu0 0.0
    %1057 = vmatprep.mubr.f32.mxu0 0.0
    %1058 = vmatmul.mubr.f32.gmra.mrb[0].mxu0 %v921
    %v1059 = vpop.f32.mrb[0].mxu0
    %v1060 = vadd.f32 0.0, %v1059
    %v1061 = vpop.f32.mrb[0].mxu0
    %v1062 = vadd.f32 0.0, %v1061
    %1063 = vdwg.mxu0
    %1064 = vmatprep.subr.mxu0 %v932
    %1065 = vmatpush1.msra.mxu0 %v931
    %1066 = vmatprep.subr.mxu0 %v936
    %1067 = vmatpush1.msra.mxu0 %v935
    %1068 = vmatprep.subr.mxu0 %v940
    %1069 = vmatpush1.msra.mxu0 %v939
    %1070 = vmatprep.subr.mxu0 %v944
    %1071 = vmatpush1.msra.mxu0 %v943
    %1072 = vmatprep.subr.mxu0 %v948
    %1073 = vmatpush1.msra.mxu0 %v947
    %1074 = vmatprep.subr.mxu0 %v952
    %1075 = vmatpush1.msra.mxu0 %v951
    %1076 = vmatprep.subr.mxu0 %v956
    %1077 = vmatpush1.msra.mxu0 %v955
    %1078 = vmatprep.subr.mxu0 %v960
    %1079 = vmatpush1.msra.mxu0 %v959
    %1080 = vmatprep.subr.mxu0 %v964
    %1081 = vmatpush1.msra.mxu0 %v963
    %1082 = vmatprep.subr.mxu0 %v968
    %1083 = vmatpush1.msra.mxu0 %v967
    %1084 = vmatprep.subr.mxu0 %v972
    %1085 = vmatpush1.msra.mxu0 %v971
    %1086 = vmatprep.subr.mxu0 %v976
    %1087 = vmatpush1.msra.mxu0 %v975
    %1088 = vmatprep.subr.mxu0 %v980
    %1089 = vmatpush1.msra.mxu0 %v979
    %1090 = vmatprep.subr.mxu0 %v984
    %1091 = vmatpush1.msra.mxu0 %v983
    %1092 = vmatprep.subr.mxu0 %v988
    %1093 = vmatpush1.msra.mxu0 %v987
    %1094 = vmatprep.subr.mxu0 %v992
    %1095 = vmatpush1.msra.mxu0 %v991
    %1096 = vmatprep.subr.mxu0 0.0
    %1097 = vmatpush1.msra.mxu0 0.0
    %1098 = vmatprep.subr.mxu0 0.0
    %1099 = vmatpush1.msra.mxu0 0.0
    %1100 = vmatprep.subr.mxu0 0.0
    %1101 = vmatpush1.msra.mxu0 0.0
    %1102 = vmatprep.subr.mxu0 0.0
    %1103 = vmatpush1.msra.mxu0 0.0
    %1104 = vmatprep.subr.mxu0 0.0
    %1105 = vmatpush1.msra.mxu0 0.0
    %1106 = vmatprep.subr.mxu0 0.0
    %1107 = vmatpush1.msra.mxu0 0.0
    %1108 = vmatprep.subr.mxu0 0.0
    %1109 = vmatpush1.msra.mxu0 0.0
    %1110 = vmatprep.subr.mxu0 0.0
    %1111 = vmatpush1.msra.mxu0 0.0
    %1112 = vmatprep.subr.mxu0 0.0
    %1113 = vmatpush1.msra.mxu0 0.0
    %1114 = vmatprep.subr.mxu0 0.0
    %1115 = vmatpush1.msra.mxu0 0.0
    %1116 = vmatprep.subr.mxu0 0.0
    %1117 = vmatpush1.msra.mxu0 0.0
    %1118 = vmatprep.subr.mxu0 0.0
    %1119 = vmatpush1.msra.mxu0 0.0
    %1120 = vmatprep.subr.mxu0 0.0
    %1121 = vmatpush1.msra.mxu0 0.0
    %1122 = vmatprep.subr.mxu0 0.0
    %1123 = vmatpush1.msra.mxu0 0.0
    %1124 = vmatprep.subr.mxu0 0.0
    %1125 = vmatpush1.msra.mxu0 0.0
    %1126 = vmatprep.subr.mxu0 0.0
    %1127 = vmatpush1.msra.mxu0 0.0
    %1128 = vmatprep.mubr.f32.mxu0 0.0
    %1129 = vmatmul.mubr.f32.gmra.mrb[0].mxu0 %v921
    %v1130 = vpop.f32.mrb[0].mxu0
    %v1131 = vadd.f32 0.0, %v1130
    %v1132 = vpop.f32.mrb[0].mxu0
    %v1133 = vadd.f32 0.0, %v1132
    %1134 = vdwg.mxu0
    %v1135 = vadd.f32 %v925, %v1060
    %v1136 = vadd.f32 %v926, %v1062
    %v1137 = vadd.f32 %v927, %v1131
    %v1138 = vadd.f32 %v928, %v1133
    %v1139 = vxor.u32 %v1135, 2147483648
    %v1140 = vmul.f32 %v1139, 1.442695
    %v1141 = vpow.pop %v1140
    %v1142 = vadd.f32 %v1141, 1.0
    %v1143 = vrcp.pop %v1142
    %v1144 = vmul.f32 1.0, %v1143
    %v1145 = vxor.u32 %v1136, 2147483648
    %v1146 = vmul.f32 %v1145, 1.442695
    %v1147 = vpow.pop %v1146
    %v1148 = vadd.f32 %v1147, 1.0
    %v1149 = vrcp.pop %v1148
    %v1150 = vmul.f32 1.0, %v1149
    %v1151 = vtanh.pop %v1137
    %v1152 = vxor.u32 %v1138, 2147483648
    %v1153 = vmul.f32 %v1152, 1.442695
    %v1154 = vpow.pop %v1153
    %v1155 = vadd.f32 %v1154, 1.0
    %v1156 = vrcp.pop %v1155
    %v1157 = vmul.f32 1.0, %v1156
    %v1158 = vmul.f32 %v1150, %v919
    %v1159 = vmul.f32 %v1144, %v1151
    %v1160 = vadd.f32 %v1158, %v1159
    %v1161 = vtanh.pop %v1160
    %v1162 = vmul.f32 %v1157, %v1161
    %s1163 = scalar_lea.vmem [#allocation12], 16
    %1164 = vst [vmem:[%s1163] sm:$0xff] %v1162
    %s1165 = scalar_lea.vmem [#allocation7], 96
    %v1166 = vld [vmem:[%s1165] sm:$0xff]
    %v1167 = vld [vmem:[%s1165 + $0x8] sm:$0xff]
    %v1168 = vld [vmem:[%s1165 + $0x10] sm:$0xff]
    %v1169 = vld [vmem:[%s1165 + $0x18] sm:$0xff]
    %v1170 = vld [vmem:[#allocation4] sm:$0xff]
    %v1171 = vld [vmem:[#allocation4 + $0x8] sm:$0xff]
    %v1172 = vld [vmem:[#allocation4 + $0x10] sm:$0xff]
    %v1173 = vld [vmem:[#allocation4 + $0x18] sm:$0xff]
    %v1174 = vld [vmem:[#allocation4 + $0x20] sm:$0xff]
    %v1175 = vld [vmem:[#allocation4 + $0x28] sm:$0xff]
    %v1176 = vld [vmem:[#allocation4 + $0x30] sm:$0xff]
    %v1177 = vld [vmem:[#allocation4 + $0x38] sm:$0xff]
    %v1178 = vld [vmem:[#allocation4 + $0x40] sm:$0xff]
    %v1179 = vld [vmem:[#allocation4 + $0x48] sm:$0xff]
    %v1180 = vld [vmem:[#allocation4 + $0x50] sm:$0xff]
    %v1181 = vld [vmem:[#allocation4 + $0x58] sm:$0xff]
    %v1182 = vld [vmem:[#allocation4 + $0x60] sm:$0xff]
    %v1183 = vld [vmem:[#allocation4 + $0x68] sm:$0xff]
    %v1184 = vld [vmem:[#allocation4 + $0x70] sm:$0xff]
    %v1185 = vld [vmem:[#allocation4 + $0x78] sm:$0xff]
    %v1186 = vld [vmem:[#allocation4 + $0x80] sm:$0xff]
    %v1187 = vld [vmem:[#allocation4 + $0x88] sm:$0xff]
    %v1188 = vld [vmem:[#allocation4 + $0x90] sm:$0xff]
    %v1189 = vld [vmem:[#allocation4 + $0x98] sm:$0xff]
    %v1190 = vld [vmem:[#allocation4 + $0xa0] sm:$0xff]
    %v1191 = vld [vmem:[#allocation4 + $0xa8] sm:$0xff]
    %v1192 = vld [vmem:[#allocation4 + $0xb0] sm:$0xff]
    %v1193 = vld [vmem:[#allocation4 + $0xb8] sm:$0xff]
    %v1194 = vld [vmem:[#allocation4 + $0xc0] sm:$0xff]
    %v1195 = vld [vmem:[#allocation4 + $0xc8] sm:$0xff]
    %v1196 = vld [vmem:[#allocation4 + $0xd0] sm:$0xff]
    %v1197 = vld [vmem:[#allocation4 + $0xd8] sm:$0xff]
    %v1198 = vld [vmem:[#allocation4 + $0xe0] sm:$0xff]
    %v1199 = vld [vmem:[#allocation4 + $0xe8] sm:$0xff]
    %v1200 = vld [vmem:[#allocation4 + $0xf0] sm:$0xff]
    %v1201 = vld [vmem:[#allocation4 + $0xf8] sm:$0xff]
    %v1202 = vld [vmem:[#allocation4 + $0x100] sm:$0xff]
    %v1203 = vld [vmem:[#allocation4 + $0x108] sm:$0xff]
    %v1204 = vld [vmem:[#allocation4 + $0x110] sm:$0xff]
    %v1205 = vld [vmem:[#allocation4 + $0x118] sm:$0xff]
    %v1206 = vld [vmem:[#allocation4 + $0x120] sm:$0xff]
    %v1207 = vld [vmem:[#allocation4 + $0x128] sm:$0xff]
    %v1208 = vld [vmem:[#allocation4 + $0x130] sm:$0xff]
    %v1209 = vld [vmem:[#allocation4 + $0x138] sm:$0xff]
    %v1210 = vld [vmem:[#allocation4 + $0x140] sm:$0xff]
    %v1211 = vld [vmem:[#allocation4 + $0x148] sm:$0xff]
    %v1212 = vld [vmem:[#allocation4 + $0x150] sm:$0xff]
    %v1213 = vld [vmem:[#allocation4 + $0x158] sm:$0xff]
    %v1214 = vld [vmem:[#allocation4 + $0x160] sm:$0xff]
    %v1215 = vld [vmem:[#allocation4 + $0x168] sm:$0xff]
    %v1216 = vld [vmem:[#allocation4 + $0x170] sm:$0xff]
    %v1217 = vld [vmem:[#allocation4 + $0x178] sm:$0xff]
    %v1218 = vld [vmem:[#allocation4 + $0x180] sm:$0xff]
    %v1219 = vld [vmem:[#allocation4 + $0x188] sm:$0xff]
    %v1220 = vld [vmem:[#allocation4 + $0x190] sm:$0xff]
    %v1221 = vld [vmem:[#allocation4 + $0x198] sm:$0xff]
    %v1222 = vld [vmem:[#allocation4 + $0x1a0] sm:$0xff]
    %v1223 = vld [vmem:[#allocation4 + $0x1a8] sm:$0xff]
    %v1224 = vld [vmem:[#allocation4 + $0x1b0] sm:$0xff]
    %v1225 = vld [vmem:[#allocation4 + $0x1b8] sm:$0xff]
    %v1226 = vld [vmem:[#allocation4 + $0x1c0] sm:$0xff]
    %v1227 = vld [vmem:[#allocation4 + $0x1c8] sm:$0xff]
    %v1228 = vld [vmem:[#allocation4 + $0x1d0] sm:$0xff]
    %v1229 = vld [vmem:[#allocation4 + $0x1d8] sm:$0xff]
    %v1230 = vld [vmem:[#allocation4 + $0x1e0] sm:$0xff]
    %v1231 = vld [vmem:[#allocation4 + $0x1e8] sm:$0xff]
    %v1232 = vld [vmem:[#allocation4 + $0x1f0] sm:$0xff]
    %v1233 = vld [vmem:[#allocation4 + $0x1f8] sm:$0xff]
    %1234 = vmatprep.subr.mxu0 %v1171
    %1235 = vmatpush1.msra.mxu0 %v1170
    %1236 = vmatprep.subr.mxu0 %v1175
    %1237 = vmatpush1.msra.mxu0 %v1174
    %1238 = vmatprep.subr.mxu0 %v1179
    %1239 = vmatpush1.msra.mxu0 %v1178
    %1240 = vmatprep.subr.mxu0 %v1183
    %1241 = vmatpush1.msra.mxu0 %v1182
    %1242 = vmatprep.subr.mxu0 %v1187
    %1243 = vmatpush1.msra.mxu0 %v1186
    %1244 = vmatprep.subr.mxu0 %v1191
    %1245 = vmatpush1.msra.mxu0 %v1190
    %1246 = vmatprep.subr.mxu0 %v1195
    %1247 = vmatpush1.msra.mxu0 %v1194
    %1248 = vmatprep.subr.mxu0 %v1199
    %1249 = vmatpush1.msra.mxu0 %v1198
    %1250 = vmatprep.subr.mxu0 %v1203
    %1251 = vmatpush1.msra.mxu0 %v1202
    %1252 = vmatprep.subr.mxu0 %v1207
    %1253 = vmatpush1.msra.mxu0 %v1206
    %1254 = vmatprep.subr.mxu0 %v1211
    %1255 = vmatpush1.msra.mxu0 %v1210
    %1256 = vmatprep.subr.mxu0 %v1215
    %1257 = vmatpush1.msra.mxu0 %v1214
    %1258 = vmatprep.subr.mxu0 %v1219
    %1259 = vmatpush1.msra.mxu0 %v1218
    %1260 = vmatprep.subr.mxu0 %v1223
    %1261 = vmatpush1.msra.mxu0 %v1222
    %1262 = vmatprep.subr.mxu0 %v1227
    %1263 = vmatpush1.msra.mxu0 %v1226
    %1264 = vmatprep.subr.mxu0 %v1231
    %1265 = vmatpush1.msra.mxu0 %v1230
    %1266 = vmatprep.subr.mxu0 0.0
    %1267 = vmatpush1.msra.mxu0 0.0
    %1268 = vmatprep.subr.mxu0 0.0
    %1269 = vmatpush1.msra.mxu0 0.0
    %1270 = vmatprep.subr.mxu0 0.0
    %1271 = vmatpush1.msra.mxu0 0.0
    %1272 = vmatprep.subr.mxu0 0.0
    %1273 = vmatpush1.msra.mxu0 0.0
    %1274 = vmatprep.subr.mxu0 0.0
    %1275 = vmatpush1.msra.mxu0 0.0
    %1276 = vmatprep.subr.mxu0 0.0
    %1277 = vmatpush1.msra.mxu0 0.0
    %1278 = vmatprep.subr.mxu0 0.0
    %1279 = vmatpush1.msra.mxu0 0.0
    %1280 = vmatprep.subr.mxu0 0.0
    %1281 = vmatpush1.msra.mxu0 0.0
    %1282 = vmatprep.subr.mxu0 0.0
    %1283 = vmatpush1.msra.mxu0 0.0
    %1284 = vmatprep.subr.mxu0 0.0
    %1285 = vmatpush1.msra.mxu0 0.0
    %1286 = vmatprep.subr.mxu0 0.0
    %1287 = vmatpush1.msra.mxu0 0.0
    %1288 = vmatprep.subr.mxu0 0.0
    %1289 = vmatpush1.msra.mxu0 0.0
    %1290 = vmatprep.subr.mxu0 0.0
    %1291 = vmatpush1.msra.mxu0 0.0
    %1292 = vmatprep.subr.mxu0 0.0
    %1293 = vmatpush1.msra.mxu0 0.0
    %1294 = vmatprep.subr.mxu0 0.0
    %1295 = vmatpush1.msra.mxu0 0.0
    %1296 = vmatprep.subr.mxu0 0.0
    %1297 = vmatpush1.msra.mxu0 0.0
    %1298 = vmatprep.mubr.f32.mxu0 0.0
    %1299 = vmatmul.mubr.f32.gmra.mrb[0].mxu0 %v1162
    %v1300 = vpop.f32.mrb[0].mxu0
    %v1301 = vadd.f32 0.0, %v1300
    %v1302 = vpop.f32.mrb[0].mxu0
    %v1303 = vadd.f32 0.0, %v1302
    %1304 = vdwg.mxu0
    %1305 = vmatprep.subr.mxu0 %v1173
    %1306 = vmatpush1.msra.mxu0 %v1172
    %1307 = vmatprep.subr.mxu0 %v1177
    %1308 = vmatpush1.msra.mxu0 %v1176
    %1309 = vmatprep.subr.mxu0 %v1181
    %1310 = vmatpush1.msra.mxu0 %v1180
    %1311 = vmatprep.subr.mxu0 %v1185
    %1312 = vmatpush1.msra.mxu0 %v1184
    %1313 = vmatprep.subr.mxu0 %v1189
    %1314 = vmatpush1.msra.mxu0 %v1188
    %1315 = vmatprep.subr.mxu0 %v1193
    %1316 = vmatpush1.msra.mxu0 %v1192
    %1317 = vmatprep.subr.mxu0 %v1197
    %1318 = vmatpush1.msra.mxu0 %v1196
    %1319 = vmatprep.subr.mxu0 %v1201
    %1320 = vmatpush1.msra.mxu0 %v1200
    %1321 = vmatprep.subr.mxu0 %v1205
    %1322 = vmatpush1.msra.mxu0 %v1204
    %1323 = vmatprep.subr.mxu0 %v1209
    %1324 = vmatpush1.msra.mxu0 %v1208
    %1325 = vmatprep.subr.mxu0 %v1213
    %1326 = vmatpush1.msra.mxu0 %v1212
    %1327 = vmatprep.subr.mxu0 %v1217
    %1328 = vmatpush1.msra.mxu0 %v1216
    %1329 = vmatprep.subr.mxu0 %v1221
    %1330 = vmatpush1.msra.mxu0 %v1220
    %1331 = vmatprep.subr.mxu0 %v1225
    %1332 = vmatpush1.msra.mxu0 %v1224
    %1333 = vmatprep.subr.mxu0 %v1229
    %1334 = vmatpush1.msra.mxu0 %v1228
    %1335 = vmatprep.subr.mxu0 %v1233
    %1336 = vmatpush1.msra.mxu0 %v1232
    %1337 = vmatprep.subr.mxu0 0.0
    %1338 = vmatpush1.msra.mxu0 0.0
    %1339 = vmatprep.subr.mxu0 0.0
    %1340 = vmatpush1.msra.mxu0 0.0
    %1341 = vmatprep.subr.mxu0 0.0
    %1342 = vmatpush1.msra.mxu0 0.0
    %1343 = vmatprep.subr.mxu0 0.0
    %1344 = vmatpush1.msra.mxu0 0.0
    %1345 = vmatprep.subr.mxu0 0.0
    %1346 = vmatpush1.msra.mxu0 0.0
    %1347 = vmatprep.subr.mxu0 0.0
    %1348 = vmatpush1.msra.mxu0 0.0
    %1349 = vmatprep.subr.mxu0 0.0
    %1350 = vmatpush1.msra.mxu0 0.0
    %1351 = vmatprep.subr.mxu0 0.0
    %1352 = vmatpush1.msra.mxu0 0.0
    %1353 = vmatprep.subr.mxu0 0.0
    %1354 = vmatpush1.msra.mxu0 0.0
    %1355 = vmatprep.subr.mxu0 0.0
    %1356 = vmatpush1.msra.mxu0 0.0
    %1357 = vmatprep.subr.mxu0 0.0
    %1358 = vmatpush1.msra.mxu0 0.0
    %1359 = vmatprep.subr.mxu0 0.0
    %1360 = vmatpush1.msra.mxu0 0.0
    %1361 = vmatprep.subr.mxu0 0.0
    %1362 = vmatpush1.msra.mxu0 0.0
    %1363 = vmatprep.subr.mxu0 0.0
    %1364 = vmatpush1.msra.mxu0 0.0
    %1365 = vmatprep.subr.mxu0 0.0
    %1366 = vmatpush1.msra.mxu0 0.0
    %1367 = vmatprep.subr.mxu0 0.0
    %1368 = vmatpush1.msra.mxu0 0.0
    %1369 = vmatprep.mubr.f32.mxu0 0.0
    %1370 = vmatmul.mubr.f32.gmra.mrb[0].mxu0 %v1162
    %v1371 = vpop.f32.mrb[0].mxu0
    %v1372 = vadd.f32 0.0, %v1371
    %v1373 = vpop.f32.mrb[0].mxu0
    %v1374 = vadd.f32 0.0, %v1373
    %1375 = vdwg.mxu0
    %v1376 = vadd.f32 %v1166, %v1301
    %v1377 = vadd.f32 %v1167, %v1303
    %v1378 = vadd.f32 %v1168, %v1372
    %v1379 = vadd.f32 %v1169, %v1374
    %v1380 = vxor.u32 %v1376, 2147483648
    %v1381 = vmul.f32 %v1380, 1.442695
    %v1382 = vpow.pop %v1381
    %v1383 = vadd.f32 %v1382, 1.0
    %v1384 = vrcp.pop %v1383
    %v1385 = vmul.f32 1.0, %v1384
    %v1386 = vxor.u32 %v1377, 2147483648
    %v1387 = vmul.f32 %v1386, 1.442695
    %v1388 = vpow.pop %v1387
    %v1389 = vadd.f32 %v1388, 1.0
    %v1390 = vrcp.pop %v1389
    %v1391 = vmul.f32 1.0, %v1390
    %v1392 = vtanh.pop %v1378
    %v1393 = vxor.u32 %v1379, 2147483648
    %v1394 = vmul.f32 %v1393, 1.442695
    %v1395 = vpow.pop %v1394
    %v1396 = vadd.f32 %v1395, 1.0
    %v1397 = vrcp.pop %v1396
    %v1398 = vmul.f32 1.0, %v1397
    %v1399 = vmul.f32 %v1391, %v1160
    %v1400 = vmul.f32 %v1385, %v1392
    %v1401 = vadd.f32 %v1399, %v1400
    %v1402 = vtanh.pop %v1401
    %v1403 = vmul.f32 %v1398, %v1402
    %s1404 = scalar_lea.vmem [#allocation12], 24
    %1405 = vst [vmem:[%s1404] sm:$0xff] %v1403
    %s1406 = scalar_lea.vmem [#allocation7], 128
    %v1407 = vld [vmem:[%s1406] sm:$0xff]
    %v1408 = vld [vmem:[%s1406 + $0x8] sm:$0xff]
    %v1409 = vld [vmem:[%s1406 + $0x10] sm:$0xff]
    %v1410 = vld [vmem:[%s1406 + $0x18] sm:$0xff]
    %v1411 = vld [vmem:[#allocation4] sm:$0xff]
    %v1412 = vld [vmem:[#allocation4 + $0x8] sm:$0xff]
    %v1413 = vld [vmem:[#allocation4 + $0x10] sm:$0xff]
    %v1414 = vld [vmem:[#allocation4 + $0x18] sm:$0xff]
    %v1415 = vld [vmem:[#allocation4 + $0x20] sm:$0xff]
    %v1416 = vld [vmem:[#allocation4 + $0x28] sm:$0xff]
    %v1417 = vld [vmem:[#allocation4 + $0x30] sm:$0xff]
    %v1418 = vld [vmem:[#allocation4 + $0x38] sm:$0xff]
    %v1419 = vld [vmem:[#allocation4 + $0x40] sm:$0xff]
    %v1420 = vld [vmem:[#allocation4 + $0x48] sm:$0xff]
    %v1421 = vld [vmem:[#allocation4 + $0x50] sm:$0xff]
    %v1422 = vld [vmem:[#allocation4 + $0x58] sm:$0xff]
    %v1423 = vld [vmem:[#allocation4 + $0x60] sm:$0xff]
    %v1424 = vld [vmem:[#allocation4 + $0x68] sm:$0xff]
    %v1425 = vld [vmem:[#allocation4 + $0x70] sm:$0xff]
    %v1426 = vld [vmem:[#allocation4 + $0x78] sm:$0xff]
    %v1427 = vld [vmem:[#allocation4 + $0x80] sm:$0xff]
    %v1428 = vld [vmem:[#allocation4 + $0x88] sm:$0xff]
    %v1429 = vld [vmem:[#allocation4 + $0x90] sm:$0xff]
    %v1430 = vld [vmem:[#allocation4 + $0x98] sm:$0xff]
    %v1431 = vld [vmem:[#allocation4 + $0xa0] sm:$0xff]
    %v1432 = vld [vmem:[#allocation4 + $0xa8] sm:$0xff]
    %v1433 = vld [vmem:[#allocation4 + $0xb0] sm:$0xff]
    %v1434 = vld [vmem:[#allocation4 + $0xb8] sm:$0xff]
    %v1435 = vld [vmem:[#allocation4 + $0xc0] sm:$0xff]
    %v1436 = vld [vmem:[#allocation4 + $0xc8] sm:$0xff]
    %v1437 = vld [vmem:[#allocation4 + $0xd0] sm:$0xff]
    %v1438 = vld [vmem:[#allocation4 + $0xd8] sm:$0xff]
    %v1439 = vld [vmem:[#allocation4 + $0xe0] sm:$0xff]
    %v1440 = vld [vmem:[#allocation4 + $0xe8] sm:$0xff]
    %v1441 = vld [vmem:[#allocation4 + $0xf0] sm:$0xff]
    %v1442 = vld [vmem:[#allocation4 + $0xf8] sm:$0xff]
    %v1443 = vld [vmem:[#allocation4 + $0x100] sm:$0xff]
    %v1444 = vld [vmem:[#allocation4 + $0x108] sm:$0xff]
    %v1445 = vld [vmem:[#allocation4 + $0x110] sm:$0xff]
    %v1446 = vld [vmem:[#allocation4 + $0x118] sm:$0xff]
    %v1447 = vld [vmem:[#allocation4 + $0x120] sm:$0xff]
    %v1448 = vld [vmem:[#allocation4 + $0x128] sm:$0xff]
    %v1449 = vld [vmem:[#allocation4 + $0x130] sm:$0xff]
    %v1450 = vld [vmem:[#allocation4 + $0x138] sm:$0xff]
    %v1451 = vld [vmem:[#allocation4 + $0x140] sm:$0xff]
    %v1452 = vld [vmem:[#allocation4 + $0x148] sm:$0xff]
    %v1453 = vld [vmem:[#allocation4 + $0x150] sm:$0xff]
    %v1454 = vld [vmem:[#allocation4 + $0x158] sm:$0xff]
    %v1455 = vld [vmem:[#allocation4 + $0x160] sm:$0xff]
    %v1456 = vld [vmem:[#allocation4 + $0x168] sm:$0xff]
    %v1457 = vld [vmem:[#allocation4 + $0x170] sm:$0xff]
    %v1458 = vld [vmem:[#allocation4 + $0x178] sm:$0xff]
    %v1459 = vld [vmem:[#allocation4 + $0x180] sm:$0xff]
    %v1460 = vld [vmem:[#allocation4 + $0x188] sm:$0xff]
    %v1461 = vld [vmem:[#allocation4 + $0x190] sm:$0xff]
    %v1462 = vld [vmem:[#allocation4 + $0x198] sm:$0xff]
    %v1463 = vld [vmem:[#allocation4 + $0x1a0] sm:$0xff]
    %v1464 = vld [vmem:[#allocation4 + $0x1a8] sm:$0xff]
    %v1465 = vld [vmem:[#allocation4 + $0x1b0] sm:$0xff]
    %v1466 = vld [vmem:[#allocation4 + $0x1b8] sm:$0xff]
    %v1467 = vld [vmem:[#allocation4 + $0x1c0] sm:$0xff]
    %v1468 = vld [vmem:[#allocation4 + $0x1c8] sm:$0xff]
    %v1469 = vld [vmem:[#allocation4 + $0x1d0] sm:$0xff]
    %v1470 = vld [vmem:[#allocation4 + $0x1d8] sm:$0xff]
    %v1471 = vld [vmem:[#allocation4 + $0x1e0] sm:$0xff]
    %v1472 = vld [vmem:[#allocation4 + $0x1e8] sm:$0xff]
    %v1473 = vld [vmem:[#allocation4 + $0x1f0] sm:$0xff]
    %v1474 = vld [vmem:[#allocation4 + $0x1f8] sm:$0xff]
    %1475 = vmatprep.subr.mxu0 %v1412
    %1476 = vmatpush1.msra.mxu0 %v1411
    %1477 = vmatprep.subr.mxu0 %v1416
    %1478 = vmatpush1.msra.mxu0 %v1415
    %1479 = vmatprep.subr.mxu0 %v1420
    %1480 = vmatpush1.msra.mxu0 %v1419
    %1481 = vmatprep.subr.mxu0 %v1424
    %1482 = vmatpush1.msra.mxu0 %v1423
    %1483 = vmatprep.subr.mxu0 %v1428
    %1484 = vmatpush1.msra.mxu0 %v1427
    %1485 = vmatprep.subr.mxu0 %v1432
    %1486 = vmatpush1.msra.mxu0 %v1431
    %1487 = vmatprep.subr.mxu0 %v1436
    %1488 = vmatpush1.msra.mxu0 %v1435
    %1489 = vmatprep.subr.mxu0 %v1440
    %1490 = vmatpush1.msra.mxu0 %v1439
    %1491 = vmatprep.subr.mxu0 %v1444
    %1492 = vmatpush1.msra.mxu0 %v1443
    %1493 = vmatprep.subr.mxu0 %v1448
    %1494 = vmatpush1.msra.mxu0 %v1447
    %1495 = vmatprep.subr.mxu0 %v1452
    %1496 = vmatpush1.msra.mxu0 %v1451
    %1497 = vmatprep.subr.mxu0 %v1456
    %1498 = vmatpush1.msra.mxu0 %v1455
    %1499 = vmatprep.subr.mxu0 %v1460
    %1500 = vmatpush1.msra.mxu0 %v1459
    %1501 = vmatprep.subr.mxu0 %v1464
    %1502 = vmatpush1.msra.mxu0 %v1463
    %1503 = vmatprep.subr.mxu0 %v1468
    %1504 = vmatpush1.msra.mxu0 %v1467
    %1505 = vmatprep.subr.mxu0 %v1472
    %1506 = vmatpush1.msra.mxu0 %v1471
    %1507 = vmatprep.subr.mxu0 0.0
    %1508 = vmatpush1.msra.mxu0 0.0
    %1509 = vmatprep.subr.mxu0 0.0
    %1510 = vmatpush1.msra.mxu0 0.0
    %1511 = vmatprep.subr.mxu0 0.0
    %1512 = vmatpush1.msra.mxu0 0.0
    %1513 = vmatprep.subr.mxu0 0.0
    %1514 = vmatpush1.msra.mxu0 0.0
    %1515 = vmatprep.subr.mxu0 0.0
    %1516 = vmatpush1.msra.mxu0 0.0
    %1517 = vmatprep.subr.mxu0 0.0
    %1518 = vmatpush1.msra.mxu0 0.0
    %1519 = vmatprep.subr.mxu0 0.0
    %1520 = vmatpush1.msra.mxu0 0.0
    %1521 = vmatprep.subr.mxu0 0.0
    %1522 = vmatpush1.msra.mxu0 0.0
    %1523 = vmatprep.subr.mxu0 0.0
    %1524 = vmatpush1.msra.mxu0 0.0
    %1525 = vmatprep.subr.mxu0 0.0
    %1526 = vmatpush1.msra.mxu0 0.0
    %1527 = vmatprep.subr.mxu0 0.0
    %1528 = vmatpush1.msra.mxu0 0.0
    %1529 = vmatprep.subr.mxu0 0.0
    %1530 = vmatpush1.msra.mxu0 0.0
    %1531 = vmatprep.subr.mxu0 0.0
    %1532 = vmatpush1.msra.mxu0 0.0
    %1533 = vmatprep.subr.mxu0 0.0
    %1534 = vmatpush1.msra.mxu0 0.0
    %1535 = vmatprep.subr.mxu0 0.0
    %1536 = vmatpush1.msra.mxu0 0.0
    %1537 = vmatprep.subr.mxu0 0.0
    %1538 = vmatpush1.msra.mxu0 0.0
    %1539 = vmatprep.mubr.f32.mxu0 0.0
    %1540 = vmatmul.mubr.f32.gmra.mrb[0].mxu0 %v1403
    %v1541 = vpop.f32.mrb[0].mxu0
    %v1542 = vadd.f32 0.0, %v1541
    %v1543 = vpop.f32.mrb[0].mxu0
    %v1544 = vadd.f32 0.0, %v1543
    %1545 = vdwg.mxu0
    %1546 = vmatprep.subr.mxu0 %v1414
    %1547 = vmatpush1.msra.mxu0 %v1413
    %1548 = vmatprep.subr.mxu0 %v1418
    %1549 = vmatpush1.msra.mxu0 %v1417
    %1550 = vmatprep.subr.mxu0 %v1422
    %1551 = vmatpush1.msra.mxu0 %v1421
    %1552 = vmatprep.subr.mxu0 %v1426
    %1553 = vmatpush1.msra.mxu0 %v1425
    %1554 = vmatprep.subr.mxu0 %v1430
    %1555 = vmatpush1.msra.mxu0 %v1429
    %1556 = vmatprep.subr.mxu0 %v1434
    %1557 = vmatpush1.msra.mxu0 %v1433
    %1558 = vmatprep.subr.mxu0 %v1438
    %1559 = vmatpush1.msra.mxu0 %v1437
    %1560 = vmatprep.subr.mxu0 %v1442
    %1561 = vmatpush1.msra.mxu0 %v1441
    %1562 = vmatprep.subr.mxu0 %v1446
    %1563 = vmatpush1.msra.mxu0 %v1445
    %1564 = vmatprep.subr.mxu0 %v1450
    %1565 = vmatpush1.msra.mxu0 %v1449
    %1566 = vmatprep.subr.mxu0 %v1454
    %1567 = vmatpush1.msra.mxu0 %v1453
    %1568 = vmatprep.subr.mxu0 %v1458
    %1569 = vmatpush1.msra.mxu0 %v1457
    %1570 = vmatprep.subr.mxu0 %v1462
    %1571 = vmatpush1.msra.mxu0 %v1461
    %1572 = vmatprep.subr.mxu0 %v1466
    %1573 = vmatpush1.msra.mxu0 %v1465
    %1574 = vmatprep.subr.mxu0 %v1470
    %1575 = vmatpush1.msra.mxu0 %v1469
    %1576 = vmatprep.subr.mxu0 %v1474
    %1577 = vmatpush1.msra.mxu0 %v1473
    %1578 = vmatprep.subr.mxu0 0.0
    %1579 = vmatpush1.msra.mxu0 0.0
    %1580 = vmatprep.subr.mxu0 0.0
    %1581 = vmatpush1.msra.mxu0 0.0
    %1582 = vmatprep.subr.mxu0 0.0
    %1583 = vmatpush1.msra.mxu0 0.0
    %1584 = vmatprep.subr.mxu0 0.0
    %1585 = vmatpush1.msra.mxu0 0.0
    %1586 = vmatprep.subr.mxu0 0.0
    %1587 = vmatpush1.msra.mxu0 0.0
    %1588 = vmatprep.subr.mxu0 0.0
    %1589 = vmatpush1.msra.mxu0 0.0
    %1590 = vmatprep.subr.mxu0 0.0
    %1591 = vmatpush1.msra.mxu0 0.0
    %1592 = vmatprep.subr.mxu0 0.0
    %1593 = vmatpush1.msra.mxu0 0.0
    %1594 = vmatprep.subr.mxu0 0.0
    %1595 = vmatpush1.msra.mxu0 0.0
    %1596 = vmatprep.subr.mxu0 0.0
    %1597 = vmatpush1.msra.mxu0 0.0
    %1598 = vmatprep.subr.mxu0 0.0
    %1599 = vmatpush1.msra.mxu0 0.0
    %1600 = vmatprep.subr.mxu0 0.0
    %1601 = vmatpush1.msra.mxu0 0.0
    %1602 = vmatprep.subr.mxu0 0.0
    %1603 = vmatpush1.msra.mxu0 0.0
    %1604 = vmatprep.subr.mxu0 0.0
    %1605 = vmatpush1.msra.mxu0 0.0
    %1606 = vmatprep.subr.mxu0 0.0
    %1607 = vmatpush1.msra.mxu0 0.0
    %1608 = vmatprep.subr.mxu0 0.0
    %1609 = vmatpush1.msra.mxu0 0.0
    %1610 = vmatprep.mubr.f32.mxu0 0.0
    %1611 = vmatmul.mubr.f32.gmra.mrb[0].mxu0 %v1403
    %v1612 = vpop.f32.mrb[0].mxu0
    %v1613 = vadd.f32 0.0, %v1612
    %v1614 = vpop.f32.mrb[0].mxu0
    %v1615 = vadd.f32 0.0, %v1614
    %1616 = vdwg.mxu0
    %v1617 = vadd.f32 %v1407, %v1542
    %v1618 = vadd.f32 %v1408, %v1544
    %v1619 = vadd.f32 %v1409, %v1613
    %v1620 = vadd.f32 %v1410, %v1615
    %v1621 = vxor.u32 %v1617, 2147483648
    %v1622 = vmul.f32 %v1621, 1.442695
    %v1623 = vpow.pop %v1622
    %v1624 = vadd.f32 %v1623, 1.0
    %v1625 = vrcp.pop %v1624
    %v1626 = vmul.f32 1.0, %v1625
    %v1627 = vxor.u32 %v1618, 2147483648
    %v1628 = vmul.f32 %v1627, 1.442695
    %v1629 = vpow.pop %v1628
    %v1630 = vadd.f32 %v1629, 1.0
    %v1631 = vrcp.pop %v1630
    %v1632 = vmul.f32 1.0, %v1631
    %v1633 = vtanh.pop %v1619
    %v1634 = vxor.u32 %v1620, 2147483648
    %v1635 = vmul.f32 %v1634, 1.442695
    %v1636 = vpow.pop %v1635
    %v1637 = vadd.f32 %v1636, 1.0
    %v1638 = vrcp.pop %v1637
    %v1639 = vmul.f32 1.0, %v1638
    %v1640 = vmul.f32 %v1632, %v1401
    %v1641 = vmul.f32 %v1626, %v1633
    %v1642 = vadd.f32 %v1640, %v1641
    %v1643 = vtanh.pop %v1642
    %v1644 = vmul.f32 %v1639, %v1643
    %s1645 = scalar_lea.vmem [#allocation12], 32
    %1646 = vst [vmem:[%s1645] sm:$0xff] %v1644
    %s1647 = scalar_lea.vmem [#allocation7], 160
    %v1648 = vld [vmem:[%s1647] sm:$0xff]
    %v1649 = vld [vmem:[%s1647 + $0x8] sm:$0xff]
    %v1650 = vld [vmem:[%s1647 + $0x10] sm:$0xff]
    %v1651 = vld [vmem:[%s1647 + $0x18] sm:$0xff]
    %v1652 = vld [vmem:[#allocation4] sm:$0xff]
    %v1653 = vld [vmem:[#allocation4 + $0x8] sm:$0xff]
    %v1654 = vld [vmem:[#allocation4 + $0x10] sm:$0xff]
    %v1655 = vld [vmem:[#allocation4 + $0x18] sm:$0xff]
    %v1656 = vld [vmem:[#allocation4 + $0x20] sm:$0xff]
    %v1657 = vld [vmem:[#allocation4 + $0x28] sm:$0xff]
    %v1658 = vld [vmem:[#allocation4 + $0x30] sm:$0xff]
    %v1659 = vld [vmem:[#allocation4 + $0x38] sm:$0xff]
    %v1660 = vld [vmem:[#allocation4 + $0x40] sm:$0xff]
    %v1661 = vld [vmem:[#allocation4 + $0x48] sm:$0xff]
    %v1662 = vld [vmem:[#allocation4 + $0x50] sm:$0xff]
    %v1663 = vld [vmem:[#allocation4 + $0x58] sm:$0xff]
    %v1664 = vld [vmem:[#allocation4 + $0x60] sm:$0xff]
    %v1665 = vld [vmem:[#allocation4 + $0x68] sm:$0xff]
    %v1666 = vld [vmem:[#allocation4 + $0x70] sm:$0xff]
    %v1667 = vld [vmem:[#allocation4 + $0x78] sm:$0xff]
    %v1668 = vld [vmem:[#allocation4 + $0x80] sm:$0xff]
    %v1669 = vld [vmem:[#allocation4 + $0x88] sm:$0xff]
    %v1670 = vld [vmem:[#allocation4 + $0x90] sm:$0xff]
    %v1671 = vld [vmem:[#allocation4 + $0x98] sm:$0xff]
    %v1672 = vld [vmem:[#allocation4 + $0xa0] sm:$0xff]
    %v1673 = vld [vmem:[#allocation4 + $0xa8] sm:$0xff]
    %v1674 = vld [vmem:[#allocation4 + $0xb0] sm:$0xff]
    %v1675 = vld [vmem:[#allocation4 + $0xb8] sm:$0xff]
    %v1676 = vld [vmem:[#allocation4 + $0xc0] sm:$0xff]
    %v1677 = vld [vmem:[#allocation4 + $0xc8] sm:$0xff]
    %v1678 = vld [vmem:[#allocation4 + $0xd0] sm:$0xff]
    %v1679 = vld [vmem:[#allocation4 + $0xd8] sm:$0xff]
    %v1680 = vld [vmem:[#allocation4 + $0xe0] sm:$0xff]
    %v1681 = vld [vmem:[#allocation4 + $0xe8] sm:$0xff]
    %v1682 = vld [vmem:[#allocation4 + $0xf0] sm:$0xff]
    %v1683 = vld [vmem:[#allocation4 + $0xf8] sm:$0xff]
    %v1684 = vld [vmem:[#allocation4 + $0x100] sm:$0xff]
    %v1685 = vld [vmem:[#allocation4 + $0x108] sm:$0xff]
    %v1686 = vld [vmem:[#allocation4 + $0x110] sm:$0xff]
    %v1687 = vld [vmem:[#allocation4 + $0x118] sm:$0xff]
    %v1688 = vld [vmem:[#allocation4 + $0x120] sm:$0xff]
    %v1689 = vld [vmem:[#allocation4 + $0x128] sm:$0xff]
    %v1690 = vld [vmem:[#allocation4 + $0x130] sm:$0xff]
    %v1691 = vld [vmem:[#allocation4 + $0x138] sm:$0xff]
    %v1692 = vld [vmem:[#allocation4 + $0x140] sm:$0xff]
    %v1693 = vld [vmem:[#allocation4 + $0x148] sm:$0xff]
    %v1694 = vld [vmem:[#allocation4 + $0x150] sm:$0xff]
    %v1695 = vld [vmem:[#allocation4 + $0x158] sm:$0xff]
    %v1696 = vld [vmem:[#allocation4 + $0x160] sm:$0xff]
    %v1697 = vld [vmem:[#allocation4 + $0x168] sm:$0xff]
    %v1698 = vld [vmem:[#allocation4 + $0x170] sm:$0xff]
    %v1699 = vld [vmem:[#allocation4 + $0x178] sm:$0xff]
    %v1700 = vld [vmem:[#allocation4 + $0x180] sm:$0xff]
    %v1701 = vld [vmem:[#allocation4 + $0x188] sm:$0xff]
    %v1702 = vld [vmem:[#allocation4 + $0x190] sm:$0xff]
    %v1703 = vld [vmem:[#allocation4 + $0x198] sm:$0xff]
    %v1704 = vld [vmem:[#allocation4 + $0x1a0] sm:$0xff]
    %v1705 = vld [vmem:[#allocation4 + $0x1a8] sm:$0xff]
    %v1706 = vld [vmem:[#allocation4 + $0x1b0] sm:$0xff]
    %v1707 = vld [vmem:[#allocation4 + $0x1b8] sm:$0xff]
    %v1708 = vld [vmem:[#allocation4 + $0x1c0] sm:$0xff]
    %v1709 = vld [vmem:[#allocation4 + $0x1c8] sm:$0xff]
    %v1710 = vld [vmem:[#allocation4 + $0x1d0] sm:$0xff]
    %v1711 = vld [vmem:[#allocation4 + $0x1d8] sm:$0xff]
    %v1712 = vld [vmem:[#allocation4 + $0x1e0] sm:$0xff]
    %v1713 = vld [vmem:[#allocation4 + $0x1e8] sm:$0xff]
    %v1714 = vld [vmem:[#allocation4 + $0x1f0] sm:$0xff]
    %v1715 = vld [vmem:[#allocation4 + $0x1f8] sm:$0xff]
    %1716 = vmatprep.subr.mxu0 %v1653
    %1717 = vmatpush1.msra.mxu0 %v1652
    %1718 = vmatprep.subr.mxu0 %v1657
    %1719 = vmatpush1.msra.mxu0 %v1656
    %1720 = vmatprep.subr.mxu0 %v1661
    %1721 = vmatpush1.msra.mxu0 %v1660
    %1722 = vmatprep.subr.mxu0 %v1665
    %1723 = vmatpush1.msra.mxu0 %v1664
    %1724 = vmatprep.subr.mxu0 %v1669
    %1725 = vmatpush1.msra.mxu0 %v1668
    %1726 = vmatprep.subr.mxu0 %v1673
    %1727 = vmatpush1.msra.mxu0 %v1672
    %1728 = vmatprep.subr.mxu0 %v1677
    %1729 = vmatpush1.msra.mxu0 %v1676
    %1730 = vmatprep.subr.mxu0 %v1681
    %1731 = vmatpush1.msra.mxu0 %v1680
    %1732 = vmatprep.subr.mxu0 %v1685
    %1733 = vmatpush1.msra.mxu0 %v1684
    %1734 = vmatprep.subr.mxu0 %v1689
    %1735 = vmatpush1.msra.mxu0 %v1688
    %1736 = vmatprep.subr.mxu0 %v1693
    %1737 = vmatpush1.msra.mxu0 %v1692
    %1738 = vmatprep.subr.mxu0 %v1697
    %1739 = vmatpush1.msra.mxu0 %v1696
    %1740 = vmatprep.subr.mxu0 %v1701
    %1741 = vmatpush1.msra.mxu0 %v1700
    %1742 = vmatprep.subr.mxu0 %v1705
    %1743 = vmatpush1.msra.mxu0 %v1704
    %1744 = vmatprep.subr.mxu0 %v1709
    %1745 = vmatpush1.msra.mxu0 %v1708
    %1746 = vmatprep.subr.mxu0 %v1713
    %1747 = vmatpush1.msra.mxu0 %v1712
    %1748 = vmatprep.subr.mxu0 0.0
    %1749 = vmatpush1.msra.mxu0 0.0
    %1750 = vmatprep.subr.mxu0 0.0
    %1751 = vmatpush1.msra.mxu0 0.0
    %1752 = vmatprep.subr.mxu0 0.0
    %1753 = vmatpush1.msra.mxu0 0.0
    %1754 = vmatprep.subr.mxu0 0.0
    %1755 = vmatpush1.msra.mxu0 0.0
    %1756 = vmatprep.subr.mxu0 0.0
    %1757 = vmatpush1.msra.mxu0 0.0
    %1758 = vmatprep.subr.mxu0 0.0
    %1759 = vmatpush1.msra.mxu0 0.0
    %1760 = vmatprep.subr.mxu0 0.0
    %1761 = vmatpush1.msra.mxu0 0.0
    %1762 = vmatprep.subr.mxu0 0.0
    %1763 = vmatpush1.msra.mxu0 0.0
    %1764 = vmatprep.subr.mxu0 0.0
    %1765 = vmatpush1.msra.mxu0 0.0
    %1766 = vmatprep.subr.mxu0 0.0
    %1767 = vmatpush1.msra.mxu0 0.0
    %1768 = vmatprep.subr.mxu0 0.0
    %1769 = vmatpush1.msra.mxu0 0.0
    %1770 = vmatprep.subr.mxu0 0.0
    %1771 = vmatpush1.msra.mxu0 0.0
    %1772 = vmatprep.subr.mxu0 0.0
    %1773 = vmatpush1.msra.mxu0 0.0
    %1774 = vmatprep.subr.mxu0 0.0
    %1775 = vmatpush1.msra.mxu0 0.0
    %1776 = vmatprep.subr.mxu0 0.0
    %1777 = vmatpush1.msra.mxu0 0.0
    %1778 = vmatprep.subr.mxu0 0.0
    %1779 = vmatpush1.msra.mxu0 0.0
    %1780 = vmatprep.mubr.f32.mxu0 0.0
    %1781 = vmatmul.mubr.f32.gmra.mrb[0].mxu0 %v1644
    %v1782 = vpop.f32.mrb[0].mxu0
    %v1783 = vadd.f32 0.0, %v1782
    %v1784 = vpop.f32.mrb[0].mxu0
    %v1785 = vadd.f32 0.0, %v1784
    %1786 = vdwg.mxu0
    %1787 = vmatprep.subr.mxu0 %v1655
    %1788 = vmatpush1.msra.mxu0 %v1654
    %1789 = vmatprep.subr.mxu0 %v1659
    %1790 = vmatpush1.msra.mxu0 %v1658
    %1791 = vmatprep.subr.mxu0 %v1663
    %1792 = vmatpush1.msra.mxu0 %v1662
    %1793 = vmatprep.subr.mxu0 %v1667
    %1794 = vmatpush1.msra.mxu0 %v1666
    %1795 = vmatprep.subr.mxu0 %v1671
    %1796 = vmatpush1.msra.mxu0 %v1670
    %1797 = vmatprep.subr.mxu0 %v1675
    %1798 = vmatpush1.msra.mxu0 %v1674
    %1799 = vmatprep.subr.mxu0 %v1679
    %1800 = vmatpush1.msra.mxu0 %v1678
    %1801 = vmatprep.subr.mxu0 %v1683
    %1802 = vmatpush1.msra.mxu0 %v1682
    %1803 = vmatprep.subr.mxu0 %v1687
    %1804 = vmatpush1.msra.mxu0 %v1686
    %1805 = vmatprep.subr.mxu0 %v1691
    %1806 = vmatpush1.msra.mxu0 %v1690
    %1807 = vmatprep.subr.mxu0 %v1695
    %1808 = vmatpush1.msra.mxu0 %v1694
    %1809 = vmatprep.subr.mxu0 %v1699
    %1810 = vmatpush1.msra.mxu0 %v1698
    %1811 = vmatprep.subr.mxu0 %v1703
    %1812 = vmatpush1.msra.mxu0 %v1702
    %1813 = vmatprep.subr.mxu0 %v1707
    %1814 = vmatpush1.msra.mxu0 %v1706
    %1815 = vmatprep.subr.mxu0 %v1711
    %1816 = vmatpush1.msra.mxu0 %v1710
    %1817 = vmatprep.subr.mxu0 %v1715
    %1818 = vmatpush1.msra.mxu0 %v1714
    %1819 = vmatprep.subr.mxu0 0.0
    %1820 = vmatpush1.msra.mxu0 0.0
    %1821 = vmatprep.subr.mxu0 0.0
    %1822 = vmatpush1.msra.mxu0 0.0
    %1823 = vmatprep.subr.mxu0 0.0
    %1824 = vmatpush1.msra.mxu0 0.0
    %1825 = vmatprep.subr.mxu0 0.0
    %1826 = vmatpush1.msra.mxu0 0.0
    %1827 = vmatprep.subr.mxu0 0.0
    %1828 = vmatpush1.msra.mxu0 0.0
    %1829 = vmatprep.subr.mxu0 0.0
    %1830 = vmatpush1.msra.mxu0 0.0
    %1831 = vmatprep.subr.mxu0 0.0
    %1832 = vmatpush1.msra.mxu0 0.0
    %1833 = vmatprep.subr.mxu0 0.0
    %1834 = vmatpush1.msra.mxu0 0.0
    %1835 = vmatprep.subr.mxu0 0.0
    %1836 = vmatpush1.msra.mxu0 0.0
    %1837 = vmatprep.subr.mxu0 0.0
    %1838 = vmatpush1.msra.mxu0 0.0
    %1839 = vmatprep.subr.mxu0 0.0
    %1840 = vmatpush1.msra.mxu0 0.0
    %1841 = vmatprep.subr.mxu0 0.0
    %1842 = vmatpush1.msra.mxu0 0.0
    %1843 = vmatprep.subr.mxu0 0.0
    %1844 = vmatpush1.msra.mxu0 0.0
    %1845 = vmatprep.subr.mxu0 0.0
    %1846 = vmatpush1.msra.mxu0 0.0
    %1847 = vmatprep.subr.mxu0 0.0
    %1848 = vmatpush1.msra.mxu0 0.0
    %1849 = vmatprep.subr.mxu0 0.0
    %1850 = vmatpush1.msra.mxu0 0.0
    %1851 = vmatprep.mubr.f32.mxu0 0.0
    %1852 = vmatmul.mubr.f32.gmra.mrb[0].mxu0 %v1644
    %v1853 = vpop.f32.mrb[0].mxu0
    %v1854 = vadd.f32 0.0, %v1853
    %v1855 = vpop.f32.mrb[0].mxu0
    %v1856 = vadd.f32 0.0, %v1855
    %1857 = vdwg.mxu0
    %v1858 = vadd.f32 %v1648, %v1783
    %v1859 = vadd.f32 %v1649, %v1785
    %v1860 = vadd.f32 %v1650, %v1854
    %v1861 = vadd.f32 %v1651, %v1856
    %v1862 = vxor.u32 %v1858, 2147483648
    %v1863 = vmul.f32 %v1862, 1.442695
    %v1864 = vpow.pop %v1863
    %v1865 = vadd.f32 %v1864, 1.0
    %v1866 = vrcp.pop %v1865
    %v1867 = vmul.f32 1.0, %v1866
    %v1868 = vxor.u32 %v1859, 2147483648
    %v1869 = vmul.f32 %v1868, 1.442695
    %v1870 = vpow.pop %v1869
    %v1871 = vadd.f32 %v1870, 1.0
    %v1872 = vrcp.pop %v1871
    %v1873 = vmul.f32 1.0, %v1872
    %v1874 = vtanh.pop %v1860
    %v1875 = vxor.u32 %v1861, 2147483648
    %v1876 = vmul.f32 %v1875, 1.442695
    %v1877 = vpow.pop %v1876
    %v1878 = vadd.f32 %v1877, 1.0
    %v1879 = vrcp.pop %v1878
    %v1880 = vmul.f32 1.0, %v1879
    %v1881 = vmul.f32 %v1873, %v1642
    %v1882 = vmul.f32 %v1867, %v1874
    %v1883 = vadd.f32 %v1881, %v1882
    %v1884 = vtanh.pop %v1883
    %v1885 = vmul.f32 %v1880, %v1884
    %s1886 = scalar_lea.vmem [#allocation12], 40
    %1887 = vst [vmem:[%s1886] sm:$0xff] %v1885
    %s1888 = scalar_lea.vmem [#allocation7], 192
    %v1889 = vld [vmem:[%s1888] sm:$0xff]
    %v1890 = vld [vmem:[%s1888 + $0x8] sm:$0xff]
    %v1891 = vld [vmem:[%s1888 + $0x10] sm:$0xff]
    %v1892 = vld [vmem:[%s1888 + $0x18] sm:$0xff]
    %v1893 = vld [vmem:[#allocation4] sm:$0xff]
    %v1894 = vld [vmem:[#allocation4 + $0x8] sm:$0xff]
    %v1895 = vld [vmem:[#allocation4 + $0x10] sm:$0xff]
    %v1896 = vld [vmem:[#allocation4 + $0x18] sm:$0xff]
    %v1897 = vld [vmem:[#allocation4 + $0x20] sm:$0xff]
    %v1898 = vld [vmem:[#allocation4 + $0x28] sm:$0xff]
    %v1899 = vld [vmem:[#allocation4 + $0x30] sm:$0xff]
    %v1900 = vld [vmem:[#allocation4 + $0x38] sm:$0xff]
    %v1901 = vld [vmem:[#allocation4 + $0x40] sm:$0xff]
    %v1902 = vld [vmem:[#allocation4 + $0x48] sm:$0xff]
    %v1903 = vld [vmem:[#allocation4 + $0x50] sm:$0xff]
    %v1904 = vld [vmem:[#allocation4 + $0x58] sm:$0xff]
    %v1905 = vld [vmem:[#allocation4 + $0x60] sm:$0xff]
    %v1906 = vld [vmem:[#allocation4 + $0x68] sm:$0xff]
    %v1907 = vld [vmem:[#allocation4 + $0x70] sm:$0xff]
    %v1908 = vld [vmem:[#allocation4 + $0x78] sm:$0xff]
    %v1909 = vld [vmem:[#allocation4 + $0x80] sm:$0xff]
    %v1910 = vld [vmem:[#allocation4 + $0x88] sm:$0xff]
    %v1911 = vld [vmem:[#allocation4 + $0x90] sm:$0xff]
    %v1912 = vld [vmem:[#allocation4 + $0x98] sm:$0xff]
    %v1913 = vld [vmem:[#allocation4 + $0xa0] sm:$0xff]
    %v1914 = vld [vmem:[#allocation4 + $0xa8] sm:$0xff]
    %v1915 = vld [vmem:[#allocation4 + $0xb0] sm:$0xff]
    %v1916 = vld [vmem:[#allocation4 + $0xb8] sm:$0xff]
    %v1917 = vld [vmem:[#allocation4 + $0xc0] sm:$0xff]
    %v1918 = vld [vmem:[#allocation4 + $0xc8] sm:$0xff]
    %v1919 = vld [vmem:[#allocation4 + $0xd0] sm:$0xff]
    %v1920 = vld [vmem:[#allocation4 + $0xd8] sm:$0xff]
    %v1921 = vld [vmem:[#allocation4 + $0xe0] sm:$0xff]
    %v1922 = vld [vmem:[#allocation4 + $0xe8] sm:$0xff]
    %v1923 = vld [vmem:[#allocation4 + $0xf0] sm:$0xff]
    %v1924 = vld [vmem:[#allocation4 + $0xf8] sm:$0xff]
    %v1925 = vld [vmem:[#allocation4 + $0x100] sm:$0xff]
    %v1926 = vld [vmem:[#allocation4 + $0x108] sm:$0xff]
    %v1927 = vld [vmem:[#allocation4 + $0x110] sm:$0xff]
    %v1928 = vld [vmem:[#allocation4 + $0x118] sm:$0xff]
    %v1929 = vld [vmem:[#allocation4 + $0x120] sm:$0xff]
    %v1930 = vld [vmem:[#allocation4 + $0x128] sm:$0xff]
    %v1931 = vld [vmem:[#allocation4 + $0x130] sm:$0xff]
    %v1932 = vld [vmem:[#allocation4 + $0x138] sm:$0xff]
    %v1933 = vld [vmem:[#allocation4 + $0x140] sm:$0xff]
    %v1934 = vld [vmem:[#allocation4 + $0x148] sm:$0xff]
    %v1935 = vld [vmem:[#allocation4 + $0x150] sm:$0xff]
    %v1936 = vld [vmem:[#allocation4 + $0x158] sm:$0xff]
    %v1937 = vld [vmem:[#allocation4 + $0x160] sm:$0xff]
    %v1938 = vld [vmem:[#allocation4 + $0x168] sm:$0xff]
    %v1939 = vld [vmem:[#allocation4 + $0x170] sm:$0xff]
    %v1940 = vld [vmem:[#allocation4 + $0x178] sm:$0xff]
    %v1941 = vld [vmem:[#allocation4 + $0x180] sm:$0xff]
    %v1942 = vld [vmem:[#allocation4 + $0x188] sm:$0xff]
    %v1943 = vld [vmem:[#allocation4 + $0x190] sm:$0xff]
    %v1944 = vld [vmem:[#allocation4 + $0x198] sm:$0xff]
    %v1945 = vld [vmem:[#allocation4 + $0x1a0] sm:$0xff]
    %v1946 = vld [vmem:[#allocation4 + $0x1a8] sm:$0xff]
    %v1947 = vld [vmem:[#allocation4 + $0x1b0] sm:$0xff]
    %v1948 = vld [vmem:[#allocation4 + $0x1b8] sm:$0xff]
    %v1949 = vld [vmem:[#allocation4 + $0x1c0] sm:$0xff]
    %v1950 = vld [vmem:[#allocation4 + $0x1c8] sm:$0xff]
    %v1951 = vld [vmem:[#allocation4 + $0x1d0] sm:$0xff]
    %v1952 = vld [vmem:[#allocation4 + $0x1d8] sm:$0xff]
    %v1953 = vld [vmem:[#allocation4 + $0x1e0] sm:$0xff]
    %v1954 = vld [vmem:[#allocation4 + $0x1e8] sm:$0xff]
    %v1955 = vld [vmem:[#allocation4 + $0x1f0] sm:$0xff]
    %v1956 = vld [vmem:[#allocation4 + $0x1f8] sm:$0xff]
    %1957 = vmatprep.subr.mxu0 %v1894
    %1958 = vmatpush1.msra.mxu0 %v1893
    %1959 = vmatprep.subr.mxu0 %v1898
    %1960 = vmatpush1.msra.mxu0 %v1897
    %1961 = vmatprep.subr.mxu0 %v1902
    %1962 = vmatpush1.msra.mxu0 %v1901
    %1963 = vmatprep.subr.mxu0 %v1906
    %1964 = vmatpush1.msra.mxu0 %v1905
    %1965 = vmatprep.subr.mxu0 %v1910
    %1966 = vmatpush1.msra.mxu0 %v1909
    %1967 = vmatprep.subr.mxu0 %v1914
    %1968 = vmatpush1.msra.mxu0 %v1913
    %1969 = vmatprep.subr.mxu0 %v1918
    %1970 = vmatpush1.msra.mxu0 %v1917
    %1971 = vmatprep.subr.mxu0 %v1922
    %1972 = vmatpush1.msra.mxu0 %v1921
    %1973 = vmatprep.subr.mxu0 %v1926
    %1974 = vmatpush1.msra.mxu0 %v1925
    %1975 = vmatprep.subr.mxu0 %v1930
    %1976 = vmatpush1.msra.mxu0 %v1929
    %1977 = vmatprep.subr.mxu0 %v1934
    %1978 = vmatpush1.msra.mxu0 %v1933
    %1979 = vmatprep.subr.mxu0 %v1938
    %1980 = vmatpush1.msra.mxu0 %v1937
    %1981 = vmatprep.subr.mxu0 %v1942
    %1982 = vmatpush1.msra.mxu0 %v1941
    %1983 = vmatprep.subr.mxu0 %v1946
    %1984 = vmatpush1.msra.mxu0 %v1945
    %1985 = vmatprep.subr.mxu0 %v1950
    %1986 = vmatpush1.msra.mxu0 %v1949
    %1987 = vmatprep.subr.mxu0 %v1954
    %1988 = vmatpush1.msra.mxu0 %v1953
    %1989 = vmatprep.subr.mxu0 0.0
    %1990 = vmatpush1.msra.mxu0 0.0
    %1991 = vmatprep.subr.mxu0 0.0
    %1992 = vmatpush1.msra.mxu0 0.0
    %1993 = vmatprep.subr.mxu0 0.0
    %1994 = vmatpush1.msra.mxu0 0.0
    %1995 = vmatprep.subr.mxu0 0.0
    %1996 = vmatpush1.msra.mxu0 0.0
    %1997 = vmatprep.subr.mxu0 0.0
    %1998 = vmatpush1.msra.mxu0 0.0
    %1999 = vmatprep.subr.mxu0 0.0
    %2000 = vmatpush1.msra.mxu0 0.0
    %2001 = vmatprep.subr.mxu0 0.0
    %2002 = vmatpush1.msra.mxu0 0.0
    %2003 = vmatprep.subr.mxu0 0.0
    %2004 = vmatpush1.msra.mxu0 0.0
    %2005 = vmatprep.subr.mxu0 0.0
    %2006 = vmatpush1.msra.mxu0 0.0
    %2007 = vmatprep.subr.mxu0 0.0
    %2008 = vmatpush1.msra.mxu0 0.0
    %2009 = vmatprep.subr.mxu0 0.0
    %2010 = vmatpush1.msra.mxu0 0.0
    %2011 = vmatprep.subr.mxu0 0.0
    %2012 = vmatpush1.msra.mxu0 0.0
    %2013 = vmatprep.subr.mxu0 0.0
    %2014 = vmatpush1.msra.mxu0 0.0
    %2015 = vmatprep.subr.mxu0 0.0
    %2016 = vmatpush1.msra.mxu0 0.0
    %2017 = vmatprep.subr.mxu0 0.0
    %2018 = vmatpush1.msra.mxu0 0.0
    %2019 = vmatprep.subr.mxu0 0.0
    %2020 = vmatpush1.msra.mxu0 0.0
    %2021 = vmatprep.mubr.f32.mxu0 0.0
    %2022 = vmatmul.mubr.f32.gmra.mrb[0].mxu0 %v1885
    %v2023 = vpop.f32.mrb[0].mxu0
    %v2024 = vadd.f32 0.0, %v2023
    %v2025 = vpop.f32.mrb[0].mxu0
    %v2026 = vadd.f32 0.0, %v2025
    %2027 = vdwg.mxu0
    %2028 = vmatprep.subr.mxu0 %v1896
    %2029 = vmatpush1.msra.mxu0 %v1895
    %2030 = vmatprep.subr.mxu0 %v1900
    %2031 = vmatpush1.msra.mxu0 %v1899
    %2032 = vmatprep.subr.mxu0 %v1904
    %2033 = vmatpush1.msra.mxu0 %v1903
    %2034 = vmatprep.subr.mxu0 %v1908
    %2035 = vmatpush1.msra.mxu0 %v1907
    %2036 = vmatprep.subr.mxu0 %v1912
    %2037 = vmatpush1.msra.mxu0 %v1911
    %2038 = vmatprep.subr.mxu0 %v1916
    %2039 = vmatpush1.msra.mxu0 %v1915
    %2040 = vmatprep.subr.mxu0 %v1920
    %2041 = vmatpush1.msra.mxu0 %v1919
    %2042 = vmatprep.subr.mxu0 %v1924
    %2043 = vmatpush1.msra.mxu0 %v1923
    %2044 = vmatprep.subr.mxu0 %v1928
    %2045 = vmatpush1.msra.mxu0 %v1927
    %2046 = vmatprep.subr.mxu0 %v1932
    %2047 = vmatpush1.msra.mxu0 %v1931
    %2048 = vmatprep.subr.mxu0 %v1936
    %2049 = vmatpush1.msra.mxu0 %v1935
    %2050 = vmatprep.subr.mxu0 %v1940
    %2051 = vmatpush1.msra.mxu0 %v1939
    %2052 = vmatprep.subr.mxu0 %v1944
    %2053 = vmatpush1.msra.mxu0 %v1943
    %2054 = vmatprep.subr.mxu0 %v1948
    %2055 = vmatpush1.msra.mxu0 %v1947
    %2056 = vmatprep.subr.mxu0 %v1952
    %2057 = vmatpush1.msra.mxu0 %v1951
    %2058 = vmatprep.subr.mxu0 %v1956
    %2059 = vmatpush1.msra.mxu0 %v1955
    %2060 = vmatprep.subr.mxu0 0.0
    %2061 = vmatpush1.msra.mxu0 0.0
    %2062 = vmatprep.subr.mxu0 0.0
    %2063 = vmatpush1.msra.mxu0 0.0
    %2064 = vmatprep.subr.mxu0 0.0
    %2065 = vmatpush1.msra.mxu0 0.0
    %2066 = vmatprep.subr.mxu0 0.0
    %2067 = vmatpush1.msra.mxu0 0.0
    %2068 = vmatprep.subr.mxu0 0.0
    %2069 = vmatpush1.msra.mxu0 0.0
    %2070 = vmatprep.subr.mxu0 0.0
    %2071 = vmatpush1.msra.mxu0 0.0
    %2072 = vmatprep.subr.mxu0 0.0
    %2073 = vmatpush1.msra.mxu0 0.0
    %2074 = vmatprep.subr.mxu0 0.0
    %2075 = vmatpush1.msra.mxu0 0.0
    %2076 = vmatprep.subr.mxu0 0.0
    %2077 = vmatpush1.msra.mxu0 0.0
    %2078 = vmatprep.subr.mxu0 0.0
    %2079 = vmatpush1.msra.mxu0 0.0
    %2080 = vmatprep.subr.mxu0 0.0
    %2081 = vmatpush1.msra.mxu0 0.0
    %2082 = vmatprep.subr.mxu0 0.0
    %2083 = vmatpush1.msra.mxu0 0.0
    %2084 = vmatprep.subr.mxu0 0.0
    %2085 = vmatpush1.msra.mxu0 0.0
    %2086 = vmatprep.subr.mxu0 0.0
    %2087 = vmatpush1.msra.mxu0 0.0
    %2088 = vmatprep.subr.mxu0 0.0
    %2089 = vmatpush1.msra.mxu0 0.0
    %2090 = vmatprep.subr.mxu0 0.0
    %2091 = vmatpush1.msra.mxu0 0.0
    %2092 = vmatprep.mubr.f32.mxu0 0.0
    %2093 = vmatmul.mubr.f32.gmra.mrb[0].mxu0 %v1885
    %v2094 = vpop.f32.mrb[0].mxu0
    %v2095 = vadd.f32 0.0, %v2094
    %v2096 = vpop.f32.mrb[0].mxu0
    %v2097 = vadd.f32 0.0, %v2096
    %2098 = vdwg.mxu0
    %v2099 = vadd.f32 %v1889, %v2024
    %v2100 = vadd.f32 %v1890, %v2026
    %v2101 = vadd.f32 %v1891, %v2095
    %v2102 = vadd.f32 %v1892, %v2097
    %v2103 = vxor.u32 %v2099, 2147483648
    %v2104 = vmul.f32 %v2103, 1.442695
    %v2105 = vpow.pop %v2104
    %v2106 = vadd.f32 %v2105, 1.0
    %v2107 = vrcp.pop %v2106
    %v2108 = vmul.f32 1.0, %v2107
    %v2109 = vxor.u32 %v2100, 2147483648
    %v2110 = vmul.f32 %v2109, 1.442695
    %v2111 = vpow.pop %v2110
    %v2112 = vadd.f32 %v2111, 1.0
    %v2113 = vrcp.pop %v2112
    %v2114 = vmul.f32 1.0, %v2113
    %v2115 = vtanh.pop %v2101
    %v2116 = vxor.u32 %v2102, 2147483648
    %v2117 = vmul.f32 %v2116, 1.442695
    %v2118 = vpow.pop %v2117
    %v2119 = vadd.f32 %v2118, 1.0
    %v2120 = vrcp.pop %v2119
    %v2121 = vmul.f32 1.0, %v2120
    %v2122 = vmul.f32 %v2114, %v1883
    %v2123 = vmul.f32 %v2108, %v2115
    %v2124 = vadd.f32 %v2122, %v2123
    %v2125 = vtanh.pop %v2124
    %v2126 = vmul.f32 %v2121, %v2125
    %s2127 = scalar_lea.vmem [#allocation12], 48
    %2128 = vst [vmem:[%s2127] sm:$0xff] %v2126
    %s2129 = scalar_lea.vmem [#allocation7], 224
    %v2130 = vld [vmem:[%s2129] sm:$0xff]
    %v2131 = vld [vmem:[%s2129 + $0x8] sm:$0xff]
    %v2132 = vld [vmem:[%s2129 + $0x10] sm:$0xff]
    %v2133 = vld [vmem:[%s2129 + $0x18] sm:$0xff]
    %v2134 = vld [vmem:[#allocation4] sm:$0xff]
    %v2135 = vld [vmem:[#allocation4 + $0x8] sm:$0xff]
    %v2136 = vld [vmem:[#allocation4 + $0x10] sm:$0xff]
    %v2137 = vld [vmem:[#allocation4 + $0x18] sm:$0xff]
    %v2138 = vld [vmem:[#allocation4 + $0x20] sm:$0xff]
    %v2139 = vld [vmem:[#allocation4 + $0x28] sm:$0xff]
    %v2140 = vld [vmem:[#allocation4 + $0x30] sm:$0xff]
    %v2141 = vld [vmem:[#allocation4 + $0x38] sm:$0xff]
    %v2142 = vld [vmem:[#allocation4 + $0x40] sm:$0xff]
    %v2143 = vld [vmem:[#allocation4 + $0x48] sm:$0xff]
    %v2144 = vld [vmem:[#allocation4 + $0x50] sm:$0xff]
    %v2145 = vld [vmem:[#allocation4 + $0x58] sm:$0xff]
    %v2146 = vld [vmem:[#allocation4 + $0x60] sm:$0xff]
    %v2147 = vld [vmem:[#allocation4 + $0x68] sm:$0xff]
    %v2148 = vld [vmem:[#allocation4 + $0x70] sm:$0xff]
    %v2149 = vld [vmem:[#allocation4 + $0x78] sm:$0xff]
    %v2150 = vld [vmem:[#allocation4 + $0x80] sm:$0xff]
    %v2151 = vld [vmem:[#allocation4 + $0x88] sm:$0xff]
    %v2152 = vld [vmem:[#allocation4 + $0x90] sm:$0xff]
    %v2153 = vld [vmem:[#allocation4 + $0x98] sm:$0xff]
    %v2154 = vld [vmem:[#allocation4 + $0xa0] sm:$0xff]
    %v2155 = vld [vmem:[#allocation4 + $0xa8] sm:$0xff]
    %v2156 = vld [vmem:[#allocation4 + $0xb0] sm:$0xff]
    %v2157 = vld [vmem:[#allocation4 + $0xb8] sm:$0xff]
    %v2158 = vld [vmem:[#allocation4 + $0xc0] sm:$0xff]
    %v2159 = vld [vmem:[#allocation4 + $0xc8] sm:$0xff]
    %v2160 = vld [vmem:[#allocation4 + $0xd0] sm:$0xff]
    %v2161 = vld [vmem:[#allocation4 + $0xd8] sm:$0xff]
    %v2162 = vld [vmem:[#allocation4 + $0xe0] sm:$0xff]
    %v2163 = vld [vmem:[#allocation4 + $0xe8] sm:$0xff]
    %v2164 = vld [vmem:[#allocation4 + $0xf0] sm:$0xff]
    %v2165 = vld [vmem:[#allocation4 + $0xf8] sm:$0xff]
    %v2166 = vld [vmem:[#allocation4 + $0x100] sm:$0xff]
    %v2167 = vld [vmem:[#allocation4 + $0x108] sm:$0xff]
    %v2168 = vld [vmem:[#allocation4 + $0x110] sm:$0xff]
    %v2169 = vld [vmem:[#allocation4 + $0x118] sm:$0xff]
    %v2170 = vld [vmem:[#allocation4 + $0x120] sm:$0xff]
    %v2171 = vld [vmem:[#allocation4 + $0x128] sm:$0xff]
    %v2172 = vld [vmem:[#allocation4 + $0x130] sm:$0xff]
    %v2173 = vld [vmem:[#allocation4 + $0x138] sm:$0xff]
    %v2174 = vld [vmem:[#allocation4 + $0x140] sm:$0xff]
    %v2175 = vld [vmem:[#allocation4 + $0x148] sm:$0xff]
    %v2176 = vld [vmem:[#allocation4 + $0x150] sm:$0xff]
    %v2177 = vld [vmem:[#allocation4 + $0x158] sm:$0xff]
    %v2178 = vld [vmem:[#allocation4 + $0x160] sm:$0xff]
    %v2179 = vld [vmem:[#allocation4 + $0x168] sm:$0xff]
    %v2180 = vld [vmem:[#allocation4 + $0x170] sm:$0xff]
    %v2181 = vld [vmem:[#allocation4 + $0x178] sm:$0xff]
    %v2182 = vld [vmem:[#allocation4 + $0x180] sm:$0xff]
    %v2183 = vld [vmem:[#allocation4 + $0x188] sm:$0xff]
    %v2184 = vld [vmem:[#allocation4 + $0x190] sm:$0xff]
    %v2185 = vld [vmem:[#allocation4 + $0x198] sm:$0xff]
    %v2186 = vld [vmem:[#allocation4 + $0x1a0] sm:$0xff]
    %v2187 = vld [vmem:[#allocation4 + $0x1a8] sm:$0xff]
    %v2188 = vld [vmem:[#allocation4 + $0x1b0] sm:$0xff]
    %v2189 = vld [vmem:[#allocation4 + $0x1b8] sm:$0xff]
    %v2190 = vld [vmem:[#allocation4 + $0x1c0] sm:$0xff]
    %v2191 = vld [vmem:[#allocation4 + $0x1c8] sm:$0xff]
    %v2192 = vld [vmem:[#allocation4 + $0x1d0] sm:$0xff]
    %v2193 = vld [vmem:[#allocation4 + $0x1d8] sm:$0xff]
    %v2194 = vld [vmem:[#allocation4 + $0x1e0] sm:$0xff]
    %v2195 = vld [vmem:[#allocation4 + $0x1e8] sm:$0xff]
    %v2196 = vld [vmem:[#allocation4 + $0x1f0] sm:$0xff]
    %v2197 = vld [vmem:[#allocation4 + $0x1f8] sm:$0xff]
    %2198 = vmatprep.subr.mxu0 %v2135
    %2199 = vmatpush1.msra.mxu0 %v2134
    %2200 = vmatprep.subr.mxu0 %v2139
    %2201 = vmatpush1.msra.mxu0 %v2138
    %2202 = vmatprep.subr.mxu0 %v2143
    %2203 = vmatpush1.msra.mxu0 %v2142
    %2204 = vmatprep.subr.mxu0 %v2147
    %2205 = vmatpush1.msra.mxu0 %v2146
    %2206 = vmatprep.subr.mxu0 %v2151
    %2207 = vmatpush1.msra.mxu0 %v2150
    %2208 = vmatprep.subr.mxu0 %v2155
    %2209 = vmatpush1.msra.mxu0 %v2154
    %2210 = vmatprep.subr.mxu0 %v2159
    %2211 = vmatpush1.msra.mxu0 %v2158
    %2212 = vmatprep.subr.mxu0 %v2163
    %2213 = vmatpush1.msra.mxu0 %v2162
    %2214 = vmatprep.subr.mxu0 %v2167
    %2215 = vmatpush1.msra.mxu0 %v2166
    %2216 = vmatprep.subr.mxu0 %v2171
    %2217 = vmatpush1.msra.mxu0 %v2170
    %2218 = vmatprep.subr.mxu0 %v2175
    %2219 = vmatpush1.msra.mxu0 %v2174
    %2220 = vmatprep.subr.mxu0 %v2179
    %2221 = vmatpush1.msra.mxu0 %v2178
    %2222 = vmatprep.subr.mxu0 %v2183
    %2223 = vmatpush1.msra.mxu0 %v2182
    %2224 = vmatprep.subr.mxu0 %v2187
    %2225 = vmatpush1.msra.mxu0 %v2186
    %2226 = vmatprep.subr.mxu0 %v2191
    %2227 = vmatpush1.msra.mxu0 %v2190
    %2228 = vmatprep.subr.mxu0 %v2195
    %2229 = vmatpush1.msra.mxu0 %v2194
    %2230 = vmatprep.subr.mxu0 0.0
    %2231 = vmatpush1.msra.mxu0 0.0
    %2232 = vmatprep.subr.mxu0 0.0
    %2233 = vmatpush1.msra.mxu0 0.0
    %2234 = vmatprep.subr.mxu0 0.0
    %2235 = vmatpush1.msra.mxu0 0.0
    %2236 = vmatprep.subr.mxu0 0.0
    %2237 = vmatpush1.msra.mxu0 0.0
    %2238 = vmatprep.subr.mxu0 0.0
    %2239 = vmatpush1.msra.mxu0 0.0
    %2240 = vmatprep.subr.mxu0 0.0
    %2241 = vmatpush1.msra.mxu0 0.0
    %2242 = vmatprep.subr.mxu0 0.0
    %2243 = vmatpush1.msra.mxu0 0.0
    %2244 = vmatprep.subr.mxu0 0.0
    %2245 = vmatpush1.msra.mxu0 0.0
    %2246 = vmatprep.subr.mxu0 0.0
    %2247 = vmatpush1.msra.mxu0 0.0
    %2248 = vmatprep.subr.mxu0 0.0
    %2249 = vmatpush1.msra.mxu0 0.0
    %2250 = vmatprep.subr.mxu0 0.0
    %2251 = vmatpush1.msra.mxu0 0.0
    %2252 = vmatprep.subr.mxu0 0.0
    %2253 = vmatpush1.msra.mxu0 0.0
    %2254 = vmatprep.subr.mxu0 0.0
    %2255 = vmatpush1.msra.mxu0 0.0
    %2256 = vmatprep.subr.mxu0 0.0
    %2257 = vmatpush1.msra.mxu0 0.0
    %2258 = vmatprep.subr.mxu0 0.0
    %2259 = vmatpush1.msra.mxu0 0.0
    %2260 = vmatprep.subr.mxu0 0.0
    %2261 = vmatpush1.msra.mxu0 0.0
    %2262 = vmatprep.mubr.f32.mxu0 0.0
    %2263 = vmatmul.mubr.f32.gmra.mrb[0].mxu0 %v2126
    %v2264 = vpop.f32.mrb[0].mxu0
    %v2265 = vadd.f32 0.0, %v2264
    %v2266 = vpop.f32.mrb[0].mxu0
    %v2267 = vadd.f32 0.0, %v2266
    %2268 = vdwg.mxu0
    %2269 = vmatprep.subr.mxu0 %v2137
    %2270 = vmatpush1.msra.mxu0 %v2136
    %2271 = vmatprep.subr.mxu0 %v2141
    %2272 = vmatpush1.msra.mxu0 %v2140
    %2273 = vmatprep.subr.mxu0 %v2145
    %2274 = vmatpush1.msra.mxu0 %v2144
    %2275 = vmatprep.subr.mxu0 %v2149
    %2276 = vmatpush1.msra.mxu0 %v2148
    %2277 = vmatprep.subr.mxu0 %v2153
    %2278 = vmatpush1.msra.mxu0 %v2152
    %2279 = vmatprep.subr.mxu0 %v2157
    %2280 = vmatpush1.msra.mxu0 %v2156
    %2281 = vmatprep.subr.mxu0 %v2161
    %2282 = vmatpush1.msra.mxu0 %v2160
    %2283 = vmatprep.subr.mxu0 %v2165
    %2284 = vmatpush1.msra.mxu0 %v2164
    %2285 = vmatprep.subr.mxu0 %v2169
    %2286 = vmatpush1.msra.mxu0 %v2168
    %2287 = vmatprep.subr.mxu0 %v2173
    %2288 = vmatpush1.msra.mxu0 %v2172
    %2289 = vmatprep.subr.mxu0 %v2177
    %2290 = vmatpush1.msra.mxu0 %v2176
    %2291 = vmatprep.subr.mxu0 %v2181
    %2292 = vmatpush1.msra.mxu0 %v2180
    %2293 = vmatprep.subr.mxu0 %v2185
    %2294 = vmatpush1.msra.mxu0 %v2184
    %2295 = vmatprep.subr.mxu0 %v2189
    %2296 = vmatpush1.msra.mxu0 %v2188
    %2297 = vmatprep.subr.mxu0 %v2193
    %2298 = vmatpush1.msra.mxu0 %v2192
    %2299 = vmatprep.subr.mxu0 %v2197
    %2300 = vmatpush1.msra.mxu0 %v2196
    %2301 = vmatprep.subr.mxu0 0.0
    %2302 = vmatpush1.msra.mxu0 0.0
    %2303 = vmatprep.subr.mxu0 0.0
    %2304 = vmatpush1.msra.mxu0 0.0
    %2305 = vmatprep.subr.mxu0 0.0
    %2306 = vmatpush1.msra.mxu0 0.0
    %2307 = vmatprep.subr.mxu0 0.0
    %2308 = vmatpush1.msra.mxu0 0.0
    %2309 = vmatprep.subr.mxu0 0.0
    %2310 = vmatpush1.msra.mxu0 0.0
    %2311 = vmatprep.subr.mxu0 0.0
    %2312 = vmatpush1.msra.mxu0 0.0
    %2313 = vmatprep.subr.mxu0 0.0
    %2314 = vmatpush1.msra.mxu0 0.0
    %2315 = vmatprep.subr.mxu0 0.0
    %2316 = vmatpush1.msra.mxu0 0.0
    %2317 = vmatprep.subr.mxu0 0.0
    %2318 = vmatpush1.msra.mxu0 0.0
    %2319 = vmatprep.subr.mxu0 0.0
    %2320 = vmatpush1.msra.mxu0 0.0
    %2321 = vmatprep.subr.mxu0 0.0
    %2322 = vmatpush1.msra.mxu0 0.0
    %2323 = vmatprep.subr.mxu0 0.0
    %2324 = vmatpush1.msra.mxu0 0.0
    %2325 = vmatprep.subr.mxu0 0.0
    %2326 = vmatpush1.msra.mxu0 0.0
    %2327 = vmatprep.subr.mxu0 0.0
    %2328 = vmatpush1.msra.mxu0 0.0
    %2329 = vmatprep.subr.mxu0 0.0
    %2330 = vmatpush1.msra.mxu0 0.0
    %2331 = vmatprep.subr.mxu0 0.0
    %2332 = vmatpush1.msra.mxu0 0.0
    %2333 = vmatprep.mubr.f32.mxu0 0.0
    %2334 = vmatmul.mubr.f32.gmra.mrb[0].mxu0 %v2126
    %v2335 = vpop.f32.mrb[0].mxu0
    %v2336 = vadd.f32 0.0, %v2335
    %v2337 = vpop.f32.mrb[0].mxu0
    %v2338 = vadd.f32 0.0, %v2337
    %2339 = vdwg.mxu0
    %v2340 = vadd.f32 %v2130, %v2265
    %v2341 = vadd.f32 %v2131, %v2267
    %v2342 = vadd.f32 %v2132, %v2336
    %v2343 = vadd.f32 %v2133, %v2338
    %v2344 = vxor.u32 %v2340, 2147483648
    %v2345 = vmul.f32 %v2344, 1.442695
    %v2346 = vpow.pop %v2345
    %v2347 = vadd.f32 %v2346, 1.0
    %v2348 = vrcp.pop %v2347
    %v2349 = vmul.f32 1.0, %v2348
    %v2350 = vxor.u32 %v2341, 2147483648
    %v2351 = vmul.f32 %v2350, 1.442695
    %v2352 = vpow.pop %v2351
    %v2353 = vadd.f32 %v2352, 1.0
    %v2354 = vrcp.pop %v2353
    %v2355 = vmul.f32 1.0, %v2354
    %v2356 = vtanh.pop %v2342
    %v2357 = vxor.u32 %v2343, 2147483648
    %v2358 = vmul.f32 %v2357, 1.442695
    %v2359 = vpow.pop %v2358
    %v2360 = vadd.f32 %v2359, 1.0
    %v2361 = vrcp.pop %v2360
    %v2362 = vmul.f32 1.0, %v2361
    %v2363 = vmul.f32 %v2355, %v2124
    %v2364 = vmul.f32 %v2349, %v2356
    %v2365 = vadd.f32 %v2363, %v2364
    %v2366 = vtanh.pop %v2365
    %v2367 = vmul.f32 %v2362, %v2366
    %s2368 = scalar_lea.vmem [#allocation12], 56
    %2369 = vst [vmem:[%s2368] sm:$0xff] %v2367
    %2370 = vst [vmem:[#allocation5] sm:$0xff] %v2367
    %2371 = vst [vmem:[#allocation6] sm:$0xff] %v2365
    %v2372 = vld [vmem:[#allocation12] sm:$0xff]
    %v2373 = vld [vmem:[#allocation12 + $0x8] sm:$0xff]
    %v2374 = vld [vmem:[#allocation12 + $0x10] sm:$0xff]
    %v2375 = vld [vmem:[#allocation12 + $0x18] sm:$0xff]
    %v2376 = vld [vmem:[#allocation12 + $0x20] sm:$0xff]
    %v2377 = vld [vmem:[#allocation12 + $0x28] sm:$0xff]
    %v2378 = vld [vmem:[#allocation12 + $0x30] sm:$0xff]
    %v2379 = vld [vmem:[#allocation12 + $0x38] sm:$0xff]
    %v2380 = vld [vmem:[#allocation3] sm:$0xff]
    %v2381 = vld [vmem:[#allocation3 + $0x8] sm:$0xff]
    %v2382 = vld [vmem:[#allocation3 + $0x10] sm:$0xff]
    %v2383 = vld [vmem:[#allocation3 + $0x18] sm:$0xff]
    %v2384 = vld [vmem:[#allocation3 + $0x20] sm:$0xff]
    %v2385 = vld [vmem:[#allocation3 + $0x28] sm:$0xff]
    %v2386 = vld [vmem:[#allocation3 + $0x30] sm:$0xff]
    %v2387 = vld [vmem:[#allocation3 + $0x38] sm:$0xff]
    %v2388 = vld [vmem:[#allocation3 + $0x40] sm:$0xff]
    %v2389 = vld [vmem:[#allocation3 + $0x48] sm:$0xff]
    %v2390 = vld [vmem:[#allocation3 + $0x50] sm:$0xff]
    %v2391 = vld [vmem:[#allocation3 + $0x58] sm:$0xff]
    %v2392 = vld [vmem:[#allocation3 + $0x60] sm:$0xff]
    %v2393 = vld [vmem:[#allocation3 + $0x68] sm:$0xff]
    %v2394 = vld [vmem:[#allocation3 + $0x70] sm:$0xff]
    %v2395 = vld [vmem:[#allocation3 + $0x78] sm:$0xff]
    %v2396 = vld [vmem:[#allocation3 + $0x80] sm:$0xff]
    %v2397 = vld [vmem:[#allocation3 + $0x88] sm:$0xff]
    %v2398 = vld [vmem:[#allocation3 + $0x90] sm:$0xff]
    %v2399 = vld [vmem:[#allocation3 + $0x98] sm:$0xff]
    %v2400 = vld [vmem:[#allocation3 + $0xa0] sm:$0xff]
    %v2401 = vld [vmem:[#allocation3 + $0xa8] sm:$0xff]
    %v2402 = vld [vmem:[#allocation3 + $0xb0] sm:$0xff]
    %v2403 = vld [vmem:[#allocation3 + $0xb8] sm:$0xff]
    %v2404 = vld [vmem:[#allocation3 + $0xc0] sm:$0xff]
    %v2405 = vld [vmem:[#allocation3 + $0xc8] sm:$0xff]
    %v2406 = vld [vmem:[#allocation3 + $0xd0] sm:$0xff]
    %v2407 = vld [vmem:[#allocation3 + $0xd8] sm:$0xff]
    %v2408 = vld [vmem:[#allocation3 + $0xe0] sm:$0xff]
    %v2409 = vld [vmem:[#allocation3 + $0xe8] sm:$0xff]
    %v2410 = vld [vmem:[#allocation3 + $0xf0] sm:$0xff]
    %v2411 = vld [vmem:[#allocation3 + $0xf8] sm:$0xff]
    %v2412 = vld [vmem:[#allocation3 + $0x100] sm:$0xff]
    %v2413 = vld [vmem:[#allocation3 + $0x108] sm:$0xff]
    %v2414 = vld [vmem:[#allocation3 + $0x110] sm:$0xff]
    %v2415 = vld [vmem:[#allocation3 + $0x118] sm:$0xff]
    %v2416 = vld [vmem:[#allocation3 + $0x120] sm:$0xff]
    %v2417 = vld [vmem:[#allocation3 + $0x128] sm:$0xff]
    %v2418 = vld [vmem:[#allocation3 + $0x130] sm:$0xff]
    %v2419 = vld [vmem:[#allocation3 + $0x138] sm:$0xff]
    %v2420 = vld [vmem:[#allocation3 + $0x140] sm:$0xff]
    %v2421 = vld [vmem:[#allocation3 + $0x148] sm:$0xff]
    %v2422 = vld [vmem:[#allocation3 + $0x150] sm:$0xff]
    %v2423 = vld [vmem:[#allocation3 + $0x158] sm:$0xff]
    %v2424 = vld [vmem:[#allocation3 + $0x160] sm:$0xff]
    %v2425 = vld [vmem:[#allocation3 + $0x168] sm:$0xff]
    %v2426 = vld [vmem:[#allocation3 + $0x170] sm:$0xff]
    %v2427 = vld [vmem:[#allocation3 + $0x178] sm:$0xff]
    %v2428 = vld [vmem:[#allocation3 + $0x180] sm:$0xff]
    %v2429 = vld [vmem:[#allocation3 + $0x188] sm:$0xff]
    %v2430 = vld [vmem:[#allocation3 + $0x190] sm:$0xff]
    %v2431 = vld [vmem:[#allocation3 + $0x198] sm:$0xff]
    %v2432 = vld [vmem:[#allocation3 + $0x1a0] sm:$0xff]
    %v2433 = vld [vmem:[#allocation3 + $0x1a8] sm:$0xff]
    %v2434 = vld [vmem:[#allocation3 + $0x1b0] sm:$0xff]
    %v2435 = vld [vmem:[#allocation3 + $0x1b8] sm:$0xff]
    %v2436 = vld [vmem:[#allocation3 + $0x1c0] sm:$0xff]
    %v2437 = vld [vmem:[#allocation3 + $0x1c8] sm:$0xff]
    %v2438 = vld [vmem:[#allocation3 + $0x1d0] sm:$0xff]
    %v2439 = vld [vmem:[#allocation3 + $0x1d8] sm:$0xff]
    %v2440 = vld [vmem:[#allocation3 + $0x1e0] sm:$0xff]
    %v2441 = vld [vmem:[#allocation3 + $0x1e8] sm:$0xff]
    %v2442 = vld [vmem:[#allocation3 + $0x1f0] sm:$0xff]
    %v2443 = vld [vmem:[#allocation3 + $0x1f8] sm:$0xff]
    %s2444 = scalar_lea.vmem %s4, 4
    %v2445 = vld [vmem:[%s2444] sm:$0xf]
    %v2447 = vlaneseq
    %v2448 = vshrl.u32 %v2447, 7
    %v2449 = vsub.s32 0, %v2448
    %v2450 = vrot.slane %v2445, %v2449
    %v2451 = vlaneseq
    %v2452 = vshrl.u32 %v2451, 7
    %v2453 = vsub.s32 1, %v2452
    %v2454 = vrot.slane %v2445, %v2453
    %v2455 = vlaneseq
    %v2456 = vshrl.u32 %v2455, 7
    %v2457 = vsub.s32 2, %v2456
    %v2458 = vrot.slane %v2445, %v2457
    %v2459 = vlaneseq
    %v2460 = vshrl.u32 %v2459, 7
    %v2461 = vsub.s32 3, %v2460
    %v2462 = vrot.slane %v2445, %v2461
    %2467 = vmatprep.subr.mxu0 %v2381
    %2468 = vmatpush1.msra.mxu0 %v2380
    %2469 = vmatprep.subr.mxu0 %v2385
    %2470 = vmatpush1.msra.mxu0 %v2384
    %2471 = vmatprep.subr.mxu0 %v2389
    %2472 = vmatpush1.msra.mxu0 %v2388
    %2473 = vmatprep.subr.mxu0 %v2393
    %2474 = vmatpush1.msra.mxu0 %v2392
    %2475 = vmatprep.subr.mxu0 %v2397
    %2476 = vmatpush1.msra.mxu0 %v2396
    %2477 = vmatprep.subr.mxu0 %v2401
    %2478 = vmatpush1.msra.mxu0 %v2400
    %2479 = vmatprep.subr.mxu0 %v2405
    %2480 = vmatpush1.msra.mxu0 %v2404
    %2481 = vmatprep.subr.mxu0 %v2409
    %2482 = vmatpush1.msra.mxu0 %v2408
    %2483 = vmatprep.subr.mxu0 %v2413
    %2484 = vmatpush1.msra.mxu0 %v2412
    %2485 = vmatprep.subr.mxu0 %v2417
    %2486 = vmatpush1.msra.mxu0 %v2416
    %2487 = vmatprep.subr.mxu0 %v2421
    %2488 = vmatpush1.msra.mxu0 %v2420
    %2489 = vmatprep.subr.mxu0 %v2425
    %2490 = vmatpush1.msra.mxu0 %v2424
    %2491 = vmatprep.subr.mxu0 %v2429
    %2492 = vmatpush1.msra.mxu0 %v2428
    %2493 = vmatprep.subr.mxu0 %v2433
    %2494 = vmatpush1.msra.mxu0 %v2432
    %2495 = vmatprep.subr.mxu0 %v2437
    %2496 = vmatpush1.msra.mxu0 %v2436
    %2497 = vmatprep.subr.mxu0 %v2441
    %2498 = vmatpush1.msra.mxu0 %v2440
    %2499 = vmatprep.subr.mxu0 0.0
    %2500 = vmatpush1.msra.mxu0 0.0
    %2501 = vmatprep.subr.mxu0 0.0
    %2502 = vmatpush1.msra.mxu0 0.0
    %2503 = vmatprep.subr.mxu0 0.0
    %2504 = vmatpush1.msra.mxu0 0.0
    %2505 = vmatprep.subr.mxu0 0.0
    %2506 = vmatpush1.msra.mxu0 0.0
    %2507 = vmatprep.subr.mxu0 0.0
    %2508 = vmatpush1.msra.mxu0 0.0
    %2509 = vmatprep.subr.mxu0 0.0
    %2510 = vmatpush1.msra.mxu0 0.0
    %2511 = vmatprep.subr.mxu0 0.0
    %2512 = vmatpush1.msra.mxu0 0.0
    %2513 = vmatprep.subr.mxu0 0.0
    %2514 = vmatpush1.msra.mxu0 0.0
    %2515 = vmatprep.subr.mxu0 0.0
    %2516 = vmatpush1.msra.mxu0 0.0
    %2517 = vmatprep.subr.mxu0 0.0
    %2518 = vmatpush1.msra.mxu0 0.0
    %2519 = vmatprep.subr.mxu0 0.0
    %2520 = vmatpush1.msra.mxu0 0.0
    %2521 = vmatprep.subr.mxu0 0.0
    %2522 = vmatpush1.msra.mxu0 0.0
    %2523 = vmatprep.subr.mxu0 0.0
    %2524 = vmatpush1.msra.mxu0 0.0
    %2525 = vmatprep.subr.mxu0 0.0
    %2526 = vmatpush1.msra.mxu0 0.0
    %2527 = vmatprep.subr.mxu0 0.0
    %2528 = vmatpush1.msra.mxu0 0.0
    %2529 = vmatprep.subr.mxu0 0.0
    %2530 = vmatpush1.msra.mxu0 0.0
    %2531 = vmatprep.mubr.f32.mxu0 0.0
    %2532 = vmatmul.mubr.f32.gmra.mrb[0].mxu0 %v2372
    %v2533 = vpop.f32.mrb[0].mxu0
    %v2534 = vadd.f32 %v2450, %v2533
    %v2535 = vpop.f32.mrb[0].mxu0
    %v2536 = vadd.f32 %v2454, %v2535
    %2537 = vmatprep.mubr.f32.mxu0 0.0
    %2538 = vmatmul.mubr.f32.gmra.mrb[0].mxu0 %v2373
    %v2539 = vpop.f32.mrb[0].mxu0
    %v2540 = vadd.f32 %v2450, %v2539
    %v2541 = vpop.f32.mrb[0].mxu0
    %v2542 = vadd.f32 %v2454, %v2541
    %2543 = vmatprep.mubr.f32.mxu0 0.0
    %2544 = vmatmul.mubr.f32.gmra.mrb[0].mxu0 %v2374
    %v2545 = vpop.f32.mrb[0].mxu0
    %v2546 = vadd.f32 %v2450, %v2545
    %v2547 = vpop.f32.mrb[0].mxu0
    %v2548 = vadd.f32 %v2454, %v2547
    %2549 = vmatprep.mubr.f32.mxu0 0.0
    %2550 = vmatmul.mubr.f32.gmra.mrb[0].mxu0 %v2375
    %v2551 = vpop.f32.mrb[0].mxu0
    %v2552 = vadd.f32 %v2450, %v2551
    %v2553 = vpop.f32.mrb[0].mxu0
    %v2554 = vadd.f32 %v2454, %v2553
    %2555 = vmatprep.mubr.f32.mxu0 0.0
    %2556 = vmatmul.mubr.f32.gmra.mrb[0].mxu0 %v2376
    %v2557 = vpop.f32.mrb[0].mxu0
    %v2558 = vadd.f32 %v2450, %v2557
    %v2559 = vpop.f32.mrb[0].mxu0
    %v2560 = vadd.f32 %v2454, %v2559
    %2561 = vmatprep.mubr.f32.mxu0 0.0
    %2562 = vmatmul.mubr.f32.gmra.mrb[0].mxu0 %v2377
    %v2563 = vpop.f32.mrb[0].mxu0
    %v2564 = vadd.f32 %v2450, %v2563
    %v2565 = vpop.f32.mrb[0].mxu0
    %v2566 = vadd.f32 %v2454, %v2565
    %2567 = vmatprep.mubr.f32.mxu0 0.0
    %2568 = vmatmul.mubr.f32.gmra.mrb[0].mxu0 %v2378
    %v2569 = vpop.f32.mrb[0].mxu0
    %v2570 = vadd.f32 %v2450, %v2569
    %v2571 = vpop.f32.mrb[0].mxu0
    %v2572 = vadd.f32 %v2454, %v2571
    %2573 = vmatprep.mubr.f32.mxu0 0.0
    %2574 = vmatmul.mubr.f32.gmra.mrb[0].mxu0 %v2379
    %v2575 = vpop.f32.mrb[0].mxu0
    %v2576 = vadd.f32 %v2450, %v2575
    %v2577 = vpop.f32.mrb[0].mxu0
    %v2578 = vadd.f32 %v2454, %v2577
    %2579 = vdwg.mxu0
    %2580 = vmatprep.subr.mxu0 %v2383
    %2581 = vmatpush1.msra.mxu0 %v2382
    %2582 = vmatprep.subr.mxu0 %v2387
    %2583 = vmatpush1.msra.mxu0 %v2386
    %2584 = vmatprep.subr.mxu0 %v2391
    %2585 = vmatpush1.msra.mxu0 %v2390
    %2586 = vmatprep.subr.mxu0 %v2395
    %2587 = vmatpush1.msra.mxu0 %v2394
    %2588 = vmatprep.subr.mxu0 %v2399
    %2589 = vmatpush1.msra.mxu0 %v2398
    %2590 = vmatprep.subr.mxu0 %v2403
    %2591 = vmatpush1.msra.mxu0 %v2402
    %2592 = vmatprep.subr.mxu0 %v2407
    %2593 = vmatpush1.msra.mxu0 %v2406
    %2594 = vmatprep.subr.mxu0 %v2411
    %2595 = vmatpush1.msra.mxu0 %v2410
    %2596 = vmatprep.subr.mxu0 %v2415
    %2597 = vmatpush1.msra.mxu0 %v2414
    %2598 = vmatprep.subr.mxu0 %v2419
    %2599 = vmatpush1.msra.mxu0 %v2418
    %2600 = vmatprep.subr.mxu0 %v2423
    %2601 = vmatpush1.msra.mxu0 %v2422
    %2602 = vmatprep.subr.mxu0 %v2427
    %2603 = vmatpush1.msra.mxu0 %v2426
    %2604 = vmatprep.subr.mxu0 %v2431
    %2605 = vmatpush1.msra.mxu0 %v2430
    %2606 = vmatprep.subr.mxu0 %v2435
    %2607 = vmatpush1.msra.mxu0 %v2434
    %2608 = vmatprep.subr.mxu0 %v2439
    %2609 = vmatpush1.msra.mxu0 %v2438
    %2610 = vmatprep.subr.mxu0 %v2443
    %2611 = vmatpush1.msra.mxu0 %v2442
    %2612 = vmatprep.subr.mxu0 0.0
    %2613 = vmatpush1.msra.mxu0 0.0
    %2614 = vmatprep.subr.mxu0 0.0
    %2615 = vmatpush1.msra.mxu0 0.0
    %2616 = vmatprep.subr.mxu0 0.0
    %2617 = vmatpush1.msra.mxu0 0.0
    %2618 = vmatprep.subr.mxu0 0.0
    %2619 = vmatpush1.msra.mxu0 0.0
    %2620 = vmatprep.subr.mxu0 0.0
    %2621 = vmatpush1.msra.mxu0 0.0
    %2622 = vmatprep.subr.mxu0 0.0
    %2623 = vmatpush1.msra.mxu0 0.0
    %2624 = vmatprep.subr.mxu0 0.0
    %2625 = vmatpush1.msra.mxu0 0.0
    %2626 = vmatprep.subr.mxu0 0.0
    %2627 = vmatpush1.msra.mxu0 0.0
    %2628 = vmatprep.subr.mxu0 0.0
    %2629 = vmatpush1.msra.mxu0 0.0
    %2630 = vmatprep.subr.mxu0 0.0
    %2631 = vmatpush1.msra.mxu0 0.0
    %2632 = vmatprep.subr.mxu0 0.0
    %2633 = vmatpush1.msra.mxu0 0.0
    %2634 = vmatprep.subr.mxu0 0.0
    %2635 = vmatpush1.msra.mxu0 0.0
    %2636 = vmatprep.subr.mxu0 0.0
    %2637 = vmatpush1.msra.mxu0 0.0
    %2638 = vmatprep.subr.mxu0 0.0
    %2639 = vmatpush1.msra.mxu0 0.0
    %2640 = vmatprep.subr.mxu0 0.0
    %2641 = vmatpush1.msra.mxu0 0.0
    %2642 = vmatprep.subr.mxu0 0.0
    %2643 = vmatpush1.msra.mxu0 0.0
    %2644 = vmatprep.mubr.f32.mxu0 0.0
    %2645 = vmatmul.mubr.f32.gmra.mrb[0].mxu0 %v2372
    %v2646 = vpop.f32.mrb[0].mxu0
    %v2647 = vadd.f32 %v2458, %v2646
    %v2648 = vpop.f32.mrb[0].mxu0
    %v2649 = vadd.f32 %v2462, %v2648
    %2650 = vmatprep.mubr.f32.mxu0 0.0
    %2651 = vmatmul.mubr.f32.gmra.mrb[0].mxu0 %v2373
    %v2652 = vpop.f32.mrb[0].mxu0
    %v2653 = vadd.f32 %v2458, %v2652
    %v2654 = vpop.f32.mrb[0].mxu0
    %v2655 = vadd.f32 %v2462, %v2654
    %2656 = vmatprep.mubr.f32.mxu0 0.0
    %2657 = vmatmul.mubr.f32.gmra.mrb[0].mxu0 %v2374
    %v2658 = vpop.f32.mrb[0].mxu0
    %v2659 = vadd.f32 %v2458, %v2658
    %v2660 = vpop.f32.mrb[0].mxu0
    %v2661 = vadd.f32 %v2462, %v2660
    %2662 = vmatprep.mubr.f32.mxu0 0.0
    %2663 = vmatmul.mubr.f32.gmra.mrb[0].mxu0 %v2375
    %v2664 = vpop.f32.mrb[0].mxu0
    %v2665 = vadd.f32 %v2458, %v2664
    %v2666 = vpop.f32.mrb[0].mxu0
    %v2667 = vadd.f32 %v2462, %v2666
    %2668 = vmatprep.mubr.f32.mxu0 0.0
    %2669 = vmatmul.mubr.f32.gmra.mrb[0].mxu0 %v2376
    %v2670 = vpop.f32.mrb[0].mxu0
    %v2671 = vadd.f32 %v2458, %v2670
    %v2672 = vpop.f32.mrb[0].mxu0
    %v2673 = vadd.f32 %v2462, %v2672
    %2674 = vmatprep.mubr.f32.mxu0 0.0
    %2675 = vmatmul.mubr.f32.gmra.mrb[0].mxu0 %v2377
    %v2676 = vpop.f32.mrb[0].mxu0
    %v2677 = vadd.f32 %v2458, %v2676
    %v2678 = vpop.f32.mrb[0].mxu0
    %v2679 = vadd.f32 %v2462, %v2678
    %2680 = vmatprep.mubr.f32.mxu0 0.0
    %2681 = vmatmul.mubr.f32.gmra.mrb[0].mxu0 %v2378
    %v2682 = vpop.f32.mrb[0].mxu0
    %v2683 = vadd.f32 %v2458, %v2682
    %v2684 = vpop.f32.mrb[0].mxu0
    %v2685 = vadd.f32 %v2462, %v2684
    %2686 = vmatprep.mubr.f32.mxu0 0.0
    %2687 = vmatmul.mubr.f32.gmra.mrb[0].mxu0 %v2379
    %v2688 = vpop.f32.mrb[0].mxu0
    %v2689 = vadd.f32 %v2458, %v2688
    %v2690 = vpop.f32.mrb[0].mxu0
    %v2691 = vadd.f32 %v2462, %v2690
    %2692 = vdwg.mxu0
    %2693 = vst [vmem:[#allocation7] sm:$0xff] %v2534
    %2694 = vst [vmem:[#allocation7 + $0x8] sm:$0xff] %v2536
    %2695 = vst [vmem:[#allocation7 + $0x10] sm:$0xff] %v2647
    %2696 = vst [vmem:[#allocation7 + $0x18] sm:$0xff] %v2649
    %2697 = vst [vmem:[#allocation7 + $0x20] sm:$0xff] %v2540
    %2698 = vst [vmem:[#allocation7 + $0x28] sm:$0xff] %v2542
    %2699 = vst [vmem:[#allocation7 + $0x30] sm:$0xff] %v2653
    %2700 = vst [vmem:[#allocation7 + $0x38] sm:$0xff] %v2655
    %2701 = vst [vmem:[#allocation7 + $0x40] sm:$0xff] %v2546
    %2702 = vst [vmem:[#allocation7 + $0x48] sm:$0xff] %v2548
    %2703 = vst [vmem:[#allocation7 + $0x50] sm:$0xff] %v2659
    %2704 = vst [vmem:[#allocation7 + $0x58] sm:$0xff] %v2661
    %2705 = vst [vmem:[#allocation7 + $0x60] sm:$0xff] %v2552
    %2706 = vst [vmem:[#allocation7 + $0x68] sm:$0xff] %v2554
    %2707 = vst [vmem:[#allocation7 + $0x70] sm:$0xff] %v2665
    %2708 = vst [vmem:[#allocation7 + $0x78] sm:$0xff] %v2667
    %2709 = vst [vmem:[#allocation7 + $0x80] sm:$0xff] %v2558
    %2710 = vst [vmem:[#allocation7 + $0x88] sm:$0xff] %v2560
    %2711 = vst [vmem:[#allocation7 + $0x90] sm:$0xff] %v2671
    %2712 = vst [vmem:[#allocation7 + $0x98] sm:$0xff] %v2673
    %2713 = vst [vmem:[#allocation7 + $0xa0] sm:$0xff] %v2564
    %2714 = vst [vmem:[#allocation7 + $0xa8] sm:$0xff] %v2566
    %2715 = vst [vmem:[#allocation7 + $0xb0] sm:$0xff] %v2677
    %2716 = vst [vmem:[#allocation7 + $0xb8] sm:$0xff] %v2679
    %2717 = vst [vmem:[#allocation7 + $0xc0] sm:$0xff] %v2570
    %2718 = vst [vmem:[#allocation7 + $0xc8] sm:$0xff] %v2572
    %2719 = vst [vmem:[#allocation7 + $0xd0] sm:$0xff] %v2683
    %2720 = vst [vmem:[#allocation7 + $0xd8] sm:$0xff] %v2685
    %2721 = vst [vmem:[#allocation7 + $0xe0] sm:$0xff] %v2576
    %2722 = vst [vmem:[#allocation7 + $0xe8] sm:$0xff] %v2578
    %2723 = vst [vmem:[#allocation7 + $0xf0] sm:$0xff] %v2689
    %2724 = vst [vmem:[#allocation7 + $0xf8] sm:$0xff] %v2691
    %s2725 = scalar_lea.vmem [#allocation5], 8
    %v2726 = vld [vmem:[%s2725] sm:$0xff]
    %s2727 = scalar_lea.vmem [#allocation6], 8
    %v2728 = vld [vmem:[%s2727] sm:$0xff]
    %v2729 = vld [vmem:[#allocation7] sm:$0xff]
    %v2730 = vld [vmem:[#allocation7 + $0x8] sm:$0xff]
    %v2731 = vld [vmem:[#allocation7 + $0x10] sm:$0xff]
    %v2732 = vld [vmem:[#allocation7 + $0x18] sm:$0xff]
    %s2733 = scalar_lea.vmem [#allocation4], 512
    %v2734 = vld [vmem:[%s2733] sm:$0xff]
    %v2735 = vld [vmem:[%s2733 + $0x8] sm:$0xff]
    %v2736 = vld [vmem:[%s2733 + $0x10] sm:$0xff]
    %v2737 = vld [vmem:[%s2733 + $0x18] sm:$0xff]
    %v2738 = vld [vmem:[%s2733 + $0x20] sm:$0xff]
    %v2739 = vld [vmem:[%s2733 + $0x28] sm:$0xff]
    %v2740 = vld [vmem:[%s2733 + $0x30] sm:$0xff]
    %v2741 = vld [vmem:[%s2733 + $0x38] sm:$0xff]
    %v2742 = vld [vmem:[%s2733 + $0x40] sm:$0xff]
    %v2743 = vld [vmem:[%s2733 + $0x48] sm:$0xff]
    %v2744 = vld [vmem:[%s2733 + $0x50] sm:$0xff]
    %v2745 = vld [vmem:[%s2733 + $0x58] sm:$0xff]
    %v2746 = vld [vmem:[%s2733 + $0x60] sm:$0xff]
    %v2747 = vld [vmem:[%s2733 + $0x68] sm:$0xff]
    %v2748 = vld [vmem:[%s2733 + $0x70] sm:$0xff]
    %v2749 = vld [vmem:[%s2733 + $0x78] sm:$0xff]
    %v2750 = vld [vmem:[%s2733 + $0x80] sm:$0xff]
    %v2751 = vld [vmem:[%s2733 + $0x88] sm:$0xff]
    %v2752 = vld [vmem:[%s2733 + $0x90] sm:$0xff]
    %v2753 = vld [vmem:[%s2733 + $0x98] sm:$0xff]
    %v2754 = vld [vmem:[%s2733 + $0xa0] sm:$0xff]
    %v2755 = vld [vmem:[%s2733 + $0xa8] sm:$0xff]
    %v2756 = vld [vmem:[%s2733 + $0xb0] sm:$0xff]
    %v2757 = vld [vmem:[%s2733 + $0xb8] sm:$0xff]
    %v2758 = vld [vmem:[%s2733 + $0xc0] sm:$0xff]
    %v2759 = vld [vmem:[%s2733 + $0xc8] sm:$0xff]
    %v2760 = vld [vmem:[%s2733 + $0xd0] sm:$0xff]
    %v2761 = vld [vmem:[%s2733 + $0xd8] sm:$0xff]
    %v2762 = vld [vmem:[%s2733 + $0xe0] sm:$0xff]
    %v2763 = vld [vmem:[%s2733 + $0xe8] sm:$0xff]
    %v2764 = vld [vmem:[%s2733 + $0xf0] sm:$0xff]
    %v2765 = vld [vmem:[%s2733 + $0xf8] sm:$0xff]
    %v2766 = vld [vmem:[%s2733 + $0x100] sm:$0xff]
    %v2767 = vld [vmem:[%s2733 + $0x108] sm:$0xff]
    %v2768 = vld [vmem:[%s2733 + $0x110] sm:$0xff]
    %v2769 = vld [vmem:[%s2733 + $0x118] sm:$0xff]
    %v2770 = vld [vmem:[%s2733 + $0x120] sm:$0xff]
    %v2771 = vld [vmem:[%s2733 + $0x128] sm:$0xff]
    %v2772 = vld [vmem:[%s2733 + $0x130] sm:$0xff]
    %v2773 = vld [vmem:[%s2733 + $0x138] sm:$0xff]
    %v2774 = vld [vmem:[%s2733 + $0x140] sm:$0xff]
    %v2775 = vld [vmem:[%s2733 + $0x148] sm:$0xff]
    %v2776 = vld [vmem:[%s2733 + $0x150] sm:$0xff]
    %v2777 = vld [vmem:[%s2733 + $0x158] sm:$0xff]
    %v2778 = vld [vmem:[%s2733 + $0x160] sm:$0xff]
    %v2779 = vld [vmem:[%s2733 + $0x168] sm:$0xff]
    %v2780 = vld [vmem:[%s2733 + $0x170] sm:$0xff]
    %v2781 = vld [vmem:[%s2733 + $0x178] sm:$0xff]
    %v2782 = vld [vmem:[%s2733 + $0x180] sm:$0xff]
    %v2783 = vld [vmem:[%s2733 + $0x188] sm:$0xff]
    %v2784 = vld [vmem:[%s2733 + $0x190] sm:$0xff]
    %v2785 = vld [vmem:[%s2733 + $0x198] sm:$0xff]
    %v2786 = vld [vmem:[%s2733 + $0x1a0] sm:$0xff]
    %v2787 = vld [vmem:[%s2733 + $0x1a8] sm:$0xff]
    %v2788 = vld [vmem:[%s2733 + $0x1b0] sm:$0xff]
    %v2789 = vld [vmem:[%s2733 + $0x1b8] sm:$0xff]
    %v2790 = vld [vmem:[%s2733 + $0x1c0] sm:$0xff]
    %v2791 = vld [vmem:[%s2733 + $0x1c8] sm:$0xff]
    %v2792 = vld [vmem:[%s2733 + $0x1d0] sm:$0xff]
    %v2793 = vld [vmem:[%s2733 + $0x1d8] sm:$0xff]
    %v2794 = vld [vmem:[%s2733 + $0x1e0] sm:$0xff]
    %v2795 = vld [vmem:[%s2733 + $0x1e8] sm:$0xff]
    %v2796 = vld [vmem:[%s2733 + $0x1f0] sm:$0xff]
    %v2797 = vld [vmem:[%s2733 + $0x1f8] sm:$0xff]
    %2798 = vmatprep.subr.mxu0 %v2735
    %2799 = vmatpush1.msra.mxu0 %v2734
    %2800 = vmatprep.subr.mxu0 %v2739
    %2801 = vmatpush1.msra.mxu0 %v2738
    %2802 = vmatprep.subr.mxu0 %v2743
    %2803 = vmatpush1.msra.mxu0 %v2742
    %2804 = vmatprep.subr.mxu0 %v2747
    %2805 = vmatpush1.msra.mxu0 %v2746
    %2806 = vmatprep.subr.mxu0 %v2751
    %2807 = vmatpush1.msra.mxu0 %v2750
    %2808 = vmatprep.subr.mxu0 %v2755
    %2809 = vmatpush1.msra.mxu0 %v2754
    %2810 = vmatprep.subr.mxu0 %v2759
    %2811 = vmatpush1.msra.mxu0 %v2758
    %2812 = vmatprep.subr.mxu0 %v2763
    %2813 = vmatpush1.msra.mxu0 %v2762
    %2814 = vmatprep.subr.mxu0 %v2767
    %2815 = vmatpush1.msra.mxu0 %v2766
    %2816 = vmatprep.subr.mxu0 %v2771
    %2817 = vmatpush1.msra.mxu0 %v2770
    %2818 = vmatprep.subr.mxu0 %v2775
    %2819 = vmatpush1.msra.mxu0 %v2774
    %2820 = vmatprep.subr.mxu0 %v2779
    %2821 = vmatpush1.msra.mxu0 %v2778
    %2822 = vmatprep.subr.mxu0 %v2783
    %2823 = vmatpush1.msra.mxu0 %v2782
    %2824 = vmatprep.subr.mxu0 %v2787
    %2825 = vmatpush1.msra.mxu0 %v2786
    %2826 = vmatprep.subr.mxu0 %v2791
    %2827 = vmatpush1.msra.mxu0 %v2790
    %2828 = vmatprep.subr.mxu0 %v2795
    %2829 = vmatpush1.msra.mxu0 %v2794
    %2830 = vmatprep.subr.mxu0 0.0
    %2831 = vmatpush1.msra.mxu0 0.0
    %2832 = vmatprep.subr.mxu0 0.0
    %2833 = vmatpush1.msra.mxu0 0.0
    %2834 = vmatprep.subr.mxu0 0.0
    %2835 = vmatpush1.msra.mxu0 0.0
    %2836 = vmatprep.subr.mxu0 0.0
    %2837 = vmatpush1.msra.mxu0 0.0
    %2838 = vmatprep.subr.mxu0 0.0
    %2839 = vmatpush1.msra.mxu0 0.0
    %2840 = vmatprep.subr.mxu0 0.0
    %2841 = vmatpush1.msra.mxu0 0.0
    %2842 = vmatprep.subr.mxu0 0.0
    %2843 = vmatpush1.msra.mxu0 0.0
    %2844 = vmatprep.subr.mxu0 0.0
    %2845 = vmatpush1.msra.mxu0 0.0
    %2846 = vmatprep.subr.mxu0 0.0
    %2847 = vmatpush1.msra.mxu0 0.0
    %2848 = vmatprep.subr.mxu0 0.0
    %2849 = vmatpush1.msra.mxu0 0.0
    %2850 = vmatprep.subr.mxu0 0.0
    %2851 = vmatpush1.msra.mxu0 0.0
    %2852 = vmatprep.subr.mxu0 0.0
    %2853 = vmatpush1.msra.mxu0 0.0
    %2854 = vmatprep.subr.mxu0 0.0
    %2855 = vmatpush1.msra.mxu0 0.0
    %2856 = vmatprep.subr.mxu0 0.0
    %2857 = vmatpush1.msra.mxu0 0.0
    %2858 = vmatprep.subr.mxu0 0.0
    %2859 = vmatpush1.msra.mxu0 0.0
    %2860 = vmatprep.subr.mxu0 0.0
    %2861 = vmatpush1.msra.mxu0 0.0
    %2862 = vmatprep.mubr.f32.mxu0 0.0
    %2863 = vmatmul.mubr.f32.gmra.mrb[0].mxu0 %v2726
    %v2864 = vpop.f32.mrb[0].mxu0
    %v2865 = vadd.f32 0.0, %v2864
    %v2866 = vpop.f32.mrb[0].mxu0
    %v2867 = vadd.f32 0.0, %v2866
    %2868 = vdwg.mxu0
    %2869 = vmatprep.subr.mxu0 %v2737
    %2870 = vmatpush1.msra.mxu0 %v2736
    %2871 = vmatprep.subr.mxu0 %v2741
    %2872 = vmatpush1.msra.mxu0 %v2740
    %2873 = vmatprep.subr.mxu0 %v2745
    %2874 = vmatpush1.msra.mxu0 %v2744
    %2875 = vmatprep.subr.mxu0 %v2749
    %2876 = vmatpush1.msra.mxu0 %v2748
    %2877 = vmatprep.subr.mxu0 %v2753
    %2878 = vmatpush1.msra.mxu0 %v2752
    %2879 = vmatprep.subr.mxu0 %v2757
    %2880 = vmatpush1.msra.mxu0 %v2756
    %2881 = vmatprep.subr.mxu0 %v2761
    %2882 = vmatpush1.msra.mxu0 %v2760
    %2883 = vmatprep.subr.mxu0 %v2765
    %2884 = vmatpush1.msra.mxu0 %v2764
    %2885 = vmatprep.subr.mxu0 %v2769
    %2886 = vmatpush1.msra.mxu0 %v2768
    %2887 = vmatprep.subr.mxu0 %v2773
    %2888 = vmatpush1.msra.mxu0 %v2772
    %2889 = vmatprep.subr.mxu0 %v2777
    %2890 = vmatpush1.msra.mxu0 %v2776
    %2891 = vmatprep.subr.mxu0 %v2781
    %2892 = vmatpush1.msra.mxu0 %v2780
    %2893 = vmatprep.subr.mxu0 %v2785
    %2894 = vmatpush1.msra.mxu0 %v2784
    %2895 = vmatprep.subr.mxu0 %v2789
    %2896 = vmatpush1.msra.mxu0 %v2788
    %2897 = vmatprep.subr.mxu0 %v2793
    %2898 = vmatpush1.msra.mxu0 %v2792
    %2899 = vmatprep.subr.mxu0 %v2797
    %2900 = vmatpush1.msra.mxu0 %v2796
    %2901 = vmatprep.subr.mxu0 0.0
    %2902 = vmatpush1.msra.mxu0 0.0
    %2903 = vmatprep.subr.mxu0 0.0
    %2904 = vmatpush1.msra.mxu0 0.0
    %2905 = vmatprep.subr.mxu0 0.0
    %2906 = vmatpush1.msra.mxu0 0.0
    %2907 = vmatprep.subr.mxu0 0.0
    %2908 = vmatpush1.msra.mxu0 0.0
    %2909 = vmatprep.subr.mxu0 0.0
    %2910 = vmatpush1.msra.mxu0 0.0
    %2911 = vmatprep.subr.mxu0 0.0
    %2912 = vmatpush1.msra.mxu0 0.0
    %2913 = vmatprep.subr.mxu0 0.0
    %2914 = vmatpush1.msra.mxu0 0.0
    %2915 = vmatprep.subr.mxu0 0.0
    %2916 = vmatpush1.msra.mxu0 0.0
    %2917 = vmatprep.subr.mxu0 0.0
    %2918 = vmatpush1.msra.mxu0 0.0
    %2919 = vmatprep.subr.mxu0 0.0
    %2920 = vmatpush1.msra.mxu0 0.0
    %2921 = vmatprep.subr.mxu0 0.0
    %2922 = vmatpush1.msra.mxu0 0.0
    %2923 = vmatprep.subr.mxu0 0.0
    %2924 = vmatpush1.msra.mxu0 0.0
    %2925 = vmatprep.subr.mxu0 0.0
    %2926 = vmatpush1.msra.mxu0 0.0
    %2927 = vmatprep.subr.mxu0 0.0
    %2928 = vmatpush1.msra.mxu0 0.0
    %2929 = vmatprep.subr.mxu0 0.0
    %2930 = vmatpush1.msra.mxu0 0.0
    %2931 = vmatprep.subr.mxu0 0.0
    %2932 = vmatpush1.msra.mxu0 0.0
    %2933 = vmatprep.mubr.f32.mxu0 0.0
    %2934 = vmatmul.mubr.f32.gmra.mrb[0].mxu0 %v2726
    %v2935 = vpop.f32.mrb[0].mxu0
    %v2936 = vadd.f32 0.0, %v2935
    %v2937 = vpop.f32.mrb[0].mxu0
    %v2938 = vadd.f32 0.0, %v2937
    %2939 = vdwg.mxu0
    %v2940 = vadd.f32 %v2729, %v2865
    %v2941 = vadd.f32 %v2730, %v2867
    %v2942 = vadd.f32 %v2731, %v2936
    %v2943 = vadd.f32 %v2732, %v2938
    %v2944 = vxor.u32 %v2940, 2147483648
    %v2945 = vmul.f32 %v2944, 1.442695
    %v2946 = vpow.pop %v2945
    %v2947 = vadd.f32 %v2946, 1.0
    %v2948 = vrcp.pop %v2947
    %v2949 = vmul.f32 1.0, %v2948
    %v2950 = vxor.u32 %v2941, 2147483648
    %v2951 = vmul.f32 %v2950, 1.442695
    %v2952 = vpow.pop %v2951
    %v2953 = vadd.f32 %v2952, 1.0
    %v2954 = vrcp.pop %v2953
    %v2955 = vmul.f32 1.0, %v2954
    %v2956 = vtanh.pop %v2942
    %v2957 = vxor.u32 %v2943, 2147483648
    %v2958 = vmul.f32 %v2957, 1.442695
    %v2959 = vpow.pop %v2958
    %v2960 = vadd.f32 %v2959, 1.0
    %v2961 = vrcp.pop %v2960
    %v2962 = vmul.f32 1.0, %v2961
    %v2963 = vmul.f32 %v2955, %v2728
    %v2964 = vmul.f32 %v2949, %v2956
    %v2965 = vadd.f32 %v2963, %v2964
    %v2966 = vtanh.pop %v2965
    %v2967 = vmul.f32 %v2962, %v2966
    %2968 = vst [vmem:[#allocation12] sm:$0xff] %v2967
    %v2969 = vld [vmem:[%s683] sm:$0xff]
    %v2970 = vld [vmem:[%s683 + $0x8] sm:$0xff]
    %v2971 = vld [vmem:[%s683 + $0x10] sm:$0xff]
    %v2972 = vld [vmem:[%s683 + $0x18] sm:$0xff]
    %v2973 = vld [vmem:[%s2733] sm:$0xff]
    %v2974 = vld [vmem:[%s2733 + $0x8] sm:$0xff]
    %v2975 = vld [vmem:[%s2733 + $0x10] sm:$0xff]
    %v2976 = vld [vmem:[%s2733 + $0x18] sm:$0xff]
    %v2977 = vld [vmem:[%s2733 + $0x20] sm:$0xff]
    %v2978 = vld [vmem:[%s2733 + $0x28] sm:$0xff]
    %v2979 = vld [vmem:[%s2733 + $0x30] sm:$0xff]
    %v2980 = vld [vmem:[%s2733 + $0x38] sm:$0xff]
    %v2981 = vld [vmem:[%s2733 + $0x40] sm:$0xff]
    %v2982 = vld [vmem:[%s2733 + $0x48] sm:$0xff]
    %v2983 = vld [vmem:[%s2733 + $0x50] sm:$0xff]
    %v2984 = vld [vmem:[%s2733 + $0x58] sm:$0xff]
    %v2985 = vld [vmem:[%s2733 + $0x60] sm:$0xff]
    %v2986 = vld [vmem:[%s2733 + $0x68] sm:$0xff]
    %v2987 = vld [vmem:[%s2733 + $0x70] sm:$0xff]
    %v2988 = vld [vmem:[%s2733 + $0x78] sm:$0xff]
    %v2989 = vld [vmem:[%s2733 + $0x80] sm:$0xff]
    %v2990 = vld [vmem:[%s2733 + $0x88] sm:$0xff]
    %v2991 = vld [vmem:[%s2733 + $0x90] sm:$0xff]
    %v2992 = vld [vmem:[%s2733 + $0x98] sm:$0xff]
    %v2993 = vld [vmem:[%s2733 + $0xa0] sm:$0xff]
    %v2994 = vld [vmem:[%s2733 + $0xa8] sm:$0xff]
    %v2995 = vld [vmem:[%s2733 + $0xb0] sm:$0xff]
    %v2996 = vld [vmem:[%s2733 + $0xb8] sm:$0xff]
    %v2997 = vld [vmem:[%s2733 + $0xc0] sm:$0xff]
    %v2998 = vld [vmem:[%s2733 + $0xc8] sm:$0xff]
    %v2999 = vld [vmem:[%s2733 + $0xd0] sm:$0xff]
    %v3000 = vld [vmem:[%s2733 + $0xd8] sm:$0xff]
    %v3001 = vld [vmem:[%s2733 + $0xe0] sm:$0xff]
    %v3002 = vld [vmem:[%s2733 + $0xe8] sm:$0xff]
    %v3003 = vld [vmem:[%s2733 + $0xf0] sm:$0xff]
    %v3004 = vld [vmem:[%s2733 + $0xf8] sm:$0xff]
    %v3005 = vld [vmem:[%s2733 + $0x100] sm:$0xff]
    %v3006 = vld [vmem:[%s2733 + $0x108] sm:$0xff]
    %v3007 = vld [vmem:[%s2733 + $0x110] sm:$0xff]
    %v3008 = vld [vmem:[%s2733 + $0x118] sm:$0xff]
    %v3009 = vld [vmem:[%s2733 + $0x120] sm:$0xff]
    %v3010 = vld [vmem:[%s2733 + $0x128] sm:$0xff]
    %v3011 = vld [vmem:[%s2733 + $0x130] sm:$0xff]
    %v3012 = vld [vmem:[%s2733 + $0x138] sm:$0xff]
    %v3013 = vld [vmem:[%s2733 + $0x140] sm:$0xff]
    %v3014 = vld [vmem:[%s2733 + $0x148] sm:$0xff]
    %v3015 = vld [vmem:[%s2733 + $0x150] sm:$0xff]
    %v3016 = vld [vmem:[%s2733 + $0x158] sm:$0xff]
    %v3017 = vld [vmem:[%s2733 + $0x160] sm:$0xff]
    %v3018 = vld [vmem:[%s2733 + $0x168] sm:$0xff]
    %v3019 = vld [vmem:[%s2733 + $0x170] sm:$0xff]
    %v3020 = vld [vmem:[%s2733 + $0x178] sm:$0xff]
    %v3021 = vld [vmem:[%s2733 + $0x180] sm:$0xff]
    %v3022 = vld [vmem:[%s2733 + $0x188] sm:$0xff]
    %v3023 = vld [vmem:[%s2733 + $0x190] sm:$0xff]
    %v3024 = vld [vmem:[%s2733 + $0x198] sm:$0xff]
    %v3025 = vld [vmem:[%s2733 + $0x1a0] sm:$0xff]
    %v3026 = vld [vmem:[%s2733 + $0x1a8] sm:$0xff]
    %v3027 = vld [vmem:[%s2733 + $0x1b0] sm:$0xff]
    %v3028 = vld [vmem:[%s2733 + $0x1b8] sm:$0xff]
    %v3029 = vld [vmem:[%s2733 + $0x1c0] sm:$0xff]
    %v3030 = vld [vmem:[%s2733 + $0x1c8] sm:$0xff]
    %v3031 = vld [vmem:[%s2733 + $0x1d0] sm:$0xff]
    %v3032 = vld [vmem:[%s2733 + $0x1d8] sm:$0xff]
    %v3033 = vld [vmem:[%s2733 + $0x1e0] sm:$0xff]
    %v3034 = vld [vmem:[%s2733 + $0x1e8] sm:$0xff]
    %v3035 = vld [vmem:[%s2733 + $0x1f0] sm:$0xff]
    %v3036 = vld [vmem:[%s2733 + $0x1f8] sm:$0xff]
    %3037 = vmatprep.subr.mxu0 %v2974
    %3038 = vmatpush1.msra.mxu0 %v2973
    %3039 = vmatprep.subr.mxu0 %v2978
    %3040 = vmatpush1.msra.mxu0 %v2977
    %3041 = vmatprep.subr.mxu0 %v2982
    %3042 = vmatpush1.msra.mxu0 %v2981
    %3043 = vmatprep.subr.mxu0 %v2986
    %3044 = vmatpush1.msra.mxu0 %v2985
    %3045 = vmatprep.subr.mxu0 %v2990
    %3046 = vmatpush1.msra.mxu0 %v2989
    %3047 = vmatprep.subr.mxu0 %v2994
    %3048 = vmatpush1.msra.mxu0 %v2993
    %3049 = vmatprep.subr.mxu0 %v2998
    %3050 = vmatpush1.msra.mxu0 %v2997
    %3051 = vmatprep.subr.mxu0 %v3002
    %3052 = vmatpush1.msra.mxu0 %v3001
    %3053 = vmatprep.subr.mxu0 %v3006
    %3054 = vmatpush1.msra.mxu0 %v3005
    %3055 = vmatprep.subr.mxu0 %v3010
    %3056 = vmatpush1.msra.mxu0 %v3009
    %3057 = vmatprep.subr.mxu0 %v3014
    %3058 = vmatpush1.msra.mxu0 %v3013
    %3059 = vmatprep.subr.mxu0 %v3018
    %3060 = vmatpush1.msra.mxu0 %v3017
    %3061 = vmatprep.subr.mxu0 %v3022
    %3062 = vmatpush1.msra.mxu0 %v3021
    %3063 = vmatprep.subr.mxu0 %v3026
    %3064 = vmatpush1.msra.mxu0 %v3025
    %3065 = vmatprep.subr.mxu0 %v3030
    %3066 = vmatpush1.msra.mxu0 %v3029
    %3067 = vmatprep.subr.mxu0 %v3034
    %3068 = vmatpush1.msra.mxu0 %v3033
    %3069 = vmatprep.subr.mxu0 0.0
    %3070 = vmatpush1.msra.mxu0 0.0
    %3071 = vmatprep.subr.mxu0 0.0
    %3072 = vmatpush1.msra.mxu0 0.0
    %3073 = vmatprep.subr.mxu0 0.0
    %3074 = vmatpush1.msra.mxu0 0.0
    %3075 = vmatprep.subr.mxu0 0.0
    %3076 = vmatpush1.msra.mxu0 0.0
    %3077 = vmatprep.subr.mxu0 0.0
    %3078 = vmatpush1.msra.mxu0 0.0
    %3079 = vmatprep.subr.mxu0 0.0
    %3080 = vmatpush1.msra.mxu0 0.0
    %3081 = vmatprep.subr.mxu0 0.0
    %3082 = vmatpush1.msra.mxu0 0.0
    %3083 = vmatprep.subr.mxu0 0.0
    %3084 = vmatpush1.msra.mxu0 0.0
    %3085 = vmatprep.subr.mxu0 0.0
    %3086 = vmatpush1.msra.mxu0 0.0
    %3087 = vmatprep.subr.mxu0 0.0
    %3088 = vmatpush1.msra.mxu0 0.0
    %3089 = vmatprep.subr.mxu0 0.0
    %3090 = vmatpush1.msra.mxu0 0.0
    %3091 = vmatprep.subr.mxu0 0.0
    %3092 = vmatpush1.msra.mxu0 0.0
    %3093 = vmatprep.subr.mxu0 0.0
    %3094 = vmatpush1.msra.mxu0 0.0
    %3095 = vmatprep.subr.mxu0 0.0
    %3096 = vmatpush1.msra.mxu0 0.0
    %3097 = vmatprep.subr.mxu0 0.0
    %3098 = vmatpush1.msra.mxu0 0.0
    %3099 = vmatprep.subr.mxu0 0.0
    %3100 = vmatpush1.msra.mxu0 0.0
    %3101 = vmatprep.mubr.f32.mxu0 0.0
    %3102 = vmatmul.mubr.f32.gmra.mrb[0].mxu0 %v2967
    %v3103 = vpop.f32.mrb[0].mxu0
    %v3104 = vadd.f32 0.0, %v3103
    %v3105 = vpop.f32.mrb[0].mxu0
    %v3106 = vadd.f32 0.0, %v3105
    %3107 = vdwg.mxu0
    %3108 = vmatprep.subr.mxu0 %v2976
    %3109 = vmatpush1.msra.mxu0 %v2975
    %3110 = vmatprep.subr.mxu0 %v2980
    %3111 = vmatpush1.msra.mxu0 %v2979
    %3112 = vmatprep.subr.mxu0 %v2984
    %3113 = vmatpush1.msra.mxu0 %v2983
    %3114 = vmatprep.subr.mxu0 %v2988
    %3115 = vmatpush1.msra.mxu0 %v2987
    %3116 = vmatprep.subr.mxu0 %v2992
    %3117 = vmatpush1.msra.mxu0 %v2991
    %3118 = vmatprep.subr.mxu0 %v2996
    %3119 = vmatpush1.msra.mxu0 %v2995
    %3120 = vmatprep.subr.mxu0 %v3000
    %3121 = vmatpush1.msra.mxu0 %v2999
    %3122 = vmatprep.subr.mxu0 %v3004
    %3123 = vmatpush1.msra.mxu0 %v3003
    %3124 = vmatprep.subr.mxu0 %v3008
    %3125 = vmatpush1.msra.mxu0 %v3007
    %3126 = vmatprep.subr.mxu0 %v3012
    %3127 = vmatpush1.msra.mxu0 %v3011
    %3128 = vmatprep.subr.mxu0 %v3016
    %3129 = vmatpush1.msra.mxu0 %v3015
    %3130 = vmatprep.subr.mxu0 %v3020
    %3131 = vmatpush1.msra.mxu0 %v3019
    %3132 = vmatprep.subr.mxu0 %v3024
    %3133 = vmatpush1.msra.mxu0 %v3023
    %3134 = vmatprep.subr.mxu0 %v3028
    %3135 = vmatpush1.msra.mxu0 %v3027
    %3136 = vmatprep.subr.mxu0 %v3032
    %3137 = vmatpush1.msra.mxu0 %v3031
    %3138 = vmatprep.subr.mxu0 %v3036
    %3139 = vmatpush1.msra.mxu0 %v3035
    %3140 = vmatprep.subr.mxu0 0.0
    %3141 = vmatpush1.msra.mxu0 0.0
    %3142 = vmatprep.subr.mxu0 0.0
    %3143 = vmatpush1.msra.mxu0 0.0
    %3144 = vmatprep.subr.mxu0 0.0
    %3145 = vmatpush1.msra.mxu0 0.0
    %3146 = vmatprep.subr.mxu0 0.0
    %3147 = vmatpush1.msra.mxu0 0.0
    %3148 = vmatprep.subr.mxu0 0.0
    %3149 = vmatpush1.msra.mxu0 0.0
    %3150 = vmatprep.subr.mxu0 0.0
    %3151 = vmatpush1.msra.mxu0 0.0
    %3152 = vmatprep.subr.mxu0 0.0
    %3153 = vmatpush1.msra.mxu0 0.0
    %3154 = vmatprep.subr.mxu0 0.0
    %3155 = vmatpush1.msra.mxu0 0.0
    %3156 = vmatprep.subr.mxu0 0.0
    %3157 = vmatpush1.msra.mxu0 0.0
    %3158 = vmatprep.subr.mxu0 0.0
    %3159 = vmatpush1.msra.mxu0 0.0
    %3160 = vmatprep.subr.mxu0 0.0
    %3161 = vmatpush1.msra.mxu0 0.0
    %3162 = vmatprep.subr.mxu0 0.0
    %3163 = vmatpush1.msra.mxu0 0.0
    %3164 = vmatprep.subr.mxu0 0.0
    %3165 = vmatpush1.msra.mxu0 0.0
    %3166 = vmatprep.subr.mxu0 0.0
    %3167 = vmatpush1.msra.mxu0 0.0
    %3168 = vmatprep.subr.mxu0 0.0
    %3169 = vmatpush1.msra.mxu0 0.0
    %3170 = vmatprep.subr.mxu0 0.0
    %3171 = vmatpush1.msra.mxu0 0.0
    %3172 = vmatprep.mubr.f32.mxu0 0.0
    %3173 = vmatmul.mubr.f32.gmra.mrb[0].mxu0 %v2967
    %v3174 = vpop.f32.mrb[0].mxu0
    %v3175 = vadd.f32 0.0, %v3174
    %v3176 = vpop.f32.mrb[0].mxu0
    %v3177 = vadd.f32 0.0, %v3176
    %3178 = vdwg.mxu0
    %v3179 = vadd.f32 %v2969, %v3104
    %v3180 = vadd.f32 %v2970, %v3106
    %v3181 = vadd.f32 %v2971, %v3175
    %v3182 = vadd.f32 %v2972, %v3177
    %v3183 = vxor.u32 %v3179, 2147483648
    %v3184 = vmul.f32 %v3183, 1.442695
    %v3185 = vpow.pop %v3184
    %v3186 = vadd.f32 %v3185, 1.0
    %v3187 = vrcp.pop %v3186
    %v3188 = vmul.f32 1.0, %v3187
    %v3189 = vxor.u32 %v3180, 2147483648
    %v3190 = vmul.f32 %v3189, 1.442695
    %v3191 = vpow.pop %v3190
    %v3192 = vadd.f32 %v3191, 1.0
    %v3193 = vrcp.pop %v3192
    %v3194 = vmul.f32 1.0, %v3193
    %v3195 = vtanh.pop %v3181
    %v3196 = vxor.u32 %v3182, 2147483648
    %v3197 = vmul.f32 %v3196, 1.442695
    %v3198 = vpow.pop %v3197
    %v3199 = vadd.f32 %v3198, 1.0
    %v3200 = vrcp.pop %v3199
    %v3201 = vmul.f32 1.0, %v3200
    %v3202 = vmul.f32 %v3194, %v2965
    %v3203 = vmul.f32 %v3188, %v3195
    %v3204 = vadd.f32 %v3202, %v3203
    %v3205 = vtanh.pop %v3204
    %v3206 = vmul.f32 %v3201, %v3205
    %3207 = vst [vmem:[%s922] sm:$0xff] %v3206
    %v3208 = vld [vmem:[%s924] sm:$0xff]
    %v3209 = vld [vmem:[%s924 + $0x8] sm:$0xff]
    %v3210 = vld [vmem:[%s924 + $0x10] sm:$0xff]
    %v3211 = vld [vmem:[%s924 + $0x18] sm:$0xff]
    %v3212 = vld [vmem:[%s2733] sm:$0xff]
    %v3213 = vld [vmem:[%s2733 + $0x8] sm:$0xff]
    %v3214 = vld [vmem:[%s2733 + $0x10] sm:$0xff]
    %v3215 = vld [vmem:[%s2733 + $0x18] sm:$0xff]
    %v3216 = vld [vmem:[%s2733 + $0x20] sm:$0xff]
    %v3217 = vld [vmem:[%s2733 + $0x28] sm:$0xff]
    %v3218 = vld [vmem:[%s2733 + $0x30] sm:$0xff]
    %v3219 = vld [vmem:[%s2733 + $0x38] sm:$0xff]
    %v3220 = vld [vmem:[%s2733 + $0x40] sm:$0xff]
    %v3221 = vld [vmem:[%s2733 + $0x48] sm:$0xff]
    %v3222 = vld [vmem:[%s2733 + $0x50] sm:$0xff]
    %v3223 = vld [vmem:[%s2733 + $0x58] sm:$0xff]
    %v3224 = vld [vmem:[%s2733 + $0x60] sm:$0xff]
    %v3225 = vld [vmem:[%s2733 + $0x68] sm:$0xff]
    %v3226 = vld [vmem:[%s2733 + $0x70] sm:$0xff]
    %v3227 = vld [vmem:[%s2733 + $0x78] sm:$0xff]
    %v3228 = vld [vmem:[%s2733 + $0x80] sm:$0xff]
    %v3229 = vld [vmem:[%s2733 + $0x88] sm:$0xff]
    %v3230 = vld [vmem:[%s2733 + $0x90] sm:$0xff]
    %v3231 = vld [vmem:[%s2733 + $0x98] sm:$0xff]
    %v3232 = vld [vmem:[%s2733 + $0xa0] sm:$0xff]
    %v3233 = vld [vmem:[%s2733 + $0xa8] sm:$0xff]
    %v3234 = vld [vmem:[%s2733 + $0xb0] sm:$0xff]
    %v3235 = vld [vmem:[%s2733 + $0xb8] sm:$0xff]
    %v3236 = vld [vmem:[%s2733 + $0xc0] sm:$0xff]
    %v3237 = vld [vmem:[%s2733 + $0xc8] sm:$0xff]
    %v3238 = vld [vmem:[%s2733 + $0xd0] sm:$0xff]
    %v3239 = vld [vmem:[%s2733 + $0xd8] sm:$0xff]
    %v3240 = vld [vmem:[%s2733 + $0xe0] sm:$0xff]
    %v3241 = vld [vmem:[%s2733 + $0xe8] sm:$0xff]
    %v3242 = vld [vmem:[%s2733 + $0xf0] sm:$0xff]
    %v3243 = vld [vmem:[%s2733 + $0xf8] sm:$0xff]
    %v3244 = vld [vmem:[%s2733 + $0x100] sm:$0xff]
    %v3245 = vld [vmem:[%s2733 + $0x108] sm:$0xff]
    %v3246 = vld [vmem:[%s2733 + $0x110] sm:$0xff]
    %v3247 = vld [vmem:[%s2733 + $0x118] sm:$0xff]
    %v3248 = vld [vmem:[%s2733 + $0x120] sm:$0xff]
    %v3249 = vld [vmem:[%s2733 + $0x128] sm:$0xff]
    %v3250 = vld [vmem:[%s2733 + $0x130] sm:$0xff]
    %v3251 = vld [vmem:[%s2733 + $0x138] sm:$0xff]
    %v3252 = vld [vmem:[%s2733 + $0x140] sm:$0xff]
    %v3253 = vld [vmem:[%s2733 + $0x148] sm:$0xff]
    %v3254 = vld [vmem:[%s2733 + $0x150] sm:$0xff]
    %v3255 = vld [vmem:[%s2733 + $0x158] sm:$0xff]
    %v3256 = vld [vmem:[%s2733 + $0x160] sm:$0xff]
    %v3257 = vld [vmem:[%s2733 + $0x168] sm:$0xff]
    %v3258 = vld [vmem:[%s2733 + $0x170] sm:$0xff]
    %v3259 = vld [vmem:[%s2733 + $0x178] sm:$0xff]
    %v3260 = vld [vmem:[%s2733 + $0x180] sm:$0xff]
    %v3261 = vld [vmem:[%s2733 + $0x188] sm:$0xff]
    %v3262 = vld [vmem:[%s2733 + $0x190] sm:$0xff]
    %v3263 = vld [vmem:[%s2733 + $0x198] sm:$0xff]
    %v3264 = vld [vmem:[%s2733 + $0x1a0] sm:$0xff]
    %v3265 = vld [vmem:[%s2733 + $0x1a8] sm:$0xff]
    %v3266 = vld [vmem:[%s2733 + $0x1b0] sm:$0xff]
    %v3267 = vld [vmem:[%s2733 + $0x1b8] sm:$0xff]
    %v3268 = vld [vmem:[%s2733 + $0x1c0] sm:$0xff]
    %v3269 = vld [vmem:[%s2733 + $0x1c8] sm:$0xff]
    %v3270 = vld [vmem:[%s2733 + $0x1d0] sm:$0xff]
    %v3271 = vld [vmem:[%s2733 + $0x1d8] sm:$0xff]
    %v3272 = vld [vmem:[%s2733 + $0x1e0] sm:$0xff]
    %v3273 = vld [vmem:[%s2733 + $0x1e8] sm:$0xff]
    %v3274 = vld [vmem:[%s2733 + $0x1f0] sm:$0xff]
    %v3275 = vld [vmem:[%s2733 + $0x1f8] sm:$0xff]
    %3276 = vmatprep.subr.mxu0 %v3213
    %3277 = vmatpush1.msra.mxu0 %v3212
    %3278 = vmatprep.subr.mxu0 %v3217
    %3279 = vmatpush1.msra.mxu0 %v3216
    %3280 = vmatprep.subr.mxu0 %v3221
    %3281 = vmatpush1.msra.mxu0 %v3220
    %3282 = vmatprep.subr.mxu0 %v3225
    %3283 = vmatpush1.msra.mxu0 %v3224
    %3284 = vmatprep.subr.mxu0 %v3229
    %3285 = vmatpush1.msra.mxu0 %v3228
    %3286 = vmatprep.subr.mxu0 %v3233
    %3287 = vmatpush1.msra.mxu0 %v3232
    %3288 = vmatprep.subr.mxu0 %v3237
    %3289 = vmatpush1.msra.mxu0 %v3236
    %3290 = vmatprep.subr.mxu0 %v3241
    %3291 = vmatpush1.msra.mxu0 %v3240
    %3292 = vmatprep.subr.mxu0 %v3245
    %3293 = vmatpush1.msra.mxu0 %v3244
    %3294 = vmatprep.subr.mxu0 %v3249
    %3295 = vmatpush1.msra.mxu0 %v3248
    %3296 = vmatprep.subr.mxu0 %v3253
    %3297 = vmatpush1.msra.mxu0 %v3252
    %3298 = vmatprep.subr.mxu0 %v3257
    %3299 = vmatpush1.msra.mxu0 %v3256
    %3300 = vmatprep.subr.mxu0 %v3261
    %3301 = vmatpush1.msra.mxu0 %v3260
    %3302 = vmatprep.subr.mxu0 %v3265
    %3303 = vmatpush1.msra.mxu0 %v3264
    %3304 = vmatprep.subr.mxu0 %v3269
    %3305 = vmatpush1.msra.mxu0 %v3268
    %3306 = vmatprep.subr.mxu0 %v3273
    %3307 = vmatpush1.msra.mxu0 %v3272
    %3308 = vmatprep.subr.mxu0 0.0
    %3309 = vmatpush1.msra.mxu0 0.0
    %3310 = vmatprep.subr.mxu0 0.0
    %3311 = vmatpush1.msra.mxu0 0.0
    %3312 = vmatprep.subr.mxu0 0.0
    %3313 = vmatpush1.msra.mxu0 0.0
    %3314 = vmatprep.subr.mxu0 0.0
    %3315 = vmatpush1.msra.mxu0 0.0
    %3316 = vmatprep.subr.mxu0 0.0
    %3317 = vmatpush1.msra.mxu0 0.0
    %3318 = vmatprep.subr.mxu0 0.0
    %3319 = vmatpush1.msra.mxu0 0.0
    %3320 = vmatprep.subr.mxu0 0.0
    %3321 = vmatpush1.msra.mxu0 0.0
    %3322 = vmatprep.subr.mxu0 0.0
    %3323 = vmatpush1.msra.mxu0 0.0
    %3324 = vmatprep.subr.mxu0 0.0
    %3325 = vmatpush1.msra.mxu0 0.0
    %3326 = vmatprep.subr.mxu0 0.0
    %3327 = vmatpush1.msra.mxu0 0.0
    %3328 = vmatprep.subr.mxu0 0.0
    %3329 = vmatpush1.msra.mxu0 0.0
    %3330 = vmatprep.subr.mxu0 0.0
    %3331 = vmatpush1.msra.mxu0 0.0
    %3332 = vmatprep.subr.mxu0 0.0
    %3333 = vmatpush1.msra.mxu0 0.0
    %3334 = vmatprep.subr.mxu0 0.0
    %3335 = vmatpush1.msra.mxu0 0.0
    %3336 = vmatprep.subr.mxu0 0.0
    %3337 = vmatpush1.msra.mxu0 0.0
    %3338 = vmatprep.subr.mxu0 0.0
    %3339 = vmatpush1.msra.mxu0 0.0
    %3340 = vmatprep.mubr.f32.mxu0 0.0
    %3341 = vmatmul.mubr.f32.gmra.mrb[0].mxu0 %v3206
    %v3342 = vpop.f32.mrb[0].mxu0
    %v3343 = vadd.f32 0.0, %v3342
    %v3344 = vpop.f32.mrb[0].mxu0
    %v3345 = vadd.f32 0.0, %v3344
    %3346 = vdwg.mxu0
    %3347 = vmatprep.subr.mxu0 %v3215
    %3348 = vmatpush1.msra.mxu0 %v3214
    %3349 = vmatprep.subr.mxu0 %v3219
    %3350 = vmatpush1.msra.mxu0 %v3218
    %3351 = vmatprep.subr.mxu0 %v3223
    %3352 = vmatpush1.msra.mxu0 %v3222
    %3353 = vmatprep.subr.mxu0 %v3227
    %3354 = vmatpush1.msra.mxu0 %v3226
    %3355 = vmatprep.subr.mxu0 %v3231
    %3356 = vmatpush1.msra.mxu0 %v3230
    %3357 = vmatprep.subr.mxu0 %v3235
    %3358 = vmatpush1.msra.mxu0 %v3234
    %3359 = vmatprep.subr.mxu0 %v3239
    %3360 = vmatpush1.msra.mxu0 %v3238
    %3361 = vmatprep.subr.mxu0 %v3243
    %3362 = vmatpush1.msra.mxu0 %v3242
    %3363 = vmatprep.subr.mxu0 %v3247
    %3364 = vmatpush1.msra.mxu0 %v3246
    %3365 = vmatprep.subr.mxu0 %v3251
    %3366 = vmatpush1.msra.mxu0 %v3250
    %3367 = vmatprep.subr.mxu0 %v3255
    %3368 = vmatpush1.msra.mxu0 %v3254
    %3369 = vmatprep.subr.mxu0 %v3259
    %3370 = vmatpush1.msra.mxu0 %v3258
    %3371 = vmatprep.subr.mxu0 %v3263
    %3372 = vmatpush1.msra.mxu0 %v3262
    %3373 = vmatprep.subr.mxu0 %v3267
    %3374 = vmatpush1.msra.mxu0 %v3266
    %3375 = vmatprep.subr.mxu0 %v3271
    %3376 = vmatpush1.msra.mxu0 %v3270
    %3377 = vmatprep.subr.mxu0 %v3275
    %3378 = vmatpush1.msra.mxu0 %v3274
    %3379 = vmatprep.subr.mxu0 0.0
    %3380 = vmatpush1.msra.mxu0 0.0
    %3381 = vmatprep.subr.mxu0 0.0
    %3382 = vmatpush1.msra.mxu0 0.0
    %3383 = vmatprep.subr.mxu0 0.0
    %3384 = vmatpush1.msra.mxu0 0.0
    %3385 = vmatprep.subr.mxu0 0.0
    %3386 = vmatpush1.msra.mxu0 0.0
    %3387 = vmatprep.subr.mxu0 0.0
    %3388 = vmatpush1.msra.mxu0 0.0
    %3389 = vmatprep.subr.mxu0 0.0
    %3390 = vmatpush1.msra.mxu0 0.0
    %3391 = vmatprep.subr.mxu0 0.0
    %3392 = vmatpush1.msra.mxu0 0.0
    %3393 = vmatprep.subr.mxu0 0.0
    %3394 = vmatpush1.msra.mxu0 0.0
    %3395 = vmatprep.subr.mxu0 0.0
    %3396 = vmatpush1.msra.mxu0 0.0
    %3397 = vmatprep.subr.mxu0 0.0
    %3398 = vmatpush1.msra.mxu0 0.0
    %3399 = vmatprep.subr.mxu0 0.0
    %3400 = vmatpush1.msra.mxu0 0.0
    %3401 = vmatprep.subr.mxu0 0.0
    %3402 = vmatpush1.msra.mxu0 0.0
    %3403 = vmatprep.subr.mxu0 0.0
    %3404 = vmatpush1.msra.mxu0 0.0
    %3405 = vmatprep.subr.mxu0 0.0
    %3406 = vmatpush1.msra.mxu0 0.0
    %3407 = vmatprep.subr.mxu0 0.0
    %3408 = vmatpush1.msra.mxu0 0.0
    %3409 = vmatprep.subr.mxu0 0.0
    %3410 = vmatpush1.msra.mxu0 0.0
    %3411 = vmatprep.mubr.f32.mxu0 0.0
    %3412 = vmatmul.mubr.f32.gmra.mrb[0].mxu0 %v3206
    %v3413 = vpop.f32.mrb[0].mxu0
    %v3414 = vadd.f32 0.0, %v3413
    %v3415 = vpop.f32.mrb[0].mxu0
    %v3416 = vadd.f32 0.0, %v3415
    %3417 = vdwg.mxu0
    %v3418 = vadd.f32 %v3208, %v3343
    %v3419 = vadd.f32 %v3209, %v3345
    %v3420 = vadd.f32 %v3210, %v3414
    %v3421 = vadd.f32 %v3211, %v3416
    %v3422 = vxor.u32 %v3418, 2147483648
    %v3423 = vmul.f32 %v3422, 1.442695
    %v3424 = vpow.pop %v3423
    %v3425 = vadd.f32 %v3424, 1.0
    %v3426 = vrcp.pop %v3425
    %v3427 = vmul.f32 1.0, %v3426
    %v3428 = vxor.u32 %v3419, 2147483648
    %v3429 = vmul.f32 %v3428, 1.442695
    %v3430 = vpow.pop %v3429
    %v3431 = vadd.f32 %v3430, 1.0
    %v3432 = vrcp.pop %v3431
    %v3433 = vmul.f32 1.0, %v3432
    %v3434 = vtanh.pop %v3420
    %v3435 = vxor.u32 %v3421, 2147483648
    %v3436 = vmul.f32 %v3435, 1.442695
    %v3437 = vpow.pop %v3436
    %v3438 = vadd.f32 %v3437, 1.0
    %v3439 = vrcp.pop %v3438
    %v3440 = vmul.f32 1.0, %v3439
    %v3441 = vmul.f32 %v3433, %v3204
    %v3442 = vmul.f32 %v3427, %v3434
    %v3443 = vadd.f32 %v3441, %v3442
    %v3444 = vtanh.pop %v3443
    %v3445 = vmul.f32 %v3440, %v3444
    %3446 = vst [vmem:[%s1163] sm:$0xff] %v3445
    %v3447 = vld [vmem:[%s1165] sm:$0xff]
    %v3448 = vld [vmem:[%s1165 + $0x8] sm:$0xff]
    %v3449 = vld [vmem:[%s1165 + $0x10] sm:$0xff]
    %v3450 = vld [vmem:[%s1165 + $0x18] sm:$0xff]
    %v3451 = vld [vmem:[%s2733] sm:$0xff]
    %v3452 = vld [vmem:[%s2733 + $0x8] sm:$0xff]
    %v3453 = vld [vmem:[%s2733 + $0x10] sm:$0xff]
    %v3454 = vld [vmem:[%s2733 + $0x18] sm:$0xff]
    %v3455 = vld [vmem:[%s2733 + $0x20] sm:$0xff]
    %v3456 = vld [vmem:[%s2733 + $0x28] sm:$0xff]
    %v3457 = vld [vmem:[%s2733 + $0x30] sm:$0xff]
    %v3458 = vld [vmem:[%s2733 + $0x38] sm:$0xff]
    %v3459 = vld [vmem:[%s2733 + $0x40] sm:$0xff]
    %v3460 = vld [vmem:[%s2733 + $0x48] sm:$0xff]
    %v3461 = vld [vmem:[%s2733 + $0x50] sm:$0xff]
    %v3462 = vld [vmem:[%s2733 + $0x58] sm:$0xff]
    %v3463 = vld [vmem:[%s2733 + $0x60] sm:$0xff]
    %v3464 = vld [vmem:[%s2733 + $0x68] sm:$0xff]
    %v3465 = vld [vmem:[%s2733 + $0x70] sm:$0xff]
    %v3466 = vld [vmem:[%s2733 + $0x78] sm:$0xff]
    %v3467 = vld [vmem:[%s2733 + $0x80] sm:$0xff]
    %v3468 = vld [vmem:[%s2733 + $0x88] sm:$0xff]
    %v3469 = vld [vmem:[%s2733 + $0x90] sm:$0xff]
    %v3470 = vld [vmem:[%s2733 + $0x98] sm:$0xff]
    %v3471 = vld [vmem:[%s2733 + $0xa0] sm:$0xff]
    %v3472 = vld [vmem:[%s2733 + $0xa8] sm:$0xff]
    %v3473 = vld [vmem:[%s2733 + $0xb0] sm:$0xff]
    %v3474 = vld [vmem:[%s2733 + $0xb8] sm:$0xff]
    %v3475 = vld [vmem:[%s2733 + $0xc0] sm:$0xff]
    %v3476 = vld [vmem:[%s2733 + $0xc8] sm:$0xff]
    %v3477 = vld [vmem:[%s2733 + $0xd0] sm:$0xff]
    %v3478 = vld [vmem:[%s2733 + $0xd8] sm:$0xff]
    %v3479 = vld [vmem:[%s2733 + $0xe0] sm:$0xff]
    %v3480 = vld [vmem:[%s2733 + $0xe8] sm:$0xff]
    %v3481 = vld [vmem:[%s2733 + $0xf0] sm:$0xff]
    %v3482 = vld [vmem:[%s2733 + $0xf8] sm:$0xff]
    %v3483 = vld [vmem:[%s2733 + $0x100] sm:$0xff]
    %v3484 = vld [vmem:[%s2733 + $0x108] sm:$0xff]
    %v3485 = vld [vmem:[%s2733 + $0x110] sm:$0xff]
    %v3486 = vld [vmem:[%s2733 + $0x118] sm:$0xff]
    %v3487 = vld [vmem:[%s2733 + $0x120] sm:$0xff]
    %v3488 = vld [vmem:[%s2733 + $0x128] sm:$0xff]
    %v3489 = vld [vmem:[%s2733 + $0x130] sm:$0xff]
    %v3490 = vld [vmem:[%s2733 + $0x138] sm:$0xff]
    %v3491 = vld [vmem:[%s2733 + $0x140] sm:$0xff]
    %v3492 = vld [vmem:[%s2733 + $0x148] sm:$0xff]
    %v3493 = vld [vmem:[%s2733 + $0x150] sm:$0xff]
    %v3494 = vld [vmem:[%s2733 + $0x158] sm:$0xff]
    %v3495 = vld [vmem:[%s2733 + $0x160] sm:$0xff]
    %v3496 = vld [vmem:[%s2733 + $0x168] sm:$0xff]
    %v3497 = vld [vmem:[%s2733 + $0x170] sm:$0xff]
    %v3498 = vld [vmem:[%s2733 + $0x178] sm:$0xff]
    %v3499 = vld [vmem:[%s2733 + $0x180] sm:$0xff]
    %v3500 = vld [vmem:[%s2733 + $0x188] sm:$0xff]
    %v3501 = vld [vmem:[%s2733 + $0x190] sm:$0xff]
    %v3502 = vld [vmem:[%s2733 + $0x198] sm:$0xff]
    %v3503 = vld [vmem:[%s2733 + $0x1a0] sm:$0xff]
    %v3504 = vld [vmem:[%s2733 + $0x1a8] sm:$0xff]
    %v3505 = vld [vmem:[%s2733 + $0x1b0] sm:$0xff]
    %v3506 = vld [vmem:[%s2733 + $0x1b8] sm:$0xff]
    %v3507 = vld [vmem:[%s2733 + $0x1c0] sm:$0xff]
    %v3508 = vld [vmem:[%s2733 + $0x1c8] sm:$0xff]
    %v3509 = vld [vmem:[%s2733 + $0x1d0] sm:$0xff]
    %v3510 = vld [vmem:[%s2733 + $0x1d8] sm:$0xff]
    %v3511 = vld [vmem:[%s2733 + $0x1e0] sm:$0xff]
    %v3512 = vld [vmem:[%s2733 + $0x1e8] sm:$0xff]
    %v3513 = vld [vmem:[%s2733 + $0x1f0] sm:$0xff]
    %v3514 = vld [vmem:[%s2733 + $0x1f8] sm:$0xff]
    %3515 = vmatprep.subr.mxu0 %v3452
    %3516 = vmatpush1.msra.mxu0 %v3451
    %3517 = vmatprep.subr.mxu0 %v3456
    %3518 = vmatpush1.msra.mxu0 %v3455
    %3519 = vmatprep.subr.mxu0 %v3460
    %3520 = vmatpush1.msra.mxu0 %v3459
    %3521 = vmatprep.subr.mxu0 %v3464
    %3522 = vmatpush1.msra.mxu0 %v3463
    %3523 = vmatprep.subr.mxu0 %v3468
    %3524 = vmatpush1.msra.mxu0 %v3467
    %3525 = vmatprep.subr.mxu0 %v3472
    %3526 = vmatpush1.msra.mxu0 %v3471
    %3527 = vmatprep.subr.mxu0 %v3476
    %3528 = vmatpush1.msra.mxu0 %v3475
    %3529 = vmatprep.subr.mxu0 %v3480
    %3530 = vmatpush1.msra.mxu0 %v3479
    %3531 = vmatprep.subr.mxu0 %v3484
    %3532 = vmatpush1.msra.mxu0 %v3483
    %3533 = vmatprep.subr.mxu0 %v3488
    %3534 = vmatpush1.msra.mxu0 %v3487
    %3535 = vmatprep.subr.mxu0 %v3492
    %3536 = vmatpush1.msra.mxu0 %v3491
    %3537 = vmatprep.subr.mxu0 %v3496
    %3538 = vmatpush1.msra.mxu0 %v3495
    %3539 = vmatprep.subr.mxu0 %v3500
    %3540 = vmatpush1.msra.mxu0 %v3499
    %3541 = vmatprep.subr.mxu0 %v3504
    %3542 = vmatpush1.msra.mxu0 %v3503
    %3543 = vmatprep.subr.mxu0 %v3508
    %3544 = vmatpush1.msra.mxu0 %v3507
    %3545 = vmatprep.subr.mxu0 %v3512
    %3546 = vmatpush1.msra.mxu0 %v3511
    %3547 = vmatprep.subr.mxu0 0.0
    %3548 = vmatpush1.msra.mxu0 0.0
    %3549 = vmatprep.subr.mxu0 0.0
    %3550 = vmatpush1.msra.mxu0 0.0
    %3551 = vmatprep.subr.mxu0 0.0
    %3552 = vmatpush1.msra.mxu0 0.0
    %3553 = vmatprep.subr.mxu0 0.0
    %3554 = vmatpush1.msra.mxu0 0.0
    %3555 = vmatprep.subr.mxu0 0.0
    %3556 = vmatpush1.msra.mxu0 0.0
    %3557 = vmatprep.subr.mxu0 0.0
    %3558 = vmatpush1.msra.mxu0 0.0
    %3559 = vmatprep.subr.mxu0 0.0
    %3560 = vmatpush1.msra.mxu0 0.0
    %3561 = vmatprep.subr.mxu0 0.0
    %3562 = vmatpush1.msra.mxu0 0.0
    %3563 = vmatprep.subr.mxu0 0.0
    %3564 = vmatpush1.msra.mxu0 0.0
    %3565 = vmatprep.subr.mxu0 0.0
    %3566 = vmatpush1.msra.mxu0 0.0
    %3567 = vmatprep.subr.mxu0 0.0
    %3568 = vmatpush1.msra.mxu0 0.0
    %3569 = vmatprep.subr.mxu0 0.0
    %3570 = vmatpush1.msra.mxu0 0.0
    %3571 = vmatprep.subr.mxu0 0.0
    %3572 = vmatpush1.msra.mxu0 0.0
    %3573 = vmatprep.subr.mxu0 0.0
    %3574 = vmatpush1.msra.mxu0 0.0
    %3575 = vmatprep.subr.mxu0 0.0
    %3576 = vmatpush1.msra.mxu0 0.0
    %3577 = vmatprep.subr.mxu0 0.0
    %3578 = vmatpush1.msra.mxu0 0.0
    %3579 = vmatprep.mubr.f32.mxu0 0.0
    %3580 = vmatmul.mubr.f32.gmra.mrb[0].mxu0 %v3445
    %v3581 = vpop.f32.mrb[0].mxu0
    %v3582 = vadd.f32 0.0, %v3581
    %v3583 = vpop.f32.mrb[0].mxu0
    %v3584 = vadd.f32 0.0, %v3583
    %3585 = vdwg.mxu0
    %3586 = vmatprep.subr.mxu0 %v3454
    %3587 = vmatpush1.msra.mxu0 %v3453
    %3588 = vmatprep.subr.mxu0 %v3458
    %3589 = vmatpush1.msra.mxu0 %v3457
    %3590 = vmatprep.subr.mxu0 %v3462
    %3591 = vmatpush1.msra.mxu0 %v3461
    %3592 = vmatprep.subr.mxu0 %v3466
    %3593 = vmatpush1.msra.mxu0 %v3465
    %3594 = vmatprep.subr.mxu0 %v3470
    %3595 = vmatpush1.msra.mxu0 %v3469
    %3596 = vmatprep.subr.mxu0 %v3474
    %3597 = vmatpush1.msra.mxu0 %v3473
    %3598 = vmatprep.subr.mxu0 %v3478
    %3599 = vmatpush1.msra.mxu0 %v3477
    %3600 = vmatprep.subr.mxu0 %v3482
    %3601 = vmatpush1.msra.mxu0 %v3481
    %3602 = vmatprep.subr.mxu0 %v3486
    %3603 = vmatpush1.msra.mxu0 %v3485
    %3604 = vmatprep.subr.mxu0 %v3490
    %3605 = vmatpush1.msra.mxu0 %v3489
    %3606 = vmatprep.subr.mxu0 %v3494
    %3607 = vmatpush1.msra.mxu0 %v3493
    %3608 = vmatprep.subr.mxu0 %v3498
    %3609 = vmatpush1.msra.mxu0 %v3497
    %3610 = vmatprep.subr.mxu0 %v3502
    %3611 = vmatpush1.msra.mxu0 %v3501
    %3612 = vmatprep.subr.mxu0 %v3506
    %3613 = vmatpush1.msra.mxu0 %v3505
    %3614 = vmatprep.subr.mxu0 %v3510
    %3615 = vmatpush1.msra.mxu0 %v3509
    %3616 = vmatprep.subr.mxu0 %v3514
    %3617 = vmatpush1.msra.mxu0 %v3513
    %3618 = vmatprep.subr.mxu0 0.0
    %3619 = vmatpush1.msra.mxu0 0.0
    %3620 = vmatprep.subr.mxu0 0.0
    %3621 = vmatpush1.msra.mxu0 0.0
    %3622 = vmatprep.subr.mxu0 0.0
    %3623 = vmatpush1.msra.mxu0 0.0
    %3624 = vmatprep.subr.mxu0 0.0
    %3625 = vmatpush1.msra.mxu0 0.0
    %3626 = vmatprep.subr.mxu0 0.0
    %3627 = vmatpush1.msra.mxu0 0.0
    %3628 = vmatprep.subr.mxu0 0.0
    %3629 = vmatpush1.msra.mxu0 0.0
    %3630 = vmatprep.subr.mxu0 0.0
    %3631 = vmatpush1.msra.mxu0 0.0
    %3632 = vmatprep.subr.mxu0 0.0
    %3633 = vmatpush1.msra.mxu0 0.0
    %3634 = vmatprep.subr.mxu0 0.0
    %3635 = vmatpush1.msra.mxu0 0.0
    %3636 = vmatprep.subr.mxu0 0.0
    %3637 = vmatpush1.msra.mxu0 0.0
    %3638 = vmatprep.subr.mxu0 0.0
    %3639 = vmatpush1.msra.mxu0 0.0
    %3640 = vmatprep.subr.mxu0 0.0
    %3641 = vmatpush1.msra.mxu0 0.0
    %3642 = vmatprep.subr.mxu0 0.0
    %3643 = vmatpush1.msra.mxu0 0.0
    %3644 = vmatprep.subr.mxu0 0.0
    %3645 = vmatpush1.msra.mxu0 0.0
    %3646 = vmatprep.subr.mxu0 0.0
    %3647 = vmatpush1.msra.mxu0 0.0
    %3648 = vmatprep.subr.mxu0 0.0
    %3649 = vmatpush1.msra.mxu0 0.0
    %3650 = vmatprep.mubr.f32.mxu0 0.0
    %3651 = vmatmul.mubr.f32.gmra.mrb[0].mxu0 %v3445
    %v3652 = vpop.f32.mrb[0].mxu0
    %v3653 = vadd.f32 0.0, %v3652
    %v3654 = vpop.f32.mrb[0].mxu0
    %v3655 = vadd.f32 0.0, %v3654
    %3656 = vdwg.mxu0
    %v3657 = vadd.f32 %v3447, %v3582
    %v3658 = vadd.f32 %v3448, %v3584
    %v3659 = vadd.f32 %v3449, %v3653
    %v3660 = vadd.f32 %v3450, %v3655
    %v3661 = vxor.u32 %v3657, 2147483648
    %v3662 = vmul.f32 %v3661, 1.442695
    %v3663 = vpow.pop %v3662
    %v3664 = vadd.f32 %v3663, 1.0
    %v3665 = vrcp.pop %v3664
    %v3666 = vmul.f32 1.0, %v3665
    %v3667 = vxor.u32 %v3658, 2147483648
    %v3668 = vmul.f32 %v3667, 1.442695
    %v3669 = vpow.pop %v3668
    %v3670 = vadd.f32 %v3669, 1.0
    %v3671 = vrcp.pop %v3670
    %v3672 = vmul.f32 1.0, %v3671
    %v3673 = vtanh.pop %v3659
    %v3674 = vxor.u32 %v3660, 2147483648
    %v3675 = vmul.f32 %v3674, 1.442695
    %v3676 = vpow.pop %v3675
    %v3677 = vadd.f32 %v3676, 1.0
    %v3678 = vrcp.pop %v3677
    %v3679 = vmul.f32 1.0, %v3678
    %v3680 = vmul.f32 %v3672, %v3443
    %v3681 = vmul.f32 %v3666, %v3673
    %v3682 = vadd.f32 %v3680, %v3681
    %v3683 = vtanh.pop %v3682
    %v3684 = vmul.f32 %v3679, %v3683
    %3685 = vst [vmem:[%s1404] sm:$0xff] %v3684
    %v3686 = vld [vmem:[%s1406] sm:$0xff]
    %v3687 = vld [vmem:[%s1406 + $0x8] sm:$0xff]
    %v3688 = vld [vmem:[%s1406 + $0x10] sm:$0xff]
    %v3689 = vld [vmem:[%s1406 + $0x18] sm:$0xff]
    %v3690 = vld [vmem:[%s2733] sm:$0xff]
    %v3691 = vld [vmem:[%s2733 + $0x8] sm:$0xff]
    %v3692 = vld [vmem:[%s2733 + $0x10] sm:$0xff]
    %v3693 = vld [vmem:[%s2733 + $0x18] sm:$0xff]
    %v3694 = vld [vmem:[%s2733 + $0x20] sm:$0xff]
    %v3695 = vld [vmem:[%s2733 + $0x28] sm:$0xff]
    %v3696 = vld [vmem:[%s2733 + $0x30] sm:$0xff]
    %v3697 = vld [vmem:[%s2733 + $0x38] sm:$0xff]
    %v3698 = vld [vmem:[%s2733 + $0x40] sm:$0xff]
    %v3699 = vld [vmem:[%s2733 + $0x48] sm:$0xff]
    %v3700 = vld [vmem:[%s2733 + $0x50] sm:$0xff]
    %v3701 = vld [vmem:[%s2733 + $0x58] sm:$0xff]
    %v3702 = vld [vmem:[%s2733 + $0x60] sm:$0xff]
    %v3703 = vld [vmem:[%s2733 + $0x68] sm:$0xff]
    %v3704 = vld [vmem:[%s2733 + $0x70] sm:$0xff]
    %v3705 = vld [vmem:[%s2733 + $0x78] sm:$0xff]
    %v3706 = vld [vmem:[%s2733 + $0x80] sm:$0xff]
    %v3707 = vld [vmem:[%s2733 + $0x88] sm:$0xff]
    %v3708 = vld [vmem:[%s2733 + $0x90] sm:$0xff]
    %v3709 = vld [vmem:[%s2733 + $0x98] sm:$0xff]
    %v3710 = vld [vmem:[%s2733 + $0xa0] sm:$0xff]
    %v3711 = vld [vmem:[%s2733 + $0xa8] sm:$0xff]
    %v3712 = vld [vmem:[%s2733 + $0xb0] sm:$0xff]
    %v3713 = vld [vmem:[%s2733 + $0xb8] sm:$0xff]
    %v3714 = vld [vmem:[%s2733 + $0xc0] sm:$0xff]
    %v3715 = vld [vmem:[%s2733 + $0xc8] sm:$0xff]
    %v3716 = vld [vmem:[%s2733 + $0xd0] sm:$0xff]
    %v3717 = vld [vmem:[%s2733 + $0xd8] sm:$0xff]
    %v3718 = vld [vmem:[%s2733 + $0xe0] sm:$0xff]
    %v3719 = vld [vmem:[%s2733 + $0xe8] sm:$0xff]
    %v3720 = vld [vmem:[%s2733 + $0xf0] sm:$0xff]
    %v3721 = vld [vmem:[%s2733 + $0xf8] sm:$0xff]
    %v3722 = vld [vmem:[%s2733 + $0x100] sm:$0xff]
    %v3723 = vld [vmem:[%s2733 + $0x108] sm:$0xff]
    %v3724 = vld [vmem:[%s2733 + $0x110] sm:$0xff]
    %v3725 = vld [vmem:[%s2733 + $0x118] sm:$0xff]
    %v3726 = vld [vmem:[%s2733 + $0x120] sm:$0xff]
    %v3727 = vld [vmem:[%s2733 + $0x128] sm:$0xff]
    %v3728 = vld [vmem:[%s2733 + $0x130] sm:$0xff]
    %v3729 = vld [vmem:[%s2733 + $0x138] sm:$0xff]
    %v3730 = vld [vmem:[%s2733 + $0x140] sm:$0xff]
    %v3731 = vld [vmem:[%s2733 + $0x148] sm:$0xff]
    %v3732 = vld [vmem:[%s2733 + $0x150] sm:$0xff]
    %v3733 = vld [vmem:[%s2733 + $0x158] sm:$0xff]
    %v3734 = vld [vmem:[%s2733 + $0x160] sm:$0xff]
    %v3735 = vld [vmem:[%s2733 + $0x168] sm:$0xff]
    %v3736 = vld [vmem:[%s2733 + $0x170] sm:$0xff]
    %v3737 = vld [vmem:[%s2733 + $0x178] sm:$0xff]
    %v3738 = vld [vmem:[%s2733 + $0x180] sm:$0xff]
    %v3739 = vld [vmem:[%s2733 + $0x188] sm:$0xff]
    %v3740 = vld [vmem:[%s2733 + $0x190] sm:$0xff]
    %v3741 = vld [vmem:[%s2733 + $0x198] sm:$0xff]
    %v3742 = vld [vmem:[%s2733 + $0x1a0] sm:$0xff]
    %v3743 = vld [vmem:[%s2733 + $0x1a8] sm:$0xff]
    %v3744 = vld [vmem:[%s2733 + $0x1b0] sm:$0xff]
    %v3745 = vld [vmem:[%s2733 + $0x1b8] sm:$0xff]
    %v3746 = vld [vmem:[%s2733 + $0x1c0] sm:$0xff]
    %v3747 = vld [vmem:[%s2733 + $0x1c8] sm:$0xff]
    %v3748 = vld [vmem:[%s2733 + $0x1d0] sm:$0xff]
    %v3749 = vld [vmem:[%s2733 + $0x1d8] sm:$0xff]
    %v3750 = vld [vmem:[%s2733 + $0x1e0] sm:$0xff]
    %v3751 = vld [vmem:[%s2733 + $0x1e8] sm:$0xff]
    %v3752 = vld [vmem:[%s2733 + $0x1f0] sm:$0xff]
    %v3753 = vld [vmem:[%s2733 + $0x1f8] sm:$0xff]
    %3754 = vmatprep.subr.mxu0 %v3691
    %3755 = vmatpush1.msra.mxu0 %v3690
    %3756 = vmatprep.subr.mxu0 %v3695
    %3757 = vmatpush1.msra.mxu0 %v3694
    %3758 = vmatprep.subr.mxu0 %v3699
    %3759 = vmatpush1.msra.mxu0 %v3698
    %3760 = vmatprep.subr.mxu0 %v3703
    %3761 = vmatpush1.msra.mxu0 %v3702
    %3762 = vmatprep.subr.mxu0 %v3707
    %3763 = vmatpush1.msra.mxu0 %v3706
    %3764 = vmatprep.subr.mxu0 %v3711
    %3765 = vmatpush1.msra.mxu0 %v3710
    %3766 = vmatprep.subr.mxu0 %v3715
    %3767 = vmatpush1.msra.mxu0 %v3714
    %3768 = vmatprep.subr.mxu0 %v3719
    %3769 = vmatpush1.msra.mxu0 %v3718
    %3770 = vmatprep.subr.mxu0 %v3723
    %3771 = vmatpush1.msra.mxu0 %v3722
    %3772 = vmatprep.subr.mxu0 %v3727
    %3773 = vmatpush1.msra.mxu0 %v3726
    %3774 = vmatprep.subr.mxu0 %v3731
    %3775 = vmatpush1.msra.mxu0 %v3730
    %3776 = vmatprep.subr.mxu0 %v3735
    %3777 = vmatpush1.msra.mxu0 %v3734
    %3778 = vmatprep.subr.mxu0 %v3739
    %3779 = vmatpush1.msra.mxu0 %v3738
    %3780 = vmatprep.subr.mxu0 %v3743
    %3781 = vmatpush1.msra.mxu0 %v3742
    %3782 = vmatprep.subr.mxu0 %v3747
    %3783 = vmatpush1.msra.mxu0 %v3746
    %3784 = vmatprep.subr.mxu0 %v3751
    %3785 = vmatpush1.msra.mxu0 %v3750
    %3786 = vmatprep.subr.mxu0 0.0
    %3787 = vmatpush1.msra.mxu0 0.0
    %3788 = vmatprep.subr.mxu0 0.0
    %3789 = vmatpush1.msra.mxu0 0.0
    %3790 = vmatprep.subr.mxu0 0.0
    %3791 = vmatpush1.msra.mxu0 0.0
    %3792 = vmatprep.subr.mxu0 0.0
    %3793 = vmatpush1.msra.mxu0 0.0
    %3794 = vmatprep.subr.mxu0 0.0
    %3795 = vmatpush1.msra.mxu0 0.0
    %3796 = vmatprep.subr.mxu0 0.0
    %3797 = vmatpush1.msra.mxu0 0.0
    %3798 = vmatprep.subr.mxu0 0.0
    %3799 = vmatpush1.msra.mxu0 0.0
    %3800 = vmatprep.subr.mxu0 0.0
    %3801 = vmatpush1.msra.mxu0 0.0
    %3802 = vmatprep.subr.mxu0 0.0
    %3803 = vmatpush1.msra.mxu0 0.0
    %3804 = vmatprep.subr.mxu0 0.0
    %3805 = vmatpush1.msra.mxu0 0.0
    %3806 = vmatprep.subr.mxu0 0.0
    %3807 = vmatpush1.msra.mxu0 0.0
    %3808 = vmatprep.subr.mxu0 0.0
    %3809 = vmatpush1.msra.mxu0 0.0
    %3810 = vmatprep.subr.mxu0 0.0
    %3811 = vmatpush1.msra.mxu0 0.0
    %3812 = vmatprep.subr.mxu0 0.0
    %3813 = vmatpush1.msra.mxu0 0.0
    %3814 = vmatprep.subr.mxu0 0.0
    %3815 = vmatpush1.msra.mxu0 0.0
    %3816 = vmatprep.subr.mxu0 0.0
    %3817 = vmatpush1.msra.mxu0 0.0
    %3818 = vmatprep.mubr.f32.mxu0 0.0
    %3819 = vmatmul.mubr.f32.gmra.mrb[0].mxu0 %v3684
    %v3820 = vpop.f32.mrb[0].mxu0
    %v3821 = vadd.f32 0.0, %v3820
    %v3822 = vpop.f32.mrb[0].mxu0
    %v3823 = vadd.f32 0.0, %v3822
    %3824 = vdwg.mxu0
    %3825 = vmatprep.subr.mxu0 %v3693
    %3826 = vmatpush1.msra.mxu0 %v3692
    %3827 = vmatprep.subr.mxu0 %v3697
    %3828 = vmatpush1.msra.mxu0 %v3696
    %3829 = vmatprep.subr.mxu0 %v3701
    %3830 = vmatpush1.msra.mxu0 %v3700
    %3831 = vmatprep.subr.mxu0 %v3705
    %3832 = vmatpush1.msra.mxu0 %v3704
    %3833 = vmatprep.subr.mxu0 %v3709
    %3834 = vmatpush1.msra.mxu0 %v3708
    %3835 = vmatprep.subr.mxu0 %v3713
    %3836 = vmatpush1.msra.mxu0 %v3712
    %3837 = vmatprep.subr.mxu0 %v3717
    %3838 = vmatpush1.msra.mxu0 %v3716
    %3839 = vmatprep.subr.mxu0 %v3721
    %3840 = vmatpush1.msra.mxu0 %v3720
    %3841 = vmatprep.subr.mxu0 %v3725
    %3842 = vmatpush1.msra.mxu0 %v3724
    %3843 = vmatprep.subr.mxu0 %v3729
    %3844 = vmatpush1.msra.mxu0 %v3728
    %3845 = vmatprep.subr.mxu0 %v3733
    %3846 = vmatpush1.msra.mxu0 %v3732
    %3847 = vmatprep.subr.mxu0 %v3737
    %3848 = vmatpush1.msra.mxu0 %v3736
    %3849 = vmatprep.subr.mxu0 %v3741
    %3850 = vmatpush1.msra.mxu0 %v3740
    %3851 = vmatprep.subr.mxu0 %v3745
    %3852 = vmatpush1.msra.mxu0 %v3744
    %3853 = vmatprep.subr.mxu0 %v3749
    %3854 = vmatpush1.msra.mxu0 %v3748
    %3855 = vmatprep.subr.mxu0 %v3753
    %3856 = vmatpush1.msra.mxu0 %v3752
    %3857 = vmatprep.subr.mxu0 0.0
    %3858 = vmatpush1.msra.mxu0 0.0
    %3859 = vmatprep.subr.mxu0 0.0
    %3860 = vmatpush1.msra.mxu0 0.0
    %3861 = vmatprep.subr.mxu0 0.0
    %3862 = vmatpush1.msra.mxu0 0.0
    %3863 = vmatprep.subr.mxu0 0.0
    %3864 = vmatpush1.msra.mxu0 0.0
    %3865 = vmatprep.subr.mxu0 0.0
    %3866 = vmatpush1.msra.mxu0 0.0
    %3867 = vmatprep.subr.mxu0 0.0
    %3868 = vmatpush1.msra.mxu0 0.0
    %3869 = vmatprep.subr.mxu0 0.0
    %3870 = vmatpush1.msra.mxu0 0.0
    %3871 = vmatprep.subr.mxu0 0.0
    %3872 = vmatpush1.msra.mxu0 0.0
    %3873 = vmatprep.subr.mxu0 0.0
    %3874 = vmatpush1.msra.mxu0 0.0
    %3875 = vmatprep.subr.mxu0 0.0
    %3876 = vmatpush1.msra.mxu0 0.0
    %3877 = vmatprep.subr.mxu0 0.0
    %3878 = vmatpush1.msra.mxu0 0.0
    %3879 = vmatprep.subr.mxu0 0.0
    %3880 = vmatpush1.msra.mxu0 0.0
    %3881 = vmatprep.subr.mxu0 0.0
    %3882 = vmatpush1.msra.mxu0 0.0
    %3883 = vmatprep.subr.mxu0 0.0
    %3884 = vmatpush1.msra.mxu0 0.0
    %3885 = vmatprep.subr.mxu0 0.0
    %3886 = vmatpush1.msra.mxu0 0.0
    %3887 = vmatprep.subr.mxu0 0.0
    %3888 = vmatpush1.msra.mxu0 0.0
    %3889 = vmatprep.mubr.f32.mxu0 0.0
    %3890 = vmatmul.mubr.f32.gmra.mrb[0].mxu0 %v3684
    %v3891 = vpop.f32.mrb[0].mxu0
    %v3892 = vadd.f32 0.0, %v3891
    %v3893 = vpop.f32.mrb[0].mxu0
    %v3894 = vadd.f32 0.0, %v3893
    %3895 = vdwg.mxu0
    %v3896 = vadd.f32 %v3686, %v3821
    %v3897 = vadd.f32 %v3687, %v3823
    %v3898 = vadd.f32 %v3688, %v3892
    %v3899 = vadd.f32 %v3689, %v3894
    %v3900 = vxor.u32 %v3896, 2147483648
    %v3901 = vmul.f32 %v3900, 1.442695
    %v3902 = vpow.pop %v3901
    %v3903 = vadd.f32 %v3902, 1.0
    %v3904 = vrcp.pop %v3903
    %v3905 = vmul.f32 1.0, %v3904
    %v3906 = vxor.u32 %v3897, 2147483648
    %v3907 = vmul.f32 %v3906, 1.442695
    %v3908 = vpow.pop %v3907
    %v3909 = vadd.f32 %v3908, 1.0
    %v3910 = vrcp.pop %v3909
    %v3911 = vmul.f32 1.0, %v3910
    %v3912 = vtanh.pop %v3898
    %v3913 = vxor.u32 %v3899, 2147483648
    %v3914 = vmul.f32 %v3913, 1.442695
    %v3915 = vpow.pop %v3914
    %v3916 = vadd.f32 %v3915, 1.0
    %v3917 = vrcp.pop %v3916
    %v3918 = vmul.f32 1.0, %v3917
    %v3919 = vmul.f32 %v3911, %v3682
    %v3920 = vmul.f32 %v3905, %v3912
    %v3921 = vadd.f32 %v3919, %v3920
    %v3922 = vtanh.pop %v3921
    %v3923 = vmul.f32 %v3918, %v3922
    %3924 = vst [vmem:[%s1645] sm:$0xff] %v3923
    %v3925 = vld [vmem:[%s1647] sm:$0xff]
    %v3926 = vld [vmem:[%s1647 + $0x8] sm:$0xff]
    %v3927 = vld [vmem:[%s1647 + $0x10] sm:$0xff]
    %v3928 = vld [vmem:[%s1647 + $0x18] sm:$0xff]
    %v3929 = vld [vmem:[%s2733] sm:$0xff]
    %v3930 = vld [vmem:[%s2733 + $0x8] sm:$0xff]
    %v3931 = vld [vmem:[%s2733 + $0x10] sm:$0xff]
    %v3932 = vld [vmem:[%s2733 + $0x18] sm:$0xff]
    %v3933 = vld [vmem:[%s2733 + $0x20] sm:$0xff]
    %v3934 = vld [vmem:[%s2733 + $0x28] sm:$0xff]
    %v3935 = vld [vmem:[%s2733 + $0x30] sm:$0xff]
    %v3936 = vld [vmem:[%s2733 + $0x38] sm:$0xff]
    %v3937 = vld [vmem:[%s2733 + $0x40] sm:$0xff]
    %v3938 = vld [vmem:[%s2733 + $0x48] sm:$0xff]
    %v3939 = vld [vmem:[%s2733 + $0x50] sm:$0xff]
    %v3940 = vld [vmem:[%s2733 + $0x58] sm:$0xff]
    %v3941 = vld [vmem:[%s2733 + $0x60] sm:$0xff]
    %v3942 = vld [vmem:[%s2733 + $0x68] sm:$0xff]
    %v3943 = vld [vmem:[%s2733 + $0x70] sm:$0xff]
    %v3944 = vld [vmem:[%s2733 + $0x78] sm:$0xff]
    %v3945 = vld [vmem:[%s2733 + $0x80] sm:$0xff]
    %v3946 = vld [vmem:[%s2733 + $0x88] sm:$0xff]
    %v3947 = vld [vmem:[%s2733 + $0x90] sm:$0xff]
    %v3948 = vld [vmem:[%s2733 + $0x98] sm:$0xff]
    %v3949 = vld [vmem:[%s2733 + $0xa0] sm:$0xff]
    %v3950 = vld [vmem:[%s2733 + $0xa8] sm:$0xff]
    %v3951 = vld [vmem:[%s2733 + $0xb0] sm:$0xff]
    %v3952 = vld [vmem:[%s2733 + $0xb8] sm:$0xff]
    %v3953 = vld [vmem:[%s2733 + $0xc0] sm:$0xff]
    %v3954 = vld [vmem:[%s2733 + $0xc8] sm:$0xff]
    %v3955 = vld [vmem:[%s2733 + $0xd0] sm:$0xff]
    %v3956 = vld [vmem:[%s2733 + $0xd8] sm:$0xff]
    %v3957 = vld [vmem:[%s2733 + $0xe0] sm:$0xff]
    %v3958 = vld [vmem:[%s2733 + $0xe8] sm:$0xff]
    %v3959 = vld [vmem:[%s2733 + $0xf0] sm:$0xff]
    %v3960 = vld [vmem:[%s2733 + $0xf8] sm:$0xff]
    %v3961 = vld [vmem:[%s2733 + $0x100] sm:$0xff]
    %v3962 = vld [vmem:[%s2733 + $0x108] sm:$0xff]
    %v3963 = vld [vmem:[%s2733 + $0x110] sm:$0xff]
    %v3964 = vld [vmem:[%s2733 + $0x118] sm:$0xff]
    %v3965 = vld [vmem:[%s2733 + $0x120] sm:$0xff]
    %v3966 = vld [vmem:[%s2733 + $0x128] sm:$0xff]
    %v3967 = vld [vmem:[%s2733 + $0x130] sm:$0xff]
    %v3968 = vld [vmem:[%s2733 + $0x138] sm:$0xff]
    %v3969 = vld [vmem:[%s2733 + $0x140] sm:$0xff]
    %v3970 = vld [vmem:[%s2733 + $0x148] sm:$0xff]
    %v3971 = vld [vmem:[%s2733 + $0x150] sm:$0xff]
    %v3972 = vld [vmem:[%s2733 + $0x158] sm:$0xff]
    %v3973 = vld [vmem:[%s2733 + $0x160] sm:$0xff]
    %v3974 = vld [vmem:[%s2733 + $0x168] sm:$0xff]
    %v3975 = vld [vmem:[%s2733 + $0x170] sm:$0xff]
    %v3976 = vld [vmem:[%s2733 + $0x178] sm:$0xff]
    %v3977 = vld [vmem:[%s2733 + $0x180] sm:$0xff]
    %v3978 = vld [vmem:[%s2733 + $0x188] sm:$0xff]
    %v3979 = vld [vmem:[%s2733 + $0x190] sm:$0xff]
    %v3980 = vld [vmem:[%s2733 + $0x198] sm:$0xff]
    %v3981 = vld [vmem:[%s2733 + $0x1a0] sm:$0xff]
    %v3982 = vld [vmem:[%s2733 + $0x1a8] sm:$0xff]
    %v3983 = vld [vmem:[%s2733 + $0x1b0] sm:$0xff]
    %v3984 = vld [vmem:[%s2733 + $0x1b8] sm:$0xff]
    %v3985 = vld [vmem:[%s2733 + $0x1c0] sm:$0xff]
    %v3986 = vld [vmem:[%s2733 + $0x1c8] sm:$0xff]
    %v3987 = vld [vmem:[%s2733 + $0x1d0] sm:$0xff]
    %v3988 = vld [vmem:[%s2733 + $0x1d8] sm:$0xff]
    %v3989 = vld [vmem:[%s2733 + $0x1e0] sm:$0xff]
    %v3990 = vld [vmem:[%s2733 + $0x1e8] sm:$0xff]
    %v3991 = vld [vmem:[%s2733 + $0x1f0] sm:$0xff]
    %v3992 = vld [vmem:[%s2733 + $0x1f8] sm:$0xff]
    %3993 = vmatprep.subr.mxu0 %v3930
    %3994 = vmatpush1.msra.mxu0 %v3929
    %3995 = vmatprep.subr.mxu0 %v3934
    %3996 = vmatpush1.msra.mxu0 %v3933
    %3997 = vmatprep.subr.mxu0 %v3938
    %3998 = vmatpush1.msra.mxu0 %v3937
    %3999 = vmatprep.subr.mxu0 %v3942
    %4000 = vmatpush1.msra.mxu0 %v3941
    %4001 = vmatprep.subr.mxu0 %v3946
    %4002 = vmatpush1.msra.mxu0 %v3945
    %4003 = vmatprep.subr.mxu0 %v3950
    %4004 = vmatpush1.msra.mxu0 %v3949
    %4005 = vmatprep.subr.mxu0 %v3954
    %4006 = vmatpush1.msra.mxu0 %v3953
    %4007 = vmatprep.subr.mxu0 %v3958
    %4008 = vmatpush1.msra.mxu0 %v3957
    %4009 = vmatprep.subr.mxu0 %v3962
    %4010 = vmatpush1.msra.mxu0 %v3961
    %4011 = vmatprep.subr.mxu0 %v3966
    %4012 = vmatpush1.msra.mxu0 %v3965
    %4013 = vmatprep.subr.mxu0 %v3970
    %4014 = vmatpush1.msra.mxu0 %v3969
    %4015 = vmatprep.subr.mxu0 %v3974
    %4016 = vmatpush1.msra.mxu0 %v3973
    %4017 = vmatprep.subr.mxu0 %v3978
    %4018 = vmatpush1.msra.mxu0 %v3977
    %4019 = vmatprep.subr.mxu0 %v3982
    %4020 = vmatpush1.msra.mxu0 %v3981
    %4021 = vmatprep.subr.mxu0 %v3986
    %4022 = vmatpush1.msra.mxu0 %v3985
    %4023 = vmatprep.subr.mxu0 %v3990
    %4024 = vmatpush1.msra.mxu0 %v3989
    %4025 = vmatprep.subr.mxu0 0.0
    %4026 = vmatpush1.msra.mxu0 0.0
    %4027 = vmatprep.subr.mxu0 0.0
    %4028 = vmatpush1.msra.mxu0 0.0
    %4029 = vmatprep.subr.mxu0 0.0
    %4030 = vmatpush1.msra.mxu0 0.0
    %4031 = vmatprep.subr.mxu0 0.0
    %4032 = vmatpush1.msra.mxu0 0.0
    %4033 = vmatprep.subr.mxu0 0.0
    %4034 = vmatpush1.msra.mxu0 0.0
    %4035 = vmatprep.subr.mxu0 0.0
    %4036 = vmatpush1.msra.mxu0 0.0
    %4037 = vmatprep.subr.mxu0 0.0
    %4038 = vmatpush1.msra.mxu0 0.0
    %4039 = vmatprep.subr.mxu0 0.0
    %4040 = vmatpush1.msra.mxu0 0.0
    %4041 = vmatprep.subr.mxu0 0.0
    %4042 = vmatpush1.msra.mxu0 0.0
    %4043 = vmatprep.subr.mxu0 0.0
    %4044 = vmatpush1.msra.mxu0 0.0
    %4045 = vmatprep.subr.mxu0 0.0
    %4046 = vmatpush1.msra.mxu0 0.0
    %4047 = vmatprep.subr.mxu0 0.0
    %4048 = vmatpush1.msra.mxu0 0.0
    %4049 = vmatprep.subr.mxu0 0.0
    %4050 = vmatpush1.msra.mxu0 0.0
    %4051 = vmatprep.subr.mxu0 0.0
    %4052 = vmatpush1.msra.mxu0 0.0
    %4053 = vmatprep.subr.mxu0 0.0
    %4054 = vmatpush1.msra.mxu0 0.0
    %4055 = vmatprep.subr.mxu0 0.0
    %4056 = vmatpush1.msra.mxu0 0.0
    %4057 = vmatprep.mubr.f32.mxu0 0.0
    %4058 = vmatmul.mubr.f32.gmra.mrb[0].mxu0 %v3923
    %v4059 = vpop.f32.mrb[0].mxu0
    %v4060 = vadd.f32 0.0, %v4059
    %v4061 = vpop.f32.mrb[0].mxu0
    %v4062 = vadd.f32 0.0, %v4061
    %4063 = vdwg.mxu0
    %4064 = vmatprep.subr.mxu0 %v3932
    %4065 = vmatpush1.msra.mxu0 %v3931
    %4066 = vmatprep.subr.mxu0 %v3936
    %4067 = vmatpush1.msra.mxu0 %v3935
    %4068 = vmatprep.subr.mxu0 %v3940
    %4069 = vmatpush1.msra.mxu0 %v3939
    %4070 = vmatprep.subr.mxu0 %v3944
    %4071 = vmatpush1.msra.mxu0 %v3943
    %4072 = vmatprep.subr.mxu0 %v3948
    %4073 = vmatpush1.msra.mxu0 %v3947
    %4074 = vmatprep.subr.mxu0 %v3952
    %4075 = vmatpush1.msra.mxu0 %v3951
    %4076 = vmatprep.subr.mxu0 %v3956
    %4077 = vmatpush1.msra.mxu0 %v3955
    %4078 = vmatprep.subr.mxu0 %v3960
    %4079 = vmatpush1.msra.mxu0 %v3959
    %4080 = vmatprep.subr.mxu0 %v3964
    %4081 = vmatpush1.msra.mxu0 %v3963
    %4082 = vmatprep.subr.mxu0 %v3968
    %4083 = vmatpush1.msra.mxu0 %v3967
    %4084 = vmatprep.subr.mxu0 %v3972
    %4085 = vmatpush1.msra.mxu0 %v3971
    %4086 = vmatprep.subr.mxu0 %v3976
    %4087 = vmatpush1.msra.mxu0 %v3975
    %4088 = vmatprep.subr.mxu0 %v3980
    %4089 = vmatpush1.msra.mxu0 %v3979
    %4090 = vmatprep.subr.mxu0 %v3984
    %4091 = vmatpush1.msra.mxu0 %v3983
    %4092 = vmatprep.subr.mxu0 %v3988
    %4093 = vmatpush1.msra.mxu0 %v3987
    %4094 = vmatprep.subr.mxu0 %v3992
    %4095 = vmatpush1.msra.mxu0 %v3991
    %4096 = vmatprep.subr.mxu0 0.0
    %4097 = vmatpush1.msra.mxu0 0.0
    %4098 = vmatprep.subr.mxu0 0.0
    %4099 = vmatpush1.msra.mxu0 0.0
    %4100 = vmatprep.subr.mxu0 0.0
    %4101 = vmatpush1.msra.mxu0 0.0
    %4102 = vmatprep.subr.mxu0 0.0
    %4103 = vmatpush1.msra.mxu0 0.0
    %4104 = vmatprep.subr.mxu0 0.0
    %4105 = vmatpush1.msra.mxu0 0.0
    %4106 = vmatprep.subr.mxu0 0.0
    %4107 = vmatpush1.msra.mxu0 0.0
    %4108 = vmatprep.subr.mxu0 0.0
    %4109 = vmatpush1.msra.mxu0 0.0
    %4110 = vmatprep.subr.mxu0 0.0
    %4111 = vmatpush1.msra.mxu0 0.0
    %4112 = vmatprep.subr.mxu0 0.0
    %4113 = vmatpush1.msra.mxu0 0.0
    %4114 = vmatprep.subr.mxu0 0.0
    %4115 = vmatpush1.msra.mxu0 0.0
    %4116 = vmatprep.subr.mxu0 0.0
    %4117 = vmatpush1.msra.mxu0 0.0
    %4118 = vmatprep.subr.mxu0 0.0
    %4119 = vmatpush1.msra.mxu0 0.0
    %4120 = vmatprep.subr.mxu0 0.0
    %4121 = vmatpush1.msra.mxu0 0.0
    %4122 = vmatprep.subr.mxu0 0.0
    %4123 = vmatpush1.msra.mxu0 0.0
    %4124 = vmatprep.subr.mxu0 0.0
    %4125 = vmatpush1.msra.mxu0 0.0
    %4126 = vmatprep.subr.mxu0 0.0
    %4127 = vmatpush1.msra.mxu0 0.0
    %4128 = vmatprep.mubr.f32.mxu0 0.0
    %4129 = vmatmul.mubr.f32.gmra.mrb[0].mxu0 %v3923
    %v4130 = vpop.f32.mrb[0].mxu0
    %v4131 = vadd.f32 0.0, %v4130
    %v4132 = vpop.f32.mrb[0].mxu0
    %v4133 = vadd.f32 0.0, %v4132
    %4134 = vdwg.mxu0
    %v4135 = vadd.f32 %v3925, %v4060
    %v4136 = vadd.f32 %v3926, %v4062
    %v4137 = vadd.f32 %v3927, %v4131
    %v4138 = vadd.f32 %v3928, %v4133
    %v4139 = vxor.u32 %v4135, 2147483648
    %v4140 = vmul.f32 %v4139, 1.442695
    %v4141 = vpow.pop %v4140
    %v4142 = vadd.f32 %v4141, 1.0
    %v4143 = vrcp.pop %v4142
    %v4144 = vmul.f32 1.0, %v4143
    %v4145 = vxor.u32 %v4136, 2147483648
    %v4146 = vmul.f32 %v4145, 1.442695
    %v4147 = vpow.pop %v4146
    %v4148 = vadd.f32 %v4147, 1.0
    %v4149 = vrcp.pop %v4148
    %v4150 = vmul.f32 1.0, %v4149
    %v4151 = vtanh.pop %v4137
    %v4152 = vxor.u32 %v4138, 2147483648
    %v4153 = vmul.f32 %v4152, 1.442695
    %v4154 = vpow.pop %v4153
    %v4155 = vadd.f32 %v4154, 1.0
    %v4156 = vrcp.pop %v4155
    %v4157 = vmul.f32 1.0, %v4156
    %v4158 = vmul.f32 %v4150, %v3921
    %v4159 = vmul.f32 %v4144, %v4151
    %v4160 = vadd.f32 %v4158, %v4159
    %v4161 = vtanh.pop %v4160
    %v4162 = vmul.f32 %v4157, %v4161
    %4163 = vst [vmem:[%s1886] sm:$0xff] %v4162
    %v4164 = vld [vmem:[%s1888] sm:$0xff]
    %v4165 = vld [vmem:[%s1888 + $0x8] sm:$0xff]
    %v4166 = vld [vmem:[%s1888 + $0x10] sm:$0xff]
    %v4167 = vld [vmem:[%s1888 + $0x18] sm:$0xff]
    %v4168 = vld [vmem:[%s2733] sm:$0xff]
    %v4169 = vld [vmem:[%s2733 + $0x8] sm:$0xff]
    %v4170 = vld [vmem:[%s2733 + $0x10] sm:$0xff]
    %v4171 = vld [vmem:[%s2733 + $0x18] sm:$0xff]
    %v4172 = vld [vmem:[%s2733 + $0x20] sm:$0xff]
    %v4173 = vld [vmem:[%s2733 + $0x28] sm:$0xff]
    %v4174 = vld [vmem:[%s2733 + $0x30] sm:$0xff]
    %v4175 = vld [vmem:[%s2733 + $0x38] sm:$0xff]
    %v4176 = vld [vmem:[%s2733 + $0x40] sm:$0xff]
    %v4177 = vld [vmem:[%s2733 + $0x48] sm:$0xff]
    %v4178 = vld [vmem:[%s2733 + $0x50] sm:$0xff]
    %v4179 = vld [vmem:[%s2733 + $0x58] sm:$0xff]
    %v4180 = vld [vmem:[%s2733 + $0x60] sm:$0xff]
    %v4181 = vld [vmem:[%s2733 + $0x68] sm:$0xff]
    %v4182 = vld [vmem:[%s2733 + $0x70] sm:$0xff]
    %v4183 = vld [vmem:[%s2733 + $0x78] sm:$0xff]
    %v4184 = vld [vmem:[%s2733 + $0x80] sm:$0xff]
    %v4185 = vld [vmem:[%s2733 + $0x88] sm:$0xff]
    %v4186 = vld [vmem:[%s2733 + $0x90] sm:$0xff]
    %v4187 = vld [vmem:[%s2733 + $0x98] sm:$0xff]
    %v4188 = vld [vmem:[%s2733 + $0xa0] sm:$0xff]
    %v4189 = vld [vmem:[%s2733 + $0xa8] sm:$0xff]
    %v4190 = vld [vmem:[%s2733 + $0xb0] sm:$0xff]
    %v4191 = vld [vmem:[%s2733 + $0xb8] sm:$0xff]
    %v4192 = vld [vmem:[%s2733 + $0xc0] sm:$0xff]
    %v4193 = vld [vmem:[%s2733 + $0xc8] sm:$0xff]
    %v4194 = vld [vmem:[%s2733 + $0xd0] sm:$0xff]
    %v4195 = vld [vmem:[%s2733 + $0xd8] sm:$0xff]
    %v4196 = vld [vmem:[%s2733 + $0xe0] sm:$0xff]
    %v4197 = vld [vmem:[%s2733 + $0xe8] sm:$0xff]
    %v4198 = vld [vmem:[%s2733 + $0xf0] sm:$0xff]
    %v4199 = vld [vmem:[%s2733 + $0xf8] sm:$0xff]
    %v4200 = vld [vmem:[%s2733 + $0x100] sm:$0xff]
    %v4201 = vld [vmem:[%s2733 + $0x108] sm:$0xff]
    %v4202 = vld [vmem:[%s2733 + $0x110] sm:$0xff]
    %v4203 = vld [vmem:[%s2733 + $0x118] sm:$0xff]
    %v4204 = vld [vmem:[%s2733 + $0x120] sm:$0xff]
    %v4205 = vld [vmem:[%s2733 + $0x128] sm:$0xff]
    %v4206 = vld [vmem:[%s2733 + $0x130] sm:$0xff]
    %v4207 = vld [vmem:[%s2733 + $0x138] sm:$0xff]
    %v4208 = vld [vmem:[%s2733 + $0x140] sm:$0xff]
    %v4209 = vld [vmem:[%s2733 + $0x148] sm:$0xff]
    %v4210 = vld [vmem:[%s2733 + $0x150] sm:$0xff]
    %v4211 = vld [vmem:[%s2733 + $0x158] sm:$0xff]
    %v4212 = vld [vmem:[%s2733 + $0x160] sm:$0xff]
    %v4213 = vld [vmem:[%s2733 + $0x168] sm:$0xff]
    %v4214 = vld [vmem:[%s2733 + $0x170] sm:$0xff]
    %v4215 = vld [vmem:[%s2733 + $0x178] sm:$0xff]
    %v4216 = vld [vmem:[%s2733 + $0x180] sm:$0xff]
    %v4217 = vld [vmem:[%s2733 + $0x188] sm:$0xff]
    %v4218 = vld [vmem:[%s2733 + $0x190] sm:$0xff]
    %v4219 = vld [vmem:[%s2733 + $0x198] sm:$0xff]
    %v4220 = vld [vmem:[%s2733 + $0x1a0] sm:$0xff]
    %v4221 = vld [vmem:[%s2733 + $0x1a8] sm:$0xff]
    %v4222 = vld [vmem:[%s2733 + $0x1b0] sm:$0xff]
    %v4223 = vld [vmem:[%s2733 + $0x1b8] sm:$0xff]
    %v4224 = vld [vmem:[%s2733 + $0x1c0] sm:$0xff]
    %v4225 = vld [vmem:[%s2733 + $0x1c8] sm:$0xff]
    %v4226 = vld [vmem:[%s2733 + $0x1d0] sm:$0xff]
    %v4227 = vld [vmem:[%s2733 + $0x1d8] sm:$0xff]
    %v4228 = vld [vmem:[%s2733 + $0x1e0] sm:$0xff]
    %v4229 = vld [vmem:[%s2733 + $0x1e8] sm:$0xff]
    %v4230 = vld [vmem:[%s2733 + $0x1f0] sm:$0xff]
    %v4231 = vld [vmem:[%s2733 + $0x1f8] sm:$0xff]
    %4232 = vmatprep.subr.mxu0 %v4169
    %4233 = vmatpush1.msra.mxu0 %v4168
    %4234 = vmatprep.subr.mxu0 %v4173
    %4235 = vmatpush1.msra.mxu0 %v4172
    %4236 = vmatprep.subr.mxu0 %v4177
    %4237 = vmatpush1.msra.mxu0 %v4176
    %4238 = vmatprep.subr.mxu0 %v4181
    %4239 = vmatpush1.msra.mxu0 %v4180
    %4240 = vmatprep.subr.mxu0 %v4185
    %4241 = vmatpush1.msra.mxu0 %v4184
    %4242 = vmatprep.subr.mxu0 %v4189
    %4243 = vmatpush1.msra.mxu0 %v4188
    %4244 = vmatprep.subr.mxu0 %v4193
    %4245 = vmatpush1.msra.mxu0 %v4192
    %4246 = vmatprep.subr.mxu0 %v4197
    %4247 = vmatpush1.msra.mxu0 %v4196
    %4248 = vmatprep.subr.mxu0 %v4201
    %4249 = vmatpush1.msra.mxu0 %v4200
    %4250 = vmatprep.subr.mxu0 %v4205
    %4251 = vmatpush1.msra.mxu0 %v4204
    %4252 = vmatprep.subr.mxu0 %v4209
    %4253 = vmatpush1.msra.mxu0 %v4208
    %4254 = vmatprep.subr.mxu0 %v4213
    %4255 = vmatpush1.msra.mxu0 %v4212
    %4256 = vmatprep.subr.mxu0 %v4217
    %4257 = vmatpush1.msra.mxu0 %v4216
    %4258 = vmatprep.subr.mxu0 %v4221
    %4259 = vmatpush1.msra.mxu0 %v4220
    %4260 = vmatprep.subr.mxu0 %v4225
    %4261 = vmatpush1.msra.mxu0 %v4224
    %4262 = vmatprep.subr.mxu0 %v4229
    %4263 = vmatpush1.msra.mxu0 %v4228
    %4264 = vmatprep.subr.mxu0 0.0
    %4265 = vmatpush1.msra.mxu0 0.0
    %4266 = vmatprep.subr.mxu0 0.0
    %4267 = vmatpush1.msra.mxu0 0.0
    %4268 = vmatprep.subr.mxu0 0.0
    %4269 = vmatpush1.msra.mxu0 0.0
    %4270 = vmatprep.subr.mxu0 0.0
    %4271 = vmatpush1.msra.mxu0 0.0
    %4272 = vmatprep.subr.mxu0 0.0
    %4273 = vmatpush1.msra.mxu0 0.0
    %4274 = vmatprep.subr.mxu0 0.0
    %4275 = vmatpush1.msra.mxu0 0.0
    %4276 = vmatprep.subr.mxu0 0.0
    %4277 = vmatpush1.msra.mxu0 0.0
    %4278 = vmatprep.subr.mxu0 0.0
    %4279 = vmatpush1.msra.mxu0 0.0
    %4280 = vmatprep.subr.mxu0 0.0
    %4281 = vmatpush1.msra.mxu0 0.0
    %4282 = vmatprep.subr.mxu0 0.0
    %4283 = vmatpush1.msra.mxu0 0.0
    %4284 = vmatprep.subr.mxu0 0.0
    %4285 = vmatpush1.msra.mxu0 0.0
    %4286 = vmatprep.subr.mxu0 0.0
    %4287 = vmatpush1.msra.mxu0 0.0
    %4288 = vmatprep.subr.mxu0 0.0
    %4289 = vmatpush1.msra.mxu0 0.0
    %4290 = vmatprep.subr.mxu0 0.0
    %4291 = vmatpush1.msra.mxu0 0.0
    %4292 = vmatprep.subr.mxu0 0.0
    %4293 = vmatpush1.msra.mxu0 0.0
    %4294 = vmatprep.subr.mxu0 0.0
    %4295 = vmatpush1.msra.mxu0 0.0
    %4296 = vmatprep.mubr.f32.mxu0 0.0
    %4297 = vmatmul.mubr.f32.gmra.mrb[0].mxu0 %v4162
    %v4298 = vpop.f32.mrb[0].mxu0
    %v4299 = vadd.f32 0.0, %v4298
    %v4300 = vpop.f32.mrb[0].mxu0
    %v4301 = vadd.f32 0.0, %v4300
    %4302 = vdwg.mxu0
    %4303 = vmatprep.subr.mxu0 %v4171
    %4304 = vmatpush1.msra.mxu0 %v4170
    %4305 = vmatprep.subr.mxu0 %v4175
    %4306 = vmatpush1.msra.mxu0 %v4174
    %4307 = vmatprep.subr.mxu0 %v4179
    %4308 = vmatpush1.msra.mxu0 %v4178
    %4309 = vmatprep.subr.mxu0 %v4183
    %4310 = vmatpush1.msra.mxu0 %v4182
    %4311 = vmatprep.subr.mxu0 %v4187
    %4312 = vmatpush1.msra.mxu0 %v4186
    %4313 = vmatprep.subr.mxu0 %v4191
    %4314 = vmatpush1.msra.mxu0 %v4190
    %4315 = vmatprep.subr.mxu0 %v4195
    %4316 = vmatpush1.msra.mxu0 %v4194
    %4317 = vmatprep.subr.mxu0 %v4199
    %4318 = vmatpush1.msra.mxu0 %v4198
    %4319 = vmatprep.subr.mxu0 %v4203
    %4320 = vmatpush1.msra.mxu0 %v4202
    %4321 = vmatprep.subr.mxu0 %v4207
    %4322 = vmatpush1.msra.mxu0 %v4206
    %4323 = vmatprep.subr.mxu0 %v4211
    %4324 = vmatpush1.msra.mxu0 %v4210
    %4325 = vmatprep.subr.mxu0 %v4215
    %4326 = vmatpush1.msra.mxu0 %v4214
    %4327 = vmatprep.subr.mxu0 %v4219
    %4328 = vmatpush1.msra.mxu0 %v4218
    %4329 = vmatprep.subr.mxu0 %v4223
    %4330 = vmatpush1.msra.mxu0 %v4222
    %4331 = vmatprep.subr.mxu0 %v4227
    %4332 = vmatpush1.msra.mxu0 %v4226
    %4333 = vmatprep.subr.mxu0 %v4231
    %4334 = vmatpush1.msra.mxu0 %v4230
    %4335 = vmatprep.subr.mxu0 0.0
    %4336 = vmatpush1.msra.mxu0 0.0
    %4337 = vmatprep.subr.mxu0 0.0
    %4338 = vmatpush1.msra.mxu0 0.0
    %4339 = vmatprep.subr.mxu0 0.0
    %4340 = vmatpush1.msra.mxu0 0.0
    %4341 = vmatprep.subr.mxu0 0.0
    %4342 = vmatpush1.msra.mxu0 0.0
    %4343 = vmatprep.subr.mxu0 0.0
    %4344 = vmatpush1.msra.mxu0 0.0
    %4345 = vmatprep.subr.mxu0 0.0
    %4346 = vmatpush1.msra.mxu0 0.0
    %4347 = vmatprep.subr.mxu0 0.0
    %4348 = vmatpush1.msra.mxu0 0.0
    %4349 = vmatprep.subr.mxu0 0.0
    %4350 = vmatpush1.msra.mxu0 0.0
    %4351 = vmatprep.subr.mxu0 0.0
    %4352 = vmatpush1.msra.mxu0 0.0
    %4353 = vmatprep.subr.mxu0 0.0
    %4354 = vmatpush1.msra.mxu0 0.0
    %4355 = vmatprep.subr.mxu0 0.0
    %4356 = vmatpush1.msra.mxu0 0.0
    %4357 = vmatprep.subr.mxu0 0.0
    %4358 = vmatpush1.msra.mxu0 0.0
    %4359 = vmatprep.subr.mxu0 0.0
    %4360 = vmatpush1.msra.mxu0 0.0
    %4361 = vmatprep.subr.mxu0 0.0
    %4362 = vmatpush1.msra.mxu0 0.0
    %4363 = vmatprep.subr.mxu0 0.0
    %4364 = vmatpush1.msra.mxu0 0.0
    %4365 = vmatprep.subr.mxu0 0.0
    %4366 = vmatpush1.msra.mxu0 0.0
    %4367 = vmatprep.mubr.f32.mxu0 0.0
    %4368 = vmatmul.mubr.f32.gmra.mrb[0].mxu0 %v4162
    %v4369 = vpop.f32.mrb[0].mxu0
    %v4370 = vadd.f32 0.0, %v4369
    %v4371 = vpop.f32.mrb[0].mxu0
    %v4372 = vadd.f32 0.0, %v4371
    %4373 = vdwg.mxu0
    %v4374 = vadd.f32 %v4164, %v4299
    %v4375 = vadd.f32 %v4165, %v4301
    %v4376 = vadd.f32 %v4166, %v4370
    %v4377 = vadd.f32 %v4167, %v4372
    %v4378 = vxor.u32 %v4374, 2147483648
    %v4379 = vmul.f32 %v4378, 1.442695
    %v4380 = vpow.pop %v4379
    %v4381 = vadd.f32 %v4380, 1.0
    %v4382 = vrcp.pop %v4381
    %v4383 = vmul.f32 1.0, %v4382
    %v4384 = vxor.u32 %v4375, 2147483648
    %v4385 = vmul.f32 %v4384, 1.442695
    %v4386 = vpow.pop %v4385
    %v4387 = vadd.f32 %v4386, 1.0
    %v4388 = vrcp.pop %v4387
    %v4389 = vmul.f32 1.0, %v4388
    %v4390 = vtanh.pop %v4376
    %v4391 = vxor.u32 %v4377, 2147483648
    %v4392 = vmul.f32 %v4391, 1.442695
    %v4393 = vpow.pop %v4392
    %v4394 = vadd.f32 %v4393, 1.0
    %v4395 = vrcp.pop %v4394
    %v4396 = vmul.f32 1.0, %v4395
    %v4397 = vmul.f32 %v4389, %v4160
    %v4398 = vmul.f32 %v4383, %v4390
    %v4399 = vadd.f32 %v4397, %v4398
    %v4400 = vtanh.pop %v4399
    %v4401 = vmul.f32 %v4396, %v4400
    %4402 = vst [vmem:[%s2127] sm:$0xff] %v4401
    %v4403 = vld [vmem:[%s2129] sm:$0xff]
    %v4404 = vld [vmem:[%s2129 + $0x8] sm:$0xff]
    %v4405 = vld [vmem:[%s2129 + $0x10] sm:$0xff]
    %v4406 = vld [vmem:[%s2129 + $0x18] sm:$0xff]
    %v4407 = vld [vmem:[%s2733] sm:$0xff]
    %v4408 = vld [vmem:[%s2733 + $0x8] sm:$0xff]
    %v4409 = vld [vmem:[%s2733 + $0x10] sm:$0xff]
    %v4410 = vld [vmem:[%s2733 + $0x18] sm:$0xff]
    %v4411 = vld [vmem:[%s2733 + $0x20] sm:$0xff]
    %v4412 = vld [vmem:[%s2733 + $0x28] sm:$0xff]
    %v4413 = vld [vmem:[%s2733 + $0x30] sm:$0xff]
    %v4414 = vld [vmem:[%s2733 + $0x38] sm:$0xff]
    %v4415 = vld [vmem:[%s2733 + $0x40] sm:$0xff]
    %v4416 = vld [vmem:[%s2733 + $0x48] sm:$0xff]
    %v4417 = vld [vmem:[%s2733 + $0x50] sm:$0xff]
    %v4418 = vld [vmem:[%s2733 + $0x58] sm:$0xff]
    %v4419 = vld [vmem:[%s2733 + $0x60] sm:$0xff]
    %v4420 = vld [vmem:[%s2733 + $0x68] sm:$0xff]
    %v4421 = vld [vmem:[%s2733 + $0x70] sm:$0xff]
    %v4422 = vld [vmem:[%s2733 + $0x78] sm:$0xff]
    %v4423 = vld [vmem:[%s2733 + $0x80] sm:$0xff]
    %v4424 = vld [vmem:[%s2733 + $0x88] sm:$0xff]
    %v4425 = vld [vmem:[%s2733 + $0x90] sm:$0xff]
    %v4426 = vld [vmem:[%s2733 + $0x98] sm:$0xff]
    %v4427 = vld [vmem:[%s2733 + $0xa0] sm:$0xff]
    %v4428 = vld [vmem:[%s2733 + $0xa8] sm:$0xff]
    %v4429 = vld [vmem:[%s2733 + $0xb0] sm:$0xff]
    %v4430 = vld [vmem:[%s2733 + $0xb8] sm:$0xff]
    %v4431 = vld [vmem:[%s2733 + $0xc0] sm:$0xff]
    %v4432 = vld [vmem:[%s2733 + $0xc8] sm:$0xff]
    %v4433 = vld [vmem:[%s2733 + $0xd0] sm:$0xff]
    %v4434 = vld [vmem:[%s2733 + $0xd8] sm:$0xff]
    %v4435 = vld [vmem:[%s2733 + $0xe0] sm:$0xff]
    %v4436 = vld [vmem:[%s2733 + $0xe8] sm:$0xff]
    %v4437 = vld [vmem:[%s2733 + $0xf0] sm:$0xff]
    %v4438 = vld [vmem:[%s2733 + $0xf8] sm:$0xff]
    %v4439 = vld [vmem:[%s2733 + $0x100] sm:$0xff]
    %v4440 = vld [vmem:[%s2733 + $0x108] sm:$0xff]
    %v4441 = vld [vmem:[%s2733 + $0x110] sm:$0xff]
    %v4442 = vld [vmem:[%s2733 + $0x118] sm:$0xff]
    %v4443 = vld [vmem:[%s2733 + $0x120] sm:$0xff]
    %v4444 = vld [vmem:[%s2733 + $0x128] sm:$0xff]
    %v4445 = vld [vmem:[%s2733 + $0x130] sm:$0xff]
    %v4446 = vld [vmem:[%s2733 + $0x138] sm:$0xff]
    %v4447 = vld [vmem:[%s2733 + $0x140] sm:$0xff]
    %v4448 = vld [vmem:[%s2733 + $0x148] sm:$0xff]
    %v4449 = vld [vmem:[%s2733 + $0x150] sm:$0xff]
    %v4450 = vld [vmem:[%s2733 + $0x158] sm:$0xff]
    %v4451 = vld [vmem:[%s2733 + $0x160] sm:$0xff]
    %v4452 = vld [vmem:[%s2733 + $0x168] sm:$0xff]
    %v4453 = vld [vmem:[%s2733 + $0x170] sm:$0xff]
    %v4454 = vld [vmem:[%s2733 + $0x178] sm:$0xff]
    %v4455 = vld [vmem:[%s2733 + $0x180] sm:$0xff]
    %v4456 = vld [vmem:[%s2733 + $0x188] sm:$0xff]
    %v4457 = vld [vmem:[%s2733 + $0x190] sm:$0xff]
    %v4458 = vld [vmem:[%s2733 + $0x198] sm:$0xff]
    %v4459 = vld [vmem:[%s2733 + $0x1a0] sm:$0xff]
    %v4460 = vld [vmem:[%s2733 + $0x1a8] sm:$0xff]
    %v4461 = vld [vmem:[%s2733 + $0x1b0] sm:$0xff]
    %v4462 = vld [vmem:[%s2733 + $0x1b8] sm:$0xff]
    %v4463 = vld [vmem:[%s2733 + $0x1c0] sm:$0xff]
    %v4464 = vld [vmem:[%s2733 + $0x1c8] sm:$0xff]
    %v4465 = vld [vmem:[%s2733 + $0x1d0] sm:$0xff]
    %v4466 = vld [vmem:[%s2733 + $0x1d8] sm:$0xff]
    %v4467 = vld [vmem:[%s2733 + $0x1e0] sm:$0xff]
    %v4468 = vld [vmem:[%s2733 + $0x1e8] sm:$0xff]
    %v4469 = vld [vmem:[%s2733 + $0x1f0] sm:$0xff]
    %v4470 = vld [vmem:[%s2733 + $0x1f8] sm:$0xff]
    %4471 = vmatprep.subr.mxu0 %v4408
    %4472 = vmatpush1.msra.mxu0 %v4407
    %4473 = vmatprep.subr.mxu0 %v4412
    %4474 = vmatpush1.msra.mxu0 %v4411
    %4475 = vmatprep.subr.mxu0 %v4416
    %4476 = vmatpush1.msra.mxu0 %v4415
    %4477 = vmatprep.subr.mxu0 %v4420
    %4478 = vmatpush1.msra.mxu0 %v4419
    %4479 = vmatprep.subr.mxu0 %v4424
    %4480 = vmatpush1.msra.mxu0 %v4423
    %4481 = vmatprep.subr.mxu0 %v4428
    %4482 = vmatpush1.msra.mxu0 %v4427
    %4483 = vmatprep.subr.mxu0 %v4432
    %4484 = vmatpush1.msra.mxu0 %v4431
    %4485 = vmatprep.subr.mxu0 %v4436
    %4486 = vmatpush1.msra.mxu0 %v4435
    %4487 = vmatprep.subr.mxu0 %v4440
    %4488 = vmatpush1.msra.mxu0 %v4439
    %4489 = vmatprep.subr.mxu0 %v4444
    %4490 = vmatpush1.msra.mxu0 %v4443
    %4491 = vmatprep.subr.mxu0 %v4448
    %4492 = vmatpush1.msra.mxu0 %v4447
    %4493 = vmatprep.subr.mxu0 %v4452
    %4494 = vmatpush1.msra.mxu0 %v4451
    %4495 = vmatprep.subr.mxu0 %v4456
    %4496 = vmatpush1.msra.mxu0 %v4455
    %4497 = vmatprep.subr.mxu0 %v4460
    %4498 = vmatpush1.msra.mxu0 %v4459
    %4499 = vmatprep.subr.mxu0 %v4464
    %4500 = vmatpush1.msra.mxu0 %v4463
    %4501 = vmatprep.subr.mxu0 %v4468
    %4502 = vmatpush1.msra.mxu0 %v4467
    %4503 = vmatprep.subr.mxu0 0.0
    %4504 = vmatpush1.msra.mxu0 0.0
    %4505 = vmatprep.subr.mxu0 0.0
    %4506 = vmatpush1.msra.mxu0 0.0
    %4507 = vmatprep.subr.mxu0 0.0
    %4508 = vmatpush1.msra.mxu0 0.0
    %4509 = vmatprep.subr.mxu0 0.0
    %4510 = vmatpush1.msra.mxu0 0.0
    %4511 = vmatprep.subr.mxu0 0.0
    %4512 = vmatpush1.msra.mxu0 0.0
    %4513 = vmatprep.subr.mxu0 0.0
    %4514 = vmatpush1.msra.mxu0 0.0
    %4515 = vmatprep.subr.mxu0 0.0
    %4516 = vmatpush1.msra.mxu0 0.0
    %4517 = vmatprep.subr.mxu0 0.0
    %4518 = vmatpush1.msra.mxu0 0.0
    %4519 = vmatprep.subr.mxu0 0.0
    %4520 = vmatpush1.msra.mxu0 0.0
    %4521 = vmatprep.subr.mxu0 0.0
    %4522 = vmatpush1.msra.mxu0 0.0
    %4523 = vmatprep.subr.mxu0 0.0
    %4524 = vmatpush1.msra.mxu0 0.0
    %4525 = vmatprep.subr.mxu0 0.0
    %4526 = vmatpush1.msra.mxu0 0.0
    %4527 = vmatprep.subr.mxu0 0.0
    %4528 = vmatpush1.msra.mxu0 0.0
    %4529 = vmatprep.subr.mxu0 0.0
    %4530 = vmatpush1.msra.mxu0 0.0
    %4531 = vmatprep.subr.mxu0 0.0
    %4532 = vmatpush1.msra.mxu0 0.0
    %4533 = vmatprep.subr.mxu0 0.0
    %4534 = vmatpush1.msra.mxu0 0.0
    %4535 = vmatprep.mubr.f32.mxu0 0.0
    %4536 = vmatmul.mubr.f32.gmra.mrb[0].mxu0 %v4401
    %v4537 = vpop.f32.mrb[0].mxu0
    %v4538 = vadd.f32 0.0, %v4537
    %v4539 = vpop.f32.mrb[0].mxu0
    %v4540 = vadd.f32 0.0, %v4539
    %4541 = vdwg.mxu0
    %4542 = vmatprep.subr.mxu0 %v4410
    %4543 = vmatpush1.msra.mxu0 %v4409
    %4544 = vmatprep.subr.mxu0 %v4414
    %4545 = vmatpush1.msra.mxu0 %v4413
    %4546 = vmatprep.subr.mxu0 %v4418
    %4547 = vmatpush1.msra.mxu0 %v4417
    %4548 = vmatprep.subr.mxu0 %v4422
    %4549 = vmatpush1.msra.mxu0 %v4421
    %4550 = vmatprep.subr.mxu0 %v4426
    %4551 = vmatpush1.msra.mxu0 %v4425
    %4552 = vmatprep.subr.mxu0 %v4430
    %4553 = vmatpush1.msra.mxu0 %v4429
    %4554 = vmatprep.subr.mxu0 %v4434
    %4555 = vmatpush1.msra.mxu0 %v4433
    %4556 = vmatprep.subr.mxu0 %v4438
    %4557 = vmatpush1.msra.mxu0 %v4437
    %4558 = vmatprep.subr.mxu0 %v4442
    %4559 = vmatpush1.msra.mxu0 %v4441
    %4560 = vmatprep.subr.mxu0 %v4446
    %4561 = vmatpush1.msra.mxu0 %v4445
    %4562 = vmatprep.subr.mxu0 %v4450
    %4563 = vmatpush1.msra.mxu0 %v4449
    %4564 = vmatprep.subr.mxu0 %v4454
    %4565 = vmatpush1.msra.mxu0 %v4453
    %4566 = vmatprep.subr.mxu0 %v4458
    %4567 = vmatpush1.msra.mxu0 %v4457
    %4568 = vmatprep.subr.mxu0 %v4462
    %4569 = vmatpush1.msra.mxu0 %v4461
    %4570 = vmatprep.subr.mxu0 %v4466
    %4571 = vmatpush1.msra.mxu0 %v4465
    %4572 = vmatprep.subr.mxu0 %v4470
    %4573 = vmatpush1.msra.mxu0 %v4469
    %4574 = vmatprep.subr.mxu0 0.0
    %4575 = vmatpush1.msra.mxu0 0.0
    %4576 = vmatprep.subr.mxu0 0.0
    %4577 = vmatpush1.msra.mxu0 0.0
    %4578 = vmatprep.subr.mxu0 0.0
    %4579 = vmatpush1.msra.mxu0 0.0
    %4580 = vmatprep.subr.mxu0 0.0
    %4581 = vmatpush1.msra.mxu0 0.0
    %4582 = vmatprep.subr.mxu0 0.0
    %4583 = vmatpush1.msra.mxu0 0.0
    %4584 = vmatprep.subr.mxu0 0.0
    %4585 = vmatpush1.msra.mxu0 0.0
    %4586 = vmatprep.subr.mxu0 0.0
    %4587 = vmatpush1.msra.mxu0 0.0
    %4588 = vmatprep.subr.mxu0 0.0
    %4589 = vmatpush1.msra.mxu0 0.0
    %4590 = vmatprep.subr.mxu0 0.0
    %4591 = vmatpush1.msra.mxu0 0.0
    %4592 = vmatprep.subr.mxu0 0.0
    %4593 = vmatpush1.msra.mxu0 0.0
    %4594 = vmatprep.subr.mxu0 0.0
    %4595 = vmatpush1.msra.mxu0 0.0
    %4596 = vmatprep.subr.mxu0 0.0
    %4597 = vmatpush1.msra.mxu0 0.0
    %4598 = vmatprep.subr.mxu0 0.0
    %4599 = vmatpush1.msra.mxu0 0.0
    %4600 = vmatprep.subr.mxu0 0.0
    %4601 = vmatpush1.msra.mxu0 0.0
    %4602 = vmatprep.subr.mxu0 0.0
    %4603 = vmatpush1.msra.mxu0 0.0
    %4604 = vmatprep.subr.mxu0 0.0
    %4605 = vmatpush1.msra.mxu0 0.0
    %4606 = vmatprep.mubr.f32.mxu0 0.0
    %4607 = vmatmul.mubr.f32.gmra.mrb[0].mxu0 %v4401
    %v4608 = vpop.f32.mrb[0].mxu0
    %v4609 = vadd.f32 0.0, %v4608
    %v4610 = vpop.f32.mrb[0].mxu0
    %v4611 = vadd.f32 0.0, %v4610
    %4612 = vdwg.mxu0
    %v4613 = vadd.f32 %v4403, %v4538
    %v4614 = vadd.f32 %v4404, %v4540
    %v4615 = vadd.f32 %v4405, %v4609
    %v4616 = vadd.f32 %v4406, %v4611
    %v4617 = vxor.u32 %v4613, 2147483648
    %v4618 = vmul.f32 %v4617, 1.442695
    %v4619 = vpow.pop %v4618
    %v4620 = vadd.f32 %v4619, 1.0
    %v4621 = vrcp.pop %v4620
    %v4622 = vmul.f32 1.0, %v4621
    %v4623 = vxor.u32 %v4614, 2147483648
    %v4624 = vmul.f32 %v4623, 1.442695
    %v4625 = vpow.pop %v4624
    %v4626 = vadd.f32 %v4625, 1.0
    %v4627 = vrcp.pop %v4626
    %v4628 = vmul.f32 1.0, %v4627
    %v4629 = vtanh.pop %v4615
    %v4630 = vxor.u32 %v4616, 2147483648
    %v4631 = vmul.f32 %v4630, 1.442695
    %v4632 = vpow.pop %v4631
    %v4633 = vadd.f32 %v4632, 1.0
    %v4634 = vrcp.pop %v4633
    %v4635 = vmul.f32 1.0, %v4634
    %v4636 = vmul.f32 %v4628, %v4399
    %v4637 = vmul.f32 %v4622, %v4629
    %v4638 = vadd.f32 %v4636, %v4637
    %v4639 = vtanh.pop %v4638
    %v4640 = vmul.f32 %v4635, %v4639
    %4641 = vst [vmem:[%s2368] sm:$0xff] %v4640
    %4642 = vst [vmem:[%s2725] sm:$0xff] %v4640
    %4643 = vst [vmem:[%s2727] sm:$0xff] %v4638
    // Predicated region
    $region30: #{tpu_custom_call.1} parent=1 // pred_check
      %p4644 = pneg %p33
    $region31: #{tpu_custom_call.1} parent=1 // pred_check_branch
      %4646 = sbr.rel (%p4644) target = $region33
    $region32: #{tpu_custom_call.1} parent=1 // pred_region
      %v4647 = vld [vmem:[#allocation5] sm:$0xff]
      %v4648 = vld [vmem:[#allocation5 + $0x8] sm:$0xff]
      %4649 = vst [vmem:[#allocation13] sm:$0xff] %v4647
      %4650 = vst [vmem:[#allocation13 + $0x8] sm:$0xff] %v4648
      %v4651 = vld [vmem:[#allocation6] sm:$0xff]
      %v4652 = vld [vmem:[#allocation6 + $0x8] sm:$0xff]
      %4653 = vst [vmem:[#allocation15] sm:$0xff] %v4651
      %4654 = vst [vmem:[#allocation15 + $0x8] sm:$0xff] %v4652
    $region33: #{tpu_custom_call.1} parent=1 // pred_fallthru
      _
    // Predicated region
    $region34: #{tpu_custom_call.1} parent=1 // pred_check
      _
    $region35: #{tpu_custom_call.1} parent=1 // pred_check_branch
      %4656 = sbr.rel (0) target = $region37
    $region36: #{tpu_custom_call.1} parent=1 // pred_region
      %s4658 = ssub.s32 1024, 1024
      %4659 = vsyncadd [#allocation11], %s4658
      %s4660 = sshll.u32 [#allocation12], 4
      %s4661 = int_to_ptr.vmem [resolvable:$true] %s4660
      %4666 = dma.vmem_to_hbm [thread:$0]  %s4661, 1024, %s5, [#allocation11], 128, 128, 8
    $region37: #{tpu_custom_call.1} parent=1 // pred_fallthru
      _
    // Predicated region
    $region38: #{tpu_custom_call.1} parent=1 // pred_check
      _
    $region39: #{tpu_custom_call.1} parent=1 // pred_check_branch
      %4668 = sbr.rel (0) target = $region41
    $region40: #{tpu_custom_call.1} parent=1 // pred_region
      %s4670 = ssub.s32 256, 256
      %4671 = vsyncadd [#allocation14], %s4670
      %s4672 = sshll.u32 [#allocation13], 4
      %s4673 = int_to_ptr.vmem [resolvable:$true] %s4672
      %4678 = dma.vmem_to_hbm [thread:$0]  %s4673, 256, %s6, [#allocation14], 128, 128, 8
    $region41: #{tpu_custom_call.1} parent=1 // pred_fallthru
      _
    // Predicated region
    $region42: #{tpu_custom_call.1} parent=1 // pred_check
      _
    $region43: #{tpu_custom_call.1} parent=1 // pred_check_branch
      %4680 = sbr.rel (0) target = $region45
    $region44: #{tpu_custom_call.1} parent=1 // pred_region
      %s4682 = ssub.s32 256, 256
      %4683 = vsyncadd [#allocation14], %s4682
      %s4684 = sshll.u32 [#allocation15], 4
      %s4685 = int_to_ptr.vmem [resolvable:$true] %s4684
      %4690 = dma.vmem_to_hbm [thread:$0]  %s4685, 256, %s7, [#allocation14], 128, 128, 8
    $region45: #{tpu_custom_call.1} parent=1 // pred_fallthru
      _
    // Predicated region
    $region46: #{tpu_custom_call.1} parent=1 // pred_check
      _
    $region47: #{tpu_custom_call.1} parent=1 // pred_check_branch
      %4692 = sbr.rel (0) target = $region49
    $region48: #{tpu_custom_call.1} parent=1 // pred_region
      %4693 = dma.done [#allocation11], 1024
    $region49: #{tpu_custom_call.1} parent=1 // pred_fallthru
      _
    // Predicated region
    $region50: #{tpu_custom_call.1} parent=1 // pred_check
      _
    $region51: #{tpu_custom_call.1} parent=1 // pred_check_branch
      %4695 = sbr.rel (0) target = $region53
    $region52: #{tpu_custom_call.1} parent=1 // pred_region
      %4696 = dma.done [#allocation14], 256
    $region53: #{tpu_custom_call.1} parent=1 // pred_fallthru
      _
    // Predicated region
    $region54: #{tpu_custom_call.1} parent=1 // pred_check
      _
    $region55: #{tpu_custom_call.1} parent=1 // pred_check_branch
      %4698 = sbr.rel (0) target = $region57
    $region56: #{tpu_custom_call.1} parent=1 // pred_region
      %4699 = dma.done [#allocation14], 256
    $region57: #{tpu_custom_call.1} parent=1 // pred_fallthru
      _
    %4700 = vsyncpa [#allocation10], 1
    %4701 = vsyncpa [#allocation11], 1
    %4702 = vsyncpa [#allocation14], 1
  %4703 = vsyncmov [#allocation8]
  %s4704 = vpop.sfrf %4703
  %p4705 = scmp.eq.s32.totalorder %s4704, 0
  %p4706 = pneg %p4705
  %4708 = shalt.err (%p4706)
  %s4709 = scalar_lea.sflag [#allocation8], 1
  %4710 = vsyncmov %s4709
  %s4711 = vpop.sfrf %4710
  %p4712 = scmp.eq.s32.totalorder %s4711, 0
  %p4713 = pneg %p4712
  %4715 = shalt.err (%p4713)
  %s4716 = scalar_lea.sflag [#allocation8], 2
  %4717 = vsyncmov %s4716
  %s4718 = vpop.sfrf %4717
  %p4719 = scmp.eq.s32.totalorder %s4718, 0
  %p4720 = pneg %p4719
  %4722 = shalt.err (%p4720)

</llo_original>
